<compile_context>
chip_gen: v5e
topology: v5e:2x2
jax: 0.10.0
libtpu: 0.0.40
codegen_flags: <defaults>
</compile_context>

<pallas_src>
import functools

import jax
import jax.numpy as jnp
import numpy as np
from jax import lax
from jax.experimental import pallas as pl
from jax.experimental.pallas import tpu as pltpu

DIM = 17            # LUT lattice size (torch default is 33; kept small here)
NUM = 8             # number of basis LUTs
BATCH = 2           # batch size for `weights`
LAMBDA_SMOOTH = 1e-4
LAMBDA_MN = 10.0
LANE = 128


# --------------------------- fused CLUT kernel -----------------------------
def _clut_fused_kernel(wexp_ref, lut_ref, mask_ref, d3_ref, loss_ref, *,
                       dim, num, lambda_smooth, lambda_mn, use_tvmn):
    # LUT bank: (num*3, Npad), lane-dense, zero-padded past N = dim^3.
    x = lut_ref[...]
    npad = x.shape[1]

    # ---- combine on the MXU: one (BP, num*3) x (num*3, Npad) matmul --------
    # Wexp row 3b+c has weights[b, n] at column 3n+c, so output row 3b+c is
    # sum_n weights[b, n] * LUT[n, c, :].  HIGHEST keeps exact-f32 semantics.
    d3_ref[...] = jnp.dot(wexp_ref[...], x,
                          precision=lax.Precision.HIGHEST,
                          preferred_element_type=jnp.float32)

    # ---- TVMN regularizer: full-width rolls + ONE fused reduction ----------
    if use_tvmn:
        d2 = dim * dim
        # Per-direction mean denominator (matches torch: num*3*dim*dim*(dim-1)).
        n_valid = float(num * 3 * d2 * (dim - 1))
        acc = None
        for dirn, stride in enumerate((1, dim, d2)):   # r, g, b neighbours
            # shifted[p] = x[(p + stride) % Npad]; wrap-around, padding lanes
            # and cube-face crossings all carry mask weight 0.
            shifted = pltpu.roll(x, npad - stride, axis=1)
            d = x - shifted
            wd = mask_ref[pl.ds(dirn, 1), :] * d       # weights in {0, 1, 2}
            r = jnp.maximum(wd, 0.0)                   # relu(dif * w)
            term = lambda_smooth * (wd * d) + lambda_mn * (r * r)
            acc = term if acc is None else acc + term
        loss_ref[...] = jnp.sum(acc, keepdims=True) * (1.0 / n_valid)
    else:
        loss_ref[...] = jnp.zeros_like(loss_ref)


# ------------------- TVMN weight masks (flat, zero-extended) ---------------
def _tvmn_masks(dim, n_pad):
    """One (3, Npad) array: row d holds the weight of LUT_flat[p] - LUT_flat[p + stride_d].

    0 marks pairs that cross a cube face, wrap around, or fall in the lane
    padding; 2 marks the boundary slices PyTorch doubles; 1 otherwise.
    """
    N = dim ** 3
    d2 = dim * dim
    p = np.arange(N)
    coords = (p % dim, (p // dim) % dim, p // d2)     # (k, j, i) <-> strides (1, dim, d2)
    m = np.zeros((3, n_pad), np.float32)
    for row, q in enumerate(coords):
        m[row, :N] = np.where(q == dim - 1, 0.0,
                              np.where((q == 0) | (q == dim - 2), 2.0, 1.0))
    return jnp.asarray(m)


# ------------------------------ CLUT forward -------------------------------
def clut_forward(weights, luts, use_tvmn=True,
                 lambda_smooth=LAMBDA_SMOOTH, lambda_mn=LAMBDA_MN):
    """CLUT.forward(weights, TVMN) for mode '--'.

    weights: (B, num) f32
    luts:    (num, 3, dim, dim, dim) f32   (the nn.Parameter LUT bank)
    returns: (D3LUT (B, 3, dim, dim, dim), tvmn_loss scalar)
    """
    B, num = weights.shape
    dim = luts.shape[2]
    N = dim ** 3
    n_pad = ((N + LANE - 1) // LANE) * LANE            # lane-multiple padding
    bp = ((B * 3 + 7) // 8) * 8                        # sublane-multiple rows

    # Lane-dense, zero-padded views (pure reshape + pad; single HBM read of
    # the LUT bank inside the kernel).
    luts2d = jnp.pad(luts.reshape(num * 3, N), ((0, 0), (0, n_pad - N)))
    wexp = jnp.kron(weights.astype(jnp.float32), jnp.eye(3, dtype=jnp.float32))
    wexp = jnp.pad(wexp, ((0, bp - B * 3), (0, 0)))    # (bp, num*3)
    masks = _tvmn_masks(dim, n_pad)                    # (3, n_pad)

    kern = functools.partial(
        _clut_fused_kernel, dim=dim, num=num,
        lambda_smooth=lambda_smooth, lambda_mn=lambda_mn, use_tvmn=use_tvmn)

    cost = pl.CostEstimate(
        flops=2 * bp * (num * 3) * n_pad + 10 * 3 * (num * 3) * n_pad,
        transcendentals=0,
        bytes_accessed=4 * ((num * 3) * n_pad + bp * n_pad + 3 * n_pad
                            + bp * num * 3 + 1))

    d3_flat, loss = pl.pallas_call(
        kern,
        out_shape=(jax.ShapeDtypeStruct((bp, n_pad), jnp.float32),
                   jax.ShapeDtypeStruct((1, 1), jnp.float32)),
        grid=(1,),
        in_specs=[
            pl.BlockSpec((bp, num * 3), lambda i: (0, 0)),      # Wexp
            pl.BlockSpec((num * 3, n_pad), lambda i: (0, 0)),   # LUT bank (flat)
            pl.BlockSpec((3, n_pad), lambda i: (0, 0)),         # TVMN masks
        ],
        out_specs=(
            pl.BlockSpec((bp, n_pad), lambda i: (0, 0)),        # D3LUT (flat)
            pl.BlockSpec((1, 1), lambda i: (0, 0)),             # tvmn loss
        ),
        compiler_params=pltpu.CompilerParams(
            dimension_semantics=("arbitrary",),
            # Headroom for whole-tile temporaries at the torch default dim=33
            # (v5e default scoped limit is only 16 MiB); demo dim=17 uses ~4 MB.
            vmem_limit_bytes=64 * 1024 * 1024),
        cost_estimate=cost,
    )(wexp, luts2d, masks)

    d3lut = d3_flat[:B * 3, :N].reshape(B, 3, dim, dim, dim)
    return d3lut, loss[0, 0]


# ------------------------------ pure-JAX ref -------------------------------
def _tvmn_ref(LUT, dim, lambda_smooth, lambda_mn):
    dif_r = LUT[..., :-1] - LUT[..., 1:]
    dif_g = LUT[..., :-1, :] - LUT[..., 1:, :]
    dif_b = LUT[..., :-1, :, :] - LUT[..., 1:, :, :]
    wr = jnp.ones((dim, dim, dim - 1), jnp.float32)
    wr = wr.at[..., 0].multiply(2.0).at[..., dim - 2].multiply(2.0)
    wg = jnp.ones((dim, dim - 1, dim), jnp.float32)
    wg = wg.at[..., 0, :].multiply(2.0).at[..., dim - 2, :].multiply(2.0)
    wb = jnp.ones((dim - 1, dim, dim), jnp.float32)
    wb = wb.at[0].multiply(2.0).at[dim - 2].multiply(2.0)
    tv0 = (jnp.mean(dif_r ** 2 * wr) + jnp.mean(dif_g ** 2 * wg)
           + jnp.mean(dif_b ** 2 * wb))
    tv1 = (jnp.mean(jnp.maximum(dif_r * wr, 0.0) ** 2)
           + jnp.mean(jnp.maximum(dif_g * wg, 0.0) ** 2)
           + jnp.mean(jnp.maximum(dif_b * wb, 0.0) ** 2))
    return lambda_smooth * tv0 + lambda_mn * tv1


def _clut_ref(weights, luts):
    num = luts.shape[0]
    dim = luts.shape[2]
    d3lut = jnp.dot(weights, luts.reshape(num, -1),
                    precision=lax.Precision.HIGHEST)
    d3lut = d3lut.reshape(-1, 3, dim, dim, dim)
    loss = _tvmn_ref(luts, dim, LAMBDA_SMOOTH, LAMBDA_MN)
    return d3lut, loss


# ---------------------------------- main -----------------------------------
if __name__ == "__main__":
    key = jax.random.PRNGKey(0)
    k_w, k_l = jax.random.split(key)

    # Parameter shapes match CLUT.__init__ (mode '--'): LUTs (num, 3, dim, dim, dim).
    # (torch inits LUTs to zeros; deterministic random values are used so the
    #  kernels compute something non-trivial.)
    weights = jax.random.normal(k_w, (BATCH, NUM), jnp.float32)
    luts = jax.random.uniform(k_l, (NUM, 3, DIM, DIM, DIM),
                              jnp.float32, minval=-0.5, maxval=0.5)

    d3lut, loss = clut_forward(weights, luts, use_tvmn=True)
    d3lut = jax.block_until_ready(d3lut)
    loss = jax.block_until_ready(loss)

    d3lut_ref, loss_ref_val = _clut_ref(weights, luts)
    np.testing.assert_allclose(np.asarray(d3lut), np.asarray(d3lut_ref),
                               rtol=1e-4, atol=1e-4)
    np.testing.assert_allclose(np.asarray(loss), np.asarray(loss_ref_val),
                               rtol=1e-4, atol=1e-4)

    print("KERNEL_OK")
</pallas_src>

<mosaic_0001>
module attributes {stable_mosaic.version = 11 : i64} {
  func.func @_clut_fused_kernel(%arg0: i32, %arg1: memref<8x24xf32, #tpu.memory_space<vmem>>, %arg2: memref<24x4992xf32, #tpu.memory_space<vmem>>, %arg3: memref<3x4992xf32, #tpu.memory_space<vmem>>, %arg4: memref<8x4992xf32, #tpu.memory_space<vmem>>, %arg5: memref<1x1xf32, #tpu.memory_space<vmem>>) attributes {dimension_semantics = [#tpu.dimension_semantics<arbitrary>], iteration_bounds = array<i64: 1>, scalar_prefetch = 0 : i64, scratch_operands = 0 : i64, tpu.core_type = #tpu.core_type<tc>, window_params = [{pipeline_mode = #tpu.pipeline_mode<synchronous>, transform_indices = @transform_0, window_bounds = array<i64: 8, 24>}, {pipeline_mode = #tpu.pipeline_mode<synchronous>, transform_indices = @transform_1, window_bounds = array<i64: 24, 4992>}, {pipeline_mode = #tpu.pipeline_mode<synchronous>, transform_indices = @transform_2, window_bounds = array<i64: 3, 4992>}, {pipeline_mode = #tpu.pipeline_mode<synchronous>, transform_indices = @transform_3, window_bounds = array<i64: 8, 4992>}, {pipeline_mode = #tpu.pipeline_mode<synchronous>, transform_indices = @transform_4, window_bounds = array<i64: 1, 1>}]} {
    %c0 = arith.constant 0 : index
    %c0_0 = arith.constant 0 : index
    %0 = vector.load %arg2[%c0, %c0_0] : memref<24x4992xf32, #tpu.memory_space<vmem>>, vector<24x4992xf32>
    %c0_1 = arith.constant 0 : index
    %c0_2 = arith.constant 0 : index
    %1 = vector.load %arg1[%c0_1, %c0_2] : memref<8x24xf32, #tpu.memory_space<vmem>>, vector<8x24xf32>
    %cst = arith.constant dense<0.000000e+00> : vector<8x4992xf32>
    %2 = tpu.matmul %1, %0, %cst {dimension_numbers = #tpu.dot_dimension_numbers<[1], [0], [0], [1], [0, 0, 1, 1], [], []>, precision = #tpu.contract_precision<fp32>} : vector<8x24xf32>, vector<24x4992xf32>, vector<8x4992xf32> -> vector<8x4992xf32>
    %c0_3 = arith.constant 0 : index
    %c0_4 = arith.constant 0 : index
    %3 = vector.load %arg4[%c0_3, %c0_4] : memref<8x4992xf32, #tpu.memory_space<vmem>>, vector<8x4992xf32>
    tpu.vector_store %arg4[%c0_3, %c0_4], %2 {strides = array<i32>} : memref<8x4992xf32, #tpu.memory_space<vmem>>, vector<8x4992xf32>,
    %c4991_i32 = arith.constant 4991 : i32
    %4 = tpu.dynamic_rotate %0 by %c4991_i32 dim 1 : vector<24x4992xf32>, i32 -> vector<24x4992xf32>
    %5 = arith.subf %0, %4 : vector<24x4992xf32>
    %c0_5 = arith.constant 0 : index
    %c0_6 = arith.constant 0 : index
    %6 = vector.load %arg3[%c0_5, %c0_6] : memref<3x4992xf32, #tpu.memory_space<vmem>>, vector<1x4992xf32>
    %7 = vector.broadcast %6 : vector<1x4992xf32> to vector<24x4992xf32>
    %8 = arith.mulf %7, %5 : vector<24x4992xf32>
    %cst_7 = arith.constant 0.000000e+00 : f32
    %9 = vector.broadcast %cst_7 : f32 to vector<24x4992xf32>
    %10 = arith.maximumf %8, %9 : vector<24x4992xf32>
    %11 = arith.mulf %8, %5 : vector<24x4992xf32>
    %cst_8 = arith.constant 9.99999974E-5 : f32
    %12 = vector.broadcast %cst_8 : f32 to vector<24x4992xf32>
    %13 = arith.mulf %12, %11 : vector<24x4992xf32>
    %14 = arith.mulf %10, %10 : vector<24x4992xf32>
    %cst_9 = arith.constant 1.000000e+01 : f32
    %15 = vector.broadcast %cst_9 : f32 to vector<24x4992xf32>
    %16 = arith.mulf %15, %14 : vector<24x4992xf32>
    %17 = arith.addf %13, %16 : vector<24x4992xf32>
    %c4975_i32 = arith.constant 4975 : i32
    %18 = tpu.dynamic_rotate %0 by %c4975_i32 dim 1 : vector<24x4992xf32>, i32 -> vector<24x4992xf32>
    %19 = arith.subf %0, %18 : vector<24x4992xf32>
    %c1 = arith.constant 1 : index
    %c0_10 = arith.constant 0 : index
    %20 = vector.load %arg3[%c1, %c0_10] : memref<3x4992xf32, #tpu.memory_space<vmem>>, vector<1x4992xf32>
    %21 = vector.broadcast %20 : vector<1x4992xf32> to vector<24x4992xf32>
    %22 = arith.mulf %21, %19 : vector<24x4992xf32>
    %cst_11 = arith.constant 0.000000e+00 : f32
    %23 = vector.broadcast %cst_11 : f32 to vector<24x4992xf32>
    %24 = arith.maximumf %22, %23 : vector<24x4992xf32>
    %25 = arith.mulf %22, %19 : vector<24x4992xf32>
    %cst_12 = arith.constant 9.99999974E-5 : f32
    %26 = vector.broadcast %cst_12 : f32 to vector<24x4992xf32>
    %27 = arith.mulf %26, %25 : vector<24x4992xf32>
    %28 = arith.mulf %24, %24 : vector<24x4992xf32>
    %cst_13 = arith.constant 1.000000e+01 : f32
    %29 = vector.broadcast %cst_13 : f32 to vector<24x4992xf32>
    %30 = arith.mulf %29, %28 : vector<24x4992xf32>
    %31 = arith.addf %27, %30 : vector<24x4992xf32>
    %32 = arith.addf %17, %31 : vector<24x4992xf32>
    %c4703_i32 = arith.constant 4703 : i32
    %33 = tpu.dynamic_rotate %0 by %c4703_i32 dim 1 : vector<24x4992xf32>, i32 -> vector<24x4992xf32>
    %34 = arith.subf %0, %33 : vector<24x4992xf32>
    %c2 = arith.constant 2 : index
    %c0_14 = arith.constant 0 : index
    %35 = vector.load %arg3[%c2, %c0_14] : memref<3x4992xf32, #tpu.memory_space<vmem>>, vector<1x4992xf32>
    %36 = vector.broadcast %35 : vector<1x4992xf32> to vector<24x4992xf32>
    %37 = arith.mulf %36, %34 : vector<24x4992xf32>
    %cst_15 = arith.constant 0.000000e+00 : f32
    %38 = vector.broadcast %cst_15 : f32 to vector<24x4992xf32>
    %39 = arith.maximumf %37, %38 : vector<24x4992xf32>
    %40 = arith.mulf %37, %34 : vector<24x4992xf32>
    %cst_16 = arith.constant 9.99999974E-5 : f32
    %41 = vector.broadcast %cst_16 : f32 to vector<24x4992xf32>
    %42 = arith.mulf %41, %40 : vector<24x4992xf32>
    %43 = arith.mulf %39, %39 : vector<24x4992xf32>
    %cst_17 = arith.constant 1.000000e+01 : f32
    %44 = vector.broadcast %cst_17 : f32 to vector<24x4992xf32>
    %45 = arith.mulf %44, %43 : vector<24x4992xf32>
    %46 = arith.addf %42, %45 : vector<24x4992xf32>
    %47 = arith.addf %32, %46 : vector<24x4992xf32>
    %48 = vector.shape_cast %47 : vector<24x4992xf32> to vector<1x24x4992xf32>
    %cst_18 = arith.constant dense<0.000000e+00> : vector<1xf32>
    %49 = vector.multi_reduction <add>, %48, %cst_18 [1, 2] : vector<1x24x4992xf32> to vector<1xf32>
    %50 = vector.shape_cast %49 : vector<1xf32> to vector<1x1x1xf32>
    %51 = vector.extract %50[0, 0, 0] : f32 from vector<1x1x1xf32>
    %52 = vector.broadcast %51 : f32 to vector<1x1xf32>
    %cst_19 = arith.constant 9.010957E-6 : f32
    %53 = vector.broadcast %cst_19 : f32 to vector<1x1xf32>
    %54 = arith.mulf %52, %53 : vector<1x1xf32>
    %c0_20 = arith.constant 0 : index
    %c0_21 = arith.constant 0 : index
    %55 = vector.load %arg5[%c0_20, %c0_21] : memref<1x1xf32, #tpu.memory_space<vmem>>, vector<1x1xf32>
    tpu.vector_store %arg5[%c0_20, %c0_21], %54 {strides = array<i32>} : memref<1x1xf32, #tpu.memory_space<vmem>>, vector<1x1xf32>,
    return
  }
  func.func @transform_0(%arg0: i32) -> (i32, i32) {
    %c0_i32 = arith.constant 0 : i32
    %c0_i32_0 = arith.constant 0 : i32
    %c0_i32_1 = arith.constant 0 : i32
    return %c0_i32, %c0_i32_0 : i32, i32
  }
  func.func @transform_1(%arg0: i32) -> (i32, i32) {
    %c0_i32 = arith.constant 0 : i32
    %c0_i32_0 = arith.constant 0 : i32
    %c0_i32_1 = arith.constant 0 : i32
    return %c0_i32, %c0_i32_0 : i32, i32
  }
  func.func @transform_2(%arg0: i32) -> (i32, i32) {
    %c0_i32 = arith.constant 0 : i32
    %c0_i32_0 = arith.constant 0 : i32
    %c0_i32_1 = arith.constant 0 : i32
    return %c0_i32, %c0_i32_0 : i32, i32
  }
  func.func @transform_3(%arg0: i32) -> (i32, i32) {
    %c0_i32 = arith.constant 0 : i32
    %c0_i32_0 = arith.constant 0 : i32
    %c0_i32_1 = arith.constant 0 : i32
    return %c0_i32, %c0_i32_0 : i32, i32
  }
  func.func @transform_4(%arg0: i32) -> (i32, i32) {
    %c0_i32 = arith.constant 0 : i32
    %c0_i32_0 = arith.constant 0 : i32
    %c0_i32_1 = arith.constant 0 : i32
    return %c0_i32, %c0_i32_0 : i32, i32
  }
}

</mosaic_0001>

<llo_original>
// kernel: tpu_custom_call.1
$region0: #{tpu_custom_call.1}
  #allocation0 [shape = 'u32[]', space=smem, size = 0x4, offset = 0x4, fixed_abs, tag = 'smem constant byte address 0x4 - core index']
  #allocation1 [shape = 'u32[72,128]{1,0:T(1,128)}', space=vmem, size = 0x9000, scoped, tag = 'internal scratch']
  %s0 = inlined_call_operand.hbm [shape: f32[8,24], index: 0, kind: input, shape index: {}]
  %s1 = inlined_call_operand.hbm [shape: f32[24,4992], index: 1, kind: input, shape index: {}]
  %s2 = inlined_call_operand.hbm [shape: f32[3,4992], index: 2, kind: input, shape index: {}]
  %s3 = inlined_call_operand.hbm [shape: f32[8,4992], index: 3, kind: output, shape index: {0}]
  %s4 = inlined_call_operand.hbm [shape: f32[1,1], index: 4, kind: output, shape index: {1}]
  %5 = xla_tuple %s3, %s4
  %s6 = sld [smem:[#allocation0]]
  $region42: #{tpu_custom_call.1} parent=0
    _
  %s8 = ssub.s32 1, %s6
  %s9 = scalar_select 0, %s8, %s6
  $region1: #{tpu_custom_call.1} parent=0
    #allocation2 [shape = 'u8[4096]{0}', space=vmem, size = 0x1000, scoped, tag = 'input window, operand 0, single buffered']
    #allocation3 [shape = 's32[1]{0}', space=sflag, size = 0x4, scoped, tag = 'scoped memory for tpu_custom_call.1']
    #allocation4 [shape = 's32[1]{0}', space=sflag, size = 0x4, scoped, tag = 'scoped memory for tpu_custom_call.1']
    #allocation5 [shape = 'u8[479232]{0}', space=vmem, size = 0x75000, scoped, tag = 'input window, operand 1, single buffered']
    #allocation6 [shape = 's32[1]{0}', space=sflag, size = 0x4, scoped, tag = 'scoped memory for tpu_custom_call.1']
    #allocation7 [shape = 'u8[79872]{0}', space=vmem, size = 0x13800, scoped, tag = 'input window, operand 2, single buffered']
    #allocation8 [shape = 'u8[159744]{0}', space=vmem, size = 0x27000, scoped, tag = 'output window, operand 0, single buffered']
    #allocation9 [shape = 'u8[512]{0}', space=vmem, size = 0x400, scoped, tag = 'output window, operand 1, single buffered']
    #allocation10 [shape = 's32[1]{0}', space=sflag, size = 0x4, scoped, tag = 'scoped memory for tpu_custom_call.1']
    %10 = vsyncpa [#allocation3], 0
    %11 = vsyncpa [#allocation6], 0
    %12 = vsyncpa [#allocation4], 0
    %13 = vsyncpa [#allocation10], 0
    // Predicated region
    $region2: #{tpu_custom_call.1} parent=1 // pred_check
      _
    $region3: #{tpu_custom_call.1} parent=1 // pred_check_branch
      %15 = sbr.rel (0) target = $region5
    $region4: #{tpu_custom_call.1} parent=1 // pred_region
      %17 = vsyncadd [#allocation3], 0
      %s19 = sshll.u32 %s0, 4
      %s20 = int_to_ptr.hbm [resolvable:$true] %s19
      %s21 = sshll.u32 [#allocation2], 4
      %s22 = int_to_ptr.vmem [resolvable:$true] %s21
      %24 = dma.hbm_to_vmem [thread:$0]  %s20, 128, %s22, [#allocation3]
    $region5: #{tpu_custom_call.1} parent=1 // pred_fallthru
      _
    // Predicated region
    $region6: #{tpu_custom_call.1} parent=1 // pred_check
      _
    $region7: #{tpu_custom_call.1} parent=1 // pred_check_branch
      %26 = sbr.rel (0) target = $region9
    $region8: #{tpu_custom_call.1} parent=1 // pred_region
      %28 = vsyncadd [#allocation6], 0
      %s29 = sshll.u32 %s1, 4
      %s30 = int_to_ptr.hbm [resolvable:$true] %s29
      %s31 = sshll.u32 [#allocation5], 4
      %s32 = int_to_ptr.vmem [resolvable:$true] %s31
      %37 = dma.hbm_to_vmem [thread:$0]  %s30, 14976, %s32, [#allocation6], 4992, 4992, 312
    $region9: #{tpu_custom_call.1} parent=1 // pred_fallthru
      _
    // Predicated region
    $region10: #{tpu_custom_call.1} parent=1 // pred_check
      _
    $region11: #{tpu_custom_call.1} parent=1 // pred_check_branch
      %39 = sbr.rel (0) target = $region13
    $region12: #{tpu_custom_call.1} parent=1 // pred_region
      %41 = vsyncadd [#allocation6], 0
      %s43 = sshll.u32 %s2, 4
      %s44 = int_to_ptr.hbm [resolvable:$true] %s43
      %s45 = sshll.u32 [#allocation7], 4
      %s46 = int_to_ptr.vmem [resolvable:$true] %s45
      %48 = dma.hbm_to_vmem [thread:$0]  %s44, 2496, %s46, [#allocation6]
    $region13: #{tpu_custom_call.1} parent=1 // pred_fallthru
      _
    // Predicated region
    $region14: #{tpu_custom_call.1} parent=1 // pred_check
      _
    $region15: #{tpu_custom_call.1} parent=1 // pred_check_branch
      %50 = sbr.rel (0) target = $region17
    $region16: #{tpu_custom_call.1} parent=1 // pred_region
      %52 = dma.done [#allocation3], 128
    $region17: #{tpu_custom_call.1} parent=1 // pred_fallthru
      _
    // Predicated region
    $region18: #{tpu_custom_call.1} parent=1 // pred_check
      _
    $region19: #{tpu_custom_call.1} parent=1 // pred_check_branch
      %54 = sbr.rel (0) target = $region21
    $region20: #{tpu_custom_call.1} parent=1 // pred_region
      %56 = dma.done [#allocation6], 14976
    $region21: #{tpu_custom_call.1} parent=1 // pred_fallthru
      _
    // Predicated region
    $region22: #{tpu_custom_call.1} parent=1 // pred_check
      _
    $region23: #{tpu_custom_call.1} parent=1 // pred_check_branch
      %58 = sbr.rel (0) target = $region25
    $region24: #{tpu_custom_call.1} parent=1 // pred_region
      %60 = dma.done [#allocation6], 2496
    $region25: #{tpu_custom_call.1} parent=1 // pred_fallthru
      _
    %v61 = vld [vmem:[#allocation5] sm:$0xff]
    %v62 = vld [vmem:[#allocation5 + $0x8] sm:$0xff]
    %v63 = vld [vmem:[#allocation5 + $0x10] sm:$0xff]
    %v64 = vld [vmem:[#allocation5 + $0x18] sm:$0xff]
    %v65 = vld [vmem:[#allocation5 + $0x20] sm:$0xff]
    %v66 = vld [vmem:[#allocation5 + $0x28] sm:$0xff]
    %v67 = vld [vmem:[#allocation5 + $0x30] sm:$0xff]
    %v68 = vld [vmem:[#allocation5 + $0x38] sm:$0xff]
    %v69 = vld [vmem:[#allocation5 + $0x40] sm:$0xff]
    %v70 = vld [vmem:[#allocation5 + $0x48] sm:$0xff]
    %v71 = vld [vmem:[#allocation5 + $0x50] sm:$0xff]
    %v72 = vld [vmem:[#allocation5 + $0x58] sm:$0xff]
    %v73 = vld [vmem:[#allocation5 + $0x60] sm:$0xff]
    %v74 = vld [vmem:[#allocation5 + $0x68] sm:$0xff]
    %v75 = vld [vmem:[#allocation5 + $0x70] sm:$0xff]
    %v76 = vld [vmem:[#allocation5 + $0x78] sm:$0xff]
    %v77 = vld [vmem:[#allocation5 + $0x80] sm:$0xff]
    %v78 = vld [vmem:[#allocation5 + $0x88] sm:$0xff]
    %v79 = vld [vmem:[#allocation5 + $0x90] sm:$0xff]
    %v80 = vld [vmem:[#allocation5 + $0x98] sm:$0xff]
    %v81 = vld [vmem:[#allocation5 + $0xa0] sm:$0xff]
    %v82 = vld [vmem:[#allocation5 + $0xa8] sm:$0xff]
    %v83 = vld [vmem:[#allocation5 + $0xb0] sm:$0xff]
    %v84 = vld [vmem:[#allocation5 + $0xb8] sm:$0xff]
    %v85 = vld [vmem:[#allocation5 + $0xc0] sm:$0xff]
    %v86 = vld [vmem:[#allocation5 + $0xc8] sm:$0xff]
    %v87 = vld [vmem:[#allocation5 + $0xd0] sm:$0xff]
    %v88 = vld [vmem:[#allocation5 + $0xd8] sm:$0xff]
    %v89 = vld [vmem:[#allocation5 + $0xe0] sm:$0xff]
    %v90 = vld [vmem:[#allocation5 + $0xe8] sm:$0xff]
    %v91 = vld [vmem:[#allocation5 + $0xf0] sm:$0xff]
    %v92 = vld [vmem:[#allocation5 + $0xf8] sm:$0xff]
    %v93 = vld [vmem:[#allocation5 + $0x100] sm:$0xff]
    %v94 = vld [vmem:[#allocation5 + $0x108] sm:$0xff]
    %v95 = vld [vmem:[#allocation5 + $0x110] sm:$0xff]
    %v96 = vld [vmem:[#allocation5 + $0x118] sm:$0xff]
    %v97 = vld [vmem:[#allocation5 + $0x120] sm:$0xff]
    %v98 = vld [vmem:[#allocation5 + $0x128] sm:$0xff]
    %v99 = vld [vmem:[#allocation5 + $0x130] sm:$0xff]
    %v100 = vld [vmem:[#allocation5 + $0x138] sm:$0xff]
    %v101 = vld [vmem:[#allocation5 + $0x140] sm:$0xff]
    %v102 = vld [vmem:[#allocation5 + $0x148] sm:$0xff]
    %v103 = vld [vmem:[#allocation5 + $0x150] sm:$0xff]
    %v104 = vld [vmem:[#allocation5 + $0x158] sm:$0xff]
    %v105 = vld [vmem:[#allocation5 + $0x160] sm:$0xff]
    %v106 = vld [vmem:[#allocation5 + $0x168] sm:$0xff]
    %v107 = vld [vmem:[#allocation5 + $0x170] sm:$0xff]
    %v108 = vld [vmem:[#allocation5 + $0x178] sm:$0xff]
    %v109 = vld [vmem:[#allocation5 + $0x180] sm:$0xff]
    %v110 = vld [vmem:[#allocation5 + $0x188] sm:$0xff]
    %v111 = vld [vmem:[#allocation5 + $0x190] sm:$0xff]
    %v112 = vld [vmem:[#allocation5 + $0x198] sm:$0xff]
    %v113 = vld [vmem:[#allocation5 + $0x1a0] sm:$0xff]
    %v114 = vld [vmem:[#allocation5 + $0x1a8] sm:$0xff]
    %v115 = vld [vmem:[#allocation5 + $0x1b0] sm:$0xff]
    %v116 = vld [vmem:[#allocation5 + $0x1b8] sm:$0xff]
    %v117 = vld [vmem:[#allocation5 + $0x1c0] sm:$0xff]
    %v118 = vld [vmem:[#allocation5 + $0x1c8] sm:$0xff]
    %v119 = vld [vmem:[#allocation5 + $0x1d0] sm:$0xff]
    %v120 = vld [vmem:[#allocation5 + $0x1d8] sm:$0xff]
    %v121 = vld [vmem:[#allocation5 + $0x1e0] sm:$0xff]
    %v122 = vld [vmem:[#allocation5 + $0x1e8] sm:$0xff]
    %v123 = vld [vmem:[#allocation5 + $0x1f0] sm:$0xff]
    %v124 = vld [vmem:[#allocation5 + $0x1f8] sm:$0xff]
    %v125 = vld [vmem:[#allocation5 + $0x200] sm:$0xff]
    %v126 = vld [vmem:[#allocation5 + $0x208] sm:$0xff]
    %v127 = vld [vmem:[#allocation5 + $0x210] sm:$0xff]
    %v128 = vld [vmem:[#allocation5 + $0x218] sm:$0xff]
    %v129 = vld [vmem:[#allocation5 + $0x220] sm:$0xff]
    %v130 = vld [vmem:[#allocation5 + $0x228] sm:$0xff]
    %v131 = vld [vmem:[#allocation5 + $0x230] sm:$0xff]
    %v132 = vld [vmem:[#allocation5 + $0x238] sm:$0xff]
    %v133 = vld [vmem:[#allocation5 + $0x240] sm:$0xff]
    %v134 = vld [vmem:[#allocation5 + $0x248] sm:$0xff]
    %v135 = vld [vmem:[#allocation5 + $0x250] sm:$0xff]
    %v136 = vld [vmem:[#allocation5 + $0x258] sm:$0xff]
    %v137 = vld [vmem:[#allocation5 + $0x260] sm:$0xff]
    %v138 = vld [vmem:[#allocation5 + $0x268] sm:$0xff]
    %v139 = vld [vmem:[#allocation5 + $0x270] sm:$0xff]
    %v140 = vld [vmem:[#allocation5 + $0x278] sm:$0xff]
    %v141 = vld [vmem:[#allocation5 + $0x280] sm:$0xff]
    %v142 = vld [vmem:[#allocation5 + $0x288] sm:$0xff]
    %v143 = vld [vmem:[#allocation5 + $0x290] sm:$0xff]
    %v144 = vld [vmem:[#allocation5 + $0x298] sm:$0xff]
    %v145 = vld [vmem:[#allocation5 + $0x2a0] sm:$0xff]
    %v146 = vld [vmem:[#allocation5 + $0x2a8] sm:$0xff]
    %v147 = vld [vmem:[#allocation5 + $0x2b0] sm:$0xff]
    %v148 = vld [vmem:[#allocation5 + $0x2b8] sm:$0xff]
    %v149 = vld [vmem:[#allocation5 + $0x2c0] sm:$0xff]
    %v150 = vld [vmem:[#allocation5 + $0x2c8] sm:$0xff]
    %v151 = vld [vmem:[#allocation5 + $0x2d0] sm:$0xff]
    %v152 = vld [vmem:[#allocation5 + $0x2d8] sm:$0xff]
    %v153 = vld [vmem:[#allocation5 + $0x2e0] sm:$0xff]
    %v154 = vld [vmem:[#allocation5 + $0x2e8] sm:$0xff]
    %v155 = vld [vmem:[#allocation5 + $0x2f0] sm:$0xff]
    %v156 = vld [vmem:[#allocation5 + $0x2f8] sm:$0xff]
    %v157 = vld [vmem:[#allocation5 + $0x300] sm:$0xff]
    %v158 = vld [vmem:[#allocation5 + $0x308] sm:$0xff]
    %v159 = vld [vmem:[#allocation5 + $0x310] sm:$0xff]
    %v160 = vld [vmem:[#allocation5 + $0x318] sm:$0xff]
    %v161 = vld [vmem:[#allocation5 + $0x320] sm:$0xff]
    %v162 = vld [vmem:[#allocation5 + $0x328] sm:$0xff]
    %v163 = vld [vmem:[#allocation5 + $0x330] sm:$0xff]
    %v164 = vld [vmem:[#allocation5 + $0x338] sm:$0xff]
    %v165 = vld [vmem:[#allocation5 + $0x340] sm:$0xff]
    %v166 = vld [vmem:[#allocation5 + $0x348] sm:$0xff]
    %v167 = vld [vmem:[#allocation5 + $0x350] sm:$0xff]
    %v168 = vld [vmem:[#allocation5 + $0x358] sm:$0xff]
    %v169 = vld [vmem:[#allocation5 + $0x360] sm:$0xff]
    %v170 = vld [vmem:[#allocation5 + $0x368] sm:$0xff]
    %v171 = vld [vmem:[#allocation5 + $0x370] sm:$0xff]
    %v172 = vld [vmem:[#allocation5 + $0x378] sm:$0xff]
    %v173 = vld [vmem:[#allocation5 + $0x380] sm:$0xff]
    %v174 = vld [vmem:[#allocation5 + $0x388] sm:$0xff]
    %v175 = vld [vmem:[#allocation5 + $0x390] sm:$0xff]
    %v176 = vld [vmem:[#allocation5 + $0x398] sm:$0xff]
    %v177 = vld [vmem:[#allocation5 + $0x3a0] sm:$0xff]
    %v178 = vld [vmem:[#allocation2] sm:$0xff]
    %vm179 = vcmask 195584
    %v181 = vsel %vm179, %v178, 0
    %183 = vmatpush.msra.mxu0 0.0
    %184 = vmatpush.msra.mxu0 0.0
    %185 = vmatpush.msra.mxu0 0.0
    %186 = vmatpush.msra.mxu0 0.0
    %187 = vmatpush.msra.mxu0 0.0
    %188 = vmatpush.msra.mxu0 0.0
    %189 = vmatpush.msra.mxu0 0.0
    %190 = vmatpush.msra.mxu0 0.0
    %191 = vmatpush.msra.mxu0 0.0
    %192 = vmatpush.msra.mxu0 0.0
    %193 = vmatpush.msra.mxu0 0.0
    %194 = vmatpush.msra.mxu0 0.0
    %195 = vmatpush.msra.mxu0 0.0
    %v196 = vand.u32 %v139, 4294901760
    %197 = vmatpush.msra.mxu0 %v196
    %v198 = vand.u32 %v100, 4294901760
    %199 = vmatpush.msra.mxu0 %v198
    %v200 = vand.u32 %v61, 4294901760
    %201 = vmatpush.msra.mxu0 %v200
    %v202 = vand.u32 %v181, 4294901760
    %v203 = vsub.f32 %v181, %v202
    %v204 = vand.u32 %v203, 4294901760
    %v205 = vsub.f32 %v203, %v204
    %v206 = vand.u32 %v205, 4294901760
    %207 = vmatmul.f32.gmra.mxu0 %v206
    %v208 = vpop.f32.mrf.mxu0
    %v209 = vadd.f32 0.0, %v208
    %210 = vdwg.mxu0
    %211 = vmatpush.msra.mxu0 0.0
    %212 = vmatpush.msra.mxu0 0.0
    %213 = vmatpush.msra.mxu0 0.0
    %214 = vmatpush.msra.mxu0 0.0
    %215 = vmatpush.msra.mxu0 0.0
    %216 = vmatpush.msra.mxu0 0.0
    %217 = vmatpush.msra.mxu0 0.0
    %218 = vmatpush.msra.mxu0 0.0
    %219 = vmatpush.msra.mxu0 0.0
    %220 = vmatpush.msra.mxu0 0.0
    %221 = vmatpush.msra.mxu0 0.0
    %222 = vmatpush.msra.mxu0 0.0
    %223 = vmatpush.msra.mxu0 0.0
    %v224 = vand.u32 %v139, 4294901760
    %v225 = vsub.f32 %v139, %v224
    %v226 = vand.u32 %v225, 4294901760
    %v227 = vsub.f32 %v225, %v226
    %v228 = vand.u32 %v227, 4294901760
    %229 = vmatpush.msra.mxu0 %v228
    %v230 = vand.u32 %v100, 4294901760
    %v231 = vsub.f32 %v100, %v230
    %v232 = vand.u32 %v231, 4294901760
    %v233 = vsub.f32 %v231, %v232
    %v234 = vand.u32 %v233, 4294901760
    %235 = vmatpush.msra.mxu0 %v234
    %v236 = vand.u32 %v61, 4294901760
    %v237 = vsub.f32 %v61, %v236
    %v238 = vand.u32 %v237, 4294901760
    %v239 = vsub.f32 %v237, %v238
    %v240 = vand.u32 %v239, 4294901760
    %241 = vmatpush.msra.mxu0 %v240
    %v242 = vand.u32 %v181, 4294901760
    %243 = vmatmul.f32.gmra.mxu0 %v242
    %v244 = vpop.f32.mrf.mxu0
    %v245 = vadd.f32 %v209, %v244
    %246 = vdwg.mxu0
    %247 = vmatpush.msra.mxu0 0.0
    %248 = vmatpush.msra.mxu0 0.0
    %249 = vmatpush.msra.mxu0 0.0
    %250 = vmatpush.msra.mxu0 0.0
    %251 = vmatpush.msra.mxu0 0.0
    %252 = vmatpush.msra.mxu0 0.0
    %253 = vmatpush.msra.mxu0 0.0
    %254 = vmatpush.msra.mxu0 0.0
    %255 = vmatpush.msra.mxu0 0.0
    %256 = vmatpush.msra.mxu0 0.0
    %257 = vmatpush.msra.mxu0 0.0
    %258 = vmatpush.msra.mxu0 0.0
    %259 = vmatpush.msra.mxu0 0.0
    %v260 = vand.u32 %v139, 4294901760
    %v261 = vsub.f32 %v139, %v260
    %262 = vmatpush.msra.mxu0 %v261
    %v263 = vand.u32 %v100, 4294901760
    %v264 = vsub.f32 %v100, %v263
    %265 = vmatpush.msra.mxu0 %v264
    %v266 = vand.u32 %v61, 4294901760
    %v267 = vsub.f32 %v61, %v266
    %268 = vmatpush.msra.mxu0 %v267
    %v269 = vand.u32 %v181, 4294901760
    %v270 = vsub.f32 %v181, %v269
    %271 = vmatmul.f32.gmra.mxu0 %v270
    %v272 = vpop.f32.mrf.mxu0
    %v273 = vadd.f32 %v245, %v272
    %274 = vdwg.mxu0
    %275 = vmatpush.msra.mxu0 0.0
    %276 = vmatpush.msra.mxu0 0.0
    %277 = vmatpush.msra.mxu0 0.0
    %278 = vmatpush.msra.mxu0 0.0
    %279 = vmatpush.msra.mxu0 0.0
    %280 = vmatpush.msra.mxu0 0.0
    %281 = vmatpush.msra.mxu0 0.0
    %282 = vmatpush.msra.mxu0 0.0
    %283 = vmatpush.msra.mxu0 0.0
    %284 = vmatpush.msra.mxu0 0.0
    %285 = vmatpush.msra.mxu0 0.0
    %286 = vmatpush.msra.mxu0 0.0
    %287 = vmatpush.msra.mxu0 0.0
    %v288 = vand.u32 %v139, 4294901760
    %289 = vmatpush.msra.mxu0 %v288
    %v290 = vand.u32 %v100, 4294901760
    %291 = vmatpush.msra.mxu0 %v290
    %v292 = vand.u32 %v61, 4294901760
    %293 = vmatpush.msra.mxu0 %v292
    %v294 = vand.u32 %v181, 4294901760
    %v295 = vsub.f32 %v181, %v294
    %v296 = vand.u32 %v295, 4294901760
    %297 = vmatmul.f32.gmra.mxu0 %v296
    %v298 = vpop.f32.mrf.mxu0
    %v299 = vadd.f32 %v273, %v298
    %300 = vdwg.mxu0
    %301 = vmatpush.msra.mxu0 0.0
    %302 = vmatpush.msra.mxu0 0.0
    %303 = vmatpush.msra.mxu0 0.0
    %304 = vmatpush.msra.mxu0 0.0
    %305 = vmatpush.msra.mxu0 0.0
    %306 = vmatpush.msra.mxu0 0.0
    %307 = vmatpush.msra.mxu0 0.0
    %308 = vmatpush.msra.mxu0 0.0
    %309 = vmatpush.msra.mxu0 0.0
    %310 = vmatpush.msra.mxu0 0.0
    %311 = vmatpush.msra.mxu0 0.0
    %312 = vmatpush.msra.mxu0 0.0
    %313 = vmatpush.msra.mxu0 0.0
    %v314 = vand.u32 %v139, 4294901760
    %v315 = vsub.f32 %v139, %v314
    %v316 = vand.u32 %v315, 4294901760
    %317 = vmatpush.msra.mxu0 %v316
    %v318 = vand.u32 %v100, 4294901760
    %v319 = vsub.f32 %v100, %v318
    %v320 = vand.u32 %v319, 4294901760
    %321 = vmatpush.msra.mxu0 %v320
    %v322 = vand.u32 %v61, 4294901760
    %v323 = vsub.f32 %v61, %v322
    %v324 = vand.u32 %v323, 4294901760
    %325 = vmatpush.msra.mxu0 %v324
    %v326 = vand.u32 %v181, 4294901760
    %327 = vmatmul.f32.gmra.mxu0 %v326
    %v328 = vpop.f32.mrf.mxu0
    %v329 = vadd.f32 %v299, %v328
    %330 = vdwg.mxu0
    %331 = vmatpush.msra.mxu0 0.0
    %332 = vmatpush.msra.mxu0 0.0
    %333 = vmatpush.msra.mxu0 0.0
    %334 = vmatpush.msra.mxu0 0.0
    %335 = vmatpush.msra.mxu0 0.0
    %336 = vmatpush.msra.mxu0 0.0
    %337 = vmatpush.msra.mxu0 0.0
    %338 = vmatpush.msra.mxu0 0.0
    %339 = vmatpush.msra.mxu0 0.0
    %340 = vmatpush.msra.mxu0 0.0
    %341 = vmatpush.msra.mxu0 0.0
    %342 = vmatpush.msra.mxu0 0.0
    %343 = vmatpush.msra.mxu0 0.0
    %v344 = vand.u32 %v139, 4294901760
    %345 = vmatpush.msra.mxu0 %v344
    %v346 = vand.u32 %v100, 4294901760
    %347 = vmatpush.msra.mxu0 %v346
    %v348 = vand.u32 %v61, 4294901760
    %349 = vmatpush.msra.mxu0 %v348
    %v350 = vand.u32 %v181, 4294901760
    %351 = vmatmul.f32.gmra.mxu0 %v350
    %v352 = vpop.f32.mrf.mxu0
    %v353 = vadd.f32 %v329, %v352
    %354 = vdwg.mxu0
    %355 = vmatpush.msra.mxu0 0.0
    %356 = vmatpush.msra.mxu0 0.0
    %357 = vmatpush.msra.mxu0 0.0
    %358 = vmatpush.msra.mxu0 0.0
    %359 = vmatpush.msra.mxu0 0.0
    %360 = vmatpush.msra.mxu0 0.0
    %361 = vmatpush.msra.mxu0 0.0
    %362 = vmatpush.msra.mxu0 0.0
    %363 = vmatpush.msra.mxu0 0.0
    %364 = vmatpush.msra.mxu0 0.0
    %365 = vmatpush.msra.mxu0 0.0
    %366 = vmatpush.msra.mxu0 0.0
    %367 = vmatpush.msra.mxu0 0.0
    %v368 = vand.u32 %v140, 4294901760
    %369 = vmatpush.msra.mxu0 %v368
    %v370 = vand.u32 %v101, 4294901760
    %371 = vmatpush.msra.mxu0 %v370
    %v372 = vand.u32 %v62, 4294901760
    %373 = vmatpush.msra.mxu0 %v372
    %v374 = vand.u32 %v181, 4294901760
    %v375 = vsub.f32 %v181, %v374
    %v376 = vand.u32 %v375, 4294901760
    %v377 = vsub.f32 %v375, %v376
    %v378 = vand.u32 %v377, 4294901760
    %379 = vmatmul.f32.gmra.mxu0 %v378
    %v380 = vpop.f32.mrf.mxu0
    %v381 = vadd.f32 0.0, %v380
    %382 = vdwg.mxu0
    %383 = vmatpush.msra.mxu0 0.0
    %384 = vmatpush.msra.mxu0 0.0
    %385 = vmatpush.msra.mxu0 0.0
    %386 = vmatpush.msra.mxu0 0.0
    %387 = vmatpush.msra.mxu0 0.0
    %388 = vmatpush.msra.mxu0 0.0
    %389 = vmatpush.msra.mxu0 0.0
    %390 = vmatpush.msra.mxu0 0.0
    %391 = vmatpush.msra.mxu0 0.0
    %392 = vmatpush.msra.mxu0 0.0
    %393 = vmatpush.msra.mxu0 0.0
    %394 = vmatpush.msra.mxu0 0.0
    %395 = vmatpush.msra.mxu0 0.0
    %v396 = vand.u32 %v140, 4294901760
    %v397 = vsub.f32 %v140, %v396
    %v398 = vand.u32 %v397, 4294901760
    %v399 = vsub.f32 %v397, %v398
    %v400 = vand.u32 %v399, 4294901760
    %401 = vmatpush.msra.mxu0 %v400
    %v402 = vand.u32 %v101, 4294901760
    %v403 = vsub.f32 %v101, %v402
    %v404 = vand.u32 %v403, 4294901760
    %v405 = vsub.f32 %v403, %v404
    %v406 = vand.u32 %v405, 4294901760
    %407 = vmatpush.msra.mxu0 %v406
    %v408 = vand.u32 %v62, 4294901760
    %v409 = vsub.f32 %v62, %v408
    %v410 = vand.u32 %v409, 4294901760
    %v411 = vsub.f32 %v409, %v410
    %v412 = vand.u32 %v411, 4294901760
    %413 = vmatpush.msra.mxu0 %v412
    %v414 = vand.u32 %v181, 4294901760
    %415 = vmatmul.f32.gmra.mxu0 %v414
    %v416 = vpop.f32.mrf.mxu0
    %v417 = vadd.f32 %v381, %v416
    %418 = vdwg.mxu0
    %419 = vmatpush.msra.mxu0 0.0
    %420 = vmatpush.msra.mxu0 0.0
    %421 = vmatpush.msra.mxu0 0.0
    %422 = vmatpush.msra.mxu0 0.0
    %423 = vmatpush.msra.mxu0 0.0
    %424 = vmatpush.msra.mxu0 0.0
    %425 = vmatpush.msra.mxu0 0.0
    %426 = vmatpush.msra.mxu0 0.0
    %427 = vmatpush.msra.mxu0 0.0
    %428 = vmatpush.msra.mxu0 0.0
    %429 = vmatpush.msra.mxu0 0.0
    %430 = vmatpush.msra.mxu0 0.0
    %431 = vmatpush.msra.mxu0 0.0
    %v432 = vand.u32 %v140, 4294901760
    %v433 = vsub.f32 %v140, %v432
    %434 = vmatpush.msra.mxu0 %v433
    %v435 = vand.u32 %v101, 4294901760
    %v436 = vsub.f32 %v101, %v435
    %437 = vmatpush.msra.mxu0 %v436
    %v438 = vand.u32 %v62, 4294901760
    %v439 = vsub.f32 %v62, %v438
    %440 = vmatpush.msra.mxu0 %v439
    %v441 = vand.u32 %v181, 4294901760
    %v442 = vsub.f32 %v181, %v441
    %443 = vmatmul.f32.gmra.mxu0 %v442
    %v444 = vpop.f32.mrf.mxu0
    %v445 = vadd.f32 %v417, %v444
    %446 = vdwg.mxu0
    %447 = vmatpush.msra.mxu0 0.0
    %448 = vmatpush.msra.mxu0 0.0
    %449 = vmatpush.msra.mxu0 0.0
    %450 = vmatpush.msra.mxu0 0.0
    %451 = vmatpush.msra.mxu0 0.0
    %452 = vmatpush.msra.mxu0 0.0
    %453 = vmatpush.msra.mxu0 0.0
    %454 = vmatpush.msra.mxu0 0.0
    %455 = vmatpush.msra.mxu0 0.0
    %456 = vmatpush.msra.mxu0 0.0
    %457 = vmatpush.msra.mxu0 0.0
    %458 = vmatpush.msra.mxu0 0.0
    %459 = vmatpush.msra.mxu0 0.0
    %v460 = vand.u32 %v140, 4294901760
    %461 = vmatpush.msra.mxu0 %v460
    %v462 = vand.u32 %v101, 4294901760
    %463 = vmatpush.msra.mxu0 %v462
    %v464 = vand.u32 %v62, 4294901760
    %465 = vmatpush.msra.mxu0 %v464
    %v466 = vand.u32 %v181, 4294901760
    %v467 = vsub.f32 %v181, %v466
    %v468 = vand.u32 %v467, 4294901760
    %469 = vmatmul.f32.gmra.mxu0 %v468
    %v470 = vpop.f32.mrf.mxu0
    %v471 = vadd.f32 %v445, %v470
    %472 = vdwg.mxu0
    %473 = vmatpush.msra.mxu0 0.0
    %474 = vmatpush.msra.mxu0 0.0
    %475 = vmatpush.msra.mxu0 0.0
    %476 = vmatpush.msra.mxu0 0.0
    %477 = vmatpush.msra.mxu0 0.0
    %478 = vmatpush.msra.mxu0 0.0
    %479 = vmatpush.msra.mxu0 0.0
    %480 = vmatpush.msra.mxu0 0.0
    %481 = vmatpush.msra.mxu0 0.0
    %482 = vmatpush.msra.mxu0 0.0
    %483 = vmatpush.msra.mxu0 0.0
    %484 = vmatpush.msra.mxu0 0.0
    %485 = vmatpush.msra.mxu0 0.0
    %v486 = vand.u32 %v140, 4294901760
    %v487 = vsub.f32 %v140, %v486
    %v488 = vand.u32 %v487, 4294901760
    %489 = vmatpush.msra.mxu0 %v488
    %v490 = vand.u32 %v101, 4294901760
    %v491 = vsub.f32 %v101, %v490
    %v492 = vand.u32 %v491, 4294901760
    %493 = vmatpush.msra.mxu0 %v492
    %v494 = vand.u32 %v62, 4294901760
    %v495 = vsub.f32 %v62, %v494
    %v496 = vand.u32 %v495, 4294901760
    %497 = vmatpush.msra.mxu0 %v496
    %v498 = vand.u32 %v181, 4294901760
    %499 = vmatmul.f32.gmra.mxu0 %v498
    %v500 = vpop.f32.mrf.mxu0
    %v501 = vadd.f32 %v471, %v500
    %502 = vdwg.mxu0
    %503 = vmatpush.msra.mxu0 0.0
    %504 = vmatpush.msra.mxu0 0.0
    %505 = vmatpush.msra.mxu0 0.0
    %506 = vmatpush.msra.mxu0 0.0
    %507 = vmatpush.msra.mxu0 0.0
    %508 = vmatpush.msra.mxu0 0.0
    %509 = vmatpush.msra.mxu0 0.0
    %510 = vmatpush.msra.mxu0 0.0
    %511 = vmatpush.msra.mxu0 0.0
    %512 = vmatpush.msra.mxu0 0.0
    %513 = vmatpush.msra.mxu0 0.0
    %514 = vmatpush.msra.mxu0 0.0
    %515 = vmatpush.msra.mxu0 0.0
    %v516 = vand.u32 %v140, 4294901760
    %517 = vmatpush.msra.mxu0 %v516
    %v518 = vand.u32 %v101, 4294901760
    %519 = vmatpush.msra.mxu0 %v518
    %v520 = vand.u32 %v62, 4294901760
    %521 = vmatpush.msra.mxu0 %v520
    %v522 = vand.u32 %v181, 4294901760
    %523 = vmatmul.f32.gmra.mxu0 %v522
    %v524 = vpop.f32.mrf.mxu0
    %v525 = vadd.f32 %v501, %v524
    %526 = vdwg.mxu0
    %527 = vmatpush.msra.mxu0 0.0
    %528 = vmatpush.msra.mxu0 0.0
    %529 = vmatpush.msra.mxu0 0.0
    %530 = vmatpush.msra.mxu0 0.0
    %531 = vmatpush.msra.mxu0 0.0
    %532 = vmatpush.msra.mxu0 0.0
    %533 = vmatpush.msra.mxu0 0.0
    %534 = vmatpush.msra.mxu0 0.0
    %535 = vmatpush.msra.mxu0 0.0
    %536 = vmatpush.msra.mxu0 0.0
    %537 = vmatpush.msra.mxu0 0.0
    %538 = vmatpush.msra.mxu0 0.0
    %539 = vmatpush.msra.mxu0 0.0
    %v540 = vand.u32 %v141, 4294901760
    %541 = vmatpush.msra.mxu0 %v540
    %v542 = vand.u32 %v102, 4294901760
    %543 = vmatpush.msra.mxu0 %v542
    %v544 = vand.u32 %v63, 4294901760
    %545 = vmatpush.msra.mxu0 %v544
    %v546 = vand.u32 %v181, 4294901760
    %v547 = vsub.f32 %v181, %v546
    %v548 = vand.u32 %v547, 4294901760
    %v549 = vsub.f32 %v547, %v548
    %v550 = vand.u32 %v549, 4294901760
    %551 = vmatmul.f32.gmra.mxu0 %v550
    %v552 = vpop.f32.mrf.mxu0
    %v553 = vadd.f32 0.0, %v552
    %554 = vdwg.mxu0
    %555 = vmatpush.msra.mxu0 0.0
    %556 = vmatpush.msra.mxu0 0.0
    %557 = vmatpush.msra.mxu0 0.0
    %558 = vmatpush.msra.mxu0 0.0
    %559 = vmatpush.msra.mxu0 0.0
    %560 = vmatpush.msra.mxu0 0.0
    %561 = vmatpush.msra.mxu0 0.0
    %562 = vmatpush.msra.mxu0 0.0
    %563 = vmatpush.msra.mxu0 0.0
    %564 = vmatpush.msra.mxu0 0.0
    %565 = vmatpush.msra.mxu0 0.0
    %566 = vmatpush.msra.mxu0 0.0
    %567 = vmatpush.msra.mxu0 0.0
    %v568 = vand.u32 %v141, 4294901760
    %v569 = vsub.f32 %v141, %v568
    %v570 = vand.u32 %v569, 4294901760
    %v571 = vsub.f32 %v569, %v570
    %v572 = vand.u32 %v571, 4294901760
    %573 = vmatpush.msra.mxu0 %v572
    %v574 = vand.u32 %v102, 4294901760
    %v575 = vsub.f32 %v102, %v574
    %v576 = vand.u32 %v575, 4294901760
    %v577 = vsub.f32 %v575, %v576
    %v578 = vand.u32 %v577, 4294901760
    %579 = vmatpush.msra.mxu0 %v578
    %v580 = vand.u32 %v63, 4294901760
    %v581 = vsub.f32 %v63, %v580
    %v582 = vand.u32 %v581, 4294901760
    %v583 = vsub.f32 %v581, %v582
    %v584 = vand.u32 %v583, 4294901760
    %585 = vmatpush.msra.mxu0 %v584
    %v586 = vand.u32 %v181, 4294901760
    %587 = vmatmul.f32.gmra.mxu0 %v586
    %v588 = vpop.f32.mrf.mxu0
    %v589 = vadd.f32 %v553, %v588
    %590 = vdwg.mxu0
    %591 = vmatpush.msra.mxu0 0.0
    %592 = vmatpush.msra.mxu0 0.0
    %593 = vmatpush.msra.mxu0 0.0
    %594 = vmatpush.msra.mxu0 0.0
    %595 = vmatpush.msra.mxu0 0.0
    %596 = vmatpush.msra.mxu0 0.0
    %597 = vmatpush.msra.mxu0 0.0
    %598 = vmatpush.msra.mxu0 0.0
    %599 = vmatpush.msra.mxu0 0.0
    %600 = vmatpush.msra.mxu0 0.0
    %601 = vmatpush.msra.mxu0 0.0
    %602 = vmatpush.msra.mxu0 0.0
    %603 = vmatpush.msra.mxu0 0.0
    %v604 = vand.u32 %v141, 4294901760
    %v605 = vsub.f32 %v141, %v604
    %606 = vmatpush.msra.mxu0 %v605
    %v607 = vand.u32 %v102, 4294901760
    %v608 = vsub.f32 %v102, %v607
    %609 = vmatpush.msra.mxu0 %v608
    %v610 = vand.u32 %v63, 4294901760
    %v611 = vsub.f32 %v63, %v610
    %612 = vmatpush.msra.mxu0 %v611
    %v613 = vand.u32 %v181, 4294901760
    %v614 = vsub.f32 %v181, %v613
    %615 = vmatmul.f32.gmra.mxu0 %v614
    %v616 = vpop.f32.mrf.mxu0
    %v617 = vadd.f32 %v589, %v616
    %618 = vdwg.mxu0
    %619 = vmatpush.msra.mxu0 0.0
    %620 = vmatpush.msra.mxu0 0.0
    %621 = vmatpush.msra.mxu0 0.0
    %622 = vmatpush.msra.mxu0 0.0
    %623 = vmatpush.msra.mxu0 0.0
    %624 = vmatpush.msra.mxu0 0.0
    %625 = vmatpush.msra.mxu0 0.0
    %626 = vmatpush.msra.mxu0 0.0
    %627 = vmatpush.msra.mxu0 0.0
    %628 = vmatpush.msra.mxu0 0.0
    %629 = vmatpush.msra.mxu0 0.0
    %630 = vmatpush.msra.mxu0 0.0
    %631 = vmatpush.msra.mxu0 0.0
    %v632 = vand.u32 %v141, 4294901760
    %633 = vmatpush.msra.mxu0 %v632
    %v634 = vand.u32 %v102, 4294901760
    %635 = vmatpush.msra.mxu0 %v634
    %v636 = vand.u32 %v63, 4294901760
    %637 = vmatpush.msra.mxu0 %v636
    %v638 = vand.u32 %v181, 4294901760
    %v639 = vsub.f32 %v181, %v638
    %v640 = vand.u32 %v639, 4294901760
    %641 = vmatmul.f32.gmra.mxu0 %v640
    %v642 = vpop.f32.mrf.mxu0
    %v643 = vadd.f32 %v617, %v642
    %644 = vdwg.mxu0
    %645 = vmatpush.msra.mxu0 0.0
    %646 = vmatpush.msra.mxu0 0.0
    %647 = vmatpush.msra.mxu0 0.0
    %648 = vmatpush.msra.mxu0 0.0
    %649 = vmatpush.msra.mxu0 0.0
    %650 = vmatpush.msra.mxu0 0.0
    %651 = vmatpush.msra.mxu0 0.0
    %652 = vmatpush.msra.mxu0 0.0
    %653 = vmatpush.msra.mxu0 0.0
    %654 = vmatpush.msra.mxu0 0.0
    %655 = vmatpush.msra.mxu0 0.0
    %656 = vmatpush.msra.mxu0 0.0
    %657 = vmatpush.msra.mxu0 0.0
    %v658 = vand.u32 %v141, 4294901760
    %v659 = vsub.f32 %v141, %v658
    %v660 = vand.u32 %v659, 4294901760
    %661 = vmatpush.msra.mxu0 %v660
    %v662 = vand.u32 %v102, 4294901760
    %v663 = vsub.f32 %v102, %v662
    %v664 = vand.u32 %v663, 4294901760
    %665 = vmatpush.msra.mxu0 %v664
    %v666 = vand.u32 %v63, 4294901760
    %v667 = vsub.f32 %v63, %v666
    %v668 = vand.u32 %v667, 4294901760
    %669 = vmatpush.msra.mxu0 %v668
    %v670 = vand.u32 %v181, 4294901760
    %671 = vmatmul.f32.gmra.mxu0 %v670
    %v672 = vpop.f32.mrf.mxu0
    %v673 = vadd.f32 %v643, %v672
    %674 = vdwg.mxu0
    %675 = vmatpush.msra.mxu0 0.0
    %676 = vmatpush.msra.mxu0 0.0
    %677 = vmatpush.msra.mxu0 0.0
    %678 = vmatpush.msra.mxu0 0.0
    %679 = vmatpush.msra.mxu0 0.0
    %680 = vmatpush.msra.mxu0 0.0
    %681 = vmatpush.msra.mxu0 0.0
    %682 = vmatpush.msra.mxu0 0.0
    %683 = vmatpush.msra.mxu0 0.0
    %684 = vmatpush.msra.mxu0 0.0
    %685 = vmatpush.msra.mxu0 0.0
    %686 = vmatpush.msra.mxu0 0.0
    %687 = vmatpush.msra.mxu0 0.0
    %v688 = vand.u32 %v141, 4294901760
    %689 = vmatpush.msra.mxu0 %v688
    %v690 = vand.u32 %v102, 4294901760
    %691 = vmatpush.msra.mxu0 %v690
    %v692 = vand.u32 %v63, 4294901760
    %693 = vmatpush.msra.mxu0 %v692
    %v694 = vand.u32 %v181, 4294901760
    %695 = vmatmul.f32.gmra.mxu0 %v694
    %v696 = vpop.f32.mrf.mxu0
    %v697 = vadd.f32 %v673, %v696
    %698 = vdwg.mxu0
    %699 = vmatpush.msra.mxu0 0.0
    %700 = vmatpush.msra.mxu0 0.0
    %701 = vmatpush.msra.mxu0 0.0
    %702 = vmatpush.msra.mxu0 0.0
    %703 = vmatpush.msra.mxu0 0.0
    %704 = vmatpush.msra.mxu0 0.0
    %705 = vmatpush.msra.mxu0 0.0
    %706 = vmatpush.msra.mxu0 0.0
    %707 = vmatpush.msra.mxu0 0.0
    %708 = vmatpush.msra.mxu0 0.0
    %709 = vmatpush.msra.mxu0 0.0
    %710 = vmatpush.msra.mxu0 0.0
    %711 = vmatpush.msra.mxu0 0.0
    %v712 = vand.u32 %v142, 4294901760
    %713 = vmatpush.msra.mxu0 %v712
    %v714 = vand.u32 %v103, 4294901760
    %715 = vmatpush.msra.mxu0 %v714
    %v716 = vand.u32 %v64, 4294901760
    %717 = vmatpush.msra.mxu0 %v716
    %v718 = vand.u32 %v181, 4294901760
    %v719 = vsub.f32 %v181, %v718
    %v720 = vand.u32 %v719, 4294901760
    %v721 = vsub.f32 %v719, %v720
    %v722 = vand.u32 %v721, 4294901760
    %723 = vmatmul.f32.gmra.mxu0 %v722
    %v724 = vpop.f32.mrf.mxu0
    %v725 = vadd.f32 0.0, %v724
    %726 = vdwg.mxu0
    %727 = vmatpush.msra.mxu0 0.0
    %728 = vmatpush.msra.mxu0 0.0
    %729 = vmatpush.msra.mxu0 0.0
    %730 = vmatpush.msra.mxu0 0.0
    %731 = vmatpush.msra.mxu0 0.0
    %732 = vmatpush.msra.mxu0 0.0
    %733 = vmatpush.msra.mxu0 0.0
    %734 = vmatpush.msra.mxu0 0.0
    %735 = vmatpush.msra.mxu0 0.0
    %736 = vmatpush.msra.mxu0 0.0
    %737 = vmatpush.msra.mxu0 0.0
    %738 = vmatpush.msra.mxu0 0.0
    %739 = vmatpush.msra.mxu0 0.0
    %v740 = vand.u32 %v142, 4294901760
    %v741 = vsub.f32 %v142, %v740
    %v742 = vand.u32 %v741, 4294901760
    %v743 = vsub.f32 %v741, %v742
    %v744 = vand.u32 %v743, 4294901760
    %745 = vmatpush.msra.mxu0 %v744
    %v746 = vand.u32 %v103, 4294901760
    %v747 = vsub.f32 %v103, %v746
    %v748 = vand.u32 %v747, 4294901760
    %v749 = vsub.f32 %v747, %v748
    %v750 = vand.u32 %v749, 4294901760
    %751 = vmatpush.msra.mxu0 %v750
    %v752 = vand.u32 %v64, 4294901760
    %v753 = vsub.f32 %v64, %v752
    %v754 = vand.u32 %v753, 4294901760
    %v755 = vsub.f32 %v753, %v754
    %v756 = vand.u32 %v755, 4294901760
    %757 = vmatpush.msra.mxu0 %v756
    %v758 = vand.u32 %v181, 4294901760
    %759 = vmatmul.f32.gmra.mxu0 %v758
    %v760 = vpop.f32.mrf.mxu0
    %v761 = vadd.f32 %v725, %v760
    %762 = vdwg.mxu0
    %763 = vmatpush.msra.mxu0 0.0
    %764 = vmatpush.msra.mxu0 0.0
    %765 = vmatpush.msra.mxu0 0.0
    %766 = vmatpush.msra.mxu0 0.0
    %767 = vmatpush.msra.mxu0 0.0
    %768 = vmatpush.msra.mxu0 0.0
    %769 = vmatpush.msra.mxu0 0.0
    %770 = vmatpush.msra.mxu0 0.0
    %771 = vmatpush.msra.mxu0 0.0
    %772 = vmatpush.msra.mxu0 0.0
    %773 = vmatpush.msra.mxu0 0.0
    %774 = vmatpush.msra.mxu0 0.0
    %775 = vmatpush.msra.mxu0 0.0
    %v776 = vand.u32 %v142, 4294901760
    %v777 = vsub.f32 %v142, %v776
    %778 = vmatpush.msra.mxu0 %v777
    %v779 = vand.u32 %v103, 4294901760
    %v780 = vsub.f32 %v103, %v779
    %781 = vmatpush.msra.mxu0 %v780
    %v782 = vand.u32 %v64, 4294901760
    %v783 = vsub.f32 %v64, %v782
    %784 = vmatpush.msra.mxu0 %v783
    %v785 = vand.u32 %v181, 4294901760
    %v786 = vsub.f32 %v181, %v785
    %787 = vmatmul.f32.gmra.mxu0 %v786
    %v788 = vpop.f32.mrf.mxu0
    %v789 = vadd.f32 %v761, %v788
    %790 = vdwg.mxu0
    %791 = vmatpush.msra.mxu0 0.0
    %792 = vmatpush.msra.mxu0 0.0
    %793 = vmatpush.msra.mxu0 0.0
    %794 = vmatpush.msra.mxu0 0.0
    %795 = vmatpush.msra.mxu0 0.0
    %796 = vmatpush.msra.mxu0 0.0
    %797 = vmatpush.msra.mxu0 0.0
    %798 = vmatpush.msra.mxu0 0.0
    %799 = vmatpush.msra.mxu0 0.0
    %800 = vmatpush.msra.mxu0 0.0
    %801 = vmatpush.msra.mxu0 0.0
    %802 = vmatpush.msra.mxu0 0.0
    %803 = vmatpush.msra.mxu0 0.0
    %v804 = vand.u32 %v142, 4294901760
    %805 = vmatpush.msra.mxu0 %v804
    %v806 = vand.u32 %v103, 4294901760
    %807 = vmatpush.msra.mxu0 %v806
    %v808 = vand.u32 %v64, 4294901760
    %809 = vmatpush.msra.mxu0 %v808
    %v810 = vand.u32 %v181, 4294901760
    %v811 = vsub.f32 %v181, %v810
    %v812 = vand.u32 %v811, 4294901760
    %813 = vmatmul.f32.gmra.mxu0 %v812
    %v814 = vpop.f32.mrf.mxu0
    %v815 = vadd.f32 %v789, %v814
    %816 = vdwg.mxu0
    %817 = vmatpush.msra.mxu0 0.0
    %818 = vmatpush.msra.mxu0 0.0
    %819 = vmatpush.msra.mxu0 0.0
    %820 = vmatpush.msra.mxu0 0.0
    %821 = vmatpush.msra.mxu0 0.0
    %822 = vmatpush.msra.mxu0 0.0
    %823 = vmatpush.msra.mxu0 0.0
    %824 = vmatpush.msra.mxu0 0.0
    %825 = vmatpush.msra.mxu0 0.0
    %826 = vmatpush.msra.mxu0 0.0
    %827 = vmatpush.msra.mxu0 0.0
    %828 = vmatpush.msra.mxu0 0.0
    %829 = vmatpush.msra.mxu0 0.0
    %v830 = vand.u32 %v142, 4294901760
    %v831 = vsub.f32 %v142, %v830
    %v832 = vand.u32 %v831, 4294901760
    %833 = vmatpush.msra.mxu0 %v832
    %v834 = vand.u32 %v103, 4294901760
    %v835 = vsub.f32 %v103, %v834
    %v836 = vand.u32 %v835, 4294901760
    %837 = vmatpush.msra.mxu0 %v836
    %v838 = vand.u32 %v64, 4294901760
    %v839 = vsub.f32 %v64, %v838
    %v840 = vand.u32 %v839, 4294901760
    %841 = vmatpush.msra.mxu0 %v840
    %v842 = vand.u32 %v181, 4294901760
    %843 = vmatmul.f32.gmra.mxu0 %v842
    %v844 = vpop.f32.mrf.mxu0
    %v845 = vadd.f32 %v815, %v844
    %846 = vdwg.mxu0
    %847 = vmatpush.msra.mxu0 0.0
    %848 = vmatpush.msra.mxu0 0.0
    %849 = vmatpush.msra.mxu0 0.0
    %850 = vmatpush.msra.mxu0 0.0
    %851 = vmatpush.msra.mxu0 0.0
    %852 = vmatpush.msra.mxu0 0.0
    %853 = vmatpush.msra.mxu0 0.0
    %854 = vmatpush.msra.mxu0 0.0
    %855 = vmatpush.msra.mxu0 0.0
    %856 = vmatpush.msra.mxu0 0.0
    %857 = vmatpush.msra.mxu0 0.0
    %858 = vmatpush.msra.mxu0 0.0
    %859 = vmatpush.msra.mxu0 0.0
    %v860 = vand.u32 %v142, 4294901760
    %861 = vmatpush.msra.mxu0 %v860
    %v862 = vand.u32 %v103, 4294901760
    %863 = vmatpush.msra.mxu0 %v862
    %v864 = vand.u32 %v64, 4294901760
    %865 = vmatpush.msra.mxu0 %v864
    %v866 = vand.u32 %v181, 4294901760
    %867 = vmatmul.f32.gmra.mxu0 %v866
    %v868 = vpop.f32.mrf.mxu0
    %v869 = vadd.f32 %v845, %v868
    %870 = vdwg.mxu0
    %871 = vmatpush.msra.mxu0 0.0
    %872 = vmatpush.msra.mxu0 0.0
    %873 = vmatpush.msra.mxu0 0.0
    %874 = vmatpush.msra.mxu0 0.0
    %875 = vmatpush.msra.mxu0 0.0
    %876 = vmatpush.msra.mxu0 0.0
    %877 = vmatpush.msra.mxu0 0.0
    %878 = vmatpush.msra.mxu0 0.0
    %879 = vmatpush.msra.mxu0 0.0
    %880 = vmatpush.msra.mxu0 0.0
    %881 = vmatpush.msra.mxu0 0.0
    %882 = vmatpush.msra.mxu0 0.0
    %883 = vmatpush.msra.mxu0 0.0
    %v884 = vand.u32 %v143, 4294901760
    %885 = vmatpush.msra.mxu0 %v884
    %v886 = vand.u32 %v104, 4294901760
    %887 = vmatpush.msra.mxu0 %v886
    %v888 = vand.u32 %v65, 4294901760
    %889 = vmatpush.msra.mxu0 %v888
    %v890 = vand.u32 %v181, 4294901760
    %v891 = vsub.f32 %v181, %v890
    %v892 = vand.u32 %v891, 4294901760
    %v893 = vsub.f32 %v891, %v892
    %v894 = vand.u32 %v893, 4294901760
    %895 = vmatmul.f32.gmra.mxu0 %v894
    %v896 = vpop.f32.mrf.mxu0
    %v897 = vadd.f32 0.0, %v896
    %898 = vdwg.mxu0
    %899 = vmatpush.msra.mxu0 0.0
    %900 = vmatpush.msra.mxu0 0.0
    %901 = vmatpush.msra.mxu0 0.0
    %902 = vmatpush.msra.mxu0 0.0
    %903 = vmatpush.msra.mxu0 0.0
    %904 = vmatpush.msra.mxu0 0.0
    %905 = vmatpush.msra.mxu0 0.0
    %906 = vmatpush.msra.mxu0 0.0
    %907 = vmatpush.msra.mxu0 0.0
    %908 = vmatpush.msra.mxu0 0.0
    %909 = vmatpush.msra.mxu0 0.0
    %910 = vmatpush.msra.mxu0 0.0
    %911 = vmatpush.msra.mxu0 0.0
    %v912 = vand.u32 %v143, 4294901760
    %v913 = vsub.f32 %v143, %v912
    %v914 = vand.u32 %v913, 4294901760
    %v915 = vsub.f32 %v913, %v914
    %v916 = vand.u32 %v915, 4294901760
    %917 = vmatpush.msra.mxu0 %v916
    %v918 = vand.u32 %v104, 4294901760
    %v919 = vsub.f32 %v104, %v918
    %v920 = vand.u32 %v919, 4294901760
    %v921 = vsub.f32 %v919, %v920
    %v922 = vand.u32 %v921, 4294901760
    %923 = vmatpush.msra.mxu0 %v922
    %v924 = vand.u32 %v65, 4294901760
    %v925 = vsub.f32 %v65, %v924
    %v926 = vand.u32 %v925, 4294901760
    %v927 = vsub.f32 %v925, %v926
    %v928 = vand.u32 %v927, 4294901760
    %929 = vmatpush.msra.mxu0 %v928
    %v930 = vand.u32 %v181, 4294901760
    %931 = vmatmul.f32.gmra.mxu0 %v930
    %v932 = vpop.f32.mrf.mxu0
    %v933 = vadd.f32 %v897, %v932
    %934 = vdwg.mxu0
    %935 = vmatpush.msra.mxu0 0.0
    %936 = vmatpush.msra.mxu0 0.0
    %937 = vmatpush.msra.mxu0 0.0
    %938 = vmatpush.msra.mxu0 0.0
    %939 = vmatpush.msra.mxu0 0.0
    %940 = vmatpush.msra.mxu0 0.0
    %941 = vmatpush.msra.mxu0 0.0
    %942 = vmatpush.msra.mxu0 0.0
    %943 = vmatpush.msra.mxu0 0.0
    %944 = vmatpush.msra.mxu0 0.0
    %945 = vmatpush.msra.mxu0 0.0
    %946 = vmatpush.msra.mxu0 0.0
    %947 = vmatpush.msra.mxu0 0.0
    %v948 = vand.u32 %v143, 4294901760
    %v949 = vsub.f32 %v143, %v948
    %950 = vmatpush.msra.mxu0 %v949
    %v951 = vand.u32 %v104, 4294901760
    %v952 = vsub.f32 %v104, %v951
    %953 = vmatpush.msra.mxu0 %v952
    %v954 = vand.u32 %v65, 4294901760
    %v955 = vsub.f32 %v65, %v954
    %956 = vmatpush.msra.mxu0 %v955
    %v957 = vand.u32 %v181, 4294901760
    %v958 = vsub.f32 %v181, %v957
    %959 = vmatmul.f32.gmra.mxu0 %v958
    %v960 = vpop.f32.mrf.mxu0
    %v961 = vadd.f32 %v933, %v960
    %962 = vdwg.mxu0
    %963 = vmatpush.msra.mxu0 0.0
    %964 = vmatpush.msra.mxu0 0.0
    %965 = vmatpush.msra.mxu0 0.0
    %966 = vmatpush.msra.mxu0 0.0
    %967 = vmatpush.msra.mxu0 0.0
    %968 = vmatpush.msra.mxu0 0.0
    %969 = vmatpush.msra.mxu0 0.0
    %970 = vmatpush.msra.mxu0 0.0
    %971 = vmatpush.msra.mxu0 0.0
    %972 = vmatpush.msra.mxu0 0.0
    %973 = vmatpush.msra.mxu0 0.0
    %974 = vmatpush.msra.mxu0 0.0
    %975 = vmatpush.msra.mxu0 0.0
    %v976 = vand.u32 %v143, 4294901760
    %977 = vmatpush.msra.mxu0 %v976
    %v978 = vand.u32 %v104, 4294901760
    %979 = vmatpush.msra.mxu0 %v978
    %v980 = vand.u32 %v65, 4294901760
    %981 = vmatpush.msra.mxu0 %v980
    %v982 = vand.u32 %v181, 4294901760
    %v983 = vsub.f32 %v181, %v982
    %v984 = vand.u32 %v983, 4294901760
    %985 = vmatmul.f32.gmra.mxu0 %v984
    %v986 = vpop.f32.mrf.mxu0
    %v987 = vadd.f32 %v961, %v986
    %988 = vdwg.mxu0
    %989 = vmatpush.msra.mxu0 0.0
    %990 = vmatpush.msra.mxu0 0.0
    %991 = vmatpush.msra.mxu0 0.0
    %992 = vmatpush.msra.mxu0 0.0
    %993 = vmatpush.msra.mxu0 0.0
    %994 = vmatpush.msra.mxu0 0.0
    %995 = vmatpush.msra.mxu0 0.0
    %996 = vmatpush.msra.mxu0 0.0
    %997 = vmatpush.msra.mxu0 0.0
    %998 = vmatpush.msra.mxu0 0.0
    %999 = vmatpush.msra.mxu0 0.0
    %1000 = vmatpush.msra.mxu0 0.0
    %1001 = vmatpush.msra.mxu0 0.0
    %v1002 = vand.u32 %v143, 4294901760
    %v1003 = vsub.f32 %v143, %v1002
    %v1004 = vand.u32 %v1003, 4294901760
    %1005 = vmatpush.msra.mxu0 %v1004
    %v1006 = vand.u32 %v104, 4294901760
    %v1007 = vsub.f32 %v104, %v1006
    %v1008 = vand.u32 %v1007, 4294901760
    %1009 = vmatpush.msra.mxu0 %v1008
    %v1010 = vand.u32 %v65, 4294901760
    %v1011 = vsub.f32 %v65, %v1010
    %v1012 = vand.u32 %v1011, 4294901760
    %1013 = vmatpush.msra.mxu0 %v1012
    %v1014 = vand.u32 %v181, 4294901760
    %1015 = vmatmul.f32.gmra.mxu0 %v1014
    %v1016 = vpop.f32.mrf.mxu0
    %v1017 = vadd.f32 %v987, %v1016
    %1018 = vdwg.mxu0
    %1019 = vmatpush.msra.mxu0 0.0
    %1020 = vmatpush.msra.mxu0 0.0
    %1021 = vmatpush.msra.mxu0 0.0
    %1022 = vmatpush.msra.mxu0 0.0
    %1023 = vmatpush.msra.mxu0 0.0
    %1024 = vmatpush.msra.mxu0 0.0
    %1025 = vmatpush.msra.mxu0 0.0
    %1026 = vmatpush.msra.mxu0 0.0
    %1027 = vmatpush.msra.mxu0 0.0
    %1028 = vmatpush.msra.mxu0 0.0
    %1029 = vmatpush.msra.mxu0 0.0
    %1030 = vmatpush.msra.mxu0 0.0
    %1031 = vmatpush.msra.mxu0 0.0
    %v1032 = vand.u32 %v143, 4294901760
    %1033 = vmatpush.msra.mxu0 %v1032
    %v1034 = vand.u32 %v104, 4294901760
    %1035 = vmatpush.msra.mxu0 %v1034
    %v1036 = vand.u32 %v65, 4294901760
    %1037 = vmatpush.msra.mxu0 %v1036
    %v1038 = vand.u32 %v181, 4294901760
    %1039 = vmatmul.f32.gmra.mxu0 %v1038
    %v1040 = vpop.f32.mrf.mxu0
    %v1041 = vadd.f32 %v1017, %v1040
    %1042 = vdwg.mxu0
    %1043 = vmatpush.msra.mxu0 0.0
    %1044 = vmatpush.msra.mxu0 0.0
    %1045 = vmatpush.msra.mxu0 0.0
    %1046 = vmatpush.msra.mxu0 0.0
    %1047 = vmatpush.msra.mxu0 0.0
    %1048 = vmatpush.msra.mxu0 0.0
    %1049 = vmatpush.msra.mxu0 0.0
    %1050 = vmatpush.msra.mxu0 0.0
    %1051 = vmatpush.msra.mxu0 0.0
    %1052 = vmatpush.msra.mxu0 0.0
    %1053 = vmatpush.msra.mxu0 0.0
    %1054 = vmatpush.msra.mxu0 0.0
    %1055 = vmatpush.msra.mxu0 0.0
    %v1056 = vand.u32 %v144, 4294901760
    %1057 = vmatpush.msra.mxu0 %v1056
    %v1058 = vand.u32 %v105, 4294901760
    %1059 = vmatpush.msra.mxu0 %v1058
    %v1060 = vand.u32 %v66, 4294901760
    %1061 = vmatpush.msra.mxu0 %v1060
    %v1062 = vand.u32 %v181, 4294901760
    %v1063 = vsub.f32 %v181, %v1062
    %v1064 = vand.u32 %v1063, 4294901760
    %v1065 = vsub.f32 %v1063, %v1064
    %v1066 = vand.u32 %v1065, 4294901760
    %1067 = vmatmul.f32.gmra.mxu0 %v1066
    %v1068 = vpop.f32.mrf.mxu0
    %v1069 = vadd.f32 0.0, %v1068
    %1070 = vdwg.mxu0
    %1071 = vmatpush.msra.mxu0 0.0
    %1072 = vmatpush.msra.mxu0 0.0
    %1073 = vmatpush.msra.mxu0 0.0
    %1074 = vmatpush.msra.mxu0 0.0
    %1075 = vmatpush.msra.mxu0 0.0
    %1076 = vmatpush.msra.mxu0 0.0
    %1077 = vmatpush.msra.mxu0 0.0
    %1078 = vmatpush.msra.mxu0 0.0
    %1079 = vmatpush.msra.mxu0 0.0
    %1080 = vmatpush.msra.mxu0 0.0
    %1081 = vmatpush.msra.mxu0 0.0
    %1082 = vmatpush.msra.mxu0 0.0
    %1083 = vmatpush.msra.mxu0 0.0
    %v1084 = vand.u32 %v144, 4294901760
    %v1085 = vsub.f32 %v144, %v1084
    %v1086 = vand.u32 %v1085, 4294901760
    %v1087 = vsub.f32 %v1085, %v1086
    %v1088 = vand.u32 %v1087, 4294901760
    %1089 = vmatpush.msra.mxu0 %v1088
    %v1090 = vand.u32 %v105, 4294901760
    %v1091 = vsub.f32 %v105, %v1090
    %v1092 = vand.u32 %v1091, 4294901760
    %v1093 = vsub.f32 %v1091, %v1092
    %v1094 = vand.u32 %v1093, 4294901760
    %1095 = vmatpush.msra.mxu0 %v1094
    %v1096 = vand.u32 %v66, 4294901760
    %v1097 = vsub.f32 %v66, %v1096
    %v1098 = vand.u32 %v1097, 4294901760
    %v1099 = vsub.f32 %v1097, %v1098
    %v1100 = vand.u32 %v1099, 4294901760
    %1101 = vmatpush.msra.mxu0 %v1100
    %v1102 = vand.u32 %v181, 4294901760
    %1103 = vmatmul.f32.gmra.mxu0 %v1102
    %v1104 = vpop.f32.mrf.mxu0
    %v1105 = vadd.f32 %v1069, %v1104
    %1106 = vdwg.mxu0
    %1107 = vmatpush.msra.mxu0 0.0
    %1108 = vmatpush.msra.mxu0 0.0
    %1109 = vmatpush.msra.mxu0 0.0
    %1110 = vmatpush.msra.mxu0 0.0
    %1111 = vmatpush.msra.mxu0 0.0
    %1112 = vmatpush.msra.mxu0 0.0
    %1113 = vmatpush.msra.mxu0 0.0
    %1114 = vmatpush.msra.mxu0 0.0
    %1115 = vmatpush.msra.mxu0 0.0
    %1116 = vmatpush.msra.mxu0 0.0
    %1117 = vmatpush.msra.mxu0 0.0
    %1118 = vmatpush.msra.mxu0 0.0
    %1119 = vmatpush.msra.mxu0 0.0
    %v1120 = vand.u32 %v144, 4294901760
    %v1121 = vsub.f32 %v144, %v1120
    %1122 = vmatpush.msra.mxu0 %v1121
    %v1123 = vand.u32 %v105, 4294901760
    %v1124 = vsub.f32 %v105, %v1123
    %1125 = vmatpush.msra.mxu0 %v1124
    %v1126 = vand.u32 %v66, 4294901760
    %v1127 = vsub.f32 %v66, %v1126
    %1128 = vmatpush.msra.mxu0 %v1127
    %v1129 = vand.u32 %v181, 4294901760
    %v1130 = vsub.f32 %v181, %v1129
    %1131 = vmatmul.f32.gmra.mxu0 %v1130
    %v1132 = vpop.f32.mrf.mxu0
    %v1133 = vadd.f32 %v1105, %v1132
    %1134 = vdwg.mxu0
    %1135 = vmatpush.msra.mxu0 0.0
    %1136 = vmatpush.msra.mxu0 0.0
    %1137 = vmatpush.msra.mxu0 0.0
    %1138 = vmatpush.msra.mxu0 0.0
    %1139 = vmatpush.msra.mxu0 0.0
    %1140 = vmatpush.msra.mxu0 0.0
    %1141 = vmatpush.msra.mxu0 0.0
    %1142 = vmatpush.msra.mxu0 0.0
    %1143 = vmatpush.msra.mxu0 0.0
    %1144 = vmatpush.msra.mxu0 0.0
    %1145 = vmatpush.msra.mxu0 0.0
    %1146 = vmatpush.msra.mxu0 0.0
    %1147 = vmatpush.msra.mxu0 0.0
    %v1148 = vand.u32 %v144, 4294901760
    %1149 = vmatpush.msra.mxu0 %v1148
    %v1150 = vand.u32 %v105, 4294901760
    %1151 = vmatpush.msra.mxu0 %v1150
    %v1152 = vand.u32 %v66, 4294901760
    %1153 = vmatpush.msra.mxu0 %v1152
    %v1154 = vand.u32 %v181, 4294901760
    %v1155 = vsub.f32 %v181, %v1154
    %v1156 = vand.u32 %v1155, 4294901760
    %1157 = vmatmul.f32.gmra.mxu0 %v1156
    %v1158 = vpop.f32.mrf.mxu0
    %v1159 = vadd.f32 %v1133, %v1158
    %1160 = vdwg.mxu0
    %1161 = vmatpush.msra.mxu0 0.0
    %1162 = vmatpush.msra.mxu0 0.0
    %1163 = vmatpush.msra.mxu0 0.0
    %1164 = vmatpush.msra.mxu0 0.0
    %1165 = vmatpush.msra.mxu0 0.0
    %1166 = vmatpush.msra.mxu0 0.0
    %1167 = vmatpush.msra.mxu0 0.0
    %1168 = vmatpush.msra.mxu0 0.0
    %1169 = vmatpush.msra.mxu0 0.0
    %1170 = vmatpush.msra.mxu0 0.0
    %1171 = vmatpush.msra.mxu0 0.0
    %1172 = vmatpush.msra.mxu0 0.0
    %1173 = vmatpush.msra.mxu0 0.0
    %v1174 = vand.u32 %v144, 4294901760
    %v1175 = vsub.f32 %v144, %v1174
    %v1176 = vand.u32 %v1175, 4294901760
    %1177 = vmatpush.msra.mxu0 %v1176
    %v1178 = vand.u32 %v105, 4294901760
    %v1179 = vsub.f32 %v105, %v1178
    %v1180 = vand.u32 %v1179, 4294901760
    %1181 = vmatpush.msra.mxu0 %v1180
    %v1182 = vand.u32 %v66, 4294901760
    %v1183 = vsub.f32 %v66, %v1182
    %v1184 = vand.u32 %v1183, 4294901760
    %1185 = vmatpush.msra.mxu0 %v1184
    %v1186 = vand.u32 %v181, 4294901760
    %1187 = vmatmul.f32.gmra.mxu0 %v1186
    %v1188 = vpop.f32.mrf.mxu0
    %v1189 = vadd.f32 %v1159, %v1188
    %1190 = vdwg.mxu0
    %1191 = vmatpush.msra.mxu0 0.0
    %1192 = vmatpush.msra.mxu0 0.0
    %1193 = vmatpush.msra.mxu0 0.0
    %1194 = vmatpush.msra.mxu0 0.0
    %1195 = vmatpush.msra.mxu0 0.0
    %1196 = vmatpush.msra.mxu0 0.0
    %1197 = vmatpush.msra.mxu0 0.0
    %1198 = vmatpush.msra.mxu0 0.0
    %1199 = vmatpush.msra.mxu0 0.0
    %1200 = vmatpush.msra.mxu0 0.0
    %1201 = vmatpush.msra.mxu0 0.0
    %1202 = vmatpush.msra.mxu0 0.0
    %1203 = vmatpush.msra.mxu0 0.0
    %v1204 = vand.u32 %v144, 4294901760
    %1205 = vmatpush.msra.mxu0 %v1204
    %v1206 = vand.u32 %v105, 4294901760
    %1207 = vmatpush.msra.mxu0 %v1206
    %v1208 = vand.u32 %v66, 4294901760
    %1209 = vmatpush.msra.mxu0 %v1208
    %v1210 = vand.u32 %v181, 4294901760
    %1211 = vmatmul.f32.gmra.mxu0 %v1210
    %v1212 = vpop.f32.mrf.mxu0
    %v1213 = vadd.f32 %v1189, %v1212
    %1214 = vdwg.mxu0
    %1215 = vmatpush.msra.mxu0 0.0
    %1216 = vmatpush.msra.mxu0 0.0
    %1217 = vmatpush.msra.mxu0 0.0
    %1218 = vmatpush.msra.mxu0 0.0
    %1219 = vmatpush.msra.mxu0 0.0
    %1220 = vmatpush.msra.mxu0 0.0
    %1221 = vmatpush.msra.mxu0 0.0
    %1222 = vmatpush.msra.mxu0 0.0
    %1223 = vmatpush.msra.mxu0 0.0
    %1224 = vmatpush.msra.mxu0 0.0
    %1225 = vmatpush.msra.mxu0 0.0
    %1226 = vmatpush.msra.mxu0 0.0
    %1227 = vmatpush.msra.mxu0 0.0
    %v1228 = vand.u32 %v145, 4294901760
    %1229 = vmatpush.msra.mxu0 %v1228
    %v1230 = vand.u32 %v106, 4294901760
    %1231 = vmatpush.msra.mxu0 %v1230
    %v1232 = vand.u32 %v67, 4294901760
    %1233 = vmatpush.msra.mxu0 %v1232
    %v1234 = vand.u32 %v181, 4294901760
    %v1235 = vsub.f32 %v181, %v1234
    %v1236 = vand.u32 %v1235, 4294901760
    %v1237 = vsub.f32 %v1235, %v1236
    %v1238 = vand.u32 %v1237, 4294901760
    %1239 = vmatmul.f32.gmra.mxu0 %v1238
    %v1240 = vpop.f32.mrf.mxu0
    %v1241 = vadd.f32 0.0, %v1240
    %1242 = vdwg.mxu0
    %1243 = vmatpush.msra.mxu0 0.0
    %1244 = vmatpush.msra.mxu0 0.0
    %1245 = vmatpush.msra.mxu0 0.0
    %1246 = vmatpush.msra.mxu0 0.0
    %1247 = vmatpush.msra.mxu0 0.0
    %1248 = vmatpush.msra.mxu0 0.0
    %1249 = vmatpush.msra.mxu0 0.0
    %1250 = vmatpush.msra.mxu0 0.0
    %1251 = vmatpush.msra.mxu0 0.0
    %1252 = vmatpush.msra.mxu0 0.0
    %1253 = vmatpush.msra.mxu0 0.0
    %1254 = vmatpush.msra.mxu0 0.0
    %1255 = vmatpush.msra.mxu0 0.0
    %v1256 = vand.u32 %v145, 4294901760
    %v1257 = vsub.f32 %v145, %v1256
    %v1258 = vand.u32 %v1257, 4294901760
    %v1259 = vsub.f32 %v1257, %v1258
    %v1260 = vand.u32 %v1259, 4294901760
    %1261 = vmatpush.msra.mxu0 %v1260
    %v1262 = vand.u32 %v106, 4294901760
    %v1263 = vsub.f32 %v106, %v1262
    %v1264 = vand.u32 %v1263, 4294901760
    %v1265 = vsub.f32 %v1263, %v1264
    %v1266 = vand.u32 %v1265, 4294901760
    %1267 = vmatpush.msra.mxu0 %v1266
    %v1268 = vand.u32 %v67, 4294901760
    %v1269 = vsub.f32 %v67, %v1268
    %v1270 = vand.u32 %v1269, 4294901760
    %v1271 = vsub.f32 %v1269, %v1270
    %v1272 = vand.u32 %v1271, 4294901760
    %1273 = vmatpush.msra.mxu0 %v1272
    %v1274 = vand.u32 %v181, 4294901760
    %1275 = vmatmul.f32.gmra.mxu0 %v1274
    %v1276 = vpop.f32.mrf.mxu0
    %v1277 = vadd.f32 %v1241, %v1276
    %1278 = vdwg.mxu0
    %1279 = vmatpush.msra.mxu0 0.0
    %1280 = vmatpush.msra.mxu0 0.0
    %1281 = vmatpush.msra.mxu0 0.0
    %1282 = vmatpush.msra.mxu0 0.0
    %1283 = vmatpush.msra.mxu0 0.0
    %1284 = vmatpush.msra.mxu0 0.0
    %1285 = vmatpush.msra.mxu0 0.0
    %1286 = vmatpush.msra.mxu0 0.0
    %1287 = vmatpush.msra.mxu0 0.0
    %1288 = vmatpush.msra.mxu0 0.0
    %1289 = vmatpush.msra.mxu0 0.0
    %1290 = vmatpush.msra.mxu0 0.0
    %1291 = vmatpush.msra.mxu0 0.0
    %v1292 = vand.u32 %v145, 4294901760
    %v1293 = vsub.f32 %v145, %v1292
    %1294 = vmatpush.msra.mxu0 %v1293
    %v1295 = vand.u32 %v106, 4294901760
    %v1296 = vsub.f32 %v106, %v1295
    %1297 = vmatpush.msra.mxu0 %v1296
    %v1298 = vand.u32 %v67, 4294901760
    %v1299 = vsub.f32 %v67, %v1298
    %1300 = vmatpush.msra.mxu0 %v1299
    %v1301 = vand.u32 %v181, 4294901760
    %v1302 = vsub.f32 %v181, %v1301
    %1303 = vmatmul.f32.gmra.mxu0 %v1302
    %v1304 = vpop.f32.mrf.mxu0
    %v1305 = vadd.f32 %v1277, %v1304
    %1306 = vdwg.mxu0
    %1307 = vmatpush.msra.mxu0 0.0
    %1308 = vmatpush.msra.mxu0 0.0
    %1309 = vmatpush.msra.mxu0 0.0
    %1310 = vmatpush.msra.mxu0 0.0
    %1311 = vmatpush.msra.mxu0 0.0
    %1312 = vmatpush.msra.mxu0 0.0
    %1313 = vmatpush.msra.mxu0 0.0
    %1314 = vmatpush.msra.mxu0 0.0
    %1315 = vmatpush.msra.mxu0 0.0
    %1316 = vmatpush.msra.mxu0 0.0
    %1317 = vmatpush.msra.mxu0 0.0
    %1318 = vmatpush.msra.mxu0 0.0
    %1319 = vmatpush.msra.mxu0 0.0
    %v1320 = vand.u32 %v145, 4294901760
    %1321 = vmatpush.msra.mxu0 %v1320
    %v1322 = vand.u32 %v106, 4294901760
    %1323 = vmatpush.msra.mxu0 %v1322
    %v1324 = vand.u32 %v67, 4294901760
    %1325 = vmatpush.msra.mxu0 %v1324
    %v1326 = vand.u32 %v181, 4294901760
    %v1327 = vsub.f32 %v181, %v1326
    %v1328 = vand.u32 %v1327, 4294901760
    %1329 = vmatmul.f32.gmra.mxu0 %v1328
    %v1330 = vpop.f32.mrf.mxu0
    %v1331 = vadd.f32 %v1305, %v1330
    %1332 = vdwg.mxu0
    %1333 = vmatpush.msra.mxu0 0.0
    %1334 = vmatpush.msra.mxu0 0.0
    %1335 = vmatpush.msra.mxu0 0.0
    %1336 = vmatpush.msra.mxu0 0.0
    %1337 = vmatpush.msra.mxu0 0.0
    %1338 = vmatpush.msra.mxu0 0.0
    %1339 = vmatpush.msra.mxu0 0.0
    %1340 = vmatpush.msra.mxu0 0.0
    %1341 = vmatpush.msra.mxu0 0.0
    %1342 = vmatpush.msra.mxu0 0.0
    %1343 = vmatpush.msra.mxu0 0.0
    %1344 = vmatpush.msra.mxu0 0.0
    %1345 = vmatpush.msra.mxu0 0.0
    %v1346 = vand.u32 %v145, 4294901760
    %v1347 = vsub.f32 %v145, %v1346
    %v1348 = vand.u32 %v1347, 4294901760
    %1349 = vmatpush.msra.mxu0 %v1348
    %v1350 = vand.u32 %v106, 4294901760
    %v1351 = vsub.f32 %v106, %v1350
    %v1352 = vand.u32 %v1351, 4294901760
    %1353 = vmatpush.msra.mxu0 %v1352
    %v1354 = vand.u32 %v67, 4294901760
    %v1355 = vsub.f32 %v67, %v1354
    %v1356 = vand.u32 %v1355, 4294901760
    %1357 = vmatpush.msra.mxu0 %v1356
    %v1358 = vand.u32 %v181, 4294901760
    %1359 = vmatmul.f32.gmra.mxu0 %v1358
    %v1360 = vpop.f32.mrf.mxu0
    %v1361 = vadd.f32 %v1331, %v1360
    %1362 = vdwg.mxu0
    %1363 = vmatpush.msra.mxu0 0.0
    %1364 = vmatpush.msra.mxu0 0.0
    %1365 = vmatpush.msra.mxu0 0.0
    %1366 = vmatpush.msra.mxu0 0.0
    %1367 = vmatpush.msra.mxu0 0.0
    %1368 = vmatpush.msra.mxu0 0.0
    %1369 = vmatpush.msra.mxu0 0.0
    %1370 = vmatpush.msra.mxu0 0.0
    %1371 = vmatpush.msra.mxu0 0.0
    %1372 = vmatpush.msra.mxu0 0.0
    %1373 = vmatpush.msra.mxu0 0.0
    %1374 = vmatpush.msra.mxu0 0.0
    %1375 = vmatpush.msra.mxu0 0.0
    %v1376 = vand.u32 %v145, 4294901760
    %1377 = vmatpush.msra.mxu0 %v1376
    %v1378 = vand.u32 %v106, 4294901760
    %1379 = vmatpush.msra.mxu0 %v1378
    %v1380 = vand.u32 %v67, 4294901760
    %1381 = vmatpush.msra.mxu0 %v1380
    %v1382 = vand.u32 %v181, 4294901760
    %1383 = vmatmul.f32.gmra.mxu0 %v1382
    %v1384 = vpop.f32.mrf.mxu0
    %v1385 = vadd.f32 %v1361, %v1384
    %1386 = vdwg.mxu0
    %1387 = vmatpush.msra.mxu0 0.0
    %1388 = vmatpush.msra.mxu0 0.0
    %1389 = vmatpush.msra.mxu0 0.0
    %1390 = vmatpush.msra.mxu0 0.0
    %1391 = vmatpush.msra.mxu0 0.0
    %1392 = vmatpush.msra.mxu0 0.0
    %1393 = vmatpush.msra.mxu0 0.0
    %1394 = vmatpush.msra.mxu0 0.0
    %1395 = vmatpush.msra.mxu0 0.0
    %1396 = vmatpush.msra.mxu0 0.0
    %1397 = vmatpush.msra.mxu0 0.0
    %1398 = vmatpush.msra.mxu0 0.0
    %1399 = vmatpush.msra.mxu0 0.0
    %v1400 = vand.u32 %v146, 4294901760
    %1401 = vmatpush.msra.mxu0 %v1400
    %v1402 = vand.u32 %v107, 4294901760
    %1403 = vmatpush.msra.mxu0 %v1402
    %v1404 = vand.u32 %v68, 4294901760
    %1405 = vmatpush.msra.mxu0 %v1404
    %v1406 = vand.u32 %v181, 4294901760
    %v1407 = vsub.f32 %v181, %v1406
    %v1408 = vand.u32 %v1407, 4294901760
    %v1409 = vsub.f32 %v1407, %v1408
    %v1410 = vand.u32 %v1409, 4294901760
    %1411 = vmatmul.f32.gmra.mxu0 %v1410
    %v1412 = vpop.f32.mrf.mxu0
    %v1413 = vadd.f32 0.0, %v1412
    %1414 = vdwg.mxu0
    %1415 = vmatpush.msra.mxu0 0.0
    %1416 = vmatpush.msra.mxu0 0.0
    %1417 = vmatpush.msra.mxu0 0.0
    %1418 = vmatpush.msra.mxu0 0.0
    %1419 = vmatpush.msra.mxu0 0.0
    %1420 = vmatpush.msra.mxu0 0.0
    %1421 = vmatpush.msra.mxu0 0.0
    %1422 = vmatpush.msra.mxu0 0.0
    %1423 = vmatpush.msra.mxu0 0.0
    %1424 = vmatpush.msra.mxu0 0.0
    %1425 = vmatpush.msra.mxu0 0.0
    %1426 = vmatpush.msra.mxu0 0.0
    %1427 = vmatpush.msra.mxu0 0.0
    %v1428 = vand.u32 %v146, 4294901760
    %v1429 = vsub.f32 %v146, %v1428
    %v1430 = vand.u32 %v1429, 4294901760
    %v1431 = vsub.f32 %v1429, %v1430
    %v1432 = vand.u32 %v1431, 4294901760
    %1433 = vmatpush.msra.mxu0 %v1432
    %v1434 = vand.u32 %v107, 4294901760
    %v1435 = vsub.f32 %v107, %v1434
    %v1436 = vand.u32 %v1435, 4294901760
    %v1437 = vsub.f32 %v1435, %v1436
    %v1438 = vand.u32 %v1437, 4294901760
    %1439 = vmatpush.msra.mxu0 %v1438
    %v1440 = vand.u32 %v68, 4294901760
    %v1441 = vsub.f32 %v68, %v1440
    %v1442 = vand.u32 %v1441, 4294901760
    %v1443 = vsub.f32 %v1441, %v1442
    %v1444 = vand.u32 %v1443, 4294901760
    %1445 = vmatpush.msra.mxu0 %v1444
    %v1446 = vand.u32 %v181, 4294901760
    %1447 = vmatmul.f32.gmra.mxu0 %v1446
    %v1448 = vpop.f32.mrf.mxu0
    %v1449 = vadd.f32 %v1413, %v1448
    %1450 = vdwg.mxu0
    %1451 = vmatpush.msra.mxu0 0.0
    %1452 = vmatpush.msra.mxu0 0.0
    %1453 = vmatpush.msra.mxu0 0.0
    %1454 = vmatpush.msra.mxu0 0.0
    %1455 = vmatpush.msra.mxu0 0.0
    %1456 = vmatpush.msra.mxu0 0.0
    %1457 = vmatpush.msra.mxu0 0.0
    %1458 = vmatpush.msra.mxu0 0.0
    %1459 = vmatpush.msra.mxu0 0.0
    %1460 = vmatpush.msra.mxu0 0.0
    %1461 = vmatpush.msra.mxu0 0.0
    %1462 = vmatpush.msra.mxu0 0.0
    %1463 = vmatpush.msra.mxu0 0.0
    %v1464 = vand.u32 %v146, 4294901760
    %v1465 = vsub.f32 %v146, %v1464
    %1466 = vmatpush.msra.mxu0 %v1465
    %v1467 = vand.u32 %v107, 4294901760
    %v1468 = vsub.f32 %v107, %v1467
    %1469 = vmatpush.msra.mxu0 %v1468
    %v1470 = vand.u32 %v68, 4294901760
    %v1471 = vsub.f32 %v68, %v1470
    %1472 = vmatpush.msra.mxu0 %v1471
    %v1473 = vand.u32 %v181, 4294901760
    %v1474 = vsub.f32 %v181, %v1473
    %1475 = vmatmul.f32.gmra.mxu0 %v1474
    %v1476 = vpop.f32.mrf.mxu0
    %v1477 = vadd.f32 %v1449, %v1476
    %1478 = vdwg.mxu0
    %1479 = vmatpush.msra.mxu0 0.0
    %1480 = vmatpush.msra.mxu0 0.0
    %1481 = vmatpush.msra.mxu0 0.0
    %1482 = vmatpush.msra.mxu0 0.0
    %1483 = vmatpush.msra.mxu0 0.0
    %1484 = vmatpush.msra.mxu0 0.0
    %1485 = vmatpush.msra.mxu0 0.0
    %1486 = vmatpush.msra.mxu0 0.0
    %1487 = vmatpush.msra.mxu0 0.0
    %1488 = vmatpush.msra.mxu0 0.0
    %1489 = vmatpush.msra.mxu0 0.0
    %1490 = vmatpush.msra.mxu0 0.0
    %1491 = vmatpush.msra.mxu0 0.0
    %v1492 = vand.u32 %v146, 4294901760
    %1493 = vmatpush.msra.mxu0 %v1492
    %v1494 = vand.u32 %v107, 4294901760
    %1495 = vmatpush.msra.mxu0 %v1494
    %v1496 = vand.u32 %v68, 4294901760
    %1497 = vmatpush.msra.mxu0 %v1496
    %v1498 = vand.u32 %v181, 4294901760
    %v1499 = vsub.f32 %v181, %v1498
    %v1500 = vand.u32 %v1499, 4294901760
    %1501 = vmatmul.f32.gmra.mxu0 %v1500
    %v1502 = vpop.f32.mrf.mxu0
    %v1503 = vadd.f32 %v1477, %v1502
    %1504 = vdwg.mxu0
    %1505 = vmatpush.msra.mxu0 0.0
    %1506 = vmatpush.msra.mxu0 0.0
    %1507 = vmatpush.msra.mxu0 0.0
    %1508 = vmatpush.msra.mxu0 0.0
    %1509 = vmatpush.msra.mxu0 0.0
    %1510 = vmatpush.msra.mxu0 0.0
    %1511 = vmatpush.msra.mxu0 0.0
    %1512 = vmatpush.msra.mxu0 0.0
    %1513 = vmatpush.msra.mxu0 0.0
    %1514 = vmatpush.msra.mxu0 0.0
    %1515 = vmatpush.msra.mxu0 0.0
    %1516 = vmatpush.msra.mxu0 0.0
    %1517 = vmatpush.msra.mxu0 0.0
    %v1518 = vand.u32 %v146, 4294901760
    %v1519 = vsub.f32 %v146, %v1518
    %v1520 = vand.u32 %v1519, 4294901760
    %1521 = vmatpush.msra.mxu0 %v1520
    %v1522 = vand.u32 %v107, 4294901760
    %v1523 = vsub.f32 %v107, %v1522
    %v1524 = vand.u32 %v1523, 4294901760
    %1525 = vmatpush.msra.mxu0 %v1524
    %v1526 = vand.u32 %v68, 4294901760
    %v1527 = vsub.f32 %v68, %v1526
    %v1528 = vand.u32 %v1527, 4294901760
    %1529 = vmatpush.msra.mxu0 %v1528
    %v1530 = vand.u32 %v181, 4294901760
    %1531 = vmatmul.f32.gmra.mxu0 %v1530
    %v1532 = vpop.f32.mrf.mxu0
    %v1533 = vadd.f32 %v1503, %v1532
    %1534 = vdwg.mxu0
    %1535 = vmatpush.msra.mxu0 0.0
    %1536 = vmatpush.msra.mxu0 0.0
    %1537 = vmatpush.msra.mxu0 0.0
    %1538 = vmatpush.msra.mxu0 0.0
    %1539 = vmatpush.msra.mxu0 0.0
    %1540 = vmatpush.msra.mxu0 0.0
    %1541 = vmatpush.msra.mxu0 0.0
    %1542 = vmatpush.msra.mxu0 0.0
    %1543 = vmatpush.msra.mxu0 0.0
    %1544 = vmatpush.msra.mxu0 0.0
    %1545 = vmatpush.msra.mxu0 0.0
    %1546 = vmatpush.msra.mxu0 0.0
    %1547 = vmatpush.msra.mxu0 0.0
    %v1548 = vand.u32 %v146, 4294901760
    %1549 = vmatpush.msra.mxu0 %v1548
    %v1550 = vand.u32 %v107, 4294901760
    %1551 = vmatpush.msra.mxu0 %v1550
    %v1552 = vand.u32 %v68, 4294901760
    %1553 = vmatpush.msra.mxu0 %v1552
    %v1554 = vand.u32 %v181, 4294901760
    %1555 = vmatmul.f32.gmra.mxu0 %v1554
    %v1556 = vpop.f32.mrf.mxu0
    %v1557 = vadd.f32 %v1533, %v1556
    %1558 = vdwg.mxu0
    %1559 = vmatpush.msra.mxu0 0.0
    %1560 = vmatpush.msra.mxu0 0.0
    %1561 = vmatpush.msra.mxu0 0.0
    %1562 = vmatpush.msra.mxu0 0.0
    %1563 = vmatpush.msra.mxu0 0.0
    %1564 = vmatpush.msra.mxu0 0.0
    %1565 = vmatpush.msra.mxu0 0.0
    %1566 = vmatpush.msra.mxu0 0.0
    %1567 = vmatpush.msra.mxu0 0.0
    %1568 = vmatpush.msra.mxu0 0.0
    %1569 = vmatpush.msra.mxu0 0.0
    %1570 = vmatpush.msra.mxu0 0.0
    %1571 = vmatpush.msra.mxu0 0.0
    %v1572 = vand.u32 %v147, 4294901760
    %1573 = vmatpush.msra.mxu0 %v1572
    %v1574 = vand.u32 %v108, 4294901760
    %1575 = vmatpush.msra.mxu0 %v1574
    %v1576 = vand.u32 %v69, 4294901760
    %1577 = vmatpush.msra.mxu0 %v1576
    %v1578 = vand.u32 %v181, 4294901760
    %v1579 = vsub.f32 %v181, %v1578
    %v1580 = vand.u32 %v1579, 4294901760
    %v1581 = vsub.f32 %v1579, %v1580
    %v1582 = vand.u32 %v1581, 4294901760
    %1583 = vmatmul.f32.gmra.mxu0 %v1582
    %v1584 = vpop.f32.mrf.mxu0
    %v1585 = vadd.f32 0.0, %v1584
    %1586 = vdwg.mxu0
    %1587 = vmatpush.msra.mxu0 0.0
    %1588 = vmatpush.msra.mxu0 0.0
    %1589 = vmatpush.msra.mxu0 0.0
    %1590 = vmatpush.msra.mxu0 0.0
    %1591 = vmatpush.msra.mxu0 0.0
    %1592 = vmatpush.msra.mxu0 0.0
    %1593 = vmatpush.msra.mxu0 0.0
    %1594 = vmatpush.msra.mxu0 0.0
    %1595 = vmatpush.msra.mxu0 0.0
    %1596 = vmatpush.msra.mxu0 0.0
    %1597 = vmatpush.msra.mxu0 0.0
    %1598 = vmatpush.msra.mxu0 0.0
    %1599 = vmatpush.msra.mxu0 0.0
    %v1600 = vand.u32 %v147, 4294901760
    %v1601 = vsub.f32 %v147, %v1600
    %v1602 = vand.u32 %v1601, 4294901760
    %v1603 = vsub.f32 %v1601, %v1602
    %v1604 = vand.u32 %v1603, 4294901760
    %1605 = vmatpush.msra.mxu0 %v1604
    %v1606 = vand.u32 %v108, 4294901760
    %v1607 = vsub.f32 %v108, %v1606
    %v1608 = vand.u32 %v1607, 4294901760
    %v1609 = vsub.f32 %v1607, %v1608
    %v1610 = vand.u32 %v1609, 4294901760
    %1611 = vmatpush.msra.mxu0 %v1610
    %v1612 = vand.u32 %v69, 4294901760
    %v1613 = vsub.f32 %v69, %v1612
    %v1614 = vand.u32 %v1613, 4294901760
    %v1615 = vsub.f32 %v1613, %v1614
    %v1616 = vand.u32 %v1615, 4294901760
    %1617 = vmatpush.msra.mxu0 %v1616
    %v1618 = vand.u32 %v181, 4294901760
    %1619 = vmatmul.f32.gmra.mxu0 %v1618
    %v1620 = vpop.f32.mrf.mxu0
    %v1621 = vadd.f32 %v1585, %v1620
    %1622 = vdwg.mxu0
    %1623 = vmatpush.msra.mxu0 0.0
    %1624 = vmatpush.msra.mxu0 0.0
    %1625 = vmatpush.msra.mxu0 0.0
    %1626 = vmatpush.msra.mxu0 0.0
    %1627 = vmatpush.msra.mxu0 0.0
    %1628 = vmatpush.msra.mxu0 0.0
    %1629 = vmatpush.msra.mxu0 0.0
    %1630 = vmatpush.msra.mxu0 0.0
    %1631 = vmatpush.msra.mxu0 0.0
    %1632 = vmatpush.msra.mxu0 0.0
    %1633 = vmatpush.msra.mxu0 0.0
    %1634 = vmatpush.msra.mxu0 0.0
    %1635 = vmatpush.msra.mxu0 0.0
    %v1636 = vand.u32 %v147, 4294901760
    %v1637 = vsub.f32 %v147, %v1636
    %1638 = vmatpush.msra.mxu0 %v1637
    %v1639 = vand.u32 %v108, 4294901760
    %v1640 = vsub.f32 %v108, %v1639
    %1641 = vmatpush.msra.mxu0 %v1640
    %v1642 = vand.u32 %v69, 4294901760
    %v1643 = vsub.f32 %v69, %v1642
    %1644 = vmatpush.msra.mxu0 %v1643
    %v1645 = vand.u32 %v181, 4294901760
    %v1646 = vsub.f32 %v181, %v1645
    %1647 = vmatmul.f32.gmra.mxu0 %v1646
    %v1648 = vpop.f32.mrf.mxu0
    %v1649 = vadd.f32 %v1621, %v1648
    %1650 = vdwg.mxu0
    %1651 = vmatpush.msra.mxu0 0.0
    %1652 = vmatpush.msra.mxu0 0.0
    %1653 = vmatpush.msra.mxu0 0.0
    %1654 = vmatpush.msra.mxu0 0.0
    %1655 = vmatpush.msra.mxu0 0.0
    %1656 = vmatpush.msra.mxu0 0.0
    %1657 = vmatpush.msra.mxu0 0.0
    %1658 = vmatpush.msra.mxu0 0.0
    %1659 = vmatpush.msra.mxu0 0.0
    %1660 = vmatpush.msra.mxu0 0.0
    %1661 = vmatpush.msra.mxu0 0.0
    %1662 = vmatpush.msra.mxu0 0.0
    %1663 = vmatpush.msra.mxu0 0.0
    %v1664 = vand.u32 %v147, 4294901760
    %1665 = vmatpush.msra.mxu0 %v1664
    %v1666 = vand.u32 %v108, 4294901760
    %1667 = vmatpush.msra.mxu0 %v1666
    %v1668 = vand.u32 %v69, 4294901760
    %1669 = vmatpush.msra.mxu0 %v1668
    %v1670 = vand.u32 %v181, 4294901760
    %v1671 = vsub.f32 %v181, %v1670
    %v1672 = vand.u32 %v1671, 4294901760
    %1673 = vmatmul.f32.gmra.mxu0 %v1672
    %v1674 = vpop.f32.mrf.mxu0
    %v1675 = vadd.f32 %v1649, %v1674
    %1676 = vdwg.mxu0
    %1677 = vmatpush.msra.mxu0 0.0
    %1678 = vmatpush.msra.mxu0 0.0
    %1679 = vmatpush.msra.mxu0 0.0
    %1680 = vmatpush.msra.mxu0 0.0
    %1681 = vmatpush.msra.mxu0 0.0
    %1682 = vmatpush.msra.mxu0 0.0
    %1683 = vmatpush.msra.mxu0 0.0
    %1684 = vmatpush.msra.mxu0 0.0
    %1685 = vmatpush.msra.mxu0 0.0
    %1686 = vmatpush.msra.mxu0 0.0
    %1687 = vmatpush.msra.mxu0 0.0
    %1688 = vmatpush.msra.mxu0 0.0
    %1689 = vmatpush.msra.mxu0 0.0
    %v1690 = vand.u32 %v147, 4294901760
    %v1691 = vsub.f32 %v147, %v1690
    %v1692 = vand.u32 %v1691, 4294901760
    %1693 = vmatpush.msra.mxu0 %v1692
    %v1694 = vand.u32 %v108, 4294901760
    %v1695 = vsub.f32 %v108, %v1694
    %v1696 = vand.u32 %v1695, 4294901760
    %1697 = vmatpush.msra.mxu0 %v1696
    %v1698 = vand.u32 %v69, 4294901760
    %v1699 = vsub.f32 %v69, %v1698
    %v1700 = vand.u32 %v1699, 4294901760
    %1701 = vmatpush.msra.mxu0 %v1700
    %v1702 = vand.u32 %v181, 4294901760
    %1703 = vmatmul.f32.gmra.mxu0 %v1702
    %v1704 = vpop.f32.mrf.mxu0
    %v1705 = vadd.f32 %v1675, %v1704
    %1706 = vdwg.mxu0
    %1707 = vmatpush.msra.mxu0 0.0
    %1708 = vmatpush.msra.mxu0 0.0
    %1709 = vmatpush.msra.mxu0 0.0
    %1710 = vmatpush.msra.mxu0 0.0
    %1711 = vmatpush.msra.mxu0 0.0
    %1712 = vmatpush.msra.mxu0 0.0
    %1713 = vmatpush.msra.mxu0 0.0
    %1714 = vmatpush.msra.mxu0 0.0
    %1715 = vmatpush.msra.mxu0 0.0
    %1716 = vmatpush.msra.mxu0 0.0
    %1717 = vmatpush.msra.mxu0 0.0
    %1718 = vmatpush.msra.mxu0 0.0
    %1719 = vmatpush.msra.mxu0 0.0
    %v1720 = vand.u32 %v147, 4294901760
    %1721 = vmatpush.msra.mxu0 %v1720
    %v1722 = vand.u32 %v108, 4294901760
    %1723 = vmatpush.msra.mxu0 %v1722
    %v1724 = vand.u32 %v69, 4294901760
    %1725 = vmatpush.msra.mxu0 %v1724
    %v1726 = vand.u32 %v181, 4294901760
    %1727 = vmatmul.f32.gmra.mxu0 %v1726
    %v1728 = vpop.f32.mrf.mxu0
    %v1729 = vadd.f32 %v1705, %v1728
    %1730 = vdwg.mxu0
    %1731 = vmatpush.msra.mxu0 0.0
    %1732 = vmatpush.msra.mxu0 0.0
    %1733 = vmatpush.msra.mxu0 0.0
    %1734 = vmatpush.msra.mxu0 0.0
    %1735 = vmatpush.msra.mxu0 0.0
    %1736 = vmatpush.msra.mxu0 0.0
    %1737 = vmatpush.msra.mxu0 0.0
    %1738 = vmatpush.msra.mxu0 0.0
    %1739 = vmatpush.msra.mxu0 0.0
    %1740 = vmatpush.msra.mxu0 0.0
    %1741 = vmatpush.msra.mxu0 0.0
    %1742 = vmatpush.msra.mxu0 0.0
    %1743 = vmatpush.msra.mxu0 0.0
    %v1744 = vand.u32 %v148, 4294901760
    %1745 = vmatpush.msra.mxu0 %v1744
    %v1746 = vand.u32 %v109, 4294901760
    %1747 = vmatpush.msra.mxu0 %v1746
    %v1748 = vand.u32 %v70, 4294901760
    %1749 = vmatpush.msra.mxu0 %v1748
    %v1750 = vand.u32 %v181, 4294901760
    %v1751 = vsub.f32 %v181, %v1750
    %v1752 = vand.u32 %v1751, 4294901760
    %v1753 = vsub.f32 %v1751, %v1752
    %v1754 = vand.u32 %v1753, 4294901760
    %1755 = vmatmul.f32.gmra.mxu0 %v1754
    %v1756 = vpop.f32.mrf.mxu0
    %v1757 = vadd.f32 0.0, %v1756
    %1758 = vdwg.mxu0
    %1759 = vmatpush.msra.mxu0 0.0
    %1760 = vmatpush.msra.mxu0 0.0
    %1761 = vmatpush.msra.mxu0 0.0
    %1762 = vmatpush.msra.mxu0 0.0
    %1763 = vmatpush.msra.mxu0 0.0
    %1764 = vmatpush.msra.mxu0 0.0
    %1765 = vmatpush.msra.mxu0 0.0
    %1766 = vmatpush.msra.mxu0 0.0
    %1767 = vmatpush.msra.mxu0 0.0
    %1768 = vmatpush.msra.mxu0 0.0
    %1769 = vmatpush.msra.mxu0 0.0
    %1770 = vmatpush.msra.mxu0 0.0
    %1771 = vmatpush.msra.mxu0 0.0
    %v1772 = vand.u32 %v148, 4294901760
    %v1773 = vsub.f32 %v148, %v1772
    %v1774 = vand.u32 %v1773, 4294901760
    %v1775 = vsub.f32 %v1773, %v1774
    %v1776 = vand.u32 %v1775, 4294901760
    %1777 = vmatpush.msra.mxu0 %v1776
    %v1778 = vand.u32 %v109, 4294901760
    %v1779 = vsub.f32 %v109, %v1778
    %v1780 = vand.u32 %v1779, 4294901760
    %v1781 = vsub.f32 %v1779, %v1780
    %v1782 = vand.u32 %v1781, 4294901760
    %1783 = vmatpush.msra.mxu0 %v1782
    %v1784 = vand.u32 %v70, 4294901760
    %v1785 = vsub.f32 %v70, %v1784
    %v1786 = vand.u32 %v1785, 4294901760
    %v1787 = vsub.f32 %v1785, %v1786
    %v1788 = vand.u32 %v1787, 4294901760
    %1789 = vmatpush.msra.mxu0 %v1788
    %v1790 = vand.u32 %v181, 4294901760
    %1791 = vmatmul.f32.gmra.mxu0 %v1790
    %v1792 = vpop.f32.mrf.mxu0
    %v1793 = vadd.f32 %v1757, %v1792
    %1794 = vdwg.mxu0
    %1795 = vmatpush.msra.mxu0 0.0
    %1796 = vmatpush.msra.mxu0 0.0
    %1797 = vmatpush.msra.mxu0 0.0
    %1798 = vmatpush.msra.mxu0 0.0
    %1799 = vmatpush.msra.mxu0 0.0
    %1800 = vmatpush.msra.mxu0 0.0
    %1801 = vmatpush.msra.mxu0 0.0
    %1802 = vmatpush.msra.mxu0 0.0
    %1803 = vmatpush.msra.mxu0 0.0
    %1804 = vmatpush.msra.mxu0 0.0
    %1805 = vmatpush.msra.mxu0 0.0
    %1806 = vmatpush.msra.mxu0 0.0
    %1807 = vmatpush.msra.mxu0 0.0
    %v1808 = vand.u32 %v148, 4294901760
    %v1809 = vsub.f32 %v148, %v1808
    %1810 = vmatpush.msra.mxu0 %v1809
    %v1811 = vand.u32 %v109, 4294901760
    %v1812 = vsub.f32 %v109, %v1811
    %1813 = vmatpush.msra.mxu0 %v1812
    %v1814 = vand.u32 %v70, 4294901760
    %v1815 = vsub.f32 %v70, %v1814
    %1816 = vmatpush.msra.mxu0 %v1815
    %v1817 = vand.u32 %v181, 4294901760
    %v1818 = vsub.f32 %v181, %v1817
    %1819 = vmatmul.f32.gmra.mxu0 %v1818
    %v1820 = vpop.f32.mrf.mxu0
    %v1821 = vadd.f32 %v1793, %v1820
    %1822 = vdwg.mxu0
    %1823 = vmatpush.msra.mxu0 0.0
    %1824 = vmatpush.msra.mxu0 0.0
    %1825 = vmatpush.msra.mxu0 0.0
    %1826 = vmatpush.msra.mxu0 0.0
    %1827 = vmatpush.msra.mxu0 0.0
    %1828 = vmatpush.msra.mxu0 0.0
    %1829 = vmatpush.msra.mxu0 0.0
    %1830 = vmatpush.msra.mxu0 0.0
    %1831 = vmatpush.msra.mxu0 0.0
    %1832 = vmatpush.msra.mxu0 0.0
    %1833 = vmatpush.msra.mxu0 0.0
    %1834 = vmatpush.msra.mxu0 0.0
    %1835 = vmatpush.msra.mxu0 0.0
    %v1836 = vand.u32 %v148, 4294901760
    %1837 = vmatpush.msra.mxu0 %v1836
    %v1838 = vand.u32 %v109, 4294901760
    %1839 = vmatpush.msra.mxu0 %v1838
    %v1840 = vand.u32 %v70, 4294901760
    %1841 = vmatpush.msra.mxu0 %v1840
    %v1842 = vand.u32 %v181, 4294901760
    %v1843 = vsub.f32 %v181, %v1842
    %v1844 = vand.u32 %v1843, 4294901760
    %1845 = vmatmul.f32.gmra.mxu0 %v1844
    %v1846 = vpop.f32.mrf.mxu0
    %v1847 = vadd.f32 %v1821, %v1846
    %1848 = vdwg.mxu0
    %1849 = vmatpush.msra.mxu0 0.0
    %1850 = vmatpush.msra.mxu0 0.0
    %1851 = vmatpush.msra.mxu0 0.0
    %1852 = vmatpush.msra.mxu0 0.0
    %1853 = vmatpush.msra.mxu0 0.0
    %1854 = vmatpush.msra.mxu0 0.0
    %1855 = vmatpush.msra.mxu0 0.0
    %1856 = vmatpush.msra.mxu0 0.0
    %1857 = vmatpush.msra.mxu0 0.0
    %1858 = vmatpush.msra.mxu0 0.0
    %1859 = vmatpush.msra.mxu0 0.0
    %1860 = vmatpush.msra.mxu0 0.0
    %1861 = vmatpush.msra.mxu0 0.0
    %v1862 = vand.u32 %v148, 4294901760
    %v1863 = vsub.f32 %v148, %v1862
    %v1864 = vand.u32 %v1863, 4294901760
    %1865 = vmatpush.msra.mxu0 %v1864
    %v1866 = vand.u32 %v109, 4294901760
    %v1867 = vsub.f32 %v109, %v1866
    %v1868 = vand.u32 %v1867, 4294901760
    %1869 = vmatpush.msra.mxu0 %v1868
    %v1870 = vand.u32 %v70, 4294901760
    %v1871 = vsub.f32 %v70, %v1870
    %v1872 = vand.u32 %v1871, 4294901760
    %1873 = vmatpush.msra.mxu0 %v1872
    %v1874 = vand.u32 %v181, 4294901760
    %1875 = vmatmul.f32.gmra.mxu0 %v1874
    %v1876 = vpop.f32.mrf.mxu0
    %v1877 = vadd.f32 %v1847, %v1876
    %1878 = vdwg.mxu0
    %1879 = vmatpush.msra.mxu0 0.0
    %1880 = vmatpush.msra.mxu0 0.0
    %1881 = vmatpush.msra.mxu0 0.0
    %1882 = vmatpush.msra.mxu0 0.0
    %1883 = vmatpush.msra.mxu0 0.0
    %1884 = vmatpush.msra.mxu0 0.0
    %1885 = vmatpush.msra.mxu0 0.0
    %1886 = vmatpush.msra.mxu0 0.0
    %1887 = vmatpush.msra.mxu0 0.0
    %1888 = vmatpush.msra.mxu0 0.0
    %1889 = vmatpush.msra.mxu0 0.0
    %1890 = vmatpush.msra.mxu0 0.0
    %1891 = vmatpush.msra.mxu0 0.0
    %v1892 = vand.u32 %v148, 4294901760
    %1893 = vmatpush.msra.mxu0 %v1892
    %v1894 = vand.u32 %v109, 4294901760
    %1895 = vmatpush.msra.mxu0 %v1894
    %v1896 = vand.u32 %v70, 4294901760
    %1897 = vmatpush.msra.mxu0 %v1896
    %v1898 = vand.u32 %v181, 4294901760
    %1899 = vmatmul.f32.gmra.mxu0 %v1898
    %v1900 = vpop.f32.mrf.mxu0
    %v1901 = vadd.f32 %v1877, %v1900
    %1902 = vdwg.mxu0
    %1903 = vmatpush.msra.mxu0 0.0
    %1904 = vmatpush.msra.mxu0 0.0
    %1905 = vmatpush.msra.mxu0 0.0
    %1906 = vmatpush.msra.mxu0 0.0
    %1907 = vmatpush.msra.mxu0 0.0
    %1908 = vmatpush.msra.mxu0 0.0
    %1909 = vmatpush.msra.mxu0 0.0
    %1910 = vmatpush.msra.mxu0 0.0
    %1911 = vmatpush.msra.mxu0 0.0
    %1912 = vmatpush.msra.mxu0 0.0
    %1913 = vmatpush.msra.mxu0 0.0
    %1914 = vmatpush.msra.mxu0 0.0
    %1915 = vmatpush.msra.mxu0 0.0
    %v1916 = vand.u32 %v149, 4294901760
    %1917 = vmatpush.msra.mxu0 %v1916
    %v1918 = vand.u32 %v110, 4294901760
    %1919 = vmatpush.msra.mxu0 %v1918
    %v1920 = vand.u32 %v71, 4294901760
    %1921 = vmatpush.msra.mxu0 %v1920
    %v1922 = vand.u32 %v181, 4294901760
    %v1923 = vsub.f32 %v181, %v1922
    %v1924 = vand.u32 %v1923, 4294901760
    %v1925 = vsub.f32 %v1923, %v1924
    %v1926 = vand.u32 %v1925, 4294901760
    %1927 = vmatmul.f32.gmra.mxu0 %v1926
    %v1928 = vpop.f32.mrf.mxu0
    %v1929 = vadd.f32 0.0, %v1928
    %1930 = vdwg.mxu0
    %1931 = vmatpush.msra.mxu0 0.0
    %1932 = vmatpush.msra.mxu0 0.0
    %1933 = vmatpush.msra.mxu0 0.0
    %1934 = vmatpush.msra.mxu0 0.0
    %1935 = vmatpush.msra.mxu0 0.0
    %1936 = vmatpush.msra.mxu0 0.0
    %1937 = vmatpush.msra.mxu0 0.0
    %1938 = vmatpush.msra.mxu0 0.0
    %1939 = vmatpush.msra.mxu0 0.0
    %1940 = vmatpush.msra.mxu0 0.0
    %1941 = vmatpush.msra.mxu0 0.0
    %1942 = vmatpush.msra.mxu0 0.0
    %1943 = vmatpush.msra.mxu0 0.0
    %v1944 = vand.u32 %v149, 4294901760
    %v1945 = vsub.f32 %v149, %v1944
    %v1946 = vand.u32 %v1945, 4294901760
    %v1947 = vsub.f32 %v1945, %v1946
    %v1948 = vand.u32 %v1947, 4294901760
    %1949 = vmatpush.msra.mxu0 %v1948
    %v1950 = vand.u32 %v110, 4294901760
    %v1951 = vsub.f32 %v110, %v1950
    %v1952 = vand.u32 %v1951, 4294901760
    %v1953 = vsub.f32 %v1951, %v1952
    %v1954 = vand.u32 %v1953, 4294901760
    %1955 = vmatpush.msra.mxu0 %v1954
    %v1956 = vand.u32 %v71, 4294901760
    %v1957 = vsub.f32 %v71, %v1956
    %v1958 = vand.u32 %v1957, 4294901760
    %v1959 = vsub.f32 %v1957, %v1958
    %v1960 = vand.u32 %v1959, 4294901760
    %1961 = vmatpush.msra.mxu0 %v1960
    %v1962 = vand.u32 %v181, 4294901760
    %1963 = vmatmul.f32.gmra.mxu0 %v1962
    %v1964 = vpop.f32.mrf.mxu0
    %v1965 = vadd.f32 %v1929, %v1964
    %1966 = vdwg.mxu0
    %1967 = vmatpush.msra.mxu0 0.0
    %1968 = vmatpush.msra.mxu0 0.0
    %1969 = vmatpush.msra.mxu0 0.0
    %1970 = vmatpush.msra.mxu0 0.0
    %1971 = vmatpush.msra.mxu0 0.0
    %1972 = vmatpush.msra.mxu0 0.0
    %1973 = vmatpush.msra.mxu0 0.0
    %1974 = vmatpush.msra.mxu0 0.0
    %1975 = vmatpush.msra.mxu0 0.0
    %1976 = vmatpush.msra.mxu0 0.0
    %1977 = vmatpush.msra.mxu0 0.0
    %1978 = vmatpush.msra.mxu0 0.0
    %1979 = vmatpush.msra.mxu0 0.0
    %v1980 = vand.u32 %v149, 4294901760
    %v1981 = vsub.f32 %v149, %v1980
    %1982 = vmatpush.msra.mxu0 %v1981
    %v1983 = vand.u32 %v110, 4294901760
    %v1984 = vsub.f32 %v110, %v1983
    %1985 = vmatpush.msra.mxu0 %v1984
    %v1986 = vand.u32 %v71, 4294901760
    %v1987 = vsub.f32 %v71, %v1986
    %1988 = vmatpush.msra.mxu0 %v1987
    %v1989 = vand.u32 %v181, 4294901760
    %v1990 = vsub.f32 %v181, %v1989
    %1991 = vmatmul.f32.gmra.mxu0 %v1990
    %v1992 = vpop.f32.mrf.mxu0
    %v1993 = vadd.f32 %v1965, %v1992
    %1994 = vdwg.mxu0
    %1995 = vmatpush.msra.mxu0 0.0
    %1996 = vmatpush.msra.mxu0 0.0
    %1997 = vmatpush.msra.mxu0 0.0
    %1998 = vmatpush.msra.mxu0 0.0
    %1999 = vmatpush.msra.mxu0 0.0
    %2000 = vmatpush.msra.mxu0 0.0
    %2001 = vmatpush.msra.mxu0 0.0
    %2002 = vmatpush.msra.mxu0 0.0
    %2003 = vmatpush.msra.mxu0 0.0
    %2004 = vmatpush.msra.mxu0 0.0
    %2005 = vmatpush.msra.mxu0 0.0
    %2006 = vmatpush.msra.mxu0 0.0
    %2007 = vmatpush.msra.mxu0 0.0
    %v2008 = vand.u32 %v149, 4294901760
    %2009 = vmatpush.msra.mxu0 %v2008
    %v2010 = vand.u32 %v110, 4294901760
    %2011 = vmatpush.msra.mxu0 %v2010
    %v2012 = vand.u32 %v71, 4294901760
    %2013 = vmatpush.msra.mxu0 %v2012
    %v2014 = vand.u32 %v181, 4294901760
    %v2015 = vsub.f32 %v181, %v2014
    %v2016 = vand.u32 %v2015, 4294901760
    %2017 = vmatmul.f32.gmra.mxu0 %v2016
    %v2018 = vpop.f32.mrf.mxu0
    %v2019 = vadd.f32 %v1993, %v2018
    %2020 = vdwg.mxu0
    %2021 = vmatpush.msra.mxu0 0.0
    %2022 = vmatpush.msra.mxu0 0.0
    %2023 = vmatpush.msra.mxu0 0.0
    %2024 = vmatpush.msra.mxu0 0.0
    %2025 = vmatpush.msra.mxu0 0.0
    %2026 = vmatpush.msra.mxu0 0.0
    %2027 = vmatpush.msra.mxu0 0.0
    %2028 = vmatpush.msra.mxu0 0.0
    %2029 = vmatpush.msra.mxu0 0.0
    %2030 = vmatpush.msra.mxu0 0.0
    %2031 = vmatpush.msra.mxu0 0.0
    %2032 = vmatpush.msra.mxu0 0.0
    %2033 = vmatpush.msra.mxu0 0.0
    %v2034 = vand.u32 %v149, 4294901760
    %v2035 = vsub.f32 %v149, %v2034
    %v2036 = vand.u32 %v2035, 4294901760
    %2037 = vmatpush.msra.mxu0 %v2036
    %v2038 = vand.u32 %v110, 4294901760
    %v2039 = vsub.f32 %v110, %v2038
    %v2040 = vand.u32 %v2039, 4294901760
    %2041 = vmatpush.msra.mxu0 %v2040
    %v2042 = vand.u32 %v71, 4294901760
    %v2043 = vsub.f32 %v71, %v2042
    %v2044 = vand.u32 %v2043, 4294901760
    %2045 = vmatpush.msra.mxu0 %v2044
    %v2046 = vand.u32 %v181, 4294901760
    %2047 = vmatmul.f32.gmra.mxu0 %v2046
    %v2048 = vpop.f32.mrf.mxu0
    %v2049 = vadd.f32 %v2019, %v2048
    %2050 = vdwg.mxu0
    %2051 = vmatpush.msra.mxu0 0.0
    %2052 = vmatpush.msra.mxu0 0.0
    %2053 = vmatpush.msra.mxu0 0.0
    %2054 = vmatpush.msra.mxu0 0.0
    %2055 = vmatpush.msra.mxu0 0.0
    %2056 = vmatpush.msra.mxu0 0.0
    %2057 = vmatpush.msra.mxu0 0.0
    %2058 = vmatpush.msra.mxu0 0.0
    %2059 = vmatpush.msra.mxu0 0.0
    %2060 = vmatpush.msra.mxu0 0.0
    %2061 = vmatpush.msra.mxu0 0.0
    %2062 = vmatpush.msra.mxu0 0.0
    %2063 = vmatpush.msra.mxu0 0.0
    %v2064 = vand.u32 %v149, 4294901760
    %2065 = vmatpush.msra.mxu0 %v2064
    %v2066 = vand.u32 %v110, 4294901760
    %2067 = vmatpush.msra.mxu0 %v2066
    %v2068 = vand.u32 %v71, 4294901760
    %2069 = vmatpush.msra.mxu0 %v2068
    %v2070 = vand.u32 %v181, 4294901760
    %2071 = vmatmul.f32.gmra.mxu0 %v2070
    %v2072 = vpop.f32.mrf.mxu0
    %v2073 = vadd.f32 %v2049, %v2072
    %2074 = vdwg.mxu0
    %2075 = vmatpush.msra.mxu0 0.0
    %2076 = vmatpush.msra.mxu0 0.0
    %2077 = vmatpush.msra.mxu0 0.0
    %2078 = vmatpush.msra.mxu0 0.0
    %2079 = vmatpush.msra.mxu0 0.0
    %2080 = vmatpush.msra.mxu0 0.0
    %2081 = vmatpush.msra.mxu0 0.0
    %2082 = vmatpush.msra.mxu0 0.0
    %2083 = vmatpush.msra.mxu0 0.0
    %2084 = vmatpush.msra.mxu0 0.0
    %2085 = vmatpush.msra.mxu0 0.0
    %2086 = vmatpush.msra.mxu0 0.0
    %2087 = vmatpush.msra.mxu0 0.0
    %v2088 = vand.u32 %v150, 4294901760
    %2089 = vmatpush.msra.mxu0 %v2088
    %v2090 = vand.u32 %v111, 4294901760
    %2091 = vmatpush.msra.mxu0 %v2090
    %v2092 = vand.u32 %v72, 4294901760
    %2093 = vmatpush.msra.mxu0 %v2092
    %v2094 = vand.u32 %v181, 4294901760
    %v2095 = vsub.f32 %v181, %v2094
    %v2096 = vand.u32 %v2095, 4294901760
    %v2097 = vsub.f32 %v2095, %v2096
    %v2098 = vand.u32 %v2097, 4294901760
    %2099 = vmatmul.f32.gmra.mxu0 %v2098
    %v2100 = vpop.f32.mrf.mxu0
    %v2101 = vadd.f32 0.0, %v2100
    %2102 = vdwg.mxu0
    %2103 = vmatpush.msra.mxu0 0.0
    %2104 = vmatpush.msra.mxu0 0.0
    %2105 = vmatpush.msra.mxu0 0.0
    %2106 = vmatpush.msra.mxu0 0.0
    %2107 = vmatpush.msra.mxu0 0.0
    %2108 = vmatpush.msra.mxu0 0.0
    %2109 = vmatpush.msra.mxu0 0.0
    %2110 = vmatpush.msra.mxu0 0.0
    %2111 = vmatpush.msra.mxu0 0.0
    %2112 = vmatpush.msra.mxu0 0.0
    %2113 = vmatpush.msra.mxu0 0.0
    %2114 = vmatpush.msra.mxu0 0.0
    %2115 = vmatpush.msra.mxu0 0.0
    %v2116 = vand.u32 %v150, 4294901760
    %v2117 = vsub.f32 %v150, %v2116
    %v2118 = vand.u32 %v2117, 4294901760
    %v2119 = vsub.f32 %v2117, %v2118
    %v2120 = vand.u32 %v2119, 4294901760
    %2121 = vmatpush.msra.mxu0 %v2120
    %v2122 = vand.u32 %v111, 4294901760
    %v2123 = vsub.f32 %v111, %v2122
    %v2124 = vand.u32 %v2123, 4294901760
    %v2125 = vsub.f32 %v2123, %v2124
    %v2126 = vand.u32 %v2125, 4294901760
    %2127 = vmatpush.msra.mxu0 %v2126
    %v2128 = vand.u32 %v72, 4294901760
    %v2129 = vsub.f32 %v72, %v2128
    %v2130 = vand.u32 %v2129, 4294901760
    %v2131 = vsub.f32 %v2129, %v2130
    %v2132 = vand.u32 %v2131, 4294901760
    %2133 = vmatpush.msra.mxu0 %v2132
    %v2134 = vand.u32 %v181, 4294901760
    %2135 = vmatmul.f32.gmra.mxu0 %v2134
    %v2136 = vpop.f32.mrf.mxu0
    %v2137 = vadd.f32 %v2101, %v2136
    %2138 = vdwg.mxu0
    %2139 = vmatpush.msra.mxu0 0.0
    %2140 = vmatpush.msra.mxu0 0.0
    %2141 = vmatpush.msra.mxu0 0.0
    %2142 = vmatpush.msra.mxu0 0.0
    %2143 = vmatpush.msra.mxu0 0.0
    %2144 = vmatpush.msra.mxu0 0.0
    %2145 = vmatpush.msra.mxu0 0.0
    %2146 = vmatpush.msra.mxu0 0.0
    %2147 = vmatpush.msra.mxu0 0.0
    %2148 = vmatpush.msra.mxu0 0.0
    %2149 = vmatpush.msra.mxu0 0.0
    %2150 = vmatpush.msra.mxu0 0.0
    %2151 = vmatpush.msra.mxu0 0.0
    %v2152 = vand.u32 %v150, 4294901760
    %v2153 = vsub.f32 %v150, %v2152
    %2154 = vmatpush.msra.mxu0 %v2153
    %v2155 = vand.u32 %v111, 4294901760
    %v2156 = vsub.f32 %v111, %v2155
    %2157 = vmatpush.msra.mxu0 %v2156
    %v2158 = vand.u32 %v72, 4294901760
    %v2159 = vsub.f32 %v72, %v2158
    %2160 = vmatpush.msra.mxu0 %v2159
    %v2161 = vand.u32 %v181, 4294901760
    %v2162 = vsub.f32 %v181, %v2161
    %2163 = vmatmul.f32.gmra.mxu0 %v2162
    %v2164 = vpop.f32.mrf.mxu0
    %v2165 = vadd.f32 %v2137, %v2164
    %2166 = vdwg.mxu0
    %2167 = vmatpush.msra.mxu0 0.0
    %2168 = vmatpush.msra.mxu0 0.0
    %2169 = vmatpush.msra.mxu0 0.0
    %2170 = vmatpush.msra.mxu0 0.0
    %2171 = vmatpush.msra.mxu0 0.0
    %2172 = vmatpush.msra.mxu0 0.0
    %2173 = vmatpush.msra.mxu0 0.0
    %2174 = vmatpush.msra.mxu0 0.0
    %2175 = vmatpush.msra.mxu0 0.0
    %2176 = vmatpush.msra.mxu0 0.0
    %2177 = vmatpush.msra.mxu0 0.0
    %2178 = vmatpush.msra.mxu0 0.0
    %2179 = vmatpush.msra.mxu0 0.0
    %v2180 = vand.u32 %v150, 4294901760
    %2181 = vmatpush.msra.mxu0 %v2180
    %v2182 = vand.u32 %v111, 4294901760
    %2183 = vmatpush.msra.mxu0 %v2182
    %v2184 = vand.u32 %v72, 4294901760
    %2185 = vmatpush.msra.mxu0 %v2184
    %v2186 = vand.u32 %v181, 4294901760
    %v2187 = vsub.f32 %v181, %v2186
    %v2188 = vand.u32 %v2187, 4294901760
    %2189 = vmatmul.f32.gmra.mxu0 %v2188
    %v2190 = vpop.f32.mrf.mxu0
    %v2191 = vadd.f32 %v2165, %v2190
    %2192 = vdwg.mxu0
    %2193 = vmatpush.msra.mxu0 0.0
    %2194 = vmatpush.msra.mxu0 0.0
    %2195 = vmatpush.msra.mxu0 0.0
    %2196 = vmatpush.msra.mxu0 0.0
    %2197 = vmatpush.msra.mxu0 0.0
    %2198 = vmatpush.msra.mxu0 0.0
    %2199 = vmatpush.msra.mxu0 0.0
    %2200 = vmatpush.msra.mxu0 0.0
    %2201 = vmatpush.msra.mxu0 0.0
    %2202 = vmatpush.msra.mxu0 0.0
    %2203 = vmatpush.msra.mxu0 0.0
    %2204 = vmatpush.msra.mxu0 0.0
    %2205 = vmatpush.msra.mxu0 0.0
    %v2206 = vand.u32 %v150, 4294901760
    %v2207 = vsub.f32 %v150, %v2206
    %v2208 = vand.u32 %v2207, 4294901760
    %2209 = vmatpush.msra.mxu0 %v2208
    %v2210 = vand.u32 %v111, 4294901760
    %v2211 = vsub.f32 %v111, %v2210
    %v2212 = vand.u32 %v2211, 4294901760
    %2213 = vmatpush.msra.mxu0 %v2212
    %v2214 = vand.u32 %v72, 4294901760
    %v2215 = vsub.f32 %v72, %v2214
    %v2216 = vand.u32 %v2215, 4294901760
    %2217 = vmatpush.msra.mxu0 %v2216
    %v2218 = vand.u32 %v181, 4294901760
    %2219 = vmatmul.f32.gmra.mxu0 %v2218
    %v2220 = vpop.f32.mrf.mxu0
    %v2221 = vadd.f32 %v2191, %v2220
    %2222 = vdwg.mxu0
    %2223 = vmatpush.msra.mxu0 0.0
    %2224 = vmatpush.msra.mxu0 0.0
    %2225 = vmatpush.msra.mxu0 0.0
    %2226 = vmatpush.msra.mxu0 0.0
    %2227 = vmatpush.msra.mxu0 0.0
    %2228 = vmatpush.msra.mxu0 0.0
    %2229 = vmatpush.msra.mxu0 0.0
    %2230 = vmatpush.msra.mxu0 0.0
    %2231 = vmatpush.msra.mxu0 0.0
    %2232 = vmatpush.msra.mxu0 0.0
    %2233 = vmatpush.msra.mxu0 0.0
    %2234 = vmatpush.msra.mxu0 0.0
    %2235 = vmatpush.msra.mxu0 0.0
    %v2236 = vand.u32 %v150, 4294901760
    %2237 = vmatpush.msra.mxu0 %v2236
    %v2238 = vand.u32 %v111, 4294901760
    %2239 = vmatpush.msra.mxu0 %v2238
    %v2240 = vand.u32 %v72, 4294901760
    %2241 = vmatpush.msra.mxu0 %v2240
    %v2242 = vand.u32 %v181, 4294901760
    %2243 = vmatmul.f32.gmra.mxu0 %v2242
    %v2244 = vpop.f32.mrf.mxu0
    %v2245 = vadd.f32 %v2221, %v2244
    %2246 = vdwg.mxu0
    %2247 = vmatpush.msra.mxu0 0.0
    %2248 = vmatpush.msra.mxu0 0.0
    %2249 = vmatpush.msra.mxu0 0.0
    %2250 = vmatpush.msra.mxu0 0.0
    %2251 = vmatpush.msra.mxu0 0.0
    %2252 = vmatpush.msra.mxu0 0.0
    %2253 = vmatpush.msra.mxu0 0.0
    %2254 = vmatpush.msra.mxu0 0.0
    %2255 = vmatpush.msra.mxu0 0.0
    %2256 = vmatpush.msra.mxu0 0.0
    %2257 = vmatpush.msra.mxu0 0.0
    %2258 = vmatpush.msra.mxu0 0.0
    %2259 = vmatpush.msra.mxu0 0.0
    %v2260 = vand.u32 %v151, 4294901760
    %2261 = vmatpush.msra.mxu0 %v2260
    %v2262 = vand.u32 %v112, 4294901760
    %2263 = vmatpush.msra.mxu0 %v2262
    %v2264 = vand.u32 %v73, 4294901760
    %2265 = vmatpush.msra.mxu0 %v2264
    %v2266 = vand.u32 %v181, 4294901760
    %v2267 = vsub.f32 %v181, %v2266
    %v2268 = vand.u32 %v2267, 4294901760
    %v2269 = vsub.f32 %v2267, %v2268
    %v2270 = vand.u32 %v2269, 4294901760
    %2271 = vmatmul.f32.gmra.mxu0 %v2270
    %v2272 = vpop.f32.mrf.mxu0
    %v2273 = vadd.f32 0.0, %v2272
    %2274 = vdwg.mxu0
    %2275 = vmatpush.msra.mxu0 0.0
    %2276 = vmatpush.msra.mxu0 0.0
    %2277 = vmatpush.msra.mxu0 0.0
    %2278 = vmatpush.msra.mxu0 0.0
    %2279 = vmatpush.msra.mxu0 0.0
    %2280 = vmatpush.msra.mxu0 0.0
    %2281 = vmatpush.msra.mxu0 0.0
    %2282 = vmatpush.msra.mxu0 0.0
    %2283 = vmatpush.msra.mxu0 0.0
    %2284 = vmatpush.msra.mxu0 0.0
    %2285 = vmatpush.msra.mxu0 0.0
    %2286 = vmatpush.msra.mxu0 0.0
    %2287 = vmatpush.msra.mxu0 0.0
    %v2288 = vand.u32 %v151, 4294901760
    %v2289 = vsub.f32 %v151, %v2288
    %v2290 = vand.u32 %v2289, 4294901760
    %v2291 = vsub.f32 %v2289, %v2290
    %v2292 = vand.u32 %v2291, 4294901760
    %2293 = vmatpush.msra.mxu0 %v2292
    %v2294 = vand.u32 %v112, 4294901760
    %v2295 = vsub.f32 %v112, %v2294
    %v2296 = vand.u32 %v2295, 4294901760
    %v2297 = vsub.f32 %v2295, %v2296
    %v2298 = vand.u32 %v2297, 4294901760
    %2299 = vmatpush.msra.mxu0 %v2298
    %v2300 = vand.u32 %v73, 4294901760
    %v2301 = vsub.f32 %v73, %v2300
    %v2302 = vand.u32 %v2301, 4294901760
    %v2303 = vsub.f32 %v2301, %v2302
    %v2304 = vand.u32 %v2303, 4294901760
    %2305 = vmatpush.msra.mxu0 %v2304
    %v2306 = vand.u32 %v181, 4294901760
    %2307 = vmatmul.f32.gmra.mxu0 %v2306
    %v2308 = vpop.f32.mrf.mxu0
    %v2309 = vadd.f32 %v2273, %v2308
    %2310 = vdwg.mxu0
    %2311 = vmatpush.msra.mxu0 0.0
    %2312 = vmatpush.msra.mxu0 0.0
    %2313 = vmatpush.msra.mxu0 0.0
    %2314 = vmatpush.msra.mxu0 0.0
    %2315 = vmatpush.msra.mxu0 0.0
    %2316 = vmatpush.msra.mxu0 0.0
    %2317 = vmatpush.msra.mxu0 0.0
    %2318 = vmatpush.msra.mxu0 0.0
    %2319 = vmatpush.msra.mxu0 0.0
    %2320 = vmatpush.msra.mxu0 0.0
    %2321 = vmatpush.msra.mxu0 0.0
    %2322 = vmatpush.msra.mxu0 0.0
    %2323 = vmatpush.msra.mxu0 0.0
    %v2324 = vand.u32 %v151, 4294901760
    %v2325 = vsub.f32 %v151, %v2324
    %2326 = vmatpush.msra.mxu0 %v2325
    %v2327 = vand.u32 %v112, 4294901760
    %v2328 = vsub.f32 %v112, %v2327
    %2329 = vmatpush.msra.mxu0 %v2328
    %v2330 = vand.u32 %v73, 4294901760
    %v2331 = vsub.f32 %v73, %v2330
    %2332 = vmatpush.msra.mxu0 %v2331
    %v2333 = vand.u32 %v181, 4294901760
    %v2334 = vsub.f32 %v181, %v2333
    %2335 = vmatmul.f32.gmra.mxu0 %v2334
    %v2336 = vpop.f32.mrf.mxu0
    %v2337 = vadd.f32 %v2309, %v2336
    %2338 = vdwg.mxu0
    %2339 = vmatpush.msra.mxu0 0.0
    %2340 = vmatpush.msra.mxu0 0.0
    %2341 = vmatpush.msra.mxu0 0.0
    %2342 = vmatpush.msra.mxu0 0.0
    %2343 = vmatpush.msra.mxu0 0.0
    %2344 = vmatpush.msra.mxu0 0.0
    %2345 = vmatpush.msra.mxu0 0.0
    %2346 = vmatpush.msra.mxu0 0.0
    %2347 = vmatpush.msra.mxu0 0.0
    %2348 = vmatpush.msra.mxu0 0.0
    %2349 = vmatpush.msra.mxu0 0.0
    %2350 = vmatpush.msra.mxu0 0.0
    %2351 = vmatpush.msra.mxu0 0.0
    %v2352 = vand.u32 %v151, 4294901760
    %2353 = vmatpush.msra.mxu0 %v2352
    %v2354 = vand.u32 %v112, 4294901760
    %2355 = vmatpush.msra.mxu0 %v2354
    %v2356 = vand.u32 %v73, 4294901760
    %2357 = vmatpush.msra.mxu0 %v2356
    %v2358 = vand.u32 %v181, 4294901760
    %v2359 = vsub.f32 %v181, %v2358
    %v2360 = vand.u32 %v2359, 4294901760
    %2361 = vmatmul.f32.gmra.mxu0 %v2360
    %v2362 = vpop.f32.mrf.mxu0
    %v2363 = vadd.f32 %v2337, %v2362
    %2364 = vdwg.mxu0
    %2365 = vmatpush.msra.mxu0 0.0
    %2366 = vmatpush.msra.mxu0 0.0
    %2367 = vmatpush.msra.mxu0 0.0
    %2368 = vmatpush.msra.mxu0 0.0
    %2369 = vmatpush.msra.mxu0 0.0
    %2370 = vmatpush.msra.mxu0 0.0
    %2371 = vmatpush.msra.mxu0 0.0
    %2372 = vmatpush.msra.mxu0 0.0
    %2373 = vmatpush.msra.mxu0 0.0
    %2374 = vmatpush.msra.mxu0 0.0
    %2375 = vmatpush.msra.mxu0 0.0
    %2376 = vmatpush.msra.mxu0 0.0
    %2377 = vmatpush.msra.mxu0 0.0
    %v2378 = vand.u32 %v151, 4294901760
    %v2379 = vsub.f32 %v151, %v2378
    %v2380 = vand.u32 %v2379, 4294901760
    %2381 = vmatpush.msra.mxu0 %v2380
    %v2382 = vand.u32 %v112, 4294901760
    %v2383 = vsub.f32 %v112, %v2382
    %v2384 = vand.u32 %v2383, 4294901760
    %2385 = vmatpush.msra.mxu0 %v2384
    %v2386 = vand.u32 %v73, 4294901760
    %v2387 = vsub.f32 %v73, %v2386
    %v2388 = vand.u32 %v2387, 4294901760
    %2389 = vmatpush.msra.mxu0 %v2388
    %v2390 = vand.u32 %v181, 4294901760
    %2391 = vmatmul.f32.gmra.mxu0 %v2390
    %v2392 = vpop.f32.mrf.mxu0
    %v2393 = vadd.f32 %v2363, %v2392
    %2394 = vdwg.mxu0
    %2395 = vmatpush.msra.mxu0 0.0
    %2396 = vmatpush.msra.mxu0 0.0
    %2397 = vmatpush.msra.mxu0 0.0
    %2398 = vmatpush.msra.mxu0 0.0
    %2399 = vmatpush.msra.mxu0 0.0
    %2400 = vmatpush.msra.mxu0 0.0
    %2401 = vmatpush.msra.mxu0 0.0
    %2402 = vmatpush.msra.mxu0 0.0
    %2403 = vmatpush.msra.mxu0 0.0
    %2404 = vmatpush.msra.mxu0 0.0
    %2405 = vmatpush.msra.mxu0 0.0
    %2406 = vmatpush.msra.mxu0 0.0
    %2407 = vmatpush.msra.mxu0 0.0
    %v2408 = vand.u32 %v151, 4294901760
    %2409 = vmatpush.msra.mxu0 %v2408
    %v2410 = vand.u32 %v112, 4294901760
    %2411 = vmatpush.msra.mxu0 %v2410
    %v2412 = vand.u32 %v73, 4294901760
    %2413 = vmatpush.msra.mxu0 %v2412
    %v2414 = vand.u32 %v181, 4294901760
    %2415 = vmatmul.f32.gmra.mxu0 %v2414
    %v2416 = vpop.f32.mrf.mxu0
    %v2417 = vadd.f32 %v2393, %v2416
    %2418 = vdwg.mxu0
    %2419 = vmatpush.msra.mxu0 0.0
    %2420 = vmatpush.msra.mxu0 0.0
    %2421 = vmatpush.msra.mxu0 0.0
    %2422 = vmatpush.msra.mxu0 0.0
    %2423 = vmatpush.msra.mxu0 0.0
    %2424 = vmatpush.msra.mxu0 0.0
    %2425 = vmatpush.msra.mxu0 0.0
    %2426 = vmatpush.msra.mxu0 0.0
    %2427 = vmatpush.msra.mxu0 0.0
    %2428 = vmatpush.msra.mxu0 0.0
    %2429 = vmatpush.msra.mxu0 0.0
    %2430 = vmatpush.msra.mxu0 0.0
    %2431 = vmatpush.msra.mxu0 0.0
    %v2432 = vand.u32 %v152, 4294901760
    %2433 = vmatpush.msra.mxu0 %v2432
    %v2434 = vand.u32 %v113, 4294901760
    %2435 = vmatpush.msra.mxu0 %v2434
    %v2436 = vand.u32 %v74, 4294901760
    %2437 = vmatpush.msra.mxu0 %v2436
    %v2438 = vand.u32 %v181, 4294901760
    %v2439 = vsub.f32 %v181, %v2438
    %v2440 = vand.u32 %v2439, 4294901760
    %v2441 = vsub.f32 %v2439, %v2440
    %v2442 = vand.u32 %v2441, 4294901760
    %2443 = vmatmul.f32.gmra.mxu0 %v2442
    %v2444 = vpop.f32.mrf.mxu0
    %v2445 = vadd.f32 0.0, %v2444
    %2446 = vdwg.mxu0
    %2447 = vmatpush.msra.mxu0 0.0
    %2448 = vmatpush.msra.mxu0 0.0
    %2449 = vmatpush.msra.mxu0 0.0
    %2450 = vmatpush.msra.mxu0 0.0
    %2451 = vmatpush.msra.mxu0 0.0
    %2452 = vmatpush.msra.mxu0 0.0
    %2453 = vmatpush.msra.mxu0 0.0
    %2454 = vmatpush.msra.mxu0 0.0
    %2455 = vmatpush.msra.mxu0 0.0
    %2456 = vmatpush.msra.mxu0 0.0
    %2457 = vmatpush.msra.mxu0 0.0
    %2458 = vmatpush.msra.mxu0 0.0
    %2459 = vmatpush.msra.mxu0 0.0
    %v2460 = vand.u32 %v152, 4294901760
    %v2461 = vsub.f32 %v152, %v2460
    %v2462 = vand.u32 %v2461, 4294901760
    %v2463 = vsub.f32 %v2461, %v2462
    %v2464 = vand.u32 %v2463, 4294901760
    %2465 = vmatpush.msra.mxu0 %v2464
    %v2466 = vand.u32 %v113, 4294901760
    %v2467 = vsub.f32 %v113, %v2466
    %v2468 = vand.u32 %v2467, 4294901760
    %v2469 = vsub.f32 %v2467, %v2468
    %v2470 = vand.u32 %v2469, 4294901760
    %2471 = vmatpush.msra.mxu0 %v2470
    %v2472 = vand.u32 %v74, 4294901760
    %v2473 = vsub.f32 %v74, %v2472
    %v2474 = vand.u32 %v2473, 4294901760
    %v2475 = vsub.f32 %v2473, %v2474
    %v2476 = vand.u32 %v2475, 4294901760
    %2477 = vmatpush.msra.mxu0 %v2476
    %v2478 = vand.u32 %v181, 4294901760
    %2479 = vmatmul.f32.gmra.mxu0 %v2478
    %v2480 = vpop.f32.mrf.mxu0
    %v2481 = vadd.f32 %v2445, %v2480
    %2482 = vdwg.mxu0
    %2483 = vmatpush.msra.mxu0 0.0
    %2484 = vmatpush.msra.mxu0 0.0
    %2485 = vmatpush.msra.mxu0 0.0
    %2486 = vmatpush.msra.mxu0 0.0
    %2487 = vmatpush.msra.mxu0 0.0
    %2488 = vmatpush.msra.mxu0 0.0
    %2489 = vmatpush.msra.mxu0 0.0
    %2490 = vmatpush.msra.mxu0 0.0
    %2491 = vmatpush.msra.mxu0 0.0
    %2492 = vmatpush.msra.mxu0 0.0
    %2493 = vmatpush.msra.mxu0 0.0
    %2494 = vmatpush.msra.mxu0 0.0
    %2495 = vmatpush.msra.mxu0 0.0
    %v2496 = vand.u32 %v152, 4294901760
    %v2497 = vsub.f32 %v152, %v2496
    %2498 = vmatpush.msra.mxu0 %v2497
    %v2499 = vand.u32 %v113, 4294901760
    %v2500 = vsub.f32 %v113, %v2499
    %2501 = vmatpush.msra.mxu0 %v2500
    %v2502 = vand.u32 %v74, 4294901760
    %v2503 = vsub.f32 %v74, %v2502
    %2504 = vmatpush.msra.mxu0 %v2503
    %v2505 = vand.u32 %v181, 4294901760
    %v2506 = vsub.f32 %v181, %v2505
    %2507 = vmatmul.f32.gmra.mxu0 %v2506
    %v2508 = vpop.f32.mrf.mxu0
    %v2509 = vadd.f32 %v2481, %v2508
    %2510 = vdwg.mxu0
    %2511 = vmatpush.msra.mxu0 0.0
    %2512 = vmatpush.msra.mxu0 0.0
    %2513 = vmatpush.msra.mxu0 0.0
    %2514 = vmatpush.msra.mxu0 0.0
    %2515 = vmatpush.msra.mxu0 0.0
    %2516 = vmatpush.msra.mxu0 0.0
    %2517 = vmatpush.msra.mxu0 0.0
    %2518 = vmatpush.msra.mxu0 0.0
    %2519 = vmatpush.msra.mxu0 0.0
    %2520 = vmatpush.msra.mxu0 0.0
    %2521 = vmatpush.msra.mxu0 0.0
    %2522 = vmatpush.msra.mxu0 0.0
    %2523 = vmatpush.msra.mxu0 0.0
    %v2524 = vand.u32 %v152, 4294901760
    %2525 = vmatpush.msra.mxu0 %v2524
    %v2526 = vand.u32 %v113, 4294901760
    %2527 = vmatpush.msra.mxu0 %v2526
    %v2528 = vand.u32 %v74, 4294901760
    %2529 = vmatpush.msra.mxu0 %v2528
    %v2530 = vand.u32 %v181, 4294901760
    %v2531 = vsub.f32 %v181, %v2530
    %v2532 = vand.u32 %v2531, 4294901760
    %2533 = vmatmul.f32.gmra.mxu0 %v2532
    %v2534 = vpop.f32.mrf.mxu0
    %v2535 = vadd.f32 %v2509, %v2534
    %2536 = vdwg.mxu0
    %2537 = vmatpush.msra.mxu0 0.0
    %2538 = vmatpush.msra.mxu0 0.0
    %2539 = vmatpush.msra.mxu0 0.0
    %2540 = vmatpush.msra.mxu0 0.0
    %2541 = vmatpush.msra.mxu0 0.0
    %2542 = vmatpush.msra.mxu0 0.0
    %2543 = vmatpush.msra.mxu0 0.0
    %2544 = vmatpush.msra.mxu0 0.0
    %2545 = vmatpush.msra.mxu0 0.0
    %2546 = vmatpush.msra.mxu0 0.0
    %2547 = vmatpush.msra.mxu0 0.0
    %2548 = vmatpush.msra.mxu0 0.0
    %2549 = vmatpush.msra.mxu0 0.0
    %v2550 = vand.u32 %v152, 4294901760
    %v2551 = vsub.f32 %v152, %v2550
    %v2552 = vand.u32 %v2551, 4294901760
    %2553 = vmatpush.msra.mxu0 %v2552
    %v2554 = vand.u32 %v113, 4294901760
    %v2555 = vsub.f32 %v113, %v2554
    %v2556 = vand.u32 %v2555, 4294901760
    %2557 = vmatpush.msra.mxu0 %v2556
    %v2558 = vand.u32 %v74, 4294901760
    %v2559 = vsub.f32 %v74, %v2558
    %v2560 = vand.u32 %v2559, 4294901760
    %2561 = vmatpush.msra.mxu0 %v2560
    %v2562 = vand.u32 %v181, 4294901760
    %2563 = vmatmul.f32.gmra.mxu0 %v2562
    %v2564 = vpop.f32.mrf.mxu0
    %v2565 = vadd.f32 %v2535, %v2564
    %2566 = vdwg.mxu0
    %2567 = vmatpush.msra.mxu0 0.0
    %2568 = vmatpush.msra.mxu0 0.0
    %2569 = vmatpush.msra.mxu0 0.0
    %2570 = vmatpush.msra.mxu0 0.0
    %2571 = vmatpush.msra.mxu0 0.0
    %2572 = vmatpush.msra.mxu0 0.0
    %2573 = vmatpush.msra.mxu0 0.0
    %2574 = vmatpush.msra.mxu0 0.0
    %2575 = vmatpush.msra.mxu0 0.0
    %2576 = vmatpush.msra.mxu0 0.0
    %2577 = vmatpush.msra.mxu0 0.0
    %2578 = vmatpush.msra.mxu0 0.0
    %2579 = vmatpush.msra.mxu0 0.0
    %v2580 = vand.u32 %v152, 4294901760
    %2581 = vmatpush.msra.mxu0 %v2580
    %v2582 = vand.u32 %v113, 4294901760
    %2583 = vmatpush.msra.mxu0 %v2582
    %v2584 = vand.u32 %v74, 4294901760
    %2585 = vmatpush.msra.mxu0 %v2584
    %v2586 = vand.u32 %v181, 4294901760
    %2587 = vmatmul.f32.gmra.mxu0 %v2586
    %v2588 = vpop.f32.mrf.mxu0
    %v2589 = vadd.f32 %v2565, %v2588
    %2590 = vdwg.mxu0
    %2591 = vmatpush.msra.mxu0 0.0
    %2592 = vmatpush.msra.mxu0 0.0
    %2593 = vmatpush.msra.mxu0 0.0
    %2594 = vmatpush.msra.mxu0 0.0
    %2595 = vmatpush.msra.mxu0 0.0
    %2596 = vmatpush.msra.mxu0 0.0
    %2597 = vmatpush.msra.mxu0 0.0
    %2598 = vmatpush.msra.mxu0 0.0
    %2599 = vmatpush.msra.mxu0 0.0
    %2600 = vmatpush.msra.mxu0 0.0
    %2601 = vmatpush.msra.mxu0 0.0
    %2602 = vmatpush.msra.mxu0 0.0
    %2603 = vmatpush.msra.mxu0 0.0
    %v2604 = vand.u32 %v153, 4294901760
    %2605 = vmatpush.msra.mxu0 %v2604
    %v2606 = vand.u32 %v114, 4294901760
    %2607 = vmatpush.msra.mxu0 %v2606
    %v2608 = vand.u32 %v75, 4294901760
    %2609 = vmatpush.msra.mxu0 %v2608
    %v2610 = vand.u32 %v181, 4294901760
    %v2611 = vsub.f32 %v181, %v2610
    %v2612 = vand.u32 %v2611, 4294901760
    %v2613 = vsub.f32 %v2611, %v2612
    %v2614 = vand.u32 %v2613, 4294901760
    %2615 = vmatmul.f32.gmra.mxu0 %v2614
    %v2616 = vpop.f32.mrf.mxu0
    %v2617 = vadd.f32 0.0, %v2616
    %2618 = vdwg.mxu0
    %2619 = vmatpush.msra.mxu0 0.0
    %2620 = vmatpush.msra.mxu0 0.0
    %2621 = vmatpush.msra.mxu0 0.0
    %2622 = vmatpush.msra.mxu0 0.0
    %2623 = vmatpush.msra.mxu0 0.0
    %2624 = vmatpush.msra.mxu0 0.0
    %2625 = vmatpush.msra.mxu0 0.0
    %2626 = vmatpush.msra.mxu0 0.0
    %2627 = vmatpush.msra.mxu0 0.0
    %2628 = vmatpush.msra.mxu0 0.0
    %2629 = vmatpush.msra.mxu0 0.0
    %2630 = vmatpush.msra.mxu0 0.0
    %2631 = vmatpush.msra.mxu0 0.0
    %v2632 = vand.u32 %v153, 4294901760
    %v2633 = vsub.f32 %v153, %v2632
    %v2634 = vand.u32 %v2633, 4294901760
    %v2635 = vsub.f32 %v2633, %v2634
    %v2636 = vand.u32 %v2635, 4294901760
    %2637 = vmatpush.msra.mxu0 %v2636
    %v2638 = vand.u32 %v114, 4294901760
    %v2639 = vsub.f32 %v114, %v2638
    %v2640 = vand.u32 %v2639, 4294901760
    %v2641 = vsub.f32 %v2639, %v2640
    %v2642 = vand.u32 %v2641, 4294901760
    %2643 = vmatpush.msra.mxu0 %v2642
    %v2644 = vand.u32 %v75, 4294901760
    %v2645 = vsub.f32 %v75, %v2644
    %v2646 = vand.u32 %v2645, 4294901760
    %v2647 = vsub.f32 %v2645, %v2646
    %v2648 = vand.u32 %v2647, 4294901760
    %2649 = vmatpush.msra.mxu0 %v2648
    %v2650 = vand.u32 %v181, 4294901760
    %2651 = vmatmul.f32.gmra.mxu0 %v2650
    %v2652 = vpop.f32.mrf.mxu0
    %v2653 = vadd.f32 %v2617, %v2652
    %2654 = vdwg.mxu0
    %2655 = vmatpush.msra.mxu0 0.0
    %2656 = vmatpush.msra.mxu0 0.0
    %2657 = vmatpush.msra.mxu0 0.0
    %2658 = vmatpush.msra.mxu0 0.0
    %2659 = vmatpush.msra.mxu0 0.0
    %2660 = vmatpush.msra.mxu0 0.0
    %2661 = vmatpush.msra.mxu0 0.0
    %2662 = vmatpush.msra.mxu0 0.0
    %2663 = vmatpush.msra.mxu0 0.0
    %2664 = vmatpush.msra.mxu0 0.0
    %2665 = vmatpush.msra.mxu0 0.0
    %2666 = vmatpush.msra.mxu0 0.0
    %2667 = vmatpush.msra.mxu0 0.0
    %v2668 = vand.u32 %v153, 4294901760
    %v2669 = vsub.f32 %v153, %v2668
    %2670 = vmatpush.msra.mxu0 %v2669
    %v2671 = vand.u32 %v114, 4294901760
    %v2672 = vsub.f32 %v114, %v2671
    %2673 = vmatpush.msra.mxu0 %v2672
    %v2674 = vand.u32 %v75, 4294901760
    %v2675 = vsub.f32 %v75, %v2674
    %2676 = vmatpush.msra.mxu0 %v2675
    %v2677 = vand.u32 %v181, 4294901760
    %v2678 = vsub.f32 %v181, %v2677
    %2679 = vmatmul.f32.gmra.mxu0 %v2678
    %v2680 = vpop.f32.mrf.mxu0
    %v2681 = vadd.f32 %v2653, %v2680
    %2682 = vdwg.mxu0
    %2683 = vmatpush.msra.mxu0 0.0
    %2684 = vmatpush.msra.mxu0 0.0
    %2685 = vmatpush.msra.mxu0 0.0
    %2686 = vmatpush.msra.mxu0 0.0
    %2687 = vmatpush.msra.mxu0 0.0
    %2688 = vmatpush.msra.mxu0 0.0
    %2689 = vmatpush.msra.mxu0 0.0
    %2690 = vmatpush.msra.mxu0 0.0
    %2691 = vmatpush.msra.mxu0 0.0
    %2692 = vmatpush.msra.mxu0 0.0
    %2693 = vmatpush.msra.mxu0 0.0
    %2694 = vmatpush.msra.mxu0 0.0
    %2695 = vmatpush.msra.mxu0 0.0
    %v2696 = vand.u32 %v153, 4294901760
    %2697 = vmatpush.msra.mxu0 %v2696
    %v2698 = vand.u32 %v114, 4294901760
    %2699 = vmatpush.msra.mxu0 %v2698
    %v2700 = vand.u32 %v75, 4294901760
    %2701 = vmatpush.msra.mxu0 %v2700
    %v2702 = vand.u32 %v181, 4294901760
    %v2703 = vsub.f32 %v181, %v2702
    %v2704 = vand.u32 %v2703, 4294901760
    %2705 = vmatmul.f32.gmra.mxu0 %v2704
    %v2706 = vpop.f32.mrf.mxu0
    %v2707 = vadd.f32 %v2681, %v2706
    %2708 = vdwg.mxu0
    %2709 = vmatpush.msra.mxu0 0.0
    %2710 = vmatpush.msra.mxu0 0.0
    %2711 = vmatpush.msra.mxu0 0.0
    %2712 = vmatpush.msra.mxu0 0.0
    %2713 = vmatpush.msra.mxu0 0.0
    %2714 = vmatpush.msra.mxu0 0.0
    %2715 = vmatpush.msra.mxu0 0.0
    %2716 = vmatpush.msra.mxu0 0.0
    %2717 = vmatpush.msra.mxu0 0.0
    %2718 = vmatpush.msra.mxu0 0.0
    %2719 = vmatpush.msra.mxu0 0.0
    %2720 = vmatpush.msra.mxu0 0.0
    %2721 = vmatpush.msra.mxu0 0.0
    %v2722 = vand.u32 %v153, 4294901760
    %v2723 = vsub.f32 %v153, %v2722
    %v2724 = vand.u32 %v2723, 4294901760
    %2725 = vmatpush.msra.mxu0 %v2724
    %v2726 = vand.u32 %v114, 4294901760
    %v2727 = vsub.f32 %v114, %v2726
    %v2728 = vand.u32 %v2727, 4294901760
    %2729 = vmatpush.msra.mxu0 %v2728
    %v2730 = vand.u32 %v75, 4294901760
    %v2731 = vsub.f32 %v75, %v2730
    %v2732 = vand.u32 %v2731, 4294901760
    %2733 = vmatpush.msra.mxu0 %v2732
    %v2734 = vand.u32 %v181, 4294901760
    %2735 = vmatmul.f32.gmra.mxu0 %v2734
    %v2736 = vpop.f32.mrf.mxu0
    %v2737 = vadd.f32 %v2707, %v2736
    %2738 = vdwg.mxu0
    %2739 = vmatpush.msra.mxu0 0.0
    %2740 = vmatpush.msra.mxu0 0.0
    %2741 = vmatpush.msra.mxu0 0.0
    %2742 = vmatpush.msra.mxu0 0.0
    %2743 = vmatpush.msra.mxu0 0.0
    %2744 = vmatpush.msra.mxu0 0.0
    %2745 = vmatpush.msra.mxu0 0.0
    %2746 = vmatpush.msra.mxu0 0.0
    %2747 = vmatpush.msra.mxu0 0.0
    %2748 = vmatpush.msra.mxu0 0.0
    %2749 = vmatpush.msra.mxu0 0.0
    %2750 = vmatpush.msra.mxu0 0.0
    %2751 = vmatpush.msra.mxu0 0.0
    %v2752 = vand.u32 %v153, 4294901760
    %2753 = vmatpush.msra.mxu0 %v2752
    %v2754 = vand.u32 %v114, 4294901760
    %2755 = vmatpush.msra.mxu0 %v2754
    %v2756 = vand.u32 %v75, 4294901760
    %2757 = vmatpush.msra.mxu0 %v2756
    %v2758 = vand.u32 %v181, 4294901760
    %2759 = vmatmul.f32.gmra.mxu0 %v2758
    %v2760 = vpop.f32.mrf.mxu0
    %v2761 = vadd.f32 %v2737, %v2760
    %2762 = vdwg.mxu0
    %2763 = vmatpush.msra.mxu0 0.0
    %2764 = vmatpush.msra.mxu0 0.0
    %2765 = vmatpush.msra.mxu0 0.0
    %2766 = vmatpush.msra.mxu0 0.0
    %2767 = vmatpush.msra.mxu0 0.0
    %2768 = vmatpush.msra.mxu0 0.0
    %2769 = vmatpush.msra.mxu0 0.0
    %2770 = vmatpush.msra.mxu0 0.0
    %2771 = vmatpush.msra.mxu0 0.0
    %2772 = vmatpush.msra.mxu0 0.0
    %2773 = vmatpush.msra.mxu0 0.0
    %2774 = vmatpush.msra.mxu0 0.0
    %2775 = vmatpush.msra.mxu0 0.0
    %v2776 = vand.u32 %v154, 4294901760
    %2777 = vmatpush.msra.mxu0 %v2776
    %v2778 = vand.u32 %v115, 4294901760
    %2779 = vmatpush.msra.mxu0 %v2778
    %v2780 = vand.u32 %v76, 4294901760
    %2781 = vmatpush.msra.mxu0 %v2780
    %v2782 = vand.u32 %v181, 4294901760
    %v2783 = vsub.f32 %v181, %v2782
    %v2784 = vand.u32 %v2783, 4294901760
    %v2785 = vsub.f32 %v2783, %v2784
    %v2786 = vand.u32 %v2785, 4294901760
    %2787 = vmatmul.f32.gmra.mxu0 %v2786
    %v2788 = vpop.f32.mrf.mxu0
    %v2789 = vadd.f32 0.0, %v2788
    %2790 = vdwg.mxu0
    %2791 = vmatpush.msra.mxu0 0.0
    %2792 = vmatpush.msra.mxu0 0.0
    %2793 = vmatpush.msra.mxu0 0.0
    %2794 = vmatpush.msra.mxu0 0.0
    %2795 = vmatpush.msra.mxu0 0.0
    %2796 = vmatpush.msra.mxu0 0.0
    %2797 = vmatpush.msra.mxu0 0.0
    %2798 = vmatpush.msra.mxu0 0.0
    %2799 = vmatpush.msra.mxu0 0.0
    %2800 = vmatpush.msra.mxu0 0.0
    %2801 = vmatpush.msra.mxu0 0.0
    %2802 = vmatpush.msra.mxu0 0.0
    %2803 = vmatpush.msra.mxu0 0.0
    %v2804 = vand.u32 %v154, 4294901760
    %v2805 = vsub.f32 %v154, %v2804
    %v2806 = vand.u32 %v2805, 4294901760
    %v2807 = vsub.f32 %v2805, %v2806
    %v2808 = vand.u32 %v2807, 4294901760
    %2809 = vmatpush.msra.mxu0 %v2808
    %v2810 = vand.u32 %v115, 4294901760
    %v2811 = vsub.f32 %v115, %v2810
    %v2812 = vand.u32 %v2811, 4294901760
    %v2813 = vsub.f32 %v2811, %v2812
    %v2814 = vand.u32 %v2813, 4294901760
    %2815 = vmatpush.msra.mxu0 %v2814
    %v2816 = vand.u32 %v76, 4294901760
    %v2817 = vsub.f32 %v76, %v2816
    %v2818 = vand.u32 %v2817, 4294901760
    %v2819 = vsub.f32 %v2817, %v2818
    %v2820 = vand.u32 %v2819, 4294901760
    %2821 = vmatpush.msra.mxu0 %v2820
    %v2822 = vand.u32 %v181, 4294901760
    %2823 = vmatmul.f32.gmra.mxu0 %v2822
    %v2824 = vpop.f32.mrf.mxu0
    %v2825 = vadd.f32 %v2789, %v2824
    %2826 = vdwg.mxu0
    %2827 = vmatpush.msra.mxu0 0.0
    %2828 = vmatpush.msra.mxu0 0.0
    %2829 = vmatpush.msra.mxu0 0.0
    %2830 = vmatpush.msra.mxu0 0.0
    %2831 = vmatpush.msra.mxu0 0.0
    %2832 = vmatpush.msra.mxu0 0.0
    %2833 = vmatpush.msra.mxu0 0.0
    %2834 = vmatpush.msra.mxu0 0.0
    %2835 = vmatpush.msra.mxu0 0.0
    %2836 = vmatpush.msra.mxu0 0.0
    %2837 = vmatpush.msra.mxu0 0.0
    %2838 = vmatpush.msra.mxu0 0.0
    %2839 = vmatpush.msra.mxu0 0.0
    %v2840 = vand.u32 %v154, 4294901760
    %v2841 = vsub.f32 %v154, %v2840
    %2842 = vmatpush.msra.mxu0 %v2841
    %v2843 = vand.u32 %v115, 4294901760
    %v2844 = vsub.f32 %v115, %v2843
    %2845 = vmatpush.msra.mxu0 %v2844
    %v2846 = vand.u32 %v76, 4294901760
    %v2847 = vsub.f32 %v76, %v2846
    %2848 = vmatpush.msra.mxu0 %v2847
    %v2849 = vand.u32 %v181, 4294901760
    %v2850 = vsub.f32 %v181, %v2849
    %2851 = vmatmul.f32.gmra.mxu0 %v2850
    %v2852 = vpop.f32.mrf.mxu0
    %v2853 = vadd.f32 %v2825, %v2852
    %2854 = vdwg.mxu0
    %2855 = vmatpush.msra.mxu0 0.0
    %2856 = vmatpush.msra.mxu0 0.0
    %2857 = vmatpush.msra.mxu0 0.0
    %2858 = vmatpush.msra.mxu0 0.0
    %2859 = vmatpush.msra.mxu0 0.0
    %2860 = vmatpush.msra.mxu0 0.0
    %2861 = vmatpush.msra.mxu0 0.0
    %2862 = vmatpush.msra.mxu0 0.0
    %2863 = vmatpush.msra.mxu0 0.0
    %2864 = vmatpush.msra.mxu0 0.0
    %2865 = vmatpush.msra.mxu0 0.0
    %2866 = vmatpush.msra.mxu0 0.0
    %2867 = vmatpush.msra.mxu0 0.0
    %v2868 = vand.u32 %v154, 4294901760
    %2869 = vmatpush.msra.mxu0 %v2868
    %v2870 = vand.u32 %v115, 4294901760
    %2871 = vmatpush.msra.mxu0 %v2870
    %v2872 = vand.u32 %v76, 4294901760
    %2873 = vmatpush.msra.mxu0 %v2872
    %v2874 = vand.u32 %v181, 4294901760
    %v2875 = vsub.f32 %v181, %v2874
    %v2876 = vand.u32 %v2875, 4294901760
    %2877 = vmatmul.f32.gmra.mxu0 %v2876
    %v2878 = vpop.f32.mrf.mxu0
    %v2879 = vadd.f32 %v2853, %v2878
    %2880 = vdwg.mxu0
    %2881 = vmatpush.msra.mxu0 0.0
    %2882 = vmatpush.msra.mxu0 0.0
    %2883 = vmatpush.msra.mxu0 0.0
    %2884 = vmatpush.msra.mxu0 0.0
    %2885 = vmatpush.msra.mxu0 0.0
    %2886 = vmatpush.msra.mxu0 0.0
    %2887 = vmatpush.msra.mxu0 0.0
    %2888 = vmatpush.msra.mxu0 0.0
    %2889 = vmatpush.msra.mxu0 0.0
    %2890 = vmatpush.msra.mxu0 0.0
    %2891 = vmatpush.msra.mxu0 0.0
    %2892 = vmatpush.msra.mxu0 0.0
    %2893 = vmatpush.msra.mxu0 0.0
    %v2894 = vand.u32 %v154, 4294901760
    %v2895 = vsub.f32 %v154, %v2894
    %v2896 = vand.u32 %v2895, 4294901760
    %2897 = vmatpush.msra.mxu0 %v2896
    %v2898 = vand.u32 %v115, 4294901760
    %v2899 = vsub.f32 %v115, %v2898
    %v2900 = vand.u32 %v2899, 4294901760
    %2901 = vmatpush.msra.mxu0 %v2900
    %v2902 = vand.u32 %v76, 4294901760
    %v2903 = vsub.f32 %v76, %v2902
    %v2904 = vand.u32 %v2903, 4294901760
    %2905 = vmatpush.msra.mxu0 %v2904
    %v2906 = vand.u32 %v181, 4294901760
    %2907 = vmatmul.f32.gmra.mxu0 %v2906
    %v2908 = vpop.f32.mrf.mxu0
    %v2909 = vadd.f32 %v2879, %v2908
    %2910 = vdwg.mxu0
    %2911 = vmatpush.msra.mxu0 0.0
    %2912 = vmatpush.msra.mxu0 0.0
    %2913 = vmatpush.msra.mxu0 0.0
    %2914 = vmatpush.msra.mxu0 0.0
    %2915 = vmatpush.msra.mxu0 0.0
    %2916 = vmatpush.msra.mxu0 0.0
    %2917 = vmatpush.msra.mxu0 0.0
    %2918 = vmatpush.msra.mxu0 0.0
    %2919 = vmatpush.msra.mxu0 0.0
    %2920 = vmatpush.msra.mxu0 0.0
    %2921 = vmatpush.msra.mxu0 0.0
    %2922 = vmatpush.msra.mxu0 0.0
    %2923 = vmatpush.msra.mxu0 0.0
    %v2924 = vand.u32 %v154, 4294901760
    %2925 = vmatpush.msra.mxu0 %v2924
    %v2926 = vand.u32 %v115, 4294901760
    %2927 = vmatpush.msra.mxu0 %v2926
    %v2928 = vand.u32 %v76, 4294901760
    %2929 = vmatpush.msra.mxu0 %v2928
    %v2930 = vand.u32 %v181, 4294901760
    %2931 = vmatmul.f32.gmra.mxu0 %v2930
    %v2932 = vpop.f32.mrf.mxu0
    %v2933 = vadd.f32 %v2909, %v2932
    %2934 = vdwg.mxu0
    %2935 = vmatpush.msra.mxu0 0.0
    %2936 = vmatpush.msra.mxu0 0.0
    %2937 = vmatpush.msra.mxu0 0.0
    %2938 = vmatpush.msra.mxu0 0.0
    %2939 = vmatpush.msra.mxu0 0.0
    %2940 = vmatpush.msra.mxu0 0.0
    %2941 = vmatpush.msra.mxu0 0.0
    %2942 = vmatpush.msra.mxu0 0.0
    %2943 = vmatpush.msra.mxu0 0.0
    %2944 = vmatpush.msra.mxu0 0.0
    %2945 = vmatpush.msra.mxu0 0.0
    %2946 = vmatpush.msra.mxu0 0.0
    %2947 = vmatpush.msra.mxu0 0.0
    %v2948 = vand.u32 %v155, 4294901760
    %2949 = vmatpush.msra.mxu0 %v2948
    %v2950 = vand.u32 %v116, 4294901760
    %2951 = vmatpush.msra.mxu0 %v2950
    %v2952 = vand.u32 %v77, 4294901760
    %2953 = vmatpush.msra.mxu0 %v2952
    %v2954 = vand.u32 %v181, 4294901760
    %v2955 = vsub.f32 %v181, %v2954
    %v2956 = vand.u32 %v2955, 4294901760
    %v2957 = vsub.f32 %v2955, %v2956
    %v2958 = vand.u32 %v2957, 4294901760
    %2959 = vmatmul.f32.gmra.mxu0 %v2958
    %v2960 = vpop.f32.mrf.mxu0
    %v2961 = vadd.f32 0.0, %v2960
    %2962 = vdwg.mxu0
    %2963 = vmatpush.msra.mxu0 0.0
    %2964 = vmatpush.msra.mxu0 0.0
    %2965 = vmatpush.msra.mxu0 0.0
    %2966 = vmatpush.msra.mxu0 0.0
    %2967 = vmatpush.msra.mxu0 0.0
    %2968 = vmatpush.msra.mxu0 0.0
    %2969 = vmatpush.msra.mxu0 0.0
    %2970 = vmatpush.msra.mxu0 0.0
    %2971 = vmatpush.msra.mxu0 0.0
    %2972 = vmatpush.msra.mxu0 0.0
    %2973 = vmatpush.msra.mxu0 0.0
    %2974 = vmatpush.msra.mxu0 0.0
    %2975 = vmatpush.msra.mxu0 0.0
    %v2976 = vand.u32 %v155, 4294901760
    %v2977 = vsub.f32 %v155, %v2976
    %v2978 = vand.u32 %v2977, 4294901760
    %v2979 = vsub.f32 %v2977, %v2978
    %v2980 = vand.u32 %v2979, 4294901760
    %2981 = vmatpush.msra.mxu0 %v2980
    %v2982 = vand.u32 %v116, 4294901760
    %v2983 = vsub.f32 %v116, %v2982
    %v2984 = vand.u32 %v2983, 4294901760
    %v2985 = vsub.f32 %v2983, %v2984
    %v2986 = vand.u32 %v2985, 4294901760
    %2987 = vmatpush.msra.mxu0 %v2986
    %v2988 = vand.u32 %v77, 4294901760
    %v2989 = vsub.f32 %v77, %v2988
    %v2990 = vand.u32 %v2989, 4294901760
    %v2991 = vsub.f32 %v2989, %v2990
    %v2992 = vand.u32 %v2991, 4294901760
    %2993 = vmatpush.msra.mxu0 %v2992
    %v2994 = vand.u32 %v181, 4294901760
    %2995 = vmatmul.f32.gmra.mxu0 %v2994
    %v2996 = vpop.f32.mrf.mxu0
    %v2997 = vadd.f32 %v2961, %v2996
    %2998 = vdwg.mxu0
    %2999 = vmatpush.msra.mxu0 0.0
    %3000 = vmatpush.msra.mxu0 0.0
    %3001 = vmatpush.msra.mxu0 0.0
    %3002 = vmatpush.msra.mxu0 0.0
    %3003 = vmatpush.msra.mxu0 0.0
    %3004 = vmatpush.msra.mxu0 0.0
    %3005 = vmatpush.msra.mxu0 0.0
    %3006 = vmatpush.msra.mxu0 0.0
    %3007 = vmatpush.msra.mxu0 0.0
    %3008 = vmatpush.msra.mxu0 0.0
    %3009 = vmatpush.msra.mxu0 0.0
    %3010 = vmatpush.msra.mxu0 0.0
    %3011 = vmatpush.msra.mxu0 0.0
    %v3012 = vand.u32 %v155, 4294901760
    %v3013 = vsub.f32 %v155, %v3012
    %3014 = vmatpush.msra.mxu0 %v3013
    %v3015 = vand.u32 %v116, 4294901760
    %v3016 = vsub.f32 %v116, %v3015
    %3017 = vmatpush.msra.mxu0 %v3016
    %v3018 = vand.u32 %v77, 4294901760
    %v3019 = vsub.f32 %v77, %v3018
    %3020 = vmatpush.msra.mxu0 %v3019
    %v3021 = vand.u32 %v181, 4294901760
    %v3022 = vsub.f32 %v181, %v3021
    %3023 = vmatmul.f32.gmra.mxu0 %v3022
    %v3024 = vpop.f32.mrf.mxu0
    %v3025 = vadd.f32 %v2997, %v3024
    %3026 = vdwg.mxu0
    %3027 = vmatpush.msra.mxu0 0.0
    %3028 = vmatpush.msra.mxu0 0.0
    %3029 = vmatpush.msra.mxu0 0.0
    %3030 = vmatpush.msra.mxu0 0.0
    %3031 = vmatpush.msra.mxu0 0.0
    %3032 = vmatpush.msra.mxu0 0.0
    %3033 = vmatpush.msra.mxu0 0.0
    %3034 = vmatpush.msra.mxu0 0.0
    %3035 = vmatpush.msra.mxu0 0.0
    %3036 = vmatpush.msra.mxu0 0.0
    %3037 = vmatpush.msra.mxu0 0.0
    %3038 = vmatpush.msra.mxu0 0.0
    %3039 = vmatpush.msra.mxu0 0.0
    %v3040 = vand.u32 %v155, 4294901760
    %3041 = vmatpush.msra.mxu0 %v3040
    %v3042 = vand.u32 %v116, 4294901760
    %3043 = vmatpush.msra.mxu0 %v3042
    %v3044 = vand.u32 %v77, 4294901760
    %3045 = vmatpush.msra.mxu0 %v3044
    %v3046 = vand.u32 %v181, 4294901760
    %v3047 = vsub.f32 %v181, %v3046
    %v3048 = vand.u32 %v3047, 4294901760
    %3049 = vmatmul.f32.gmra.mxu0 %v3048
    %v3050 = vpop.f32.mrf.mxu0
    %v3051 = vadd.f32 %v3025, %v3050
    %3052 = vdwg.mxu0
    %3053 = vmatpush.msra.mxu0 0.0
    %3054 = vmatpush.msra.mxu0 0.0
    %3055 = vmatpush.msra.mxu0 0.0
    %3056 = vmatpush.msra.mxu0 0.0
    %3057 = vmatpush.msra.mxu0 0.0
    %3058 = vmatpush.msra.mxu0 0.0
    %3059 = vmatpush.msra.mxu0 0.0
    %3060 = vmatpush.msra.mxu0 0.0
    %3061 = vmatpush.msra.mxu0 0.0
    %3062 = vmatpush.msra.mxu0 0.0
    %3063 = vmatpush.msra.mxu0 0.0
    %3064 = vmatpush.msra.mxu0 0.0
    %3065 = vmatpush.msra.mxu0 0.0
    %v3066 = vand.u32 %v155, 4294901760
    %v3067 = vsub.f32 %v155, %v3066
    %v3068 = vand.u32 %v3067, 4294901760
    %3069 = vmatpush.msra.mxu0 %v3068
    %v3070 = vand.u32 %v116, 4294901760
    %v3071 = vsub.f32 %v116, %v3070
    %v3072 = vand.u32 %v3071, 4294901760
    %3073 = vmatpush.msra.mxu0 %v3072
    %v3074 = vand.u32 %v77, 4294901760
    %v3075 = vsub.f32 %v77, %v3074
    %v3076 = vand.u32 %v3075, 4294901760
    %3077 = vmatpush.msra.mxu0 %v3076
    %v3078 = vand.u32 %v181, 4294901760
    %3079 = vmatmul.f32.gmra.mxu0 %v3078
    %v3080 = vpop.f32.mrf.mxu0
    %v3081 = vadd.f32 %v3051, %v3080
    %3082 = vdwg.mxu0
    %3083 = vmatpush.msra.mxu0 0.0
    %3084 = vmatpush.msra.mxu0 0.0
    %3085 = vmatpush.msra.mxu0 0.0
    %3086 = vmatpush.msra.mxu0 0.0
    %3087 = vmatpush.msra.mxu0 0.0
    %3088 = vmatpush.msra.mxu0 0.0
    %3089 = vmatpush.msra.mxu0 0.0
    %3090 = vmatpush.msra.mxu0 0.0
    %3091 = vmatpush.msra.mxu0 0.0
    %3092 = vmatpush.msra.mxu0 0.0
    %3093 = vmatpush.msra.mxu0 0.0
    %3094 = vmatpush.msra.mxu0 0.0
    %3095 = vmatpush.msra.mxu0 0.0
    %v3096 = vand.u32 %v155, 4294901760
    %3097 = vmatpush.msra.mxu0 %v3096
    %v3098 = vand.u32 %v116, 4294901760
    %3099 = vmatpush.msra.mxu0 %v3098
    %v3100 = vand.u32 %v77, 4294901760
    %3101 = vmatpush.msra.mxu0 %v3100
    %v3102 = vand.u32 %v181, 4294901760
    %3103 = vmatmul.f32.gmra.mxu0 %v3102
    %v3104 = vpop.f32.mrf.mxu0
    %v3105 = vadd.f32 %v3081, %v3104
    %3106 = vdwg.mxu0
    %3107 = vmatpush.msra.mxu0 0.0
    %3108 = vmatpush.msra.mxu0 0.0
    %3109 = vmatpush.msra.mxu0 0.0
    %3110 = vmatpush.msra.mxu0 0.0
    %3111 = vmatpush.msra.mxu0 0.0
    %3112 = vmatpush.msra.mxu0 0.0
    %3113 = vmatpush.msra.mxu0 0.0
    %3114 = vmatpush.msra.mxu0 0.0
    %3115 = vmatpush.msra.mxu0 0.0
    %3116 = vmatpush.msra.mxu0 0.0
    %3117 = vmatpush.msra.mxu0 0.0
    %3118 = vmatpush.msra.mxu0 0.0
    %3119 = vmatpush.msra.mxu0 0.0
    %v3120 = vand.u32 %v156, 4294901760
    %3121 = vmatpush.msra.mxu0 %v3120
    %v3122 = vand.u32 %v117, 4294901760
    %3123 = vmatpush.msra.mxu0 %v3122
    %v3124 = vand.u32 %v78, 4294901760
    %3125 = vmatpush.msra.mxu0 %v3124
    %v3126 = vand.u32 %v181, 4294901760
    %v3127 = vsub.f32 %v181, %v3126
    %v3128 = vand.u32 %v3127, 4294901760
    %v3129 = vsub.f32 %v3127, %v3128
    %v3130 = vand.u32 %v3129, 4294901760
    %3131 = vmatmul.f32.gmra.mxu0 %v3130
    %v3132 = vpop.f32.mrf.mxu0
    %v3133 = vadd.f32 0.0, %v3132
    %3134 = vdwg.mxu0
    %3135 = vmatpush.msra.mxu0 0.0
    %3136 = vmatpush.msra.mxu0 0.0
    %3137 = vmatpush.msra.mxu0 0.0
    %3138 = vmatpush.msra.mxu0 0.0
    %3139 = vmatpush.msra.mxu0 0.0
    %3140 = vmatpush.msra.mxu0 0.0
    %3141 = vmatpush.msra.mxu0 0.0
    %3142 = vmatpush.msra.mxu0 0.0
    %3143 = vmatpush.msra.mxu0 0.0
    %3144 = vmatpush.msra.mxu0 0.0
    %3145 = vmatpush.msra.mxu0 0.0
    %3146 = vmatpush.msra.mxu0 0.0
    %3147 = vmatpush.msra.mxu0 0.0
    %v3148 = vand.u32 %v156, 4294901760
    %v3149 = vsub.f32 %v156, %v3148
    %v3150 = vand.u32 %v3149, 4294901760
    %v3151 = vsub.f32 %v3149, %v3150
    %v3152 = vand.u32 %v3151, 4294901760
    %3153 = vmatpush.msra.mxu0 %v3152
    %v3154 = vand.u32 %v117, 4294901760
    %v3155 = vsub.f32 %v117, %v3154
    %v3156 = vand.u32 %v3155, 4294901760
    %v3157 = vsub.f32 %v3155, %v3156
    %v3158 = vand.u32 %v3157, 4294901760
    %3159 = vmatpush.msra.mxu0 %v3158
    %v3160 = vand.u32 %v78, 4294901760
    %v3161 = vsub.f32 %v78, %v3160
    %v3162 = vand.u32 %v3161, 4294901760
    %v3163 = vsub.f32 %v3161, %v3162
    %v3164 = vand.u32 %v3163, 4294901760
    %3165 = vmatpush.msra.mxu0 %v3164
    %v3166 = vand.u32 %v181, 4294901760
    %3167 = vmatmul.f32.gmra.mxu0 %v3166
    %v3168 = vpop.f32.mrf.mxu0
    %v3169 = vadd.f32 %v3133, %v3168
    %3170 = vdwg.mxu0
    %3171 = vmatpush.msra.mxu0 0.0
    %3172 = vmatpush.msra.mxu0 0.0
    %3173 = vmatpush.msra.mxu0 0.0
    %3174 = vmatpush.msra.mxu0 0.0
    %3175 = vmatpush.msra.mxu0 0.0
    %3176 = vmatpush.msra.mxu0 0.0
    %3177 = vmatpush.msra.mxu0 0.0
    %3178 = vmatpush.msra.mxu0 0.0
    %3179 = vmatpush.msra.mxu0 0.0
    %3180 = vmatpush.msra.mxu0 0.0
    %3181 = vmatpush.msra.mxu0 0.0
    %3182 = vmatpush.msra.mxu0 0.0
    %3183 = vmatpush.msra.mxu0 0.0
    %v3184 = vand.u32 %v156, 4294901760
    %v3185 = vsub.f32 %v156, %v3184
    %3186 = vmatpush.msra.mxu0 %v3185
    %v3187 = vand.u32 %v117, 4294901760
    %v3188 = vsub.f32 %v117, %v3187
    %3189 = vmatpush.msra.mxu0 %v3188
    %v3190 = vand.u32 %v78, 4294901760
    %v3191 = vsub.f32 %v78, %v3190
    %3192 = vmatpush.msra.mxu0 %v3191
    %v3193 = vand.u32 %v181, 4294901760
    %v3194 = vsub.f32 %v181, %v3193
    %3195 = vmatmul.f32.gmra.mxu0 %v3194
    %v3196 = vpop.f32.mrf.mxu0
    %v3197 = vadd.f32 %v3169, %v3196
    %3198 = vdwg.mxu0
    %3199 = vmatpush.msra.mxu0 0.0
    %3200 = vmatpush.msra.mxu0 0.0
    %3201 = vmatpush.msra.mxu0 0.0
    %3202 = vmatpush.msra.mxu0 0.0
    %3203 = vmatpush.msra.mxu0 0.0
    %3204 = vmatpush.msra.mxu0 0.0
    %3205 = vmatpush.msra.mxu0 0.0
    %3206 = vmatpush.msra.mxu0 0.0
    %3207 = vmatpush.msra.mxu0 0.0
    %3208 = vmatpush.msra.mxu0 0.0
    %3209 = vmatpush.msra.mxu0 0.0
    %3210 = vmatpush.msra.mxu0 0.0
    %3211 = vmatpush.msra.mxu0 0.0
    %v3212 = vand.u32 %v156, 4294901760
    %3213 = vmatpush.msra.mxu0 %v3212
    %v3214 = vand.u32 %v117, 4294901760
    %3215 = vmatpush.msra.mxu0 %v3214
    %v3216 = vand.u32 %v78, 4294901760
    %3217 = vmatpush.msra.mxu0 %v3216
    %v3218 = vand.u32 %v181, 4294901760
    %v3219 = vsub.f32 %v181, %v3218
    %v3220 = vand.u32 %v3219, 4294901760
    %3221 = vmatmul.f32.gmra.mxu0 %v3220
    %v3222 = vpop.f32.mrf.mxu0
    %v3223 = vadd.f32 %v3197, %v3222
    %3224 = vdwg.mxu0
    %3225 = vmatpush.msra.mxu0 0.0
    %3226 = vmatpush.msra.mxu0 0.0
    %3227 = vmatpush.msra.mxu0 0.0
    %3228 = vmatpush.msra.mxu0 0.0
    %3229 = vmatpush.msra.mxu0 0.0
    %3230 = vmatpush.msra.mxu0 0.0
    %3231 = vmatpush.msra.mxu0 0.0
    %3232 = vmatpush.msra.mxu0 0.0
    %3233 = vmatpush.msra.mxu0 0.0
    %3234 = vmatpush.msra.mxu0 0.0
    %3235 = vmatpush.msra.mxu0 0.0
    %3236 = vmatpush.msra.mxu0 0.0
    %3237 = vmatpush.msra.mxu0 0.0
    %v3238 = vand.u32 %v156, 4294901760
    %v3239 = vsub.f32 %v156, %v3238
    %v3240 = vand.u32 %v3239, 4294901760
    %3241 = vmatpush.msra.mxu0 %v3240
    %v3242 = vand.u32 %v117, 4294901760
    %v3243 = vsub.f32 %v117, %v3242
    %v3244 = vand.u32 %v3243, 4294901760
    %3245 = vmatpush.msra.mxu0 %v3244
    %v3246 = vand.u32 %v78, 4294901760
    %v3247 = vsub.f32 %v78, %v3246
    %v3248 = vand.u32 %v3247, 4294901760
    %3249 = vmatpush.msra.mxu0 %v3248
    %v3250 = vand.u32 %v181, 4294901760
    %3251 = vmatmul.f32.gmra.mxu0 %v3250
    %v3252 = vpop.f32.mrf.mxu0
    %v3253 = vadd.f32 %v3223, %v3252
    %3254 = vdwg.mxu0
    %3255 = vmatpush.msra.mxu0 0.0
    %3256 = vmatpush.msra.mxu0 0.0
    %3257 = vmatpush.msra.mxu0 0.0
    %3258 = vmatpush.msra.mxu0 0.0
    %3259 = vmatpush.msra.mxu0 0.0
    %3260 = vmatpush.msra.mxu0 0.0
    %3261 = vmatpush.msra.mxu0 0.0
    %3262 = vmatpush.msra.mxu0 0.0
    %3263 = vmatpush.msra.mxu0 0.0
    %3264 = vmatpush.msra.mxu0 0.0
    %3265 = vmatpush.msra.mxu0 0.0
    %3266 = vmatpush.msra.mxu0 0.0
    %3267 = vmatpush.msra.mxu0 0.0
    %v3268 = vand.u32 %v156, 4294901760
    %3269 = vmatpush.msra.mxu0 %v3268
    %v3270 = vand.u32 %v117, 4294901760
    %3271 = vmatpush.msra.mxu0 %v3270
    %v3272 = vand.u32 %v78, 4294901760
    %3273 = vmatpush.msra.mxu0 %v3272
    %v3274 = vand.u32 %v181, 4294901760
    %3275 = vmatmul.f32.gmra.mxu0 %v3274
    %v3276 = vpop.f32.mrf.mxu0
    %v3277 = vadd.f32 %v3253, %v3276
    %3278 = vdwg.mxu0
    %3279 = vmatpush.msra.mxu0 0.0
    %3280 = vmatpush.msra.mxu0 0.0
    %3281 = vmatpush.msra.mxu0 0.0
    %3282 = vmatpush.msra.mxu0 0.0
    %3283 = vmatpush.msra.mxu0 0.0
    %3284 = vmatpush.msra.mxu0 0.0
    %3285 = vmatpush.msra.mxu0 0.0
    %3286 = vmatpush.msra.mxu0 0.0
    %3287 = vmatpush.msra.mxu0 0.0
    %3288 = vmatpush.msra.mxu0 0.0
    %3289 = vmatpush.msra.mxu0 0.0
    %3290 = vmatpush.msra.mxu0 0.0
    %3291 = vmatpush.msra.mxu0 0.0
    %v3292 = vand.u32 %v157, 4294901760
    %3293 = vmatpush.msra.mxu0 %v3292
    %v3294 = vand.u32 %v118, 4294901760
    %3295 = vmatpush.msra.mxu0 %v3294
    %v3296 = vand.u32 %v79, 4294901760
    %3297 = vmatpush.msra.mxu0 %v3296
    %v3298 = vand.u32 %v181, 4294901760
    %v3299 = vsub.f32 %v181, %v3298
    %v3300 = vand.u32 %v3299, 4294901760
    %v3301 = vsub.f32 %v3299, %v3300
    %v3302 = vand.u32 %v3301, 4294901760
    %3303 = vmatmul.f32.gmra.mxu0 %v3302
    %v3304 = vpop.f32.mrf.mxu0
    %v3305 = vadd.f32 0.0, %v3304
    %3306 = vdwg.mxu0
    %3307 = vmatpush.msra.mxu0 0.0
    %3308 = vmatpush.msra.mxu0 0.0
    %3309 = vmatpush.msra.mxu0 0.0
    %3310 = vmatpush.msra.mxu0 0.0
    %3311 = vmatpush.msra.mxu0 0.0
    %3312 = vmatpush.msra.mxu0 0.0
    %3313 = vmatpush.msra.mxu0 0.0
    %3314 = vmatpush.msra.mxu0 0.0
    %3315 = vmatpush.msra.mxu0 0.0
    %3316 = vmatpush.msra.mxu0 0.0
    %3317 = vmatpush.msra.mxu0 0.0
    %3318 = vmatpush.msra.mxu0 0.0
    %3319 = vmatpush.msra.mxu0 0.0
    %v3320 = vand.u32 %v157, 4294901760
    %v3321 = vsub.f32 %v157, %v3320
    %v3322 = vand.u32 %v3321, 4294901760
    %v3323 = vsub.f32 %v3321, %v3322
    %v3324 = vand.u32 %v3323, 4294901760
    %3325 = vmatpush.msra.mxu0 %v3324
    %v3326 = vand.u32 %v118, 4294901760
    %v3327 = vsub.f32 %v118, %v3326
    %v3328 = vand.u32 %v3327, 4294901760
    %v3329 = vsub.f32 %v3327, %v3328
    %v3330 = vand.u32 %v3329, 4294901760
    %3331 = vmatpush.msra.mxu0 %v3330
    %v3332 = vand.u32 %v79, 4294901760
    %v3333 = vsub.f32 %v79, %v3332
    %v3334 = vand.u32 %v3333, 4294901760
    %v3335 = vsub.f32 %v3333, %v3334
    %v3336 = vand.u32 %v3335, 4294901760
    %3337 = vmatpush.msra.mxu0 %v3336
    %v3338 = vand.u32 %v181, 4294901760
    %3339 = vmatmul.f32.gmra.mxu0 %v3338
    %v3340 = vpop.f32.mrf.mxu0
    %v3341 = vadd.f32 %v3305, %v3340
    %3342 = vdwg.mxu0
    %3343 = vmatpush.msra.mxu0 0.0
    %3344 = vmatpush.msra.mxu0 0.0
    %3345 = vmatpush.msra.mxu0 0.0
    %3346 = vmatpush.msra.mxu0 0.0
    %3347 = vmatpush.msra.mxu0 0.0
    %3348 = vmatpush.msra.mxu0 0.0
    %3349 = vmatpush.msra.mxu0 0.0
    %3350 = vmatpush.msra.mxu0 0.0
    %3351 = vmatpush.msra.mxu0 0.0
    %3352 = vmatpush.msra.mxu0 0.0
    %3353 = vmatpush.msra.mxu0 0.0
    %3354 = vmatpush.msra.mxu0 0.0
    %3355 = vmatpush.msra.mxu0 0.0
    %v3356 = vand.u32 %v157, 4294901760
    %v3357 = vsub.f32 %v157, %v3356
    %3358 = vmatpush.msra.mxu0 %v3357
    %v3359 = vand.u32 %v118, 4294901760
    %v3360 = vsub.f32 %v118, %v3359
    %3361 = vmatpush.msra.mxu0 %v3360
    %v3362 = vand.u32 %v79, 4294901760
    %v3363 = vsub.f32 %v79, %v3362
    %3364 = vmatpush.msra.mxu0 %v3363
    %v3365 = vand.u32 %v181, 4294901760
    %v3366 = vsub.f32 %v181, %v3365
    %3367 = vmatmul.f32.gmra.mxu0 %v3366
    %v3368 = vpop.f32.mrf.mxu0
    %v3369 = vadd.f32 %v3341, %v3368
    %3370 = vdwg.mxu0
    %3371 = vmatpush.msra.mxu0 0.0
    %3372 = vmatpush.msra.mxu0 0.0
    %3373 = vmatpush.msra.mxu0 0.0
    %3374 = vmatpush.msra.mxu0 0.0
    %3375 = vmatpush.msra.mxu0 0.0
    %3376 = vmatpush.msra.mxu0 0.0
    %3377 = vmatpush.msra.mxu0 0.0
    %3378 = vmatpush.msra.mxu0 0.0
    %3379 = vmatpush.msra.mxu0 0.0
    %3380 = vmatpush.msra.mxu0 0.0
    %3381 = vmatpush.msra.mxu0 0.0
    %3382 = vmatpush.msra.mxu0 0.0
    %3383 = vmatpush.msra.mxu0 0.0
    %v3384 = vand.u32 %v157, 4294901760
    %3385 = vmatpush.msra.mxu0 %v3384
    %v3386 = vand.u32 %v118, 4294901760
    %3387 = vmatpush.msra.mxu0 %v3386
    %v3388 = vand.u32 %v79, 4294901760
    %3389 = vmatpush.msra.mxu0 %v3388
    %v3390 = vand.u32 %v181, 4294901760
    %v3391 = vsub.f32 %v181, %v3390
    %v3392 = vand.u32 %v3391, 4294901760
    %3393 = vmatmul.f32.gmra.mxu0 %v3392
    %v3394 = vpop.f32.mrf.mxu0
    %v3395 = vadd.f32 %v3369, %v3394
    %3396 = vdwg.mxu0
    %3397 = vmatpush.msra.mxu0 0.0
    %3398 = vmatpush.msra.mxu0 0.0
    %3399 = vmatpush.msra.mxu0 0.0
    %3400 = vmatpush.msra.mxu0 0.0
    %3401 = vmatpush.msra.mxu0 0.0
    %3402 = vmatpush.msra.mxu0 0.0
    %3403 = vmatpush.msra.mxu0 0.0
    %3404 = vmatpush.msra.mxu0 0.0
    %3405 = vmatpush.msra.mxu0 0.0
    %3406 = vmatpush.msra.mxu0 0.0
    %3407 = vmatpush.msra.mxu0 0.0
    %3408 = vmatpush.msra.mxu0 0.0
    %3409 = vmatpush.msra.mxu0 0.0
    %v3410 = vand.u32 %v157, 4294901760
    %v3411 = vsub.f32 %v157, %v3410
    %v3412 = vand.u32 %v3411, 4294901760
    %3413 = vmatpush.msra.mxu0 %v3412
    %v3414 = vand.u32 %v118, 4294901760
    %v3415 = vsub.f32 %v118, %v3414
    %v3416 = vand.u32 %v3415, 4294901760
    %3417 = vmatpush.msra.mxu0 %v3416
    %v3418 = vand.u32 %v79, 4294901760
    %v3419 = vsub.f32 %v79, %v3418
    %v3420 = vand.u32 %v3419, 4294901760
    %3421 = vmatpush.msra.mxu0 %v3420
    %v3422 = vand.u32 %v181, 4294901760
    %3423 = vmatmul.f32.gmra.mxu0 %v3422
    %v3424 = vpop.f32.mrf.mxu0
    %v3425 = vadd.f32 %v3395, %v3424
    %3426 = vdwg.mxu0
    %3427 = vmatpush.msra.mxu0 0.0
    %3428 = vmatpush.msra.mxu0 0.0
    %3429 = vmatpush.msra.mxu0 0.0
    %3430 = vmatpush.msra.mxu0 0.0
    %3431 = vmatpush.msra.mxu0 0.0
    %3432 = vmatpush.msra.mxu0 0.0
    %3433 = vmatpush.msra.mxu0 0.0
    %3434 = vmatpush.msra.mxu0 0.0
    %3435 = vmatpush.msra.mxu0 0.0
    %3436 = vmatpush.msra.mxu0 0.0
    %3437 = vmatpush.msra.mxu0 0.0
    %3438 = vmatpush.msra.mxu0 0.0
    %3439 = vmatpush.msra.mxu0 0.0
    %v3440 = vand.u32 %v157, 4294901760
    %3441 = vmatpush.msra.mxu0 %v3440
    %v3442 = vand.u32 %v118, 4294901760
    %3443 = vmatpush.msra.mxu0 %v3442
    %v3444 = vand.u32 %v79, 4294901760
    %3445 = vmatpush.msra.mxu0 %v3444
    %v3446 = vand.u32 %v181, 4294901760
    %3447 = vmatmul.f32.gmra.mxu0 %v3446
    %v3448 = vpop.f32.mrf.mxu0
    %v3449 = vadd.f32 %v3425, %v3448
    %3450 = vdwg.mxu0
    %3451 = vmatpush.msra.mxu0 0.0
    %3452 = vmatpush.msra.mxu0 0.0
    %3453 = vmatpush.msra.mxu0 0.0
    %3454 = vmatpush.msra.mxu0 0.0
    %3455 = vmatpush.msra.mxu0 0.0
    %3456 = vmatpush.msra.mxu0 0.0
    %3457 = vmatpush.msra.mxu0 0.0
    %3458 = vmatpush.msra.mxu0 0.0
    %3459 = vmatpush.msra.mxu0 0.0
    %3460 = vmatpush.msra.mxu0 0.0
    %3461 = vmatpush.msra.mxu0 0.0
    %3462 = vmatpush.msra.mxu0 0.0
    %3463 = vmatpush.msra.mxu0 0.0
    %v3464 = vand.u32 %v158, 4294901760
    %3465 = vmatpush.msra.mxu0 %v3464
    %v3466 = vand.u32 %v119, 4294901760
    %3467 = vmatpush.msra.mxu0 %v3466
    %v3468 = vand.u32 %v80, 4294901760
    %3469 = vmatpush.msra.mxu0 %v3468
    %v3470 = vand.u32 %v181, 4294901760
    %v3471 = vsub.f32 %v181, %v3470
    %v3472 = vand.u32 %v3471, 4294901760
    %v3473 = vsub.f32 %v3471, %v3472
    %v3474 = vand.u32 %v3473, 4294901760
    %3475 = vmatmul.f32.gmra.mxu0 %v3474
    %v3476 = vpop.f32.mrf.mxu0
    %v3477 = vadd.f32 0.0, %v3476
    %3478 = vdwg.mxu0
    %3479 = vmatpush.msra.mxu0 0.0
    %3480 = vmatpush.msra.mxu0 0.0
    %3481 = vmatpush.msra.mxu0 0.0
    %3482 = vmatpush.msra.mxu0 0.0
    %3483 = vmatpush.msra.mxu0 0.0
    %3484 = vmatpush.msra.mxu0 0.0
    %3485 = vmatpush.msra.mxu0 0.0
    %3486 = vmatpush.msra.mxu0 0.0
    %3487 = vmatpush.msra.mxu0 0.0
    %3488 = vmatpush.msra.mxu0 0.0
    %3489 = vmatpush.msra.mxu0 0.0
    %3490 = vmatpush.msra.mxu0 0.0
    %3491 = vmatpush.msra.mxu0 0.0
    %v3492 = vand.u32 %v158, 4294901760
    %v3493 = vsub.f32 %v158, %v3492
    %v3494 = vand.u32 %v3493, 4294901760
    %v3495 = vsub.f32 %v3493, %v3494
    %v3496 = vand.u32 %v3495, 4294901760
    %3497 = vmatpush.msra.mxu0 %v3496
    %v3498 = vand.u32 %v119, 4294901760
    %v3499 = vsub.f32 %v119, %v3498
    %v3500 = vand.u32 %v3499, 4294901760
    %v3501 = vsub.f32 %v3499, %v3500
    %v3502 = vand.u32 %v3501, 4294901760
    %3503 = vmatpush.msra.mxu0 %v3502
    %v3504 = vand.u32 %v80, 4294901760
    %v3505 = vsub.f32 %v80, %v3504
    %v3506 = vand.u32 %v3505, 4294901760
    %v3507 = vsub.f32 %v3505, %v3506
    %v3508 = vand.u32 %v3507, 4294901760
    %3509 = vmatpush.msra.mxu0 %v3508
    %v3510 = vand.u32 %v181, 4294901760
    %3511 = vmatmul.f32.gmra.mxu0 %v3510
    %v3512 = vpop.f32.mrf.mxu0
    %v3513 = vadd.f32 %v3477, %v3512
    %3514 = vdwg.mxu0
    %3515 = vmatpush.msra.mxu0 0.0
    %3516 = vmatpush.msra.mxu0 0.0
    %3517 = vmatpush.msra.mxu0 0.0
    %3518 = vmatpush.msra.mxu0 0.0
    %3519 = vmatpush.msra.mxu0 0.0
    %3520 = vmatpush.msra.mxu0 0.0
    %3521 = vmatpush.msra.mxu0 0.0
    %3522 = vmatpush.msra.mxu0 0.0
    %3523 = vmatpush.msra.mxu0 0.0
    %3524 = vmatpush.msra.mxu0 0.0
    %3525 = vmatpush.msra.mxu0 0.0
    %3526 = vmatpush.msra.mxu0 0.0
    %3527 = vmatpush.msra.mxu0 0.0
    %v3528 = vand.u32 %v158, 4294901760
    %v3529 = vsub.f32 %v158, %v3528
    %3530 = vmatpush.msra.mxu0 %v3529
    %v3531 = vand.u32 %v119, 4294901760
    %v3532 = vsub.f32 %v119, %v3531
    %3533 = vmatpush.msra.mxu0 %v3532
    %v3534 = vand.u32 %v80, 4294901760
    %v3535 = vsub.f32 %v80, %v3534
    %3536 = vmatpush.msra.mxu0 %v3535
    %v3537 = vand.u32 %v181, 4294901760
    %v3538 = vsub.f32 %v181, %v3537
    %3539 = vmatmul.f32.gmra.mxu0 %v3538
    %v3540 = vpop.f32.mrf.mxu0
    %v3541 = vadd.f32 %v3513, %v3540
    %3542 = vdwg.mxu0
    %3543 = vmatpush.msra.mxu0 0.0
    %3544 = vmatpush.msra.mxu0 0.0
    %3545 = vmatpush.msra.mxu0 0.0
    %3546 = vmatpush.msra.mxu0 0.0
    %3547 = vmatpush.msra.mxu0 0.0
    %3548 = vmatpush.msra.mxu0 0.0
    %3549 = vmatpush.msra.mxu0 0.0
    %3550 = vmatpush.msra.mxu0 0.0
    %3551 = vmatpush.msra.mxu0 0.0
    %3552 = vmatpush.msra.mxu0 0.0
    %3553 = vmatpush.msra.mxu0 0.0
    %3554 = vmatpush.msra.mxu0 0.0
    %3555 = vmatpush.msra.mxu0 0.0
    %v3556 = vand.u32 %v158, 4294901760
    %3557 = vmatpush.msra.mxu0 %v3556
    %v3558 = vand.u32 %v119, 4294901760
    %3559 = vmatpush.msra.mxu0 %v3558
    %v3560 = vand.u32 %v80, 4294901760
    %3561 = vmatpush.msra.mxu0 %v3560
    %v3562 = vand.u32 %v181, 4294901760
    %v3563 = vsub.f32 %v181, %v3562
    %v3564 = vand.u32 %v3563, 4294901760
    %3565 = vmatmul.f32.gmra.mxu0 %v3564
    %v3566 = vpop.f32.mrf.mxu0
    %v3567 = vadd.f32 %v3541, %v3566
    %3568 = vdwg.mxu0
    %3569 = vmatpush.msra.mxu0 0.0
    %3570 = vmatpush.msra.mxu0 0.0
    %3571 = vmatpush.msra.mxu0 0.0
    %3572 = vmatpush.msra.mxu0 0.0
    %3573 = vmatpush.msra.mxu0 0.0
    %3574 = vmatpush.msra.mxu0 0.0
    %3575 = vmatpush.msra.mxu0 0.0
    %3576 = vmatpush.msra.mxu0 0.0
    %3577 = vmatpush.msra.mxu0 0.0
    %3578 = vmatpush.msra.mxu0 0.0
    %3579 = vmatpush.msra.mxu0 0.0
    %3580 = vmatpush.msra.mxu0 0.0
    %3581 = vmatpush.msra.mxu0 0.0
    %v3582 = vand.u32 %v158, 4294901760
    %v3583 = vsub.f32 %v158, %v3582
    %v3584 = vand.u32 %v3583, 4294901760
    %3585 = vmatpush.msra.mxu0 %v3584
    %v3586 = vand.u32 %v119, 4294901760
    %v3587 = vsub.f32 %v119, %v3586
    %v3588 = vand.u32 %v3587, 4294901760
    %3589 = vmatpush.msra.mxu0 %v3588
    %v3590 = vand.u32 %v80, 4294901760
    %v3591 = vsub.f32 %v80, %v3590
    %v3592 = vand.u32 %v3591, 4294901760
    %3593 = vmatpush.msra.mxu0 %v3592
    %v3594 = vand.u32 %v181, 4294901760
    %3595 = vmatmul.f32.gmra.mxu0 %v3594
    %v3596 = vpop.f32.mrf.mxu0
    %v3597 = vadd.f32 %v3567, %v3596
    %3598 = vdwg.mxu0
    %3599 = vmatpush.msra.mxu0 0.0
    %3600 = vmatpush.msra.mxu0 0.0
    %3601 = vmatpush.msra.mxu0 0.0
    %3602 = vmatpush.msra.mxu0 0.0
    %3603 = vmatpush.msra.mxu0 0.0
    %3604 = vmatpush.msra.mxu0 0.0
    %3605 = vmatpush.msra.mxu0 0.0
    %3606 = vmatpush.msra.mxu0 0.0
    %3607 = vmatpush.msra.mxu0 0.0
    %3608 = vmatpush.msra.mxu0 0.0
    %3609 = vmatpush.msra.mxu0 0.0
    %3610 = vmatpush.msra.mxu0 0.0
    %3611 = vmatpush.msra.mxu0 0.0
    %v3612 = vand.u32 %v158, 4294901760
    %3613 = vmatpush.msra.mxu0 %v3612
    %v3614 = vand.u32 %v119, 4294901760
    %3615 = vmatpush.msra.mxu0 %v3614
    %v3616 = vand.u32 %v80, 4294901760
    %3617 = vmatpush.msra.mxu0 %v3616
    %v3618 = vand.u32 %v181, 4294901760
    %3619 = vmatmul.f32.gmra.mxu0 %v3618
    %v3620 = vpop.f32.mrf.mxu0
    %v3621 = vadd.f32 %v3597, %v3620
    %3622 = vdwg.mxu0
    %3623 = vmatpush.msra.mxu0 0.0
    %3624 = vmatpush.msra.mxu0 0.0
    %3625 = vmatpush.msra.mxu0 0.0
    %3626 = vmatpush.msra.mxu0 0.0
    %3627 = vmatpush.msra.mxu0 0.0
    %3628 = vmatpush.msra.mxu0 0.0
    %3629 = vmatpush.msra.mxu0 0.0
    %3630 = vmatpush.msra.mxu0 0.0
    %3631 = vmatpush.msra.mxu0 0.0
    %3632 = vmatpush.msra.mxu0 0.0
    %3633 = vmatpush.msra.mxu0 0.0
    %3634 = vmatpush.msra.mxu0 0.0
    %3635 = vmatpush.msra.mxu0 0.0
    %v3636 = vand.u32 %v159, 4294901760
    %3637 = vmatpush.msra.mxu0 %v3636
    %v3638 = vand.u32 %v120, 4294901760
    %3639 = vmatpush.msra.mxu0 %v3638
    %v3640 = vand.u32 %v81, 4294901760
    %3641 = vmatpush.msra.mxu0 %v3640
    %v3642 = vand.u32 %v181, 4294901760
    %v3643 = vsub.f32 %v181, %v3642
    %v3644 = vand.u32 %v3643, 4294901760
    %v3645 = vsub.f32 %v3643, %v3644
    %v3646 = vand.u32 %v3645, 4294901760
    %3647 = vmatmul.f32.gmra.mxu0 %v3646
    %v3648 = vpop.f32.mrf.mxu0
    %v3649 = vadd.f32 0.0, %v3648
    %3650 = vdwg.mxu0
    %3651 = vmatpush.msra.mxu0 0.0
    %3652 = vmatpush.msra.mxu0 0.0
    %3653 = vmatpush.msra.mxu0 0.0
    %3654 = vmatpush.msra.mxu0 0.0
    %3655 = vmatpush.msra.mxu0 0.0
    %3656 = vmatpush.msra.mxu0 0.0
    %3657 = vmatpush.msra.mxu0 0.0
    %3658 = vmatpush.msra.mxu0 0.0
    %3659 = vmatpush.msra.mxu0 0.0
    %3660 = vmatpush.msra.mxu0 0.0
    %3661 = vmatpush.msra.mxu0 0.0
    %3662 = vmatpush.msra.mxu0 0.0
    %3663 = vmatpush.msra.mxu0 0.0
    %v3664 = vand.u32 %v159, 4294901760
    %v3665 = vsub.f32 %v159, %v3664
    %v3666 = vand.u32 %v3665, 4294901760
    %v3667 = vsub.f32 %v3665, %v3666
    %v3668 = vand.u32 %v3667, 4294901760
    %3669 = vmatpush.msra.mxu0 %v3668
    %v3670 = vand.u32 %v120, 4294901760
    %v3671 = vsub.f32 %v120, %v3670
    %v3672 = vand.u32 %v3671, 4294901760
    %v3673 = vsub.f32 %v3671, %v3672
    %v3674 = vand.u32 %v3673, 4294901760
    %3675 = vmatpush.msra.mxu0 %v3674
    %v3676 = vand.u32 %v81, 4294901760
    %v3677 = vsub.f32 %v81, %v3676
    %v3678 = vand.u32 %v3677, 4294901760
    %v3679 = vsub.f32 %v3677, %v3678
    %v3680 = vand.u32 %v3679, 4294901760
    %3681 = vmatpush.msra.mxu0 %v3680
    %v3682 = vand.u32 %v181, 4294901760
    %3683 = vmatmul.f32.gmra.mxu0 %v3682
    %v3684 = vpop.f32.mrf.mxu0
    %v3685 = vadd.f32 %v3649, %v3684
    %3686 = vdwg.mxu0
    %3687 = vmatpush.msra.mxu0 0.0
    %3688 = vmatpush.msra.mxu0 0.0
    %3689 = vmatpush.msra.mxu0 0.0
    %3690 = vmatpush.msra.mxu0 0.0
    %3691 = vmatpush.msra.mxu0 0.0
    %3692 = vmatpush.msra.mxu0 0.0
    %3693 = vmatpush.msra.mxu0 0.0
    %3694 = vmatpush.msra.mxu0 0.0
    %3695 = vmatpush.msra.mxu0 0.0
    %3696 = vmatpush.msra.mxu0 0.0
    %3697 = vmatpush.msra.mxu0 0.0
    %3698 = vmatpush.msra.mxu0 0.0
    %3699 = vmatpush.msra.mxu0 0.0
    %v3700 = vand.u32 %v159, 4294901760
    %v3701 = vsub.f32 %v159, %v3700
    %3702 = vmatpush.msra.mxu0 %v3701
    %v3703 = vand.u32 %v120, 4294901760
    %v3704 = vsub.f32 %v120, %v3703
    %3705 = vmatpush.msra.mxu0 %v3704
    %v3706 = vand.u32 %v81, 4294901760
    %v3707 = vsub.f32 %v81, %v3706
    %3708 = vmatpush.msra.mxu0 %v3707
    %v3709 = vand.u32 %v181, 4294901760
    %v3710 = vsub.f32 %v181, %v3709
    %3711 = vmatmul.f32.gmra.mxu0 %v3710
    %v3712 = vpop.f32.mrf.mxu0
    %v3713 = vadd.f32 %v3685, %v3712
    %3714 = vdwg.mxu0
    %3715 = vmatpush.msra.mxu0 0.0
    %3716 = vmatpush.msra.mxu0 0.0
    %3717 = vmatpush.msra.mxu0 0.0
    %3718 = vmatpush.msra.mxu0 0.0
    %3719 = vmatpush.msra.mxu0 0.0
    %3720 = vmatpush.msra.mxu0 0.0
    %3721 = vmatpush.msra.mxu0 0.0
    %3722 = vmatpush.msra.mxu0 0.0
    %3723 = vmatpush.msra.mxu0 0.0
    %3724 = vmatpush.msra.mxu0 0.0
    %3725 = vmatpush.msra.mxu0 0.0
    %3726 = vmatpush.msra.mxu0 0.0
    %3727 = vmatpush.msra.mxu0 0.0
    %v3728 = vand.u32 %v159, 4294901760
    %3729 = vmatpush.msra.mxu0 %v3728
    %v3730 = vand.u32 %v120, 4294901760
    %3731 = vmatpush.msra.mxu0 %v3730
    %v3732 = vand.u32 %v81, 4294901760
    %3733 = vmatpush.msra.mxu0 %v3732
    %v3734 = vand.u32 %v181, 4294901760
    %v3735 = vsub.f32 %v181, %v3734
    %v3736 = vand.u32 %v3735, 4294901760
    %3737 = vmatmul.f32.gmra.mxu0 %v3736
    %v3738 = vpop.f32.mrf.mxu0
    %v3739 = vadd.f32 %v3713, %v3738
    %3740 = vdwg.mxu0
    %3741 = vmatpush.msra.mxu0 0.0
    %3742 = vmatpush.msra.mxu0 0.0
    %3743 = vmatpush.msra.mxu0 0.0
    %3744 = vmatpush.msra.mxu0 0.0
    %3745 = vmatpush.msra.mxu0 0.0
    %3746 = vmatpush.msra.mxu0 0.0
    %3747 = vmatpush.msra.mxu0 0.0
    %3748 = vmatpush.msra.mxu0 0.0
    %3749 = vmatpush.msra.mxu0 0.0
    %3750 = vmatpush.msra.mxu0 0.0
    %3751 = vmatpush.msra.mxu0 0.0
    %3752 = vmatpush.msra.mxu0 0.0
    %3753 = vmatpush.msra.mxu0 0.0
    %v3754 = vand.u32 %v159, 4294901760
    %v3755 = vsub.f32 %v159, %v3754
    %v3756 = vand.u32 %v3755, 4294901760
    %3757 = vmatpush.msra.mxu0 %v3756
    %v3758 = vand.u32 %v120, 4294901760
    %v3759 = vsub.f32 %v120, %v3758
    %v3760 = vand.u32 %v3759, 4294901760
    %3761 = vmatpush.msra.mxu0 %v3760
    %v3762 = vand.u32 %v81, 4294901760
    %v3763 = vsub.f32 %v81, %v3762
    %v3764 = vand.u32 %v3763, 4294901760
    %3765 = vmatpush.msra.mxu0 %v3764
    %v3766 = vand.u32 %v181, 4294901760
    %3767 = vmatmul.f32.gmra.mxu0 %v3766
    %v3768 = vpop.f32.mrf.mxu0
    %v3769 = vadd.f32 %v3739, %v3768
    %3770 = vdwg.mxu0
    %3771 = vmatpush.msra.mxu0 0.0
    %3772 = vmatpush.msra.mxu0 0.0
    %3773 = vmatpush.msra.mxu0 0.0
    %3774 = vmatpush.msra.mxu0 0.0
    %3775 = vmatpush.msra.mxu0 0.0
    %3776 = vmatpush.msra.mxu0 0.0
    %3777 = vmatpush.msra.mxu0 0.0
    %3778 = vmatpush.msra.mxu0 0.0
    %3779 = vmatpush.msra.mxu0 0.0
    %3780 = vmatpush.msra.mxu0 0.0
    %3781 = vmatpush.msra.mxu0 0.0
    %3782 = vmatpush.msra.mxu0 0.0
    %3783 = vmatpush.msra.mxu0 0.0
    %v3784 = vand.u32 %v159, 4294901760
    %3785 = vmatpush.msra.mxu0 %v3784
    %v3786 = vand.u32 %v120, 4294901760
    %3787 = vmatpush.msra.mxu0 %v3786
    %v3788 = vand.u32 %v81, 4294901760
    %3789 = vmatpush.msra.mxu0 %v3788
    %v3790 = vand.u32 %v181, 4294901760
    %3791 = vmatmul.f32.gmra.mxu0 %v3790
    %v3792 = vpop.f32.mrf.mxu0
    %v3793 = vadd.f32 %v3769, %v3792
    %3794 = vdwg.mxu0
    %3795 = vmatpush.msra.mxu0 0.0
    %3796 = vmatpush.msra.mxu0 0.0
    %3797 = vmatpush.msra.mxu0 0.0
    %3798 = vmatpush.msra.mxu0 0.0
    %3799 = vmatpush.msra.mxu0 0.0
    %3800 = vmatpush.msra.mxu0 0.0
    %3801 = vmatpush.msra.mxu0 0.0
    %3802 = vmatpush.msra.mxu0 0.0
    %3803 = vmatpush.msra.mxu0 0.0
    %3804 = vmatpush.msra.mxu0 0.0
    %3805 = vmatpush.msra.mxu0 0.0
    %3806 = vmatpush.msra.mxu0 0.0
    %3807 = vmatpush.msra.mxu0 0.0
    %v3808 = vand.u32 %v160, 4294901760
    %3809 = vmatpush.msra.mxu0 %v3808
    %v3810 = vand.u32 %v121, 4294901760
    %3811 = vmatpush.msra.mxu0 %v3810
    %v3812 = vand.u32 %v82, 4294901760
    %3813 = vmatpush.msra.mxu0 %v3812
    %v3814 = vand.u32 %v181, 4294901760
    %v3815 = vsub.f32 %v181, %v3814
    %v3816 = vand.u32 %v3815, 4294901760
    %v3817 = vsub.f32 %v3815, %v3816
    %v3818 = vand.u32 %v3817, 4294901760
    %3819 = vmatmul.f32.gmra.mxu0 %v3818
    %v3820 = vpop.f32.mrf.mxu0
    %v3821 = vadd.f32 0.0, %v3820
    %3822 = vdwg.mxu0
    %3823 = vmatpush.msra.mxu0 0.0
    %3824 = vmatpush.msra.mxu0 0.0
    %3825 = vmatpush.msra.mxu0 0.0
    %3826 = vmatpush.msra.mxu0 0.0
    %3827 = vmatpush.msra.mxu0 0.0
    %3828 = vmatpush.msra.mxu0 0.0
    %3829 = vmatpush.msra.mxu0 0.0
    %3830 = vmatpush.msra.mxu0 0.0
    %3831 = vmatpush.msra.mxu0 0.0
    %3832 = vmatpush.msra.mxu0 0.0
    %3833 = vmatpush.msra.mxu0 0.0
    %3834 = vmatpush.msra.mxu0 0.0
    %3835 = vmatpush.msra.mxu0 0.0
    %v3836 = vand.u32 %v160, 4294901760
    %v3837 = vsub.f32 %v160, %v3836
    %v3838 = vand.u32 %v3837, 4294901760
    %v3839 = vsub.f32 %v3837, %v3838
    %v3840 = vand.u32 %v3839, 4294901760
    %3841 = vmatpush.msra.mxu0 %v3840
    %v3842 = vand.u32 %v121, 4294901760
    %v3843 = vsub.f32 %v121, %v3842
    %v3844 = vand.u32 %v3843, 4294901760
    %v3845 = vsub.f32 %v3843, %v3844
    %v3846 = vand.u32 %v3845, 4294901760
    %3847 = vmatpush.msra.mxu0 %v3846
    %v3848 = vand.u32 %v82, 4294901760
    %v3849 = vsub.f32 %v82, %v3848
    %v3850 = vand.u32 %v3849, 4294901760
    %v3851 = vsub.f32 %v3849, %v3850
    %v3852 = vand.u32 %v3851, 4294901760
    %3853 = vmatpush.msra.mxu0 %v3852
    %v3854 = vand.u32 %v181, 4294901760
    %3855 = vmatmul.f32.gmra.mxu0 %v3854
    %v3856 = vpop.f32.mrf.mxu0
    %v3857 = vadd.f32 %v3821, %v3856
    %3858 = vdwg.mxu0
    %3859 = vmatpush.msra.mxu0 0.0
    %3860 = vmatpush.msra.mxu0 0.0
    %3861 = vmatpush.msra.mxu0 0.0
    %3862 = vmatpush.msra.mxu0 0.0
    %3863 = vmatpush.msra.mxu0 0.0
    %3864 = vmatpush.msra.mxu0 0.0
    %3865 = vmatpush.msra.mxu0 0.0
    %3866 = vmatpush.msra.mxu0 0.0
    %3867 = vmatpush.msra.mxu0 0.0
    %3868 = vmatpush.msra.mxu0 0.0
    %3869 = vmatpush.msra.mxu0 0.0
    %3870 = vmatpush.msra.mxu0 0.0
    %3871 = vmatpush.msra.mxu0 0.0
    %v3872 = vand.u32 %v160, 4294901760
    %v3873 = vsub.f32 %v160, %v3872
    %3874 = vmatpush.msra.mxu0 %v3873
    %v3875 = vand.u32 %v121, 4294901760
    %v3876 = vsub.f32 %v121, %v3875
    %3877 = vmatpush.msra.mxu0 %v3876
    %v3878 = vand.u32 %v82, 4294901760
    %v3879 = vsub.f32 %v82, %v3878
    %3880 = vmatpush.msra.mxu0 %v3879
    %v3881 = vand.u32 %v181, 4294901760
    %v3882 = vsub.f32 %v181, %v3881
    %3883 = vmatmul.f32.gmra.mxu0 %v3882
    %v3884 = vpop.f32.mrf.mxu0
    %v3885 = vadd.f32 %v3857, %v3884
    %3886 = vdwg.mxu0
    %3887 = vmatpush.msra.mxu0 0.0
    %3888 = vmatpush.msra.mxu0 0.0
    %3889 = vmatpush.msra.mxu0 0.0
    %3890 = vmatpush.msra.mxu0 0.0
    %3891 = vmatpush.msra.mxu0 0.0
    %3892 = vmatpush.msra.mxu0 0.0
    %3893 = vmatpush.msra.mxu0 0.0
    %3894 = vmatpush.msra.mxu0 0.0
    %3895 = vmatpush.msra.mxu0 0.0
    %3896 = vmatpush.msra.mxu0 0.0
    %3897 = vmatpush.msra.mxu0 0.0
    %3898 = vmatpush.msra.mxu0 0.0
    %3899 = vmatpush.msra.mxu0 0.0
    %v3900 = vand.u32 %v160, 4294901760
    %3901 = vmatpush.msra.mxu0 %v3900
    %v3902 = vand.u32 %v121, 4294901760
    %3903 = vmatpush.msra.mxu0 %v3902
    %v3904 = vand.u32 %v82, 4294901760
    %3905 = vmatpush.msra.mxu0 %v3904
    %v3906 = vand.u32 %v181, 4294901760
    %v3907 = vsub.f32 %v181, %v3906
    %v3908 = vand.u32 %v3907, 4294901760
    %3909 = vmatmul.f32.gmra.mxu0 %v3908
    %v3910 = vpop.f32.mrf.mxu0
    %v3911 = vadd.f32 %v3885, %v3910
    %3912 = vdwg.mxu0
    %3913 = vmatpush.msra.mxu0 0.0
    %3914 = vmatpush.msra.mxu0 0.0
    %3915 = vmatpush.msra.mxu0 0.0
    %3916 = vmatpush.msra.mxu0 0.0
    %3917 = vmatpush.msra.mxu0 0.0
    %3918 = vmatpush.msra.mxu0 0.0
    %3919 = vmatpush.msra.mxu0 0.0
    %3920 = vmatpush.msra.mxu0 0.0
    %3921 = vmatpush.msra.mxu0 0.0
    %3922 = vmatpush.msra.mxu0 0.0
    %3923 = vmatpush.msra.mxu0 0.0
    %3924 = vmatpush.msra.mxu0 0.0
    %3925 = vmatpush.msra.mxu0 0.0
    %v3926 = vand.u32 %v160, 4294901760
    %v3927 = vsub.f32 %v160, %v3926
    %v3928 = vand.u32 %v3927, 4294901760
    %3929 = vmatpush.msra.mxu0 %v3928
    %v3930 = vand.u32 %v121, 4294901760
    %v3931 = vsub.f32 %v121, %v3930
    %v3932 = vand.u32 %v3931, 4294901760
    %3933 = vmatpush.msra.mxu0 %v3932
    %v3934 = vand.u32 %v82, 4294901760
    %v3935 = vsub.f32 %v82, %v3934
    %v3936 = vand.u32 %v3935, 4294901760
    %3937 = vmatpush.msra.mxu0 %v3936
    %v3938 = vand.u32 %v181, 4294901760
    %3939 = vmatmul.f32.gmra.mxu0 %v3938
    %v3940 = vpop.f32.mrf.mxu0
    %v3941 = vadd.f32 %v3911, %v3940
    %3942 = vdwg.mxu0
    %3943 = vmatpush.msra.mxu0 0.0
    %3944 = vmatpush.msra.mxu0 0.0
    %3945 = vmatpush.msra.mxu0 0.0
    %3946 = vmatpush.msra.mxu0 0.0
    %3947 = vmatpush.msra.mxu0 0.0
    %3948 = vmatpush.msra.mxu0 0.0
    %3949 = vmatpush.msra.mxu0 0.0
    %3950 = vmatpush.msra.mxu0 0.0
    %3951 = vmatpush.msra.mxu0 0.0
    %3952 = vmatpush.msra.mxu0 0.0
    %3953 = vmatpush.msra.mxu0 0.0
    %3954 = vmatpush.msra.mxu0 0.0
    %3955 = vmatpush.msra.mxu0 0.0
    %v3956 = vand.u32 %v160, 4294901760
    %3957 = vmatpush.msra.mxu0 %v3956
    %v3958 = vand.u32 %v121, 4294901760
    %3959 = vmatpush.msra.mxu0 %v3958
    %v3960 = vand.u32 %v82, 4294901760
    %3961 = vmatpush.msra.mxu0 %v3960
    %v3962 = vand.u32 %v181, 4294901760
    %3963 = vmatmul.f32.gmra.mxu0 %v3962
    %v3964 = vpop.f32.mrf.mxu0
    %v3965 = vadd.f32 %v3941, %v3964
    %3966 = vdwg.mxu0
    %3967 = vmatpush.msra.mxu0 0.0
    %3968 = vmatpush.msra.mxu0 0.0
    %3969 = vmatpush.msra.mxu0 0.0
    %3970 = vmatpush.msra.mxu0 0.0
    %3971 = vmatpush.msra.mxu0 0.0
    %3972 = vmatpush.msra.mxu0 0.0
    %3973 = vmatpush.msra.mxu0 0.0
    %3974 = vmatpush.msra.mxu0 0.0
    %3975 = vmatpush.msra.mxu0 0.0
    %3976 = vmatpush.msra.mxu0 0.0
    %3977 = vmatpush.msra.mxu0 0.0
    %3978 = vmatpush.msra.mxu0 0.0
    %3979 = vmatpush.msra.mxu0 0.0
    %v3980 = vand.u32 %v161, 4294901760
    %3981 = vmatpush.msra.mxu0 %v3980
    %v3982 = vand.u32 %v122, 4294901760
    %3983 = vmatpush.msra.mxu0 %v3982
    %v3984 = vand.u32 %v83, 4294901760
    %3985 = vmatpush.msra.mxu0 %v3984
    %v3986 = vand.u32 %v181, 4294901760
    %v3987 = vsub.f32 %v181, %v3986
    %v3988 = vand.u32 %v3987, 4294901760
    %v3989 = vsub.f32 %v3987, %v3988
    %v3990 = vand.u32 %v3989, 4294901760
    %3991 = vmatmul.f32.gmra.mxu0 %v3990
    %v3992 = vpop.f32.mrf.mxu0
    %v3993 = vadd.f32 0.0, %v3992
    %3994 = vdwg.mxu0
    %3995 = vmatpush.msra.mxu0 0.0
    %3996 = vmatpush.msra.mxu0 0.0
    %3997 = vmatpush.msra.mxu0 0.0
    %3998 = vmatpush.msra.mxu0 0.0
    %3999 = vmatpush.msra.mxu0 0.0
    %4000 = vmatpush.msra.mxu0 0.0
    %4001 = vmatpush.msra.mxu0 0.0
    %4002 = vmatpush.msra.mxu0 0.0
    %4003 = vmatpush.msra.mxu0 0.0
    %4004 = vmatpush.msra.mxu0 0.0
    %4005 = vmatpush.msra.mxu0 0.0
    %4006 = vmatpush.msra.mxu0 0.0
    %4007 = vmatpush.msra.mxu0 0.0
    %v4008 = vand.u32 %v161, 4294901760
    %v4009 = vsub.f32 %v161, %v4008
    %v4010 = vand.u32 %v4009, 4294901760
    %v4011 = vsub.f32 %v4009, %v4010
    %v4012 = vand.u32 %v4011, 4294901760
    %4013 = vmatpush.msra.mxu0 %v4012
    %v4014 = vand.u32 %v122, 4294901760
    %v4015 = vsub.f32 %v122, %v4014
    %v4016 = vand.u32 %v4015, 4294901760
    %v4017 = vsub.f32 %v4015, %v4016
    %v4018 = vand.u32 %v4017, 4294901760
    %4019 = vmatpush.msra.mxu0 %v4018
    %v4020 = vand.u32 %v83, 4294901760
    %v4021 = vsub.f32 %v83, %v4020
    %v4022 = vand.u32 %v4021, 4294901760
    %v4023 = vsub.f32 %v4021, %v4022
    %v4024 = vand.u32 %v4023, 4294901760
    %4025 = vmatpush.msra.mxu0 %v4024
    %v4026 = vand.u32 %v181, 4294901760
    %4027 = vmatmul.f32.gmra.mxu0 %v4026
    %v4028 = vpop.f32.mrf.mxu0
    %v4029 = vadd.f32 %v3993, %v4028
    %4030 = vdwg.mxu0
    %4031 = vmatpush.msra.mxu0 0.0
    %4032 = vmatpush.msra.mxu0 0.0
    %4033 = vmatpush.msra.mxu0 0.0
    %4034 = vmatpush.msra.mxu0 0.0
    %4035 = vmatpush.msra.mxu0 0.0
    %4036 = vmatpush.msra.mxu0 0.0
    %4037 = vmatpush.msra.mxu0 0.0
    %4038 = vmatpush.msra.mxu0 0.0
    %4039 = vmatpush.msra.mxu0 0.0
    %4040 = vmatpush.msra.mxu0 0.0
    %4041 = vmatpush.msra.mxu0 0.0
    %4042 = vmatpush.msra.mxu0 0.0
    %4043 = vmatpush.msra.mxu0 0.0
    %v4044 = vand.u32 %v161, 4294901760
    %v4045 = vsub.f32 %v161, %v4044
    %4046 = vmatpush.msra.mxu0 %v4045
    %v4047 = vand.u32 %v122, 4294901760
    %v4048 = vsub.f32 %v122, %v4047
    %4049 = vmatpush.msra.mxu0 %v4048
    %v4050 = vand.u32 %v83, 4294901760
    %v4051 = vsub.f32 %v83, %v4050
    %4052 = vmatpush.msra.mxu0 %v4051
    %v4053 = vand.u32 %v181, 4294901760
    %v4054 = vsub.f32 %v181, %v4053
    %4055 = vmatmul.f32.gmra.mxu0 %v4054
    %v4056 = vpop.f32.mrf.mxu0
    %v4057 = vadd.f32 %v4029, %v4056
    %4058 = vdwg.mxu0
    %4059 = vmatpush.msra.mxu0 0.0
    %4060 = vmatpush.msra.mxu0 0.0
    %4061 = vmatpush.msra.mxu0 0.0
    %4062 = vmatpush.msra.mxu0 0.0
    %4063 = vmatpush.msra.mxu0 0.0
    %4064 = vmatpush.msra.mxu0 0.0
    %4065 = vmatpush.msra.mxu0 0.0
    %4066 = vmatpush.msra.mxu0 0.0
    %4067 = vmatpush.msra.mxu0 0.0
    %4068 = vmatpush.msra.mxu0 0.0
    %4069 = vmatpush.msra.mxu0 0.0
    %4070 = vmatpush.msra.mxu0 0.0
    %4071 = vmatpush.msra.mxu0 0.0
    %v4072 = vand.u32 %v161, 4294901760
    %4073 = vmatpush.msra.mxu0 %v4072
    %v4074 = vand.u32 %v122, 4294901760
    %4075 = vmatpush.msra.mxu0 %v4074
    %v4076 = vand.u32 %v83, 4294901760
    %4077 = vmatpush.msra.mxu0 %v4076
    %v4078 = vand.u32 %v181, 4294901760
    %v4079 = vsub.f32 %v181, %v4078
    %v4080 = vand.u32 %v4079, 4294901760
    %4081 = vmatmul.f32.gmra.mxu0 %v4080
    %v4082 = vpop.f32.mrf.mxu0
    %v4083 = vadd.f32 %v4057, %v4082
    %4084 = vdwg.mxu0
    %4085 = vmatpush.msra.mxu0 0.0
    %4086 = vmatpush.msra.mxu0 0.0
    %4087 = vmatpush.msra.mxu0 0.0
    %4088 = vmatpush.msra.mxu0 0.0
    %4089 = vmatpush.msra.mxu0 0.0
    %4090 = vmatpush.msra.mxu0 0.0
    %4091 = vmatpush.msra.mxu0 0.0
    %4092 = vmatpush.msra.mxu0 0.0
    %4093 = vmatpush.msra.mxu0 0.0
    %4094 = vmatpush.msra.mxu0 0.0
    %4095 = vmatpush.msra.mxu0 0.0
    %4096 = vmatpush.msra.mxu0 0.0
    %4097 = vmatpush.msra.mxu0 0.0
    %v4098 = vand.u32 %v161, 4294901760
    %v4099 = vsub.f32 %v161, %v4098
    %v4100 = vand.u32 %v4099, 4294901760
    %4101 = vmatpush.msra.mxu0 %v4100
    %v4102 = vand.u32 %v122, 4294901760
    %v4103 = vsub.f32 %v122, %v4102
    %v4104 = vand.u32 %v4103, 4294901760
    %4105 = vmatpush.msra.mxu0 %v4104
    %v4106 = vand.u32 %v83, 4294901760
    %v4107 = vsub.f32 %v83, %v4106
    %v4108 = vand.u32 %v4107, 4294901760
    %4109 = vmatpush.msra.mxu0 %v4108
    %v4110 = vand.u32 %v181, 4294901760
    %4111 = vmatmul.f32.gmra.mxu0 %v4110
    %v4112 = vpop.f32.mrf.mxu0
    %v4113 = vadd.f32 %v4083, %v4112
    %4114 = vdwg.mxu0
    %4115 = vmatpush.msra.mxu0 0.0
    %4116 = vmatpush.msra.mxu0 0.0
    %4117 = vmatpush.msra.mxu0 0.0
    %4118 = vmatpush.msra.mxu0 0.0
    %4119 = vmatpush.msra.mxu0 0.0
    %4120 = vmatpush.msra.mxu0 0.0
    %4121 = vmatpush.msra.mxu0 0.0
    %4122 = vmatpush.msra.mxu0 0.0
    %4123 = vmatpush.msra.mxu0 0.0
    %4124 = vmatpush.msra.mxu0 0.0
    %4125 = vmatpush.msra.mxu0 0.0
    %4126 = vmatpush.msra.mxu0 0.0
    %4127 = vmatpush.msra.mxu0 0.0
    %v4128 = vand.u32 %v161, 4294901760
    %4129 = vmatpush.msra.mxu0 %v4128
    %v4130 = vand.u32 %v122, 4294901760
    %4131 = vmatpush.msra.mxu0 %v4130
    %v4132 = vand.u32 %v83, 4294901760
    %4133 = vmatpush.msra.mxu0 %v4132
    %v4134 = vand.u32 %v181, 4294901760
    %4135 = vmatmul.f32.gmra.mxu0 %v4134
    %v4136 = vpop.f32.mrf.mxu0
    %v4137 = vadd.f32 %v4113, %v4136
    %4138 = vdwg.mxu0
    %4139 = vmatpush.msra.mxu0 0.0
    %4140 = vmatpush.msra.mxu0 0.0
    %4141 = vmatpush.msra.mxu0 0.0
    %4142 = vmatpush.msra.mxu0 0.0
    %4143 = vmatpush.msra.mxu0 0.0
    %4144 = vmatpush.msra.mxu0 0.0
    %4145 = vmatpush.msra.mxu0 0.0
    %4146 = vmatpush.msra.mxu0 0.0
    %4147 = vmatpush.msra.mxu0 0.0
    %4148 = vmatpush.msra.mxu0 0.0
    %4149 = vmatpush.msra.mxu0 0.0
    %4150 = vmatpush.msra.mxu0 0.0
    %4151 = vmatpush.msra.mxu0 0.0
    %v4152 = vand.u32 %v162, 4294901760
    %4153 = vmatpush.msra.mxu0 %v4152
    %v4154 = vand.u32 %v123, 4294901760
    %4155 = vmatpush.msra.mxu0 %v4154
    %v4156 = vand.u32 %v84, 4294901760
    %4157 = vmatpush.msra.mxu0 %v4156
    %v4158 = vand.u32 %v181, 4294901760
    %v4159 = vsub.f32 %v181, %v4158
    %v4160 = vand.u32 %v4159, 4294901760
    %v4161 = vsub.f32 %v4159, %v4160
    %v4162 = vand.u32 %v4161, 4294901760
    %4163 = vmatmul.f32.gmra.mxu0 %v4162
    %v4164 = vpop.f32.mrf.mxu0
    %v4165 = vadd.f32 0.0, %v4164
    %4166 = vdwg.mxu0
    %4167 = vmatpush.msra.mxu0 0.0
    %4168 = vmatpush.msra.mxu0 0.0
    %4169 = vmatpush.msra.mxu0 0.0
    %4170 = vmatpush.msra.mxu0 0.0
    %4171 = vmatpush.msra.mxu0 0.0
    %4172 = vmatpush.msra.mxu0 0.0
    %4173 = vmatpush.msra.mxu0 0.0
    %4174 = vmatpush.msra.mxu0 0.0
    %4175 = vmatpush.msra.mxu0 0.0
    %4176 = vmatpush.msra.mxu0 0.0
    %4177 = vmatpush.msra.mxu0 0.0
    %4178 = vmatpush.msra.mxu0 0.0
    %4179 = vmatpush.msra.mxu0 0.0
    %v4180 = vand.u32 %v162, 4294901760
    %v4181 = vsub.f32 %v162, %v4180
    %v4182 = vand.u32 %v4181, 4294901760
    %v4183 = vsub.f32 %v4181, %v4182
    %v4184 = vand.u32 %v4183, 4294901760
    %4185 = vmatpush.msra.mxu0 %v4184
    %v4186 = vand.u32 %v123, 4294901760
    %v4187 = vsub.f32 %v123, %v4186
    %v4188 = vand.u32 %v4187, 4294901760
    %v4189 = vsub.f32 %v4187, %v4188
    %v4190 = vand.u32 %v4189, 4294901760
    %4191 = vmatpush.msra.mxu0 %v4190
    %v4192 = vand.u32 %v84, 4294901760
    %v4193 = vsub.f32 %v84, %v4192
    %v4194 = vand.u32 %v4193, 4294901760
    %v4195 = vsub.f32 %v4193, %v4194
    %v4196 = vand.u32 %v4195, 4294901760
    %4197 = vmatpush.msra.mxu0 %v4196
    %v4198 = vand.u32 %v181, 4294901760
    %4199 = vmatmul.f32.gmra.mxu0 %v4198
    %v4200 = vpop.f32.mrf.mxu0
    %v4201 = vadd.f32 %v4165, %v4200
    %4202 = vdwg.mxu0
    %4203 = vmatpush.msra.mxu0 0.0
    %4204 = vmatpush.msra.mxu0 0.0
    %4205 = vmatpush.msra.mxu0 0.0
    %4206 = vmatpush.msra.mxu0 0.0
    %4207 = vmatpush.msra.mxu0 0.0
    %4208 = vmatpush.msra.mxu0 0.0
    %4209 = vmatpush.msra.mxu0 0.0
    %4210 = vmatpush.msra.mxu0 0.0
    %4211 = vmatpush.msra.mxu0 0.0
    %4212 = vmatpush.msra.mxu0 0.0
    %4213 = vmatpush.msra.mxu0 0.0
    %4214 = vmatpush.msra.mxu0 0.0
    %4215 = vmatpush.msra.mxu0 0.0
    %v4216 = vand.u32 %v162, 4294901760
    %v4217 = vsub.f32 %v162, %v4216
    %4218 = vmatpush.msra.mxu0 %v4217
    %v4219 = vand.u32 %v123, 4294901760
    %v4220 = vsub.f32 %v123, %v4219
    %4221 = vmatpush.msra.mxu0 %v4220
    %v4222 = vand.u32 %v84, 4294901760
    %v4223 = vsub.f32 %v84, %v4222
    %4224 = vmatpush.msra.mxu0 %v4223
    %v4225 = vand.u32 %v181, 4294901760
    %v4226 = vsub.f32 %v181, %v4225
    %4227 = vmatmul.f32.gmra.mxu0 %v4226
    %v4228 = vpop.f32.mrf.mxu0
    %v4229 = vadd.f32 %v4201, %v4228
    %4230 = vdwg.mxu0
    %4231 = vmatpush.msra.mxu0 0.0
    %4232 = vmatpush.msra.mxu0 0.0
    %4233 = vmatpush.msra.mxu0 0.0
    %4234 = vmatpush.msra.mxu0 0.0
    %4235 = vmatpush.msra.mxu0 0.0
    %4236 = vmatpush.msra.mxu0 0.0
    %4237 = vmatpush.msra.mxu0 0.0
    %4238 = vmatpush.msra.mxu0 0.0
    %4239 = vmatpush.msra.mxu0 0.0
    %4240 = vmatpush.msra.mxu0 0.0
    %4241 = vmatpush.msra.mxu0 0.0
    %4242 = vmatpush.msra.mxu0 0.0
    %4243 = vmatpush.msra.mxu0 0.0
    %v4244 = vand.u32 %v162, 4294901760
    %4245 = vmatpush.msra.mxu0 %v4244
    %v4246 = vand.u32 %v123, 4294901760
    %4247 = vmatpush.msra.mxu0 %v4246
    %v4248 = vand.u32 %v84, 4294901760
    %4249 = vmatpush.msra.mxu0 %v4248
    %v4250 = vand.u32 %v181, 4294901760
    %v4251 = vsub.f32 %v181, %v4250
    %v4252 = vand.u32 %v4251, 4294901760
    %4253 = vmatmul.f32.gmra.mxu0 %v4252
    %v4254 = vpop.f32.mrf.mxu0
    %v4255 = vadd.f32 %v4229, %v4254
    %4256 = vdwg.mxu0
    %4257 = vmatpush.msra.mxu0 0.0
    %4258 = vmatpush.msra.mxu0 0.0
    %4259 = vmatpush.msra.mxu0 0.0
    %4260 = vmatpush.msra.mxu0 0.0
    %4261 = vmatpush.msra.mxu0 0.0
    %4262 = vmatpush.msra.mxu0 0.0
    %4263 = vmatpush.msra.mxu0 0.0
    %4264 = vmatpush.msra.mxu0 0.0
    %4265 = vmatpush.msra.mxu0 0.0
    %4266 = vmatpush.msra.mxu0 0.0
    %4267 = vmatpush.msra.mxu0 0.0
    %4268 = vmatpush.msra.mxu0 0.0
    %4269 = vmatpush.msra.mxu0 0.0
    %v4270 = vand.u32 %v162, 4294901760
    %v4271 = vsub.f32 %v162, %v4270
    %v4272 = vand.u32 %v4271, 4294901760
    %4273 = vmatpush.msra.mxu0 %v4272
    %v4274 = vand.u32 %v123, 4294901760
    %v4275 = vsub.f32 %v123, %v4274
    %v4276 = vand.u32 %v4275, 4294901760
    %4277 = vmatpush.msra.mxu0 %v4276
    %v4278 = vand.u32 %v84, 4294901760
    %v4279 = vsub.f32 %v84, %v4278
    %v4280 = vand.u32 %v4279, 4294901760
    %4281 = vmatpush.msra.mxu0 %v4280
    %v4282 = vand.u32 %v181, 4294901760
    %4283 = vmatmul.f32.gmra.mxu0 %v4282
    %v4284 = vpop.f32.mrf.mxu0
    %v4285 = vadd.f32 %v4255, %v4284
    %4286 = vdwg.mxu0
    %4287 = vmatpush.msra.mxu0 0.0
    %4288 = vmatpush.msra.mxu0 0.0
    %4289 = vmatpush.msra.mxu0 0.0
    %4290 = vmatpush.msra.mxu0 0.0
    %4291 = vmatpush.msra.mxu0 0.0
    %4292 = vmatpush.msra.mxu0 0.0
    %4293 = vmatpush.msra.mxu0 0.0
    %4294 = vmatpush.msra.mxu0 0.0
    %4295 = vmatpush.msra.mxu0 0.0
    %4296 = vmatpush.msra.mxu0 0.0
    %4297 = vmatpush.msra.mxu0 0.0
    %4298 = vmatpush.msra.mxu0 0.0
    %4299 = vmatpush.msra.mxu0 0.0
    %v4300 = vand.u32 %v162, 4294901760
    %4301 = vmatpush.msra.mxu0 %v4300
    %v4302 = vand.u32 %v123, 4294901760
    %4303 = vmatpush.msra.mxu0 %v4302
    %v4304 = vand.u32 %v84, 4294901760
    %4305 = vmatpush.msra.mxu0 %v4304
    %v4306 = vand.u32 %v181, 4294901760
    %4307 = vmatmul.f32.gmra.mxu0 %v4306
    %v4308 = vpop.f32.mrf.mxu0
    %v4309 = vadd.f32 %v4285, %v4308
    %4310 = vdwg.mxu0
    %4311 = vmatpush.msra.mxu0 0.0
    %4312 = vmatpush.msra.mxu0 0.0
    %4313 = vmatpush.msra.mxu0 0.0
    %4314 = vmatpush.msra.mxu0 0.0
    %4315 = vmatpush.msra.mxu0 0.0
    %4316 = vmatpush.msra.mxu0 0.0
    %4317 = vmatpush.msra.mxu0 0.0
    %4318 = vmatpush.msra.mxu0 0.0
    %4319 = vmatpush.msra.mxu0 0.0
    %4320 = vmatpush.msra.mxu0 0.0
    %4321 = vmatpush.msra.mxu0 0.0
    %4322 = vmatpush.msra.mxu0 0.0
    %4323 = vmatpush.msra.mxu0 0.0
    %v4324 = vand.u32 %v163, 4294901760
    %4325 = vmatpush.msra.mxu0 %v4324
    %v4326 = vand.u32 %v124, 4294901760
    %4327 = vmatpush.msra.mxu0 %v4326
    %v4328 = vand.u32 %v85, 4294901760
    %4329 = vmatpush.msra.mxu0 %v4328
    %v4330 = vand.u32 %v181, 4294901760
    %v4331 = vsub.f32 %v181, %v4330
    %v4332 = vand.u32 %v4331, 4294901760
    %v4333 = vsub.f32 %v4331, %v4332
    %v4334 = vand.u32 %v4333, 4294901760
    %4335 = vmatmul.f32.gmra.mxu0 %v4334
    %v4336 = vpop.f32.mrf.mxu0
    %v4337 = vadd.f32 0.0, %v4336
    %4338 = vdwg.mxu0
    %4339 = vmatpush.msra.mxu0 0.0
    %4340 = vmatpush.msra.mxu0 0.0
    %4341 = vmatpush.msra.mxu0 0.0
    %4342 = vmatpush.msra.mxu0 0.0
    %4343 = vmatpush.msra.mxu0 0.0
    %4344 = vmatpush.msra.mxu0 0.0
    %4345 = vmatpush.msra.mxu0 0.0
    %4346 = vmatpush.msra.mxu0 0.0
    %4347 = vmatpush.msra.mxu0 0.0
    %4348 = vmatpush.msra.mxu0 0.0
    %4349 = vmatpush.msra.mxu0 0.0
    %4350 = vmatpush.msra.mxu0 0.0
    %4351 = vmatpush.msra.mxu0 0.0
    %v4352 = vand.u32 %v163, 4294901760
    %v4353 = vsub.f32 %v163, %v4352
    %v4354 = vand.u32 %v4353, 4294901760
    %v4355 = vsub.f32 %v4353, %v4354
    %v4356 = vand.u32 %v4355, 4294901760
    %4357 = vmatpush.msra.mxu0 %v4356
    %v4358 = vand.u32 %v124, 4294901760
    %v4359 = vsub.f32 %v124, %v4358
    %v4360 = vand.u32 %v4359, 4294901760
    %v4361 = vsub.f32 %v4359, %v4360
    %v4362 = vand.u32 %v4361, 4294901760
    %4363 = vmatpush.msra.mxu0 %v4362
    %v4364 = vand.u32 %v85, 4294901760
    %v4365 = vsub.f32 %v85, %v4364
    %v4366 = vand.u32 %v4365, 4294901760
    %v4367 = vsub.f32 %v4365, %v4366
    %v4368 = vand.u32 %v4367, 4294901760
    %4369 = vmatpush.msra.mxu0 %v4368
    %v4370 = vand.u32 %v181, 4294901760
    %4371 = vmatmul.f32.gmra.mxu0 %v4370
    %v4372 = vpop.f32.mrf.mxu0
    %v4373 = vadd.f32 %v4337, %v4372
    %4374 = vdwg.mxu0
    %4375 = vmatpush.msra.mxu0 0.0
    %4376 = vmatpush.msra.mxu0 0.0
    %4377 = vmatpush.msra.mxu0 0.0
    %4378 = vmatpush.msra.mxu0 0.0
    %4379 = vmatpush.msra.mxu0 0.0
    %4380 = vmatpush.msra.mxu0 0.0
    %4381 = vmatpush.msra.mxu0 0.0
    %4382 = vmatpush.msra.mxu0 0.0
    %4383 = vmatpush.msra.mxu0 0.0
    %4384 = vmatpush.msra.mxu0 0.0
    %4385 = vmatpush.msra.mxu0 0.0
    %4386 = vmatpush.msra.mxu0 0.0
    %4387 = vmatpush.msra.mxu0 0.0
    %v4388 = vand.u32 %v163, 4294901760
    %v4389 = vsub.f32 %v163, %v4388
    %4390 = vmatpush.msra.mxu0 %v4389
    %v4391 = vand.u32 %v124, 4294901760
    %v4392 = vsub.f32 %v124, %v4391
    %4393 = vmatpush.msra.mxu0 %v4392
    %v4394 = vand.u32 %v85, 4294901760
    %v4395 = vsub.f32 %v85, %v4394
    %4396 = vmatpush.msra.mxu0 %v4395
    %v4397 = vand.u32 %v181, 4294901760
    %v4398 = vsub.f32 %v181, %v4397
    %4399 = vmatmul.f32.gmra.mxu0 %v4398
    %v4400 = vpop.f32.mrf.mxu0
    %v4401 = vadd.f32 %v4373, %v4400
    %4402 = vdwg.mxu0
    %4403 = vmatpush.msra.mxu0 0.0
    %4404 = vmatpush.msra.mxu0 0.0
    %4405 = vmatpush.msra.mxu0 0.0
    %4406 = vmatpush.msra.mxu0 0.0
    %4407 = vmatpush.msra.mxu0 0.0
    %4408 = vmatpush.msra.mxu0 0.0
    %4409 = vmatpush.msra.mxu0 0.0
    %4410 = vmatpush.msra.mxu0 0.0
    %4411 = vmatpush.msra.mxu0 0.0
    %4412 = vmatpush.msra.mxu0 0.0
    %4413 = vmatpush.msra.mxu0 0.0
    %4414 = vmatpush.msra.mxu0 0.0
    %4415 = vmatpush.msra.mxu0 0.0
    %v4416 = vand.u32 %v163, 4294901760
    %4417 = vmatpush.msra.mxu0 %v4416
    %v4418 = vand.u32 %v124, 4294901760
    %4419 = vmatpush.msra.mxu0 %v4418
    %v4420 = vand.u32 %v85, 4294901760
    %4421 = vmatpush.msra.mxu0 %v4420
    %v4422 = vand.u32 %v181, 4294901760
    %v4423 = vsub.f32 %v181, %v4422
    %v4424 = vand.u32 %v4423, 4294901760
    %4425 = vmatmul.f32.gmra.mxu0 %v4424
    %v4426 = vpop.f32.mrf.mxu0
    %v4427 = vadd.f32 %v4401, %v4426
    %4428 = vdwg.mxu0
    %4429 = vmatpush.msra.mxu0 0.0
    %4430 = vmatpush.msra.mxu0 0.0
    %4431 = vmatpush.msra.mxu0 0.0
    %4432 = vmatpush.msra.mxu0 0.0
    %4433 = vmatpush.msra.mxu0 0.0
    %4434 = vmatpush.msra.mxu0 0.0
    %4435 = vmatpush.msra.mxu0 0.0
    %4436 = vmatpush.msra.mxu0 0.0
    %4437 = vmatpush.msra.mxu0 0.0
    %4438 = vmatpush.msra.mxu0 0.0
    %4439 = vmatpush.msra.mxu0 0.0
    %4440 = vmatpush.msra.mxu0 0.0
    %4441 = vmatpush.msra.mxu0 0.0
    %v4442 = vand.u32 %v163, 4294901760
    %v4443 = vsub.f32 %v163, %v4442
    %v4444 = vand.u32 %v4443, 4294901760
    %4445 = vmatpush.msra.mxu0 %v4444
    %v4446 = vand.u32 %v124, 4294901760
    %v4447 = vsub.f32 %v124, %v4446
    %v4448 = vand.u32 %v4447, 4294901760
    %4449 = vmatpush.msra.mxu0 %v4448
    %v4450 = vand.u32 %v85, 4294901760
    %v4451 = vsub.f32 %v85, %v4450
    %v4452 = vand.u32 %v4451, 4294901760
    %4453 = vmatpush.msra.mxu0 %v4452
    %v4454 = vand.u32 %v181, 4294901760
    %4455 = vmatmul.f32.gmra.mxu0 %v4454
    %v4456 = vpop.f32.mrf.mxu0
    %v4457 = vadd.f32 %v4427, %v4456
    %4458 = vdwg.mxu0
    %4459 = vmatpush.msra.mxu0 0.0
    %4460 = vmatpush.msra.mxu0 0.0
    %4461 = vmatpush.msra.mxu0 0.0
    %4462 = vmatpush.msra.mxu0 0.0
    %4463 = vmatpush.msra.mxu0 0.0
    %4464 = vmatpush.msra.mxu0 0.0
    %4465 = vmatpush.msra.mxu0 0.0
    %4466 = vmatpush.msra.mxu0 0.0
    %4467 = vmatpush.msra.mxu0 0.0
    %4468 = vmatpush.msra.mxu0 0.0
    %4469 = vmatpush.msra.mxu0 0.0
    %4470 = vmatpush.msra.mxu0 0.0
    %4471 = vmatpush.msra.mxu0 0.0
    %v4472 = vand.u32 %v163, 4294901760
    %4473 = vmatpush.msra.mxu0 %v4472
    %v4474 = vand.u32 %v124, 4294901760
    %4475 = vmatpush.msra.mxu0 %v4474
    %v4476 = vand.u32 %v85, 4294901760
    %4477 = vmatpush.msra.mxu0 %v4476
    %v4478 = vand.u32 %v181, 4294901760
    %4479 = vmatmul.f32.gmra.mxu0 %v4478
    %v4480 = vpop.f32.mrf.mxu0
    %v4481 = vadd.f32 %v4457, %v4480
    %4482 = vdwg.mxu0
    %4483 = vmatpush.msra.mxu0 0.0
    %4484 = vmatpush.msra.mxu0 0.0
    %4485 = vmatpush.msra.mxu0 0.0
    %4486 = vmatpush.msra.mxu0 0.0
    %4487 = vmatpush.msra.mxu0 0.0
    %4488 = vmatpush.msra.mxu0 0.0
    %4489 = vmatpush.msra.mxu0 0.0
    %4490 = vmatpush.msra.mxu0 0.0
    %4491 = vmatpush.msra.mxu0 0.0
    %4492 = vmatpush.msra.mxu0 0.0
    %4493 = vmatpush.msra.mxu0 0.0
    %4494 = vmatpush.msra.mxu0 0.0
    %4495 = vmatpush.msra.mxu0 0.0
    %v4496 = vand.u32 %v164, 4294901760
    %4497 = vmatpush.msra.mxu0 %v4496
    %v4498 = vand.u32 %v125, 4294901760
    %4499 = vmatpush.msra.mxu0 %v4498
    %v4500 = vand.u32 %v86, 4294901760
    %4501 = vmatpush.msra.mxu0 %v4500
    %v4502 = vand.u32 %v181, 4294901760
    %v4503 = vsub.f32 %v181, %v4502
    %v4504 = vand.u32 %v4503, 4294901760
    %v4505 = vsub.f32 %v4503, %v4504
    %v4506 = vand.u32 %v4505, 4294901760
    %4507 = vmatmul.f32.gmra.mxu0 %v4506
    %v4508 = vpop.f32.mrf.mxu0
    %v4509 = vadd.f32 0.0, %v4508
    %4510 = vdwg.mxu0
    %4511 = vmatpush.msra.mxu0 0.0
    %4512 = vmatpush.msra.mxu0 0.0
    %4513 = vmatpush.msra.mxu0 0.0
    %4514 = vmatpush.msra.mxu0 0.0
    %4515 = vmatpush.msra.mxu0 0.0
    %4516 = vmatpush.msra.mxu0 0.0
    %4517 = vmatpush.msra.mxu0 0.0
    %4518 = vmatpush.msra.mxu0 0.0
    %4519 = vmatpush.msra.mxu0 0.0
    %4520 = vmatpush.msra.mxu0 0.0
    %4521 = vmatpush.msra.mxu0 0.0
    %4522 = vmatpush.msra.mxu0 0.0
    %4523 = vmatpush.msra.mxu0 0.0
    %v4524 = vand.u32 %v164, 4294901760
    %v4525 = vsub.f32 %v164, %v4524
    %v4526 = vand.u32 %v4525, 4294901760
    %v4527 = vsub.f32 %v4525, %v4526
    %v4528 = vand.u32 %v4527, 4294901760
    %4529 = vmatpush.msra.mxu0 %v4528
    %v4530 = vand.u32 %v125, 4294901760
    %v4531 = vsub.f32 %v125, %v4530
    %v4532 = vand.u32 %v4531, 4294901760
    %v4533 = vsub.f32 %v4531, %v4532
    %v4534 = vand.u32 %v4533, 4294901760
    %4535 = vmatpush.msra.mxu0 %v4534
    %v4536 = vand.u32 %v86, 4294901760
    %v4537 = vsub.f32 %v86, %v4536
    %v4538 = vand.u32 %v4537, 4294901760
    %v4539 = vsub.f32 %v4537, %v4538
    %v4540 = vand.u32 %v4539, 4294901760
    %4541 = vmatpush.msra.mxu0 %v4540
    %v4542 = vand.u32 %v181, 4294901760
    %4543 = vmatmul.f32.gmra.mxu0 %v4542
    %v4544 = vpop.f32.mrf.mxu0
    %v4545 = vadd.f32 %v4509, %v4544
    %4546 = vdwg.mxu0
    %4547 = vmatpush.msra.mxu0 0.0
    %4548 = vmatpush.msra.mxu0 0.0
    %4549 = vmatpush.msra.mxu0 0.0
    %4550 = vmatpush.msra.mxu0 0.0
    %4551 = vmatpush.msra.mxu0 0.0
    %4552 = vmatpush.msra.mxu0 0.0
    %4553 = vmatpush.msra.mxu0 0.0
    %4554 = vmatpush.msra.mxu0 0.0
    %4555 = vmatpush.msra.mxu0 0.0
    %4556 = vmatpush.msra.mxu0 0.0
    %4557 = vmatpush.msra.mxu0 0.0
    %4558 = vmatpush.msra.mxu0 0.0
    %4559 = vmatpush.msra.mxu0 0.0
    %v4560 = vand.u32 %v164, 4294901760
    %v4561 = vsub.f32 %v164, %v4560
    %4562 = vmatpush.msra.mxu0 %v4561
    %v4563 = vand.u32 %v125, 4294901760
    %v4564 = vsub.f32 %v125, %v4563
    %4565 = vmatpush.msra.mxu0 %v4564
    %v4566 = vand.u32 %v86, 4294901760
    %v4567 = vsub.f32 %v86, %v4566
    %4568 = vmatpush.msra.mxu0 %v4567
    %v4569 = vand.u32 %v181, 4294901760
    %v4570 = vsub.f32 %v181, %v4569
    %4571 = vmatmul.f32.gmra.mxu0 %v4570
    %v4572 = vpop.f32.mrf.mxu0
    %v4573 = vadd.f32 %v4545, %v4572
    %4574 = vdwg.mxu0
    %4575 = vmatpush.msra.mxu0 0.0
    %4576 = vmatpush.msra.mxu0 0.0
    %4577 = vmatpush.msra.mxu0 0.0
    %4578 = vmatpush.msra.mxu0 0.0
    %4579 = vmatpush.msra.mxu0 0.0
    %4580 = vmatpush.msra.mxu0 0.0
    %4581 = vmatpush.msra.mxu0 0.0
    %4582 = vmatpush.msra.mxu0 0.0
    %4583 = vmatpush.msra.mxu0 0.0
    %4584 = vmatpush.msra.mxu0 0.0
    %4585 = vmatpush.msra.mxu0 0.0
    %4586 = vmatpush.msra.mxu0 0.0
    %4587 = vmatpush.msra.mxu0 0.0
    %v4588 = vand.u32 %v164, 4294901760
    %4589 = vmatpush.msra.mxu0 %v4588
    %v4590 = vand.u32 %v125, 4294901760
    %4591 = vmatpush.msra.mxu0 %v4590
    %v4592 = vand.u32 %v86, 4294901760
    %4593 = vmatpush.msra.mxu0 %v4592
    %v4594 = vand.u32 %v181, 4294901760
    %v4595 = vsub.f32 %v181, %v4594
    %v4596 = vand.u32 %v4595, 4294901760
    %4597 = vmatmul.f32.gmra.mxu0 %v4596
    %v4598 = vpop.f32.mrf.mxu0
    %v4599 = vadd.f32 %v4573, %v4598
    %4600 = vdwg.mxu0
    %4601 = vmatpush.msra.mxu0 0.0
    %4602 = vmatpush.msra.mxu0 0.0
    %4603 = vmatpush.msra.mxu0 0.0
    %4604 = vmatpush.msra.mxu0 0.0
    %4605 = vmatpush.msra.mxu0 0.0
    %4606 = vmatpush.msra.mxu0 0.0
    %4607 = vmatpush.msra.mxu0 0.0
    %4608 = vmatpush.msra.mxu0 0.0
    %4609 = vmatpush.msra.mxu0 0.0
    %4610 = vmatpush.msra.mxu0 0.0
    %4611 = vmatpush.msra.mxu0 0.0
    %4612 = vmatpush.msra.mxu0 0.0
    %4613 = vmatpush.msra.mxu0 0.0
    %v4614 = vand.u32 %v164, 4294901760
    %v4615 = vsub.f32 %v164, %v4614
    %v4616 = vand.u32 %v4615, 4294901760
    %4617 = vmatpush.msra.mxu0 %v4616
    %v4618 = vand.u32 %v125, 4294901760
    %v4619 = vsub.f32 %v125, %v4618
    %v4620 = vand.u32 %v4619, 4294901760
    %4621 = vmatpush.msra.mxu0 %v4620
    %v4622 = vand.u32 %v86, 4294901760
    %v4623 = vsub.f32 %v86, %v4622
    %v4624 = vand.u32 %v4623, 4294901760
    %4625 = vmatpush.msra.mxu0 %v4624
    %v4626 = vand.u32 %v181, 4294901760
    %4627 = vmatmul.f32.gmra.mxu0 %v4626
    %v4628 = vpop.f32.mrf.mxu0
    %v4629 = vadd.f32 %v4599, %v4628
    %4630 = vdwg.mxu0
    %4631 = vmatpush.msra.mxu0 0.0
    %4632 = vmatpush.msra.mxu0 0.0
    %4633 = vmatpush.msra.mxu0 0.0
    %4634 = vmatpush.msra.mxu0 0.0
    %4635 = vmatpush.msra.mxu0 0.0
    %4636 = vmatpush.msra.mxu0 0.0
    %4637 = vmatpush.msra.mxu0 0.0
    %4638 = vmatpush.msra.mxu0 0.0
    %4639 = vmatpush.msra.mxu0 0.0
    %4640 = vmatpush.msra.mxu0 0.0
    %4641 = vmatpush.msra.mxu0 0.0
    %4642 = vmatpush.msra.mxu0 0.0
    %4643 = vmatpush.msra.mxu0 0.0
    %v4644 = vand.u32 %v164, 4294901760
    %4645 = vmatpush.msra.mxu0 %v4644
    %v4646 = vand.u32 %v125, 4294901760
    %4647 = vmatpush.msra.mxu0 %v4646
    %v4648 = vand.u32 %v86, 4294901760
    %4649 = vmatpush.msra.mxu0 %v4648
    %v4650 = vand.u32 %v181, 4294901760
    %4651 = vmatmul.f32.gmra.mxu0 %v4650
    %v4652 = vpop.f32.mrf.mxu0
    %v4653 = vadd.f32 %v4629, %v4652
    %4654 = vdwg.mxu0
    %4655 = vmatpush.msra.mxu0 0.0
    %4656 = vmatpush.msra.mxu0 0.0
    %4657 = vmatpush.msra.mxu0 0.0
    %4658 = vmatpush.msra.mxu0 0.0
    %4659 = vmatpush.msra.mxu0 0.0
    %4660 = vmatpush.msra.mxu0 0.0
    %4661 = vmatpush.msra.mxu0 0.0
    %4662 = vmatpush.msra.mxu0 0.0
    %4663 = vmatpush.msra.mxu0 0.0
    %4664 = vmatpush.msra.mxu0 0.0
    %4665 = vmatpush.msra.mxu0 0.0
    %4666 = vmatpush.msra.mxu0 0.0
    %4667 = vmatpush.msra.mxu0 0.0
    %v4668 = vand.u32 %v165, 4294901760
    %4669 = vmatpush.msra.mxu0 %v4668
    %v4670 = vand.u32 %v126, 4294901760
    %4671 = vmatpush.msra.mxu0 %v4670
    %v4672 = vand.u32 %v87, 4294901760
    %4673 = vmatpush.msra.mxu0 %v4672
    %v4674 = vand.u32 %v181, 4294901760
    %v4675 = vsub.f32 %v181, %v4674
    %v4676 = vand.u32 %v4675, 4294901760
    %v4677 = vsub.f32 %v4675, %v4676
    %v4678 = vand.u32 %v4677, 4294901760
    %4679 = vmatmul.f32.gmra.mxu0 %v4678
    %v4680 = vpop.f32.mrf.mxu0
    %v4681 = vadd.f32 0.0, %v4680
    %4682 = vdwg.mxu0
    %4683 = vmatpush.msra.mxu0 0.0
    %4684 = vmatpush.msra.mxu0 0.0
    %4685 = vmatpush.msra.mxu0 0.0
    %4686 = vmatpush.msra.mxu0 0.0
    %4687 = vmatpush.msra.mxu0 0.0
    %4688 = vmatpush.msra.mxu0 0.0
    %4689 = vmatpush.msra.mxu0 0.0
    %4690 = vmatpush.msra.mxu0 0.0
    %4691 = vmatpush.msra.mxu0 0.0
    %4692 = vmatpush.msra.mxu0 0.0
    %4693 = vmatpush.msra.mxu0 0.0
    %4694 = vmatpush.msra.mxu0 0.0
    %4695 = vmatpush.msra.mxu0 0.0
    %v4696 = vand.u32 %v165, 4294901760
    %v4697 = vsub.f32 %v165, %v4696
    %v4698 = vand.u32 %v4697, 4294901760
    %v4699 = vsub.f32 %v4697, %v4698
    %v4700 = vand.u32 %v4699, 4294901760
    %4701 = vmatpush.msra.mxu0 %v4700
    %v4702 = vand.u32 %v126, 4294901760
    %v4703 = vsub.f32 %v126, %v4702
    %v4704 = vand.u32 %v4703, 4294901760
    %v4705 = vsub.f32 %v4703, %v4704
    %v4706 = vand.u32 %v4705, 4294901760
    %4707 = vmatpush.msra.mxu0 %v4706
    %v4708 = vand.u32 %v87, 4294901760
    %v4709 = vsub.f32 %v87, %v4708
    %v4710 = vand.u32 %v4709, 4294901760
    %v4711 = vsub.f32 %v4709, %v4710
    %v4712 = vand.u32 %v4711, 4294901760
    %4713 = vmatpush.msra.mxu0 %v4712
    %v4714 = vand.u32 %v181, 4294901760
    %4715 = vmatmul.f32.gmra.mxu0 %v4714
    %v4716 = vpop.f32.mrf.mxu0
    %v4717 = vadd.f32 %v4681, %v4716
    %4718 = vdwg.mxu0
    %4719 = vmatpush.msra.mxu0 0.0
    %4720 = vmatpush.msra.mxu0 0.0
    %4721 = vmatpush.msra.mxu0 0.0
    %4722 = vmatpush.msra.mxu0 0.0
    %4723 = vmatpush.msra.mxu0 0.0
    %4724 = vmatpush.msra.mxu0 0.0
    %4725 = vmatpush.msra.mxu0 0.0
    %4726 = vmatpush.msra.mxu0 0.0
    %4727 = vmatpush.msra.mxu0 0.0
    %4728 = vmatpush.msra.mxu0 0.0
    %4729 = vmatpush.msra.mxu0 0.0
    %4730 = vmatpush.msra.mxu0 0.0
    %4731 = vmatpush.msra.mxu0 0.0
    %v4732 = vand.u32 %v165, 4294901760
    %v4733 = vsub.f32 %v165, %v4732
    %4734 = vmatpush.msra.mxu0 %v4733
    %v4735 = vand.u32 %v126, 4294901760
    %v4736 = vsub.f32 %v126, %v4735
    %4737 = vmatpush.msra.mxu0 %v4736
    %v4738 = vand.u32 %v87, 4294901760
    %v4739 = vsub.f32 %v87, %v4738
    %4740 = vmatpush.msra.mxu0 %v4739
    %v4741 = vand.u32 %v181, 4294901760
    %v4742 = vsub.f32 %v181, %v4741
    %4743 = vmatmul.f32.gmra.mxu0 %v4742
    %v4744 = vpop.f32.mrf.mxu0
    %v4745 = vadd.f32 %v4717, %v4744
    %4746 = vdwg.mxu0
    %4747 = vmatpush.msra.mxu0 0.0
    %4748 = vmatpush.msra.mxu0 0.0
    %4749 = vmatpush.msra.mxu0 0.0
    %4750 = vmatpush.msra.mxu0 0.0
    %4751 = vmatpush.msra.mxu0 0.0
    %4752 = vmatpush.msra.mxu0 0.0
    %4753 = vmatpush.msra.mxu0 0.0
    %4754 = vmatpush.msra.mxu0 0.0
    %4755 = vmatpush.msra.mxu0 0.0
    %4756 = vmatpush.msra.mxu0 0.0
    %4757 = vmatpush.msra.mxu0 0.0
    %4758 = vmatpush.msra.mxu0 0.0
    %4759 = vmatpush.msra.mxu0 0.0
    %v4760 = vand.u32 %v165, 4294901760
    %4761 = vmatpush.msra.mxu0 %v4760
    %v4762 = vand.u32 %v126, 4294901760
    %4763 = vmatpush.msra.mxu0 %v4762
    %v4764 = vand.u32 %v87, 4294901760
    %4765 = vmatpush.msra.mxu0 %v4764
    %v4766 = vand.u32 %v181, 4294901760
    %v4767 = vsub.f32 %v181, %v4766
    %v4768 = vand.u32 %v4767, 4294901760
    %4769 = vmatmul.f32.gmra.mxu0 %v4768
    %v4770 = vpop.f32.mrf.mxu0
    %v4771 = vadd.f32 %v4745, %v4770
    %4772 = vdwg.mxu0
    %4773 = vmatpush.msra.mxu0 0.0
    %4774 = vmatpush.msra.mxu0 0.0
    %4775 = vmatpush.msra.mxu0 0.0
    %4776 = vmatpush.msra.mxu0 0.0
    %4777 = vmatpush.msra.mxu0 0.0
    %4778 = vmatpush.msra.mxu0 0.0
    %4779 = vmatpush.msra.mxu0 0.0
    %4780 = vmatpush.msra.mxu0 0.0
    %4781 = vmatpush.msra.mxu0 0.0
    %4782 = vmatpush.msra.mxu0 0.0
    %4783 = vmatpush.msra.mxu0 0.0
    %4784 = vmatpush.msra.mxu0 0.0
    %4785 = vmatpush.msra.mxu0 0.0
    %v4786 = vand.u32 %v165, 4294901760
    %v4787 = vsub.f32 %v165, %v4786
    %v4788 = vand.u32 %v4787, 4294901760
    %4789 = vmatpush.msra.mxu0 %v4788
    %v4790 = vand.u32 %v126, 4294901760
    %v4791 = vsub.f32 %v126, %v4790
    %v4792 = vand.u32 %v4791, 4294901760
    %4793 = vmatpush.msra.mxu0 %v4792
    %v4794 = vand.u32 %v87, 4294901760
    %v4795 = vsub.f32 %v87, %v4794
    %v4796 = vand.u32 %v4795, 4294901760
    %4797 = vmatpush.msra.mxu0 %v4796
    %v4798 = vand.u32 %v181, 4294901760
    %4799 = vmatmul.f32.gmra.mxu0 %v4798
    %v4800 = vpop.f32.mrf.mxu0
    %v4801 = vadd.f32 %v4771, %v4800
    %4802 = vdwg.mxu0
    %4803 = vmatpush.msra.mxu0 0.0
    %4804 = vmatpush.msra.mxu0 0.0
    %4805 = vmatpush.msra.mxu0 0.0
    %4806 = vmatpush.msra.mxu0 0.0
    %4807 = vmatpush.msra.mxu0 0.0
    %4808 = vmatpush.msra.mxu0 0.0
    %4809 = vmatpush.msra.mxu0 0.0
    %4810 = vmatpush.msra.mxu0 0.0
    %4811 = vmatpush.msra.mxu0 0.0
    %4812 = vmatpush.msra.mxu0 0.0
    %4813 = vmatpush.msra.mxu0 0.0
    %4814 = vmatpush.msra.mxu0 0.0
    %4815 = vmatpush.msra.mxu0 0.0
    %v4816 = vand.u32 %v165, 4294901760
    %4817 = vmatpush.msra.mxu0 %v4816
    %v4818 = vand.u32 %v126, 4294901760
    %4819 = vmatpush.msra.mxu0 %v4818
    %v4820 = vand.u32 %v87, 4294901760
    %4821 = vmatpush.msra.mxu0 %v4820
    %v4822 = vand.u32 %v181, 4294901760
    %4823 = vmatmul.f32.gmra.mxu0 %v4822
    %v4824 = vpop.f32.mrf.mxu0
    %v4825 = vadd.f32 %v4801, %v4824
    %4826 = vdwg.mxu0
    %4827 = vmatpush.msra.mxu0 0.0
    %4828 = vmatpush.msra.mxu0 0.0
    %4829 = vmatpush.msra.mxu0 0.0
    %4830 = vmatpush.msra.mxu0 0.0
    %4831 = vmatpush.msra.mxu0 0.0
    %4832 = vmatpush.msra.mxu0 0.0
    %4833 = vmatpush.msra.mxu0 0.0
    %4834 = vmatpush.msra.mxu0 0.0
    %4835 = vmatpush.msra.mxu0 0.0
    %4836 = vmatpush.msra.mxu0 0.0
    %4837 = vmatpush.msra.mxu0 0.0
    %4838 = vmatpush.msra.mxu0 0.0
    %4839 = vmatpush.msra.mxu0 0.0
    %v4840 = vand.u32 %v166, 4294901760
    %4841 = vmatpush.msra.mxu0 %v4840
    %v4842 = vand.u32 %v127, 4294901760
    %4843 = vmatpush.msra.mxu0 %v4842
    %v4844 = vand.u32 %v88, 4294901760
    %4845 = vmatpush.msra.mxu0 %v4844
    %v4846 = vand.u32 %v181, 4294901760
    %v4847 = vsub.f32 %v181, %v4846
    %v4848 = vand.u32 %v4847, 4294901760
    %v4849 = vsub.f32 %v4847, %v4848
    %v4850 = vand.u32 %v4849, 4294901760
    %4851 = vmatmul.f32.gmra.mxu0 %v4850
    %v4852 = vpop.f32.mrf.mxu0
    %v4853 = vadd.f32 0.0, %v4852
    %4854 = vdwg.mxu0
    %4855 = vmatpush.msra.mxu0 0.0
    %4856 = vmatpush.msra.mxu0 0.0
    %4857 = vmatpush.msra.mxu0 0.0
    %4858 = vmatpush.msra.mxu0 0.0
    %4859 = vmatpush.msra.mxu0 0.0
    %4860 = vmatpush.msra.mxu0 0.0
    %4861 = vmatpush.msra.mxu0 0.0
    %4862 = vmatpush.msra.mxu0 0.0
    %4863 = vmatpush.msra.mxu0 0.0
    %4864 = vmatpush.msra.mxu0 0.0
    %4865 = vmatpush.msra.mxu0 0.0
    %4866 = vmatpush.msra.mxu0 0.0
    %4867 = vmatpush.msra.mxu0 0.0
    %v4868 = vand.u32 %v166, 4294901760
    %v4869 = vsub.f32 %v166, %v4868
    %v4870 = vand.u32 %v4869, 4294901760
    %v4871 = vsub.f32 %v4869, %v4870
    %v4872 = vand.u32 %v4871, 4294901760
    %4873 = vmatpush.msra.mxu0 %v4872
    %v4874 = vand.u32 %v127, 4294901760
    %v4875 = vsub.f32 %v127, %v4874
    %v4876 = vand.u32 %v4875, 4294901760
    %v4877 = vsub.f32 %v4875, %v4876
    %v4878 = vand.u32 %v4877, 4294901760
    %4879 = vmatpush.msra.mxu0 %v4878
    %v4880 = vand.u32 %v88, 4294901760
    %v4881 = vsub.f32 %v88, %v4880
    %v4882 = vand.u32 %v4881, 4294901760
    %v4883 = vsub.f32 %v4881, %v4882
    %v4884 = vand.u32 %v4883, 4294901760
    %4885 = vmatpush.msra.mxu0 %v4884
    %v4886 = vand.u32 %v181, 4294901760
    %4887 = vmatmul.f32.gmra.mxu0 %v4886
    %v4888 = vpop.f32.mrf.mxu0
    %v4889 = vadd.f32 %v4853, %v4888
    %4890 = vdwg.mxu0
    %4891 = vmatpush.msra.mxu0 0.0
    %4892 = vmatpush.msra.mxu0 0.0
    %4893 = vmatpush.msra.mxu0 0.0
    %4894 = vmatpush.msra.mxu0 0.0
    %4895 = vmatpush.msra.mxu0 0.0
    %4896 = vmatpush.msra.mxu0 0.0
    %4897 = vmatpush.msra.mxu0 0.0
    %4898 = vmatpush.msra.mxu0 0.0
    %4899 = vmatpush.msra.mxu0 0.0
    %4900 = vmatpush.msra.mxu0 0.0
    %4901 = vmatpush.msra.mxu0 0.0
    %4902 = vmatpush.msra.mxu0 0.0
    %4903 = vmatpush.msra.mxu0 0.0
    %v4904 = vand.u32 %v166, 4294901760
    %v4905 = vsub.f32 %v166, %v4904
    %4906 = vmatpush.msra.mxu0 %v4905
    %v4907 = vand.u32 %v127, 4294901760
    %v4908 = vsub.f32 %v127, %v4907
    %4909 = vmatpush.msra.mxu0 %v4908
    %v4910 = vand.u32 %v88, 4294901760
    %v4911 = vsub.f32 %v88, %v4910
    %4912 = vmatpush.msra.mxu0 %v4911
    %v4913 = vand.u32 %v181, 4294901760
    %v4914 = vsub.f32 %v181, %v4913
    %4915 = vmatmul.f32.gmra.mxu0 %v4914
    %v4916 = vpop.f32.mrf.mxu0
    %v4917 = vadd.f32 %v4889, %v4916
    %4918 = vdwg.mxu0
    %4919 = vmatpush.msra.mxu0 0.0
    %4920 = vmatpush.msra.mxu0 0.0
    %4921 = vmatpush.msra.mxu0 0.0
    %4922 = vmatpush.msra.mxu0 0.0
    %4923 = vmatpush.msra.mxu0 0.0
    %4924 = vmatpush.msra.mxu0 0.0
    %4925 = vmatpush.msra.mxu0 0.0
    %4926 = vmatpush.msra.mxu0 0.0
    %4927 = vmatpush.msra.mxu0 0.0
    %4928 = vmatpush.msra.mxu0 0.0
    %4929 = vmatpush.msra.mxu0 0.0
    %4930 = vmatpush.msra.mxu0 0.0
    %4931 = vmatpush.msra.mxu0 0.0
    %v4932 = vand.u32 %v166, 4294901760
    %4933 = vmatpush.msra.mxu0 %v4932
    %v4934 = vand.u32 %v127, 4294901760
    %4935 = vmatpush.msra.mxu0 %v4934
    %v4936 = vand.u32 %v88, 4294901760
    %4937 = vmatpush.msra.mxu0 %v4936
    %v4938 = vand.u32 %v181, 4294901760
    %v4939 = vsub.f32 %v181, %v4938
    %v4940 = vand.u32 %v4939, 4294901760
    %4941 = vmatmul.f32.gmra.mxu0 %v4940
    %v4942 = vpop.f32.mrf.mxu0
    %v4943 = vadd.f32 %v4917, %v4942
    %4944 = vdwg.mxu0
    %4945 = vmatpush.msra.mxu0 0.0
    %4946 = vmatpush.msra.mxu0 0.0
    %4947 = vmatpush.msra.mxu0 0.0
    %4948 = vmatpush.msra.mxu0 0.0
    %4949 = vmatpush.msra.mxu0 0.0
    %4950 = vmatpush.msra.mxu0 0.0
    %4951 = vmatpush.msra.mxu0 0.0
    %4952 = vmatpush.msra.mxu0 0.0
    %4953 = vmatpush.msra.mxu0 0.0
    %4954 = vmatpush.msra.mxu0 0.0
    %4955 = vmatpush.msra.mxu0 0.0
    %4956 = vmatpush.msra.mxu0 0.0
    %4957 = vmatpush.msra.mxu0 0.0
    %v4958 = vand.u32 %v166, 4294901760
    %v4959 = vsub.f32 %v166, %v4958
    %v4960 = vand.u32 %v4959, 4294901760
    %4961 = vmatpush.msra.mxu0 %v4960
    %v4962 = vand.u32 %v127, 4294901760
    %v4963 = vsub.f32 %v127, %v4962
    %v4964 = vand.u32 %v4963, 4294901760
    %4965 = vmatpush.msra.mxu0 %v4964
    %v4966 = vand.u32 %v88, 4294901760
    %v4967 = vsub.f32 %v88, %v4966
    %v4968 = vand.u32 %v4967, 4294901760
    %4969 = vmatpush.msra.mxu0 %v4968
    %v4970 = vand.u32 %v181, 4294901760
    %4971 = vmatmul.f32.gmra.mxu0 %v4970
    %v4972 = vpop.f32.mrf.mxu0
    %v4973 = vadd.f32 %v4943, %v4972
    %4974 = vdwg.mxu0
    %4975 = vmatpush.msra.mxu0 0.0
    %4976 = vmatpush.msra.mxu0 0.0
    %4977 = vmatpush.msra.mxu0 0.0
    %4978 = vmatpush.msra.mxu0 0.0
    %4979 = vmatpush.msra.mxu0 0.0
    %4980 = vmatpush.msra.mxu0 0.0
    %4981 = vmatpush.msra.mxu0 0.0
    %4982 = vmatpush.msra.mxu0 0.0
    %4983 = vmatpush.msra.mxu0 0.0
    %4984 = vmatpush.msra.mxu0 0.0
    %4985 = vmatpush.msra.mxu0 0.0
    %4986 = vmatpush.msra.mxu0 0.0
    %4987 = vmatpush.msra.mxu0 0.0
    %v4988 = vand.u32 %v166, 4294901760
    %4989 = vmatpush.msra.mxu0 %v4988
    %v4990 = vand.u32 %v127, 4294901760
    %4991 = vmatpush.msra.mxu0 %v4990
    %v4992 = vand.u32 %v88, 4294901760
    %4993 = vmatpush.msra.mxu0 %v4992
    %v4994 = vand.u32 %v181, 4294901760
    %4995 = vmatmul.f32.gmra.mxu0 %v4994
    %v4996 = vpop.f32.mrf.mxu0
    %v4997 = vadd.f32 %v4973, %v4996
    %4998 = vdwg.mxu0
    %4999 = vmatpush.msra.mxu0 0.0
    %5000 = vmatpush.msra.mxu0 0.0
    %5001 = vmatpush.msra.mxu0 0.0
    %5002 = vmatpush.msra.mxu0 0.0
    %5003 = vmatpush.msra.mxu0 0.0
    %5004 = vmatpush.msra.mxu0 0.0
    %5005 = vmatpush.msra.mxu0 0.0
    %5006 = vmatpush.msra.mxu0 0.0
    %5007 = vmatpush.msra.mxu0 0.0
    %5008 = vmatpush.msra.mxu0 0.0
    %5009 = vmatpush.msra.mxu0 0.0
    %5010 = vmatpush.msra.mxu0 0.0
    %5011 = vmatpush.msra.mxu0 0.0
    %v5012 = vand.u32 %v167, 4294901760
    %5013 = vmatpush.msra.mxu0 %v5012
    %v5014 = vand.u32 %v128, 4294901760
    %5015 = vmatpush.msra.mxu0 %v5014
    %v5016 = vand.u32 %v89, 4294901760
    %5017 = vmatpush.msra.mxu0 %v5016
    %v5018 = vand.u32 %v181, 4294901760
    %v5019 = vsub.f32 %v181, %v5018
    %v5020 = vand.u32 %v5019, 4294901760
    %v5021 = vsub.f32 %v5019, %v5020
    %v5022 = vand.u32 %v5021, 4294901760
    %5023 = vmatmul.f32.gmra.mxu0 %v5022
    %v5024 = vpop.f32.mrf.mxu0
    %v5025 = vadd.f32 0.0, %v5024
    %5026 = vdwg.mxu0
    %5027 = vmatpush.msra.mxu0 0.0
    %5028 = vmatpush.msra.mxu0 0.0
    %5029 = vmatpush.msra.mxu0 0.0
    %5030 = vmatpush.msra.mxu0 0.0
    %5031 = vmatpush.msra.mxu0 0.0
    %5032 = vmatpush.msra.mxu0 0.0
    %5033 = vmatpush.msra.mxu0 0.0
    %5034 = vmatpush.msra.mxu0 0.0
    %5035 = vmatpush.msra.mxu0 0.0
    %5036 = vmatpush.msra.mxu0 0.0
    %5037 = vmatpush.msra.mxu0 0.0
    %5038 = vmatpush.msra.mxu0 0.0
    %5039 = vmatpush.msra.mxu0 0.0
    %v5040 = vand.u32 %v167, 4294901760
    %v5041 = vsub.f32 %v167, %v5040
    %v5042 = vand.u32 %v5041, 4294901760
    %v5043 = vsub.f32 %v5041, %v5042
    %v5044 = vand.u32 %v5043, 4294901760
    %5045 = vmatpush.msra.mxu0 %v5044
    %v5046 = vand.u32 %v128, 4294901760
    %v5047 = vsub.f32 %v128, %v5046
    %v5048 = vand.u32 %v5047, 4294901760
    %v5049 = vsub.f32 %v5047, %v5048
    %v5050 = vand.u32 %v5049, 4294901760
    %5051 = vmatpush.msra.mxu0 %v5050
    %v5052 = vand.u32 %v89, 4294901760
    %v5053 = vsub.f32 %v89, %v5052
    %v5054 = vand.u32 %v5053, 4294901760
    %v5055 = vsub.f32 %v5053, %v5054
    %v5056 = vand.u32 %v5055, 4294901760
    %5057 = vmatpush.msra.mxu0 %v5056
    %v5058 = vand.u32 %v181, 4294901760
    %5059 = vmatmul.f32.gmra.mxu0 %v5058
    %v5060 = vpop.f32.mrf.mxu0
    %v5061 = vadd.f32 %v5025, %v5060
    %5062 = vdwg.mxu0
    %5063 = vmatpush.msra.mxu0 0.0
    %5064 = vmatpush.msra.mxu0 0.0
    %5065 = vmatpush.msra.mxu0 0.0
    %5066 = vmatpush.msra.mxu0 0.0
    %5067 = vmatpush.msra.mxu0 0.0
    %5068 = vmatpush.msra.mxu0 0.0
    %5069 = vmatpush.msra.mxu0 0.0
    %5070 = vmatpush.msra.mxu0 0.0
    %5071 = vmatpush.msra.mxu0 0.0
    %5072 = vmatpush.msra.mxu0 0.0
    %5073 = vmatpush.msra.mxu0 0.0
    %5074 = vmatpush.msra.mxu0 0.0
    %5075 = vmatpush.msra.mxu0 0.0
    %v5076 = vand.u32 %v167, 4294901760
    %v5077 = vsub.f32 %v167, %v5076
    %5078 = vmatpush.msra.mxu0 %v5077
    %v5079 = vand.u32 %v128, 4294901760
    %v5080 = vsub.f32 %v128, %v5079
    %5081 = vmatpush.msra.mxu0 %v5080
    %v5082 = vand.u32 %v89, 4294901760
    %v5083 = vsub.f32 %v89, %v5082
    %5084 = vmatpush.msra.mxu0 %v5083
    %v5085 = vand.u32 %v181, 4294901760
    %v5086 = vsub.f32 %v181, %v5085
    %5087 = vmatmul.f32.gmra.mxu0 %v5086
    %v5088 = vpop.f32.mrf.mxu0
    %v5089 = vadd.f32 %v5061, %v5088
    %5090 = vdwg.mxu0
    %5091 = vmatpush.msra.mxu0 0.0
    %5092 = vmatpush.msra.mxu0 0.0
    %5093 = vmatpush.msra.mxu0 0.0
    %5094 = vmatpush.msra.mxu0 0.0
    %5095 = vmatpush.msra.mxu0 0.0
    %5096 = vmatpush.msra.mxu0 0.0
    %5097 = vmatpush.msra.mxu0 0.0
    %5098 = vmatpush.msra.mxu0 0.0
    %5099 = vmatpush.msra.mxu0 0.0
    %5100 = vmatpush.msra.mxu0 0.0
    %5101 = vmatpush.msra.mxu0 0.0
    %5102 = vmatpush.msra.mxu0 0.0
    %5103 = vmatpush.msra.mxu0 0.0
    %v5104 = vand.u32 %v167, 4294901760
    %5105 = vmatpush.msra.mxu0 %v5104
    %v5106 = vand.u32 %v128, 4294901760
    %5107 = vmatpush.msra.mxu0 %v5106
    %v5108 = vand.u32 %v89, 4294901760
    %5109 = vmatpush.msra.mxu0 %v5108
    %v5110 = vand.u32 %v181, 4294901760
    %v5111 = vsub.f32 %v181, %v5110
    %v5112 = vand.u32 %v5111, 4294901760
    %5113 = vmatmul.f32.gmra.mxu0 %v5112
    %v5114 = vpop.f32.mrf.mxu0
    %v5115 = vadd.f32 %v5089, %v5114
    %5116 = vdwg.mxu0
    %5117 = vmatpush.msra.mxu0 0.0
    %5118 = vmatpush.msra.mxu0 0.0
    %5119 = vmatpush.msra.mxu0 0.0
    %5120 = vmatpush.msra.mxu0 0.0
    %5121 = vmatpush.msra.mxu0 0.0
    %5122 = vmatpush.msra.mxu0 0.0
    %5123 = vmatpush.msra.mxu0 0.0
    %5124 = vmatpush.msra.mxu0 0.0
    %5125 = vmatpush.msra.mxu0 0.0
    %5126 = vmatpush.msra.mxu0 0.0
    %5127 = vmatpush.msra.mxu0 0.0
    %5128 = vmatpush.msra.mxu0 0.0
    %5129 = vmatpush.msra.mxu0 0.0
    %v5130 = vand.u32 %v167, 4294901760
    %v5131 = vsub.f32 %v167, %v5130
    %v5132 = vand.u32 %v5131, 4294901760
    %5133 = vmatpush.msra.mxu0 %v5132
    %v5134 = vand.u32 %v128, 4294901760
    %v5135 = vsub.f32 %v128, %v5134
    %v5136 = vand.u32 %v5135, 4294901760
    %5137 = vmatpush.msra.mxu0 %v5136
    %v5138 = vand.u32 %v89, 4294901760
    %v5139 = vsub.f32 %v89, %v5138
    %v5140 = vand.u32 %v5139, 4294901760
    %5141 = vmatpush.msra.mxu0 %v5140
    %v5142 = vand.u32 %v181, 4294901760
    %5143 = vmatmul.f32.gmra.mxu0 %v5142
    %v5144 = vpop.f32.mrf.mxu0
    %v5145 = vadd.f32 %v5115, %v5144
    %5146 = vdwg.mxu0
    %5147 = vmatpush.msra.mxu0 0.0
    %5148 = vmatpush.msra.mxu0 0.0
    %5149 = vmatpush.msra.mxu0 0.0
    %5150 = vmatpush.msra.mxu0 0.0
    %5151 = vmatpush.msra.mxu0 0.0
    %5152 = vmatpush.msra.mxu0 0.0
    %5153 = vmatpush.msra.mxu0 0.0
    %5154 = vmatpush.msra.mxu0 0.0
    %5155 = vmatpush.msra.mxu0 0.0
    %5156 = vmatpush.msra.mxu0 0.0
    %5157 = vmatpush.msra.mxu0 0.0
    %5158 = vmatpush.msra.mxu0 0.0
    %5159 = vmatpush.msra.mxu0 0.0
    %v5160 = vand.u32 %v167, 4294901760
    %5161 = vmatpush.msra.mxu0 %v5160
    %v5162 = vand.u32 %v128, 4294901760
    %5163 = vmatpush.msra.mxu0 %v5162
    %v5164 = vand.u32 %v89, 4294901760
    %5165 = vmatpush.msra.mxu0 %v5164
    %v5166 = vand.u32 %v181, 4294901760
    %5167 = vmatmul.f32.gmra.mxu0 %v5166
    %v5168 = vpop.f32.mrf.mxu0
    %v5169 = vadd.f32 %v5145, %v5168
    %5170 = vdwg.mxu0
    %5171 = vmatpush.msra.mxu0 0.0
    %5172 = vmatpush.msra.mxu0 0.0
    %5173 = vmatpush.msra.mxu0 0.0
    %5174 = vmatpush.msra.mxu0 0.0
    %5175 = vmatpush.msra.mxu0 0.0
    %5176 = vmatpush.msra.mxu0 0.0
    %5177 = vmatpush.msra.mxu0 0.0
    %5178 = vmatpush.msra.mxu0 0.0
    %5179 = vmatpush.msra.mxu0 0.0
    %5180 = vmatpush.msra.mxu0 0.0
    %5181 = vmatpush.msra.mxu0 0.0
    %5182 = vmatpush.msra.mxu0 0.0
    %5183 = vmatpush.msra.mxu0 0.0
    %v5184 = vand.u32 %v168, 4294901760
    %5185 = vmatpush.msra.mxu0 %v5184
    %v5186 = vand.u32 %v129, 4294901760
    %5187 = vmatpush.msra.mxu0 %v5186
    %v5188 = vand.u32 %v90, 4294901760
    %5189 = vmatpush.msra.mxu0 %v5188
    %v5190 = vand.u32 %v181, 4294901760
    %v5191 = vsub.f32 %v181, %v5190
    %v5192 = vand.u32 %v5191, 4294901760
    %v5193 = vsub.f32 %v5191, %v5192
    %v5194 = vand.u32 %v5193, 4294901760
    %5195 = vmatmul.f32.gmra.mxu0 %v5194
    %v5196 = vpop.f32.mrf.mxu0
    %v5197 = vadd.f32 0.0, %v5196
    %5198 = vdwg.mxu0
    %5199 = vmatpush.msra.mxu0 0.0
    %5200 = vmatpush.msra.mxu0 0.0
    %5201 = vmatpush.msra.mxu0 0.0
    %5202 = vmatpush.msra.mxu0 0.0
    %5203 = vmatpush.msra.mxu0 0.0
    %5204 = vmatpush.msra.mxu0 0.0
    %5205 = vmatpush.msra.mxu0 0.0
    %5206 = vmatpush.msra.mxu0 0.0
    %5207 = vmatpush.msra.mxu0 0.0
    %5208 = vmatpush.msra.mxu0 0.0
    %5209 = vmatpush.msra.mxu0 0.0
    %5210 = vmatpush.msra.mxu0 0.0
    %5211 = vmatpush.msra.mxu0 0.0
    %v5212 = vand.u32 %v168, 4294901760
    %v5213 = vsub.f32 %v168, %v5212
    %v5214 = vand.u32 %v5213, 4294901760
    %v5215 = vsub.f32 %v5213, %v5214
    %v5216 = vand.u32 %v5215, 4294901760
    %5217 = vmatpush.msra.mxu0 %v5216
    %v5218 = vand.u32 %v129, 4294901760
    %v5219 = vsub.f32 %v129, %v5218
    %v5220 = vand.u32 %v5219, 4294901760
    %v5221 = vsub.f32 %v5219, %v5220
    %v5222 = vand.u32 %v5221, 4294901760
    %5223 = vmatpush.msra.mxu0 %v5222
    %v5224 = vand.u32 %v90, 4294901760
    %v5225 = vsub.f32 %v90, %v5224
    %v5226 = vand.u32 %v5225, 4294901760
    %v5227 = vsub.f32 %v5225, %v5226
    %v5228 = vand.u32 %v5227, 4294901760
    %5229 = vmatpush.msra.mxu0 %v5228
    %v5230 = vand.u32 %v181, 4294901760
    %5231 = vmatmul.f32.gmra.mxu0 %v5230
    %v5232 = vpop.f32.mrf.mxu0
    %v5233 = vadd.f32 %v5197, %v5232
    %5234 = vdwg.mxu0
    %5235 = vmatpush.msra.mxu0 0.0
    %5236 = vmatpush.msra.mxu0 0.0
    %5237 = vmatpush.msra.mxu0 0.0
    %5238 = vmatpush.msra.mxu0 0.0
    %5239 = vmatpush.msra.mxu0 0.0
    %5240 = vmatpush.msra.mxu0 0.0
    %5241 = vmatpush.msra.mxu0 0.0
    %5242 = vmatpush.msra.mxu0 0.0
    %5243 = vmatpush.msra.mxu0 0.0
    %5244 = vmatpush.msra.mxu0 0.0
    %5245 = vmatpush.msra.mxu0 0.0
    %5246 = vmatpush.msra.mxu0 0.0
    %5247 = vmatpush.msra.mxu0 0.0
    %v5248 = vand.u32 %v168, 4294901760
    %v5249 = vsub.f32 %v168, %v5248
    %5250 = vmatpush.msra.mxu0 %v5249
    %v5251 = vand.u32 %v129, 4294901760
    %v5252 = vsub.f32 %v129, %v5251
    %5253 = vmatpush.msra.mxu0 %v5252
    %v5254 = vand.u32 %v90, 4294901760
    %v5255 = vsub.f32 %v90, %v5254
    %5256 = vmatpush.msra.mxu0 %v5255
    %v5257 = vand.u32 %v181, 4294901760
    %v5258 = vsub.f32 %v181, %v5257
    %5259 = vmatmul.f32.gmra.mxu0 %v5258
    %v5260 = vpop.f32.mrf.mxu0
    %v5261 = vadd.f32 %v5233, %v5260
    %5262 = vdwg.mxu0
    %5263 = vmatpush.msra.mxu0 0.0
    %5264 = vmatpush.msra.mxu0 0.0
    %5265 = vmatpush.msra.mxu0 0.0
    %5266 = vmatpush.msra.mxu0 0.0
    %5267 = vmatpush.msra.mxu0 0.0
    %5268 = vmatpush.msra.mxu0 0.0
    %5269 = vmatpush.msra.mxu0 0.0
    %5270 = vmatpush.msra.mxu0 0.0
    %5271 = vmatpush.msra.mxu0 0.0
    %5272 = vmatpush.msra.mxu0 0.0
    %5273 = vmatpush.msra.mxu0 0.0
    %5274 = vmatpush.msra.mxu0 0.0
    %5275 = vmatpush.msra.mxu0 0.0
    %v5276 = vand.u32 %v168, 4294901760
    %5277 = vmatpush.msra.mxu0 %v5276
    %v5278 = vand.u32 %v129, 4294901760
    %5279 = vmatpush.msra.mxu0 %v5278
    %v5280 = vand.u32 %v90, 4294901760
    %5281 = vmatpush.msra.mxu0 %v5280
    %v5282 = vand.u32 %v181, 4294901760
    %v5283 = vsub.f32 %v181, %v5282
    %v5284 = vand.u32 %v5283, 4294901760
    %5285 = vmatmul.f32.gmra.mxu0 %v5284
    %v5286 = vpop.f32.mrf.mxu0
    %v5287 = vadd.f32 %v5261, %v5286
    %5288 = vdwg.mxu0
    %5289 = vmatpush.msra.mxu0 0.0
    %5290 = vmatpush.msra.mxu0 0.0
    %5291 = vmatpush.msra.mxu0 0.0
    %5292 = vmatpush.msra.mxu0 0.0
    %5293 = vmatpush.msra.mxu0 0.0
    %5294 = vmatpush.msra.mxu0 0.0
    %5295 = vmatpush.msra.mxu0 0.0
    %5296 = vmatpush.msra.mxu0 0.0
    %5297 = vmatpush.msra.mxu0 0.0
    %5298 = vmatpush.msra.mxu0 0.0
    %5299 = vmatpush.msra.mxu0 0.0
    %5300 = vmatpush.msra.mxu0 0.0
    %5301 = vmatpush.msra.mxu0 0.0
    %v5302 = vand.u32 %v168, 4294901760
    %v5303 = vsub.f32 %v168, %v5302
    %v5304 = vand.u32 %v5303, 4294901760
    %5305 = vmatpush.msra.mxu0 %v5304
    %v5306 = vand.u32 %v129, 4294901760
    %v5307 = vsub.f32 %v129, %v5306
    %v5308 = vand.u32 %v5307, 4294901760
    %5309 = vmatpush.msra.mxu0 %v5308
    %v5310 = vand.u32 %v90, 4294901760
    %v5311 = vsub.f32 %v90, %v5310
    %v5312 = vand.u32 %v5311, 4294901760
    %5313 = vmatpush.msra.mxu0 %v5312
    %v5314 = vand.u32 %v181, 4294901760
    %5315 = vmatmul.f32.gmra.mxu0 %v5314
    %v5316 = vpop.f32.mrf.mxu0
    %v5317 = vadd.f32 %v5287, %v5316
    %5318 = vdwg.mxu0
    %5319 = vmatpush.msra.mxu0 0.0
    %5320 = vmatpush.msra.mxu0 0.0
    %5321 = vmatpush.msra.mxu0 0.0
    %5322 = vmatpush.msra.mxu0 0.0
    %5323 = vmatpush.msra.mxu0 0.0
    %5324 = vmatpush.msra.mxu0 0.0
    %5325 = vmatpush.msra.mxu0 0.0
    %5326 = vmatpush.msra.mxu0 0.0
    %5327 = vmatpush.msra.mxu0 0.0
    %5328 = vmatpush.msra.mxu0 0.0
    %5329 = vmatpush.msra.mxu0 0.0
    %5330 = vmatpush.msra.mxu0 0.0
    %5331 = vmatpush.msra.mxu0 0.0
    %v5332 = vand.u32 %v168, 4294901760
    %5333 = vmatpush.msra.mxu0 %v5332
    %v5334 = vand.u32 %v129, 4294901760
    %5335 = vmatpush.msra.mxu0 %v5334
    %v5336 = vand.u32 %v90, 4294901760
    %5337 = vmatpush.msra.mxu0 %v5336
    %v5338 = vand.u32 %v181, 4294901760
    %5339 = vmatmul.f32.gmra.mxu0 %v5338
    %v5340 = vpop.f32.mrf.mxu0
    %v5341 = vadd.f32 %v5317, %v5340
    %5342 = vdwg.mxu0
    %5343 = vmatpush.msra.mxu0 0.0
    %5344 = vmatpush.msra.mxu0 0.0
    %5345 = vmatpush.msra.mxu0 0.0
    %5346 = vmatpush.msra.mxu0 0.0
    %5347 = vmatpush.msra.mxu0 0.0
    %5348 = vmatpush.msra.mxu0 0.0
    %5349 = vmatpush.msra.mxu0 0.0
    %5350 = vmatpush.msra.mxu0 0.0
    %5351 = vmatpush.msra.mxu0 0.0
    %5352 = vmatpush.msra.mxu0 0.0
    %5353 = vmatpush.msra.mxu0 0.0
    %5354 = vmatpush.msra.mxu0 0.0
    %5355 = vmatpush.msra.mxu0 0.0
    %v5356 = vand.u32 %v169, 4294901760
    %5357 = vmatpush.msra.mxu0 %v5356
    %v5358 = vand.u32 %v130, 4294901760
    %5359 = vmatpush.msra.mxu0 %v5358
    %v5360 = vand.u32 %v91, 4294901760
    %5361 = vmatpush.msra.mxu0 %v5360
    %v5362 = vand.u32 %v181, 4294901760
    %v5363 = vsub.f32 %v181, %v5362
    %v5364 = vand.u32 %v5363, 4294901760
    %v5365 = vsub.f32 %v5363, %v5364
    %v5366 = vand.u32 %v5365, 4294901760
    %5367 = vmatmul.f32.gmra.mxu0 %v5366
    %v5368 = vpop.f32.mrf.mxu0
    %v5369 = vadd.f32 0.0, %v5368
    %5370 = vdwg.mxu0
    %5371 = vmatpush.msra.mxu0 0.0
    %5372 = vmatpush.msra.mxu0 0.0
    %5373 = vmatpush.msra.mxu0 0.0
    %5374 = vmatpush.msra.mxu0 0.0
    %5375 = vmatpush.msra.mxu0 0.0
    %5376 = vmatpush.msra.mxu0 0.0
    %5377 = vmatpush.msra.mxu0 0.0
    %5378 = vmatpush.msra.mxu0 0.0
    %5379 = vmatpush.msra.mxu0 0.0
    %5380 = vmatpush.msra.mxu0 0.0
    %5381 = vmatpush.msra.mxu0 0.0
    %5382 = vmatpush.msra.mxu0 0.0
    %5383 = vmatpush.msra.mxu0 0.0
    %v5384 = vand.u32 %v169, 4294901760
    %v5385 = vsub.f32 %v169, %v5384
    %v5386 = vand.u32 %v5385, 4294901760
    %v5387 = vsub.f32 %v5385, %v5386
    %v5388 = vand.u32 %v5387, 4294901760
    %5389 = vmatpush.msra.mxu0 %v5388
    %v5390 = vand.u32 %v130, 4294901760
    %v5391 = vsub.f32 %v130, %v5390
    %v5392 = vand.u32 %v5391, 4294901760
    %v5393 = vsub.f32 %v5391, %v5392
    %v5394 = vand.u32 %v5393, 4294901760
    %5395 = vmatpush.msra.mxu0 %v5394
    %v5396 = vand.u32 %v91, 4294901760
    %v5397 = vsub.f32 %v91, %v5396
    %v5398 = vand.u32 %v5397, 4294901760
    %v5399 = vsub.f32 %v5397, %v5398
    %v5400 = vand.u32 %v5399, 4294901760
    %5401 = vmatpush.msra.mxu0 %v5400
    %v5402 = vand.u32 %v181, 4294901760
    %5403 = vmatmul.f32.gmra.mxu0 %v5402
    %v5404 = vpop.f32.mrf.mxu0
    %v5405 = vadd.f32 %v5369, %v5404
    %5406 = vdwg.mxu0
    %5407 = vmatpush.msra.mxu0 0.0
    %5408 = vmatpush.msra.mxu0 0.0
    %5409 = vmatpush.msra.mxu0 0.0
    %5410 = vmatpush.msra.mxu0 0.0
    %5411 = vmatpush.msra.mxu0 0.0
    %5412 = vmatpush.msra.mxu0 0.0
    %5413 = vmatpush.msra.mxu0 0.0
    %5414 = vmatpush.msra.mxu0 0.0
    %5415 = vmatpush.msra.mxu0 0.0
    %5416 = vmatpush.msra.mxu0 0.0
    %5417 = vmatpush.msra.mxu0 0.0
    %5418 = vmatpush.msra.mxu0 0.0
    %5419 = vmatpush.msra.mxu0 0.0
    %v5420 = vand.u32 %v169, 4294901760
    %v5421 = vsub.f32 %v169, %v5420
    %5422 = vmatpush.msra.mxu0 %v5421
    %v5423 = vand.u32 %v130, 4294901760
    %v5424 = vsub.f32 %v130, %v5423
    %5425 = vmatpush.msra.mxu0 %v5424
    %v5426 = vand.u32 %v91, 4294901760
    %v5427 = vsub.f32 %v91, %v5426
    %5428 = vmatpush.msra.mxu0 %v5427
    %v5429 = vand.u32 %v181, 4294901760
    %v5430 = vsub.f32 %v181, %v5429
    %5431 = vmatmul.f32.gmra.mxu0 %v5430
    %v5432 = vpop.f32.mrf.mxu0
    %v5433 = vadd.f32 %v5405, %v5432
    %5434 = vdwg.mxu0
    %5435 = vmatpush.msra.mxu0 0.0
    %5436 = vmatpush.msra.mxu0 0.0
    %5437 = vmatpush.msra.mxu0 0.0
    %5438 = vmatpush.msra.mxu0 0.0
    %5439 = vmatpush.msra.mxu0 0.0
    %5440 = vmatpush.msra.mxu0 0.0
    %5441 = vmatpush.msra.mxu0 0.0
    %5442 = vmatpush.msra.mxu0 0.0
    %5443 = vmatpush.msra.mxu0 0.0
    %5444 = vmatpush.msra.mxu0 0.0
    %5445 = vmatpush.msra.mxu0 0.0
    %5446 = vmatpush.msra.mxu0 0.0
    %5447 = vmatpush.msra.mxu0 0.0
    %v5448 = vand.u32 %v169, 4294901760
    %5449 = vmatpush.msra.mxu0 %v5448
    %v5450 = vand.u32 %v130, 4294901760
    %5451 = vmatpush.msra.mxu0 %v5450
    %v5452 = vand.u32 %v91, 4294901760
    %5453 = vmatpush.msra.mxu0 %v5452
    %v5454 = vand.u32 %v181, 4294901760
    %v5455 = vsub.f32 %v181, %v5454
    %v5456 = vand.u32 %v5455, 4294901760
    %5457 = vmatmul.f32.gmra.mxu0 %v5456
    %v5458 = vpop.f32.mrf.mxu0
    %v5459 = vadd.f32 %v5433, %v5458
    %5460 = vdwg.mxu0
    %5461 = vmatpush.msra.mxu0 0.0
    %5462 = vmatpush.msra.mxu0 0.0
    %5463 = vmatpush.msra.mxu0 0.0
    %5464 = vmatpush.msra.mxu0 0.0
    %5465 = vmatpush.msra.mxu0 0.0
    %5466 = vmatpush.msra.mxu0 0.0
    %5467 = vmatpush.msra.mxu0 0.0
    %5468 = vmatpush.msra.mxu0 0.0
    %5469 = vmatpush.msra.mxu0 0.0
    %5470 = vmatpush.msra.mxu0 0.0
    %5471 = vmatpush.msra.mxu0 0.0
    %5472 = vmatpush.msra.mxu0 0.0
    %5473 = vmatpush.msra.mxu0 0.0
    %v5474 = vand.u32 %v169, 4294901760
    %v5475 = vsub.f32 %v169, %v5474
    %v5476 = vand.u32 %v5475, 4294901760
    %5477 = vmatpush.msra.mxu0 %v5476
    %v5478 = vand.u32 %v130, 4294901760
    %v5479 = vsub.f32 %v130, %v5478
    %v5480 = vand.u32 %v5479, 4294901760
    %5481 = vmatpush.msra.mxu0 %v5480
    %v5482 = vand.u32 %v91, 4294901760
    %v5483 = vsub.f32 %v91, %v5482
    %v5484 = vand.u32 %v5483, 4294901760
    %5485 = vmatpush.msra.mxu0 %v5484
    %v5486 = vand.u32 %v181, 4294901760
    %5487 = vmatmul.f32.gmra.mxu0 %v5486
    %v5488 = vpop.f32.mrf.mxu0
    %v5489 = vadd.f32 %v5459, %v5488
    %5490 = vdwg.mxu0
    %5491 = vmatpush.msra.mxu0 0.0
    %5492 = vmatpush.msra.mxu0 0.0
    %5493 = vmatpush.msra.mxu0 0.0
    %5494 = vmatpush.msra.mxu0 0.0
    %5495 = vmatpush.msra.mxu0 0.0
    %5496 = vmatpush.msra.mxu0 0.0
    %5497 = vmatpush.msra.mxu0 0.0
    %5498 = vmatpush.msra.mxu0 0.0
    %5499 = vmatpush.msra.mxu0 0.0
    %5500 = vmatpush.msra.mxu0 0.0
    %5501 = vmatpush.msra.mxu0 0.0
    %5502 = vmatpush.msra.mxu0 0.0
    %5503 = vmatpush.msra.mxu0 0.0
    %v5504 = vand.u32 %v169, 4294901760
    %5505 = vmatpush.msra.mxu0 %v5504
    %v5506 = vand.u32 %v130, 4294901760
    %5507 = vmatpush.msra.mxu0 %v5506
    %v5508 = vand.u32 %v91, 4294901760
    %5509 = vmatpush.msra.mxu0 %v5508
    %v5510 = vand.u32 %v181, 4294901760
    %5511 = vmatmul.f32.gmra.mxu0 %v5510
    %v5512 = vpop.f32.mrf.mxu0
    %v5513 = vadd.f32 %v5489, %v5512
    %5514 = vdwg.mxu0
    %5515 = vmatpush.msra.mxu0 0.0
    %5516 = vmatpush.msra.mxu0 0.0
    %5517 = vmatpush.msra.mxu0 0.0
    %5518 = vmatpush.msra.mxu0 0.0
    %5519 = vmatpush.msra.mxu0 0.0
    %5520 = vmatpush.msra.mxu0 0.0
    %5521 = vmatpush.msra.mxu0 0.0
    %5522 = vmatpush.msra.mxu0 0.0
    %5523 = vmatpush.msra.mxu0 0.0
    %5524 = vmatpush.msra.mxu0 0.0
    %5525 = vmatpush.msra.mxu0 0.0
    %5526 = vmatpush.msra.mxu0 0.0
    %5527 = vmatpush.msra.mxu0 0.0
    %v5528 = vand.u32 %v170, 4294901760
    %5529 = vmatpush.msra.mxu0 %v5528
    %v5530 = vand.u32 %v131, 4294901760
    %5531 = vmatpush.msra.mxu0 %v5530
    %v5532 = vand.u32 %v92, 4294901760
    %5533 = vmatpush.msra.mxu0 %v5532
    %v5534 = vand.u32 %v181, 4294901760
    %v5535 = vsub.f32 %v181, %v5534
    %v5536 = vand.u32 %v5535, 4294901760
    %v5537 = vsub.f32 %v5535, %v5536
    %v5538 = vand.u32 %v5537, 4294901760
    %5539 = vmatmul.f32.gmra.mxu0 %v5538
    %v5540 = vpop.f32.mrf.mxu0
    %v5541 = vadd.f32 0.0, %v5540
    %5542 = vdwg.mxu0
    %5543 = vmatpush.msra.mxu0 0.0
    %5544 = vmatpush.msra.mxu0 0.0
    %5545 = vmatpush.msra.mxu0 0.0
    %5546 = vmatpush.msra.mxu0 0.0
    %5547 = vmatpush.msra.mxu0 0.0
    %5548 = vmatpush.msra.mxu0 0.0
    %5549 = vmatpush.msra.mxu0 0.0
    %5550 = vmatpush.msra.mxu0 0.0
    %5551 = vmatpush.msra.mxu0 0.0
    %5552 = vmatpush.msra.mxu0 0.0
    %5553 = vmatpush.msra.mxu0 0.0
    %5554 = vmatpush.msra.mxu0 0.0
    %5555 = vmatpush.msra.mxu0 0.0
    %v5556 = vand.u32 %v170, 4294901760
    %v5557 = vsub.f32 %v170, %v5556
    %v5558 = vand.u32 %v5557, 4294901760
    %v5559 = vsub.f32 %v5557, %v5558
    %v5560 = vand.u32 %v5559, 4294901760
    %5561 = vmatpush.msra.mxu0 %v5560
    %v5562 = vand.u32 %v131, 4294901760
    %v5563 = vsub.f32 %v131, %v5562
    %v5564 = vand.u32 %v5563, 4294901760
    %v5565 = vsub.f32 %v5563, %v5564
    %v5566 = vand.u32 %v5565, 4294901760
    %5567 = vmatpush.msra.mxu0 %v5566
    %v5568 = vand.u32 %v92, 4294901760
    %v5569 = vsub.f32 %v92, %v5568
    %v5570 = vand.u32 %v5569, 4294901760
    %v5571 = vsub.f32 %v5569, %v5570
    %v5572 = vand.u32 %v5571, 4294901760
    %5573 = vmatpush.msra.mxu0 %v5572
    %v5574 = vand.u32 %v181, 4294901760
    %5575 = vmatmul.f32.gmra.mxu0 %v5574
    %v5576 = vpop.f32.mrf.mxu0
    %v5577 = vadd.f32 %v5541, %v5576
    %5578 = vdwg.mxu0
    %5579 = vmatpush.msra.mxu0 0.0
    %5580 = vmatpush.msra.mxu0 0.0
    %5581 = vmatpush.msra.mxu0 0.0
    %5582 = vmatpush.msra.mxu0 0.0
    %5583 = vmatpush.msra.mxu0 0.0
    %5584 = vmatpush.msra.mxu0 0.0
    %5585 = vmatpush.msra.mxu0 0.0
    %5586 = vmatpush.msra.mxu0 0.0
    %5587 = vmatpush.msra.mxu0 0.0
    %5588 = vmatpush.msra.mxu0 0.0
    %5589 = vmatpush.msra.mxu0 0.0
    %5590 = vmatpush.msra.mxu0 0.0
    %5591 = vmatpush.msra.mxu0 0.0
    %v5592 = vand.u32 %v170, 4294901760
    %v5593 = vsub.f32 %v170, %v5592
    %5594 = vmatpush.msra.mxu0 %v5593
    %v5595 = vand.u32 %v131, 4294901760
    %v5596 = vsub.f32 %v131, %v5595
    %5597 = vmatpush.msra.mxu0 %v5596
    %v5598 = vand.u32 %v92, 4294901760
    %v5599 = vsub.f32 %v92, %v5598
    %5600 = vmatpush.msra.mxu0 %v5599
    %v5601 = vand.u32 %v181, 4294901760
    %v5602 = vsub.f32 %v181, %v5601
    %5603 = vmatmul.f32.gmra.mxu0 %v5602
    %v5604 = vpop.f32.mrf.mxu0
    %v5605 = vadd.f32 %v5577, %v5604
    %5606 = vdwg.mxu0
    %5607 = vmatpush.msra.mxu0 0.0
    %5608 = vmatpush.msra.mxu0 0.0
    %5609 = vmatpush.msra.mxu0 0.0
    %5610 = vmatpush.msra.mxu0 0.0
    %5611 = vmatpush.msra.mxu0 0.0
    %5612 = vmatpush.msra.mxu0 0.0
    %5613 = vmatpush.msra.mxu0 0.0
    %5614 = vmatpush.msra.mxu0 0.0
    %5615 = vmatpush.msra.mxu0 0.0
    %5616 = vmatpush.msra.mxu0 0.0
    %5617 = vmatpush.msra.mxu0 0.0
    %5618 = vmatpush.msra.mxu0 0.0
    %5619 = vmatpush.msra.mxu0 0.0
    %v5620 = vand.u32 %v170, 4294901760
    %5621 = vmatpush.msra.mxu0 %v5620
    %v5622 = vand.u32 %v131, 4294901760
    %5623 = vmatpush.msra.mxu0 %v5622
    %v5624 = vand.u32 %v92, 4294901760
    %5625 = vmatpush.msra.mxu0 %v5624
    %v5626 = vand.u32 %v181, 4294901760
    %v5627 = vsub.f32 %v181, %v5626
    %v5628 = vand.u32 %v5627, 4294901760
    %5629 = vmatmul.f32.gmra.mxu0 %v5628
    %v5630 = vpop.f32.mrf.mxu0
    %v5631 = vadd.f32 %v5605, %v5630
    %5632 = vdwg.mxu0
    %5633 = vmatpush.msra.mxu0 0.0
    %5634 = vmatpush.msra.mxu0 0.0
    %5635 = vmatpush.msra.mxu0 0.0
    %5636 = vmatpush.msra.mxu0 0.0
    %5637 = vmatpush.msra.mxu0 0.0
    %5638 = vmatpush.msra.mxu0 0.0
    %5639 = vmatpush.msra.mxu0 0.0
    %5640 = vmatpush.msra.mxu0 0.0
    %5641 = vmatpush.msra.mxu0 0.0
    %5642 = vmatpush.msra.mxu0 0.0
    %5643 = vmatpush.msra.mxu0 0.0
    %5644 = vmatpush.msra.mxu0 0.0
    %5645 = vmatpush.msra.mxu0 0.0
    %v5646 = vand.u32 %v170, 4294901760
    %v5647 = vsub.f32 %v170, %v5646
    %v5648 = vand.u32 %v5647, 4294901760
    %5649 = vmatpush.msra.mxu0 %v5648
    %v5650 = vand.u32 %v131, 4294901760
    %v5651 = vsub.f32 %v131, %v5650
    %v5652 = vand.u32 %v5651, 4294901760
    %5653 = vmatpush.msra.mxu0 %v5652
    %v5654 = vand.u32 %v92, 4294901760
    %v5655 = vsub.f32 %v92, %v5654
    %v5656 = vand.u32 %v5655, 4294901760
    %5657 = vmatpush.msra.mxu0 %v5656
    %v5658 = vand.u32 %v181, 4294901760
    %5659 = vmatmul.f32.gmra.mxu0 %v5658
    %v5660 = vpop.f32.mrf.mxu0
    %v5661 = vadd.f32 %v5631, %v5660
    %5662 = vdwg.mxu0
    %5663 = vmatpush.msra.mxu0 0.0
    %5664 = vmatpush.msra.mxu0 0.0
    %5665 = vmatpush.msra.mxu0 0.0
    %5666 = vmatpush.msra.mxu0 0.0
    %5667 = vmatpush.msra.mxu0 0.0
    %5668 = vmatpush.msra.mxu0 0.0
    %5669 = vmatpush.msra.mxu0 0.0
    %5670 = vmatpush.msra.mxu0 0.0
    %5671 = vmatpush.msra.mxu0 0.0
    %5672 = vmatpush.msra.mxu0 0.0
    %5673 = vmatpush.msra.mxu0 0.0
    %5674 = vmatpush.msra.mxu0 0.0
    %5675 = vmatpush.msra.mxu0 0.0
    %v5676 = vand.u32 %v170, 4294901760
    %5677 = vmatpush.msra.mxu0 %v5676
    %v5678 = vand.u32 %v131, 4294901760
    %5679 = vmatpush.msra.mxu0 %v5678
    %v5680 = vand.u32 %v92, 4294901760
    %5681 = vmatpush.msra.mxu0 %v5680
    %v5682 = vand.u32 %v181, 4294901760
    %5683 = vmatmul.f32.gmra.mxu0 %v5682
    %v5684 = vpop.f32.mrf.mxu0
    %v5685 = vadd.f32 %v5661, %v5684
    %5686 = vdwg.mxu0
    %5687 = vmatpush.msra.mxu0 0.0
    %5688 = vmatpush.msra.mxu0 0.0
    %5689 = vmatpush.msra.mxu0 0.0
    %5690 = vmatpush.msra.mxu0 0.0
    %5691 = vmatpush.msra.mxu0 0.0
    %5692 = vmatpush.msra.mxu0 0.0
    %5693 = vmatpush.msra.mxu0 0.0
    %5694 = vmatpush.msra.mxu0 0.0
    %5695 = vmatpush.msra.mxu0 0.0
    %5696 = vmatpush.msra.mxu0 0.0
    %5697 = vmatpush.msra.mxu0 0.0
    %5698 = vmatpush.msra.mxu0 0.0
    %5699 = vmatpush.msra.mxu0 0.0
    %v5700 = vand.u32 %v171, 4294901760
    %5701 = vmatpush.msra.mxu0 %v5700
    %v5702 = vand.u32 %v132, 4294901760
    %5703 = vmatpush.msra.mxu0 %v5702
    %v5704 = vand.u32 %v93, 4294901760
    %5705 = vmatpush.msra.mxu0 %v5704
    %v5706 = vand.u32 %v181, 4294901760
    %v5707 = vsub.f32 %v181, %v5706
    %v5708 = vand.u32 %v5707, 4294901760
    %v5709 = vsub.f32 %v5707, %v5708
    %v5710 = vand.u32 %v5709, 4294901760
    %5711 = vmatmul.f32.gmra.mxu0 %v5710
    %v5712 = vpop.f32.mrf.mxu0
    %v5713 = vadd.f32 0.0, %v5712
    %5714 = vdwg.mxu0
    %5715 = vmatpush.msra.mxu0 0.0
    %5716 = vmatpush.msra.mxu0 0.0
    %5717 = vmatpush.msra.mxu0 0.0
    %5718 = vmatpush.msra.mxu0 0.0
    %5719 = vmatpush.msra.mxu0 0.0
    %5720 = vmatpush.msra.mxu0 0.0
    %5721 = vmatpush.msra.mxu0 0.0
    %5722 = vmatpush.msra.mxu0 0.0
    %5723 = vmatpush.msra.mxu0 0.0
    %5724 = vmatpush.msra.mxu0 0.0
    %5725 = vmatpush.msra.mxu0 0.0
    %5726 = vmatpush.msra.mxu0 0.0
    %5727 = vmatpush.msra.mxu0 0.0
    %v5728 = vand.u32 %v171, 4294901760
    %v5729 = vsub.f32 %v171, %v5728
    %v5730 = vand.u32 %v5729, 4294901760
    %v5731 = vsub.f32 %v5729, %v5730
    %v5732 = vand.u32 %v5731, 4294901760
    %5733 = vmatpush.msra.mxu0 %v5732
    %v5734 = vand.u32 %v132, 4294901760
    %v5735 = vsub.f32 %v132, %v5734
    %v5736 = vand.u32 %v5735, 4294901760
    %v5737 = vsub.f32 %v5735, %v5736
    %v5738 = vand.u32 %v5737, 4294901760
    %5739 = vmatpush.msra.mxu0 %v5738
    %v5740 = vand.u32 %v93, 4294901760
    %v5741 = vsub.f32 %v93, %v5740
    %v5742 = vand.u32 %v5741, 4294901760
    %v5743 = vsub.f32 %v5741, %v5742
    %v5744 = vand.u32 %v5743, 4294901760
    %5745 = vmatpush.msra.mxu0 %v5744
    %v5746 = vand.u32 %v181, 4294901760
    %5747 = vmatmul.f32.gmra.mxu0 %v5746
    %v5748 = vpop.f32.mrf.mxu0
    %v5749 = vadd.f32 %v5713, %v5748
    %5750 = vdwg.mxu0
    %5751 = vmatpush.msra.mxu0 0.0
    %5752 = vmatpush.msra.mxu0 0.0
    %5753 = vmatpush.msra.mxu0 0.0
    %5754 = vmatpush.msra.mxu0 0.0
    %5755 = vmatpush.msra.mxu0 0.0
    %5756 = vmatpush.msra.mxu0 0.0
    %5757 = vmatpush.msra.mxu0 0.0
    %5758 = vmatpush.msra.mxu0 0.0
    %5759 = vmatpush.msra.mxu0 0.0
    %5760 = vmatpush.msra.mxu0 0.0
    %5761 = vmatpush.msra.mxu0 0.0
    %5762 = vmatpush.msra.mxu0 0.0
    %5763 = vmatpush.msra.mxu0 0.0
    %v5764 = vand.u32 %v171, 4294901760
    %v5765 = vsub.f32 %v171, %v5764
    %5766 = vmatpush.msra.mxu0 %v5765
    %v5767 = vand.u32 %v132, 4294901760
    %v5768 = vsub.f32 %v132, %v5767
    %5769 = vmatpush.msra.mxu0 %v5768
    %v5770 = vand.u32 %v93, 4294901760
    %v5771 = vsub.f32 %v93, %v5770
    %5772 = vmatpush.msra.mxu0 %v5771
    %v5773 = vand.u32 %v181, 4294901760
    %v5774 = vsub.f32 %v181, %v5773
    %5775 = vmatmul.f32.gmra.mxu0 %v5774
    %v5776 = vpop.f32.mrf.mxu0
    %v5777 = vadd.f32 %v5749, %v5776
    %5778 = vdwg.mxu0
    %5779 = vmatpush.msra.mxu0 0.0
    %5780 = vmatpush.msra.mxu0 0.0
    %5781 = vmatpush.msra.mxu0 0.0
    %5782 = vmatpush.msra.mxu0 0.0
    %5783 = vmatpush.msra.mxu0 0.0
    %5784 = vmatpush.msra.mxu0 0.0
    %5785 = vmatpush.msra.mxu0 0.0
    %5786 = vmatpush.msra.mxu0 0.0
    %5787 = vmatpush.msra.mxu0 0.0
    %5788 = vmatpush.msra.mxu0 0.0
    %5789 = vmatpush.msra.mxu0 0.0
    %5790 = vmatpush.msra.mxu0 0.0
    %5791 = vmatpush.msra.mxu0 0.0
    %v5792 = vand.u32 %v171, 4294901760
    %5793 = vmatpush.msra.mxu0 %v5792
    %v5794 = vand.u32 %v132, 4294901760
    %5795 = vmatpush.msra.mxu0 %v5794
    %v5796 = vand.u32 %v93, 4294901760
    %5797 = vmatpush.msra.mxu0 %v5796
    %v5798 = vand.u32 %v181, 4294901760
    %v5799 = vsub.f32 %v181, %v5798
    %v5800 = vand.u32 %v5799, 4294901760
    %5801 = vmatmul.f32.gmra.mxu0 %v5800
    %v5802 = vpop.f32.mrf.mxu0
    %v5803 = vadd.f32 %v5777, %v5802
    %5804 = vdwg.mxu0
    %5805 = vmatpush.msra.mxu0 0.0
    %5806 = vmatpush.msra.mxu0 0.0
    %5807 = vmatpush.msra.mxu0 0.0
    %5808 = vmatpush.msra.mxu0 0.0
    %5809 = vmatpush.msra.mxu0 0.0
    %5810 = vmatpush.msra.mxu0 0.0
    %5811 = vmatpush.msra.mxu0 0.0
    %5812 = vmatpush.msra.mxu0 0.0
    %5813 = vmatpush.msra.mxu0 0.0
    %5814 = vmatpush.msra.mxu0 0.0
    %5815 = vmatpush.msra.mxu0 0.0
    %5816 = vmatpush.msra.mxu0 0.0
    %5817 = vmatpush.msra.mxu0 0.0
    %v5818 = vand.u32 %v171, 4294901760
    %v5819 = vsub.f32 %v171, %v5818
    %v5820 = vand.u32 %v5819, 4294901760
    %5821 = vmatpush.msra.mxu0 %v5820
    %v5822 = vand.u32 %v132, 4294901760
    %v5823 = vsub.f32 %v132, %v5822
    %v5824 = vand.u32 %v5823, 4294901760
    %5825 = vmatpush.msra.mxu0 %v5824
    %v5826 = vand.u32 %v93, 4294901760
    %v5827 = vsub.f32 %v93, %v5826
    %v5828 = vand.u32 %v5827, 4294901760
    %5829 = vmatpush.msra.mxu0 %v5828
    %v5830 = vand.u32 %v181, 4294901760
    %5831 = vmatmul.f32.gmra.mxu0 %v5830
    %v5832 = vpop.f32.mrf.mxu0
    %v5833 = vadd.f32 %v5803, %v5832
    %5834 = vdwg.mxu0
    %5835 = vmatpush.msra.mxu0 0.0
    %5836 = vmatpush.msra.mxu0 0.0
    %5837 = vmatpush.msra.mxu0 0.0
    %5838 = vmatpush.msra.mxu0 0.0
    %5839 = vmatpush.msra.mxu0 0.0
    %5840 = vmatpush.msra.mxu0 0.0
    %5841 = vmatpush.msra.mxu0 0.0
    %5842 = vmatpush.msra.mxu0 0.0
    %5843 = vmatpush.msra.mxu0 0.0
    %5844 = vmatpush.msra.mxu0 0.0
    %5845 = vmatpush.msra.mxu0 0.0
    %5846 = vmatpush.msra.mxu0 0.0
    %5847 = vmatpush.msra.mxu0 0.0
    %v5848 = vand.u32 %v171, 4294901760
    %5849 = vmatpush.msra.mxu0 %v5848
    %v5850 = vand.u32 %v132, 4294901760
    %5851 = vmatpush.msra.mxu0 %v5850
    %v5852 = vand.u32 %v93, 4294901760
    %5853 = vmatpush.msra.mxu0 %v5852
    %v5854 = vand.u32 %v181, 4294901760
    %5855 = vmatmul.f32.gmra.mxu0 %v5854
    %v5856 = vpop.f32.mrf.mxu0
    %v5857 = vadd.f32 %v5833, %v5856
    %5858 = vdwg.mxu0
    %5859 = vmatpush.msra.mxu0 0.0
    %5860 = vmatpush.msra.mxu0 0.0
    %5861 = vmatpush.msra.mxu0 0.0
    %5862 = vmatpush.msra.mxu0 0.0
    %5863 = vmatpush.msra.mxu0 0.0
    %5864 = vmatpush.msra.mxu0 0.0
    %5865 = vmatpush.msra.mxu0 0.0
    %5866 = vmatpush.msra.mxu0 0.0
    %5867 = vmatpush.msra.mxu0 0.0
    %5868 = vmatpush.msra.mxu0 0.0
    %5869 = vmatpush.msra.mxu0 0.0
    %5870 = vmatpush.msra.mxu0 0.0
    %5871 = vmatpush.msra.mxu0 0.0
    %v5872 = vand.u32 %v172, 4294901760
    %5873 = vmatpush.msra.mxu0 %v5872
    %v5874 = vand.u32 %v133, 4294901760
    %5875 = vmatpush.msra.mxu0 %v5874
    %v5876 = vand.u32 %v94, 4294901760
    %5877 = vmatpush.msra.mxu0 %v5876
    %v5878 = vand.u32 %v181, 4294901760
    %v5879 = vsub.f32 %v181, %v5878
    %v5880 = vand.u32 %v5879, 4294901760
    %v5881 = vsub.f32 %v5879, %v5880
    %v5882 = vand.u32 %v5881, 4294901760
    %5883 = vmatmul.f32.gmra.mxu0 %v5882
    %v5884 = vpop.f32.mrf.mxu0
    %v5885 = vadd.f32 0.0, %v5884
    %5886 = vdwg.mxu0
    %5887 = vmatpush.msra.mxu0 0.0
    %5888 = vmatpush.msra.mxu0 0.0
    %5889 = vmatpush.msra.mxu0 0.0
    %5890 = vmatpush.msra.mxu0 0.0
    %5891 = vmatpush.msra.mxu0 0.0
    %5892 = vmatpush.msra.mxu0 0.0
    %5893 = vmatpush.msra.mxu0 0.0
    %5894 = vmatpush.msra.mxu0 0.0
    %5895 = vmatpush.msra.mxu0 0.0
    %5896 = vmatpush.msra.mxu0 0.0
    %5897 = vmatpush.msra.mxu0 0.0
    %5898 = vmatpush.msra.mxu0 0.0
    %5899 = vmatpush.msra.mxu0 0.0
    %v5900 = vand.u32 %v172, 4294901760
    %v5901 = vsub.f32 %v172, %v5900
    %v5902 = vand.u32 %v5901, 4294901760
    %v5903 = vsub.f32 %v5901, %v5902
    %v5904 = vand.u32 %v5903, 4294901760
    %5905 = vmatpush.msra.mxu0 %v5904
    %v5906 = vand.u32 %v133, 4294901760
    %v5907 = vsub.f32 %v133, %v5906
    %v5908 = vand.u32 %v5907, 4294901760
    %v5909 = vsub.f32 %v5907, %v5908
    %v5910 = vand.u32 %v5909, 4294901760
    %5911 = vmatpush.msra.mxu0 %v5910
    %v5912 = vand.u32 %v94, 4294901760
    %v5913 = vsub.f32 %v94, %v5912
    %v5914 = vand.u32 %v5913, 4294901760
    %v5915 = vsub.f32 %v5913, %v5914
    %v5916 = vand.u32 %v5915, 4294901760
    %5917 = vmatpush.msra.mxu0 %v5916
    %v5918 = vand.u32 %v181, 4294901760
    %5919 = vmatmul.f32.gmra.mxu0 %v5918
    %v5920 = vpop.f32.mrf.mxu0
    %v5921 = vadd.f32 %v5885, %v5920
    %5922 = vdwg.mxu0
    %5923 = vmatpush.msra.mxu0 0.0
    %5924 = vmatpush.msra.mxu0 0.0
    %5925 = vmatpush.msra.mxu0 0.0
    %5926 = vmatpush.msra.mxu0 0.0
    %5927 = vmatpush.msra.mxu0 0.0
    %5928 = vmatpush.msra.mxu0 0.0
    %5929 = vmatpush.msra.mxu0 0.0
    %5930 = vmatpush.msra.mxu0 0.0
    %5931 = vmatpush.msra.mxu0 0.0
    %5932 = vmatpush.msra.mxu0 0.0
    %5933 = vmatpush.msra.mxu0 0.0
    %5934 = vmatpush.msra.mxu0 0.0
    %5935 = vmatpush.msra.mxu0 0.0
    %v5936 = vand.u32 %v172, 4294901760
    %v5937 = vsub.f32 %v172, %v5936
    %5938 = vmatpush.msra.mxu0 %v5937
    %v5939 = vand.u32 %v133, 4294901760
    %v5940 = vsub.f32 %v133, %v5939
    %5941 = vmatpush.msra.mxu0 %v5940
    %v5942 = vand.u32 %v94, 4294901760
    %v5943 = vsub.f32 %v94, %v5942
    %5944 = vmatpush.msra.mxu0 %v5943
    %v5945 = vand.u32 %v181, 4294901760
    %v5946 = vsub.f32 %v181, %v5945
    %5947 = vmatmul.f32.gmra.mxu0 %v5946
    %v5948 = vpop.f32.mrf.mxu0
    %v5949 = vadd.f32 %v5921, %v5948
    %5950 = vdwg.mxu0
    %5951 = vmatpush.msra.mxu0 0.0
    %5952 = vmatpush.msra.mxu0 0.0
    %5953 = vmatpush.msra.mxu0 0.0
    %5954 = vmatpush.msra.mxu0 0.0
    %5955 = vmatpush.msra.mxu0 0.0
    %5956 = vmatpush.msra.mxu0 0.0
    %5957 = vmatpush.msra.mxu0 0.0
    %5958 = vmatpush.msra.mxu0 0.0
    %5959 = vmatpush.msra.mxu0 0.0
    %5960 = vmatpush.msra.mxu0 0.0
    %5961 = vmatpush.msra.mxu0 0.0
    %5962 = vmatpush.msra.mxu0 0.0
    %5963 = vmatpush.msra.mxu0 0.0
    %v5964 = vand.u32 %v172, 4294901760
    %5965 = vmatpush.msra.mxu0 %v5964
    %v5966 = vand.u32 %v133, 4294901760
    %5967 = vmatpush.msra.mxu0 %v5966
    %v5968 = vand.u32 %v94, 4294901760
    %5969 = vmatpush.msra.mxu0 %v5968
    %v5970 = vand.u32 %v181, 4294901760
    %v5971 = vsub.f32 %v181, %v5970
    %v5972 = vand.u32 %v5971, 4294901760
    %5973 = vmatmul.f32.gmra.mxu0 %v5972
    %v5974 = vpop.f32.mrf.mxu0
    %v5975 = vadd.f32 %v5949, %v5974
    %5976 = vdwg.mxu0
    %5977 = vmatpush.msra.mxu0 0.0
    %5978 = vmatpush.msra.mxu0 0.0
    %5979 = vmatpush.msra.mxu0 0.0
    %5980 = vmatpush.msra.mxu0 0.0
    %5981 = vmatpush.msra.mxu0 0.0
    %5982 = vmatpush.msra.mxu0 0.0
    %5983 = vmatpush.msra.mxu0 0.0
    %5984 = vmatpush.msra.mxu0 0.0
    %5985 = vmatpush.msra.mxu0 0.0
    %5986 = vmatpush.msra.mxu0 0.0
    %5987 = vmatpush.msra.mxu0 0.0
    %5988 = vmatpush.msra.mxu0 0.0
    %5989 = vmatpush.msra.mxu0 0.0
    %v5990 = vand.u32 %v172, 4294901760
    %v5991 = vsub.f32 %v172, %v5990
    %v5992 = vand.u32 %v5991, 4294901760
    %5993 = vmatpush.msra.mxu0 %v5992
    %v5994 = vand.u32 %v133, 4294901760
    %v5995 = vsub.f32 %v133, %v5994
    %v5996 = vand.u32 %v5995, 4294901760
    %5997 = vmatpush.msra.mxu0 %v5996
    %v5998 = vand.u32 %v94, 4294901760
    %v5999 = vsub.f32 %v94, %v5998
    %v6000 = vand.u32 %v5999, 4294901760
    %6001 = vmatpush.msra.mxu0 %v6000
    %v6002 = vand.u32 %v181, 4294901760
    %6003 = vmatmul.f32.gmra.mxu0 %v6002
    %v6004 = vpop.f32.mrf.mxu0
    %v6005 = vadd.f32 %v5975, %v6004
    %6006 = vdwg.mxu0
    %6007 = vmatpush.msra.mxu0 0.0
    %6008 = vmatpush.msra.mxu0 0.0
    %6009 = vmatpush.msra.mxu0 0.0
    %6010 = vmatpush.msra.mxu0 0.0
    %6011 = vmatpush.msra.mxu0 0.0
    %6012 = vmatpush.msra.mxu0 0.0
    %6013 = vmatpush.msra.mxu0 0.0
    %6014 = vmatpush.msra.mxu0 0.0
    %6015 = vmatpush.msra.mxu0 0.0
    %6016 = vmatpush.msra.mxu0 0.0
    %6017 = vmatpush.msra.mxu0 0.0
    %6018 = vmatpush.msra.mxu0 0.0
    %6019 = vmatpush.msra.mxu0 0.0
    %v6020 = vand.u32 %v172, 4294901760
    %6021 = vmatpush.msra.mxu0 %v6020
    %v6022 = vand.u32 %v133, 4294901760
    %6023 = vmatpush.msra.mxu0 %v6022
    %v6024 = vand.u32 %v94, 4294901760
    %6025 = vmatpush.msra.mxu0 %v6024
    %v6026 = vand.u32 %v181, 4294901760
    %6027 = vmatmul.f32.gmra.mxu0 %v6026
    %v6028 = vpop.f32.mrf.mxu0
    %v6029 = vadd.f32 %v6005, %v6028
    %6030 = vdwg.mxu0
    %6031 = vmatpush.msra.mxu0 0.0
    %6032 = vmatpush.msra.mxu0 0.0
    %6033 = vmatpush.msra.mxu0 0.0
    %6034 = vmatpush.msra.mxu0 0.0
    %6035 = vmatpush.msra.mxu0 0.0
    %6036 = vmatpush.msra.mxu0 0.0
    %6037 = vmatpush.msra.mxu0 0.0
    %6038 = vmatpush.msra.mxu0 0.0
    %6039 = vmatpush.msra.mxu0 0.0
    %6040 = vmatpush.msra.mxu0 0.0
    %6041 = vmatpush.msra.mxu0 0.0
    %6042 = vmatpush.msra.mxu0 0.0
    %6043 = vmatpush.msra.mxu0 0.0
    %v6044 = vand.u32 %v173, 4294901760
    %6045 = vmatpush.msra.mxu0 %v6044
    %v6046 = vand.u32 %v134, 4294901760
    %6047 = vmatpush.msra.mxu0 %v6046
    %v6048 = vand.u32 %v95, 4294901760
    %6049 = vmatpush.msra.mxu0 %v6048
    %v6050 = vand.u32 %v181, 4294901760
    %v6051 = vsub.f32 %v181, %v6050
    %v6052 = vand.u32 %v6051, 4294901760
    %v6053 = vsub.f32 %v6051, %v6052
    %v6054 = vand.u32 %v6053, 4294901760
    %6055 = vmatmul.f32.gmra.mxu0 %v6054
    %v6056 = vpop.f32.mrf.mxu0
    %v6057 = vadd.f32 0.0, %v6056
    %6058 = vdwg.mxu0
    %6059 = vmatpush.msra.mxu0 0.0
    %6060 = vmatpush.msra.mxu0 0.0
    %6061 = vmatpush.msra.mxu0 0.0
    %6062 = vmatpush.msra.mxu0 0.0
    %6063 = vmatpush.msra.mxu0 0.0
    %6064 = vmatpush.msra.mxu0 0.0
    %6065 = vmatpush.msra.mxu0 0.0
    %6066 = vmatpush.msra.mxu0 0.0
    %6067 = vmatpush.msra.mxu0 0.0
    %6068 = vmatpush.msra.mxu0 0.0
    %6069 = vmatpush.msra.mxu0 0.0
    %6070 = vmatpush.msra.mxu0 0.0
    %6071 = vmatpush.msra.mxu0 0.0
    %v6072 = vand.u32 %v173, 4294901760
    %v6073 = vsub.f32 %v173, %v6072
    %v6074 = vand.u32 %v6073, 4294901760
    %v6075 = vsub.f32 %v6073, %v6074
    %v6076 = vand.u32 %v6075, 4294901760
    %6077 = vmatpush.msra.mxu0 %v6076
    %v6078 = vand.u32 %v134, 4294901760
    %v6079 = vsub.f32 %v134, %v6078
    %v6080 = vand.u32 %v6079, 4294901760
    %v6081 = vsub.f32 %v6079, %v6080
    %v6082 = vand.u32 %v6081, 4294901760
    %6083 = vmatpush.msra.mxu0 %v6082
    %v6084 = vand.u32 %v95, 4294901760
    %v6085 = vsub.f32 %v95, %v6084
    %v6086 = vand.u32 %v6085, 4294901760
    %v6087 = vsub.f32 %v6085, %v6086
    %v6088 = vand.u32 %v6087, 4294901760
    %6089 = vmatpush.msra.mxu0 %v6088
    %v6090 = vand.u32 %v181, 4294901760
    %6091 = vmatmul.f32.gmra.mxu0 %v6090
    %v6092 = vpop.f32.mrf.mxu0
    %v6093 = vadd.f32 %v6057, %v6092
    %6094 = vdwg.mxu0
    %6095 = vmatpush.msra.mxu0 0.0
    %6096 = vmatpush.msra.mxu0 0.0
    %6097 = vmatpush.msra.mxu0 0.0
    %6098 = vmatpush.msra.mxu0 0.0
    %6099 = vmatpush.msra.mxu0 0.0
    %6100 = vmatpush.msra.mxu0 0.0
    %6101 = vmatpush.msra.mxu0 0.0
    %6102 = vmatpush.msra.mxu0 0.0
    %6103 = vmatpush.msra.mxu0 0.0
    %6104 = vmatpush.msra.mxu0 0.0
    %6105 = vmatpush.msra.mxu0 0.0
    %6106 = vmatpush.msra.mxu0 0.0
    %6107 = vmatpush.msra.mxu0 0.0
    %v6108 = vand.u32 %v173, 4294901760
    %v6109 = vsub.f32 %v173, %v6108
    %6110 = vmatpush.msra.mxu0 %v6109
    %v6111 = vand.u32 %v134, 4294901760
    %v6112 = vsub.f32 %v134, %v6111
    %6113 = vmatpush.msra.mxu0 %v6112
    %v6114 = vand.u32 %v95, 4294901760
    %v6115 = vsub.f32 %v95, %v6114
    %6116 = vmatpush.msra.mxu0 %v6115
    %v6117 = vand.u32 %v181, 4294901760
    %v6118 = vsub.f32 %v181, %v6117
    %6119 = vmatmul.f32.gmra.mxu0 %v6118
    %v6120 = vpop.f32.mrf.mxu0
    %v6121 = vadd.f32 %v6093, %v6120
    %6122 = vdwg.mxu0
    %6123 = vmatpush.msra.mxu0 0.0
    %6124 = vmatpush.msra.mxu0 0.0
    %6125 = vmatpush.msra.mxu0 0.0
    %6126 = vmatpush.msra.mxu0 0.0
    %6127 = vmatpush.msra.mxu0 0.0
    %6128 = vmatpush.msra.mxu0 0.0
    %6129 = vmatpush.msra.mxu0 0.0
    %6130 = vmatpush.msra.mxu0 0.0
    %6131 = vmatpush.msra.mxu0 0.0
    %6132 = vmatpush.msra.mxu0 0.0
    %6133 = vmatpush.msra.mxu0 0.0
    %6134 = vmatpush.msra.mxu0 0.0
    %6135 = vmatpush.msra.mxu0 0.0
    %v6136 = vand.u32 %v173, 4294901760
    %6137 = vmatpush.msra.mxu0 %v6136
    %v6138 = vand.u32 %v134, 4294901760
    %6139 = vmatpush.msra.mxu0 %v6138
    %v6140 = vand.u32 %v95, 4294901760
    %6141 = vmatpush.msra.mxu0 %v6140
    %v6142 = vand.u32 %v181, 4294901760
    %v6143 = vsub.f32 %v181, %v6142
    %v6144 = vand.u32 %v6143, 4294901760
    %6145 = vmatmul.f32.gmra.mxu0 %v6144
    %v6146 = vpop.f32.mrf.mxu0
    %v6147 = vadd.f32 %v6121, %v6146
    %6148 = vdwg.mxu0
    %6149 = vmatpush.msra.mxu0 0.0
    %6150 = vmatpush.msra.mxu0 0.0
    %6151 = vmatpush.msra.mxu0 0.0
    %6152 = vmatpush.msra.mxu0 0.0
    %6153 = vmatpush.msra.mxu0 0.0
    %6154 = vmatpush.msra.mxu0 0.0
    %6155 = vmatpush.msra.mxu0 0.0
    %6156 = vmatpush.msra.mxu0 0.0
    %6157 = vmatpush.msra.mxu0 0.0
    %6158 = vmatpush.msra.mxu0 0.0
    %6159 = vmatpush.msra.mxu0 0.0
    %6160 = vmatpush.msra.mxu0 0.0
    %6161 = vmatpush.msra.mxu0 0.0
    %v6162 = vand.u32 %v173, 4294901760
    %v6163 = vsub.f32 %v173, %v6162
    %v6164 = vand.u32 %v6163, 4294901760
    %6165 = vmatpush.msra.mxu0 %v6164
    %v6166 = vand.u32 %v134, 4294901760
    %v6167 = vsub.f32 %v134, %v6166
    %v6168 = vand.u32 %v6167, 4294901760
    %6169 = vmatpush.msra.mxu0 %v6168
    %v6170 = vand.u32 %v95, 4294901760
    %v6171 = vsub.f32 %v95, %v6170
    %v6172 = vand.u32 %v6171, 4294901760
    %6173 = vmatpush.msra.mxu0 %v6172
    %v6174 = vand.u32 %v181, 4294901760
    %6175 = vmatmul.f32.gmra.mxu0 %v6174
    %v6176 = vpop.f32.mrf.mxu0
    %v6177 = vadd.f32 %v6147, %v6176
    %6178 = vdwg.mxu0
    %6179 = vmatpush.msra.mxu0 0.0
    %6180 = vmatpush.msra.mxu0 0.0
    %6181 = vmatpush.msra.mxu0 0.0
    %6182 = vmatpush.msra.mxu0 0.0
    %6183 = vmatpush.msra.mxu0 0.0
    %6184 = vmatpush.msra.mxu0 0.0
    %6185 = vmatpush.msra.mxu0 0.0
    %6186 = vmatpush.msra.mxu0 0.0
    %6187 = vmatpush.msra.mxu0 0.0
    %6188 = vmatpush.msra.mxu0 0.0
    %6189 = vmatpush.msra.mxu0 0.0
    %6190 = vmatpush.msra.mxu0 0.0
    %6191 = vmatpush.msra.mxu0 0.0
    %v6192 = vand.u32 %v173, 4294901760
    %6193 = vmatpush.msra.mxu0 %v6192
    %v6194 = vand.u32 %v134, 4294901760
    %6195 = vmatpush.msra.mxu0 %v6194
    %v6196 = vand.u32 %v95, 4294901760
    %6197 = vmatpush.msra.mxu0 %v6196
    %v6198 = vand.u32 %v181, 4294901760
    %6199 = vmatmul.f32.gmra.mxu0 %v6198
    %v6200 = vpop.f32.mrf.mxu0
    %v6201 = vadd.f32 %v6177, %v6200
    %6202 = vdwg.mxu0
    %6203 = vmatpush.msra.mxu0 0.0
    %6204 = vmatpush.msra.mxu0 0.0
    %6205 = vmatpush.msra.mxu0 0.0
    %6206 = vmatpush.msra.mxu0 0.0
    %6207 = vmatpush.msra.mxu0 0.0
    %6208 = vmatpush.msra.mxu0 0.0
    %6209 = vmatpush.msra.mxu0 0.0
    %6210 = vmatpush.msra.mxu0 0.0
    %6211 = vmatpush.msra.mxu0 0.0
    %6212 = vmatpush.msra.mxu0 0.0
    %6213 = vmatpush.msra.mxu0 0.0
    %6214 = vmatpush.msra.mxu0 0.0
    %6215 = vmatpush.msra.mxu0 0.0
    %v6216 = vand.u32 %v174, 4294901760
    %6217 = vmatpush.msra.mxu0 %v6216
    %v6218 = vand.u32 %v135, 4294901760
    %6219 = vmatpush.msra.mxu0 %v6218
    %v6220 = vand.u32 %v96, 4294901760
    %6221 = vmatpush.msra.mxu0 %v6220
    %v6222 = vand.u32 %v181, 4294901760
    %v6223 = vsub.f32 %v181, %v6222
    %v6224 = vand.u32 %v6223, 4294901760
    %v6225 = vsub.f32 %v6223, %v6224
    %v6226 = vand.u32 %v6225, 4294901760
    %6227 = vmatmul.f32.gmra.mxu0 %v6226
    %v6228 = vpop.f32.mrf.mxu0
    %v6229 = vadd.f32 0.0, %v6228
    %6230 = vdwg.mxu0
    %6231 = vmatpush.msra.mxu0 0.0
    %6232 = vmatpush.msra.mxu0 0.0
    %6233 = vmatpush.msra.mxu0 0.0
    %6234 = vmatpush.msra.mxu0 0.0
    %6235 = vmatpush.msra.mxu0 0.0
    %6236 = vmatpush.msra.mxu0 0.0
    %6237 = vmatpush.msra.mxu0 0.0
    %6238 = vmatpush.msra.mxu0 0.0
    %6239 = vmatpush.msra.mxu0 0.0
    %6240 = vmatpush.msra.mxu0 0.0
    %6241 = vmatpush.msra.mxu0 0.0
    %6242 = vmatpush.msra.mxu0 0.0
    %6243 = vmatpush.msra.mxu0 0.0
    %v6244 = vand.u32 %v174, 4294901760
    %v6245 = vsub.f32 %v174, %v6244
    %v6246 = vand.u32 %v6245, 4294901760
    %v6247 = vsub.f32 %v6245, %v6246
    %v6248 = vand.u32 %v6247, 4294901760
    %6249 = vmatpush.msra.mxu0 %v6248
    %v6250 = vand.u32 %v135, 4294901760
    %v6251 = vsub.f32 %v135, %v6250
    %v6252 = vand.u32 %v6251, 4294901760
    %v6253 = vsub.f32 %v6251, %v6252
    %v6254 = vand.u32 %v6253, 4294901760
    %6255 = vmatpush.msra.mxu0 %v6254
    %v6256 = vand.u32 %v96, 4294901760
    %v6257 = vsub.f32 %v96, %v6256
    %v6258 = vand.u32 %v6257, 4294901760
    %v6259 = vsub.f32 %v6257, %v6258
    %v6260 = vand.u32 %v6259, 4294901760
    %6261 = vmatpush.msra.mxu0 %v6260
    %v6262 = vand.u32 %v181, 4294901760
    %6263 = vmatmul.f32.gmra.mxu0 %v6262
    %v6264 = vpop.f32.mrf.mxu0
    %v6265 = vadd.f32 %v6229, %v6264
    %6266 = vdwg.mxu0
    %6267 = vmatpush.msra.mxu0 0.0
    %6268 = vmatpush.msra.mxu0 0.0
    %6269 = vmatpush.msra.mxu0 0.0
    %6270 = vmatpush.msra.mxu0 0.0
    %6271 = vmatpush.msra.mxu0 0.0
    %6272 = vmatpush.msra.mxu0 0.0
    %6273 = vmatpush.msra.mxu0 0.0
    %6274 = vmatpush.msra.mxu0 0.0
    %6275 = vmatpush.msra.mxu0 0.0
    %6276 = vmatpush.msra.mxu0 0.0
    %6277 = vmatpush.msra.mxu0 0.0
    %6278 = vmatpush.msra.mxu0 0.0
    %6279 = vmatpush.msra.mxu0 0.0
    %v6280 = vand.u32 %v174, 4294901760
    %v6281 = vsub.f32 %v174, %v6280
    %6282 = vmatpush.msra.mxu0 %v6281
    %v6283 = vand.u32 %v135, 4294901760
    %v6284 = vsub.f32 %v135, %v6283
    %6285 = vmatpush.msra.mxu0 %v6284
    %v6286 = vand.u32 %v96, 4294901760
    %v6287 = vsub.f32 %v96, %v6286
    %6288 = vmatpush.msra.mxu0 %v6287
    %v6289 = vand.u32 %v181, 4294901760
    %v6290 = vsub.f32 %v181, %v6289
    %6291 = vmatmul.f32.gmra.mxu0 %v6290
    %v6292 = vpop.f32.mrf.mxu0
    %v6293 = vadd.f32 %v6265, %v6292
    %6294 = vdwg.mxu0
    %6295 = vmatpush.msra.mxu0 0.0
    %6296 = vmatpush.msra.mxu0 0.0
    %6297 = vmatpush.msra.mxu0 0.0
    %6298 = vmatpush.msra.mxu0 0.0
    %6299 = vmatpush.msra.mxu0 0.0
    %6300 = vmatpush.msra.mxu0 0.0
    %6301 = vmatpush.msra.mxu0 0.0
    %6302 = vmatpush.msra.mxu0 0.0
    %6303 = vmatpush.msra.mxu0 0.0
    %6304 = vmatpush.msra.mxu0 0.0
    %6305 = vmatpush.msra.mxu0 0.0
    %6306 = vmatpush.msra.mxu0 0.0
    %6307 = vmatpush.msra.mxu0 0.0
    %v6308 = vand.u32 %v174, 4294901760
    %6309 = vmatpush.msra.mxu0 %v6308
    %v6310 = vand.u32 %v135, 4294901760
    %6311 = vmatpush.msra.mxu0 %v6310
    %v6312 = vand.u32 %v96, 4294901760
    %6313 = vmatpush.msra.mxu0 %v6312
    %v6314 = vand.u32 %v181, 4294901760
    %v6315 = vsub.f32 %v181, %v6314
    %v6316 = vand.u32 %v6315, 4294901760
    %6317 = vmatmul.f32.gmra.mxu0 %v6316
    %v6318 = vpop.f32.mrf.mxu0
    %v6319 = vadd.f32 %v6293, %v6318
    %6320 = vdwg.mxu0
    %6321 = vmatpush.msra.mxu0 0.0
    %6322 = vmatpush.msra.mxu0 0.0
    %6323 = vmatpush.msra.mxu0 0.0
    %6324 = vmatpush.msra.mxu0 0.0
    %6325 = vmatpush.msra.mxu0 0.0
    %6326 = vmatpush.msra.mxu0 0.0
    %6327 = vmatpush.msra.mxu0 0.0
    %6328 = vmatpush.msra.mxu0 0.0
    %6329 = vmatpush.msra.mxu0 0.0
    %6330 = vmatpush.msra.mxu0 0.0
    %6331 = vmatpush.msra.mxu0 0.0
    %6332 = vmatpush.msra.mxu0 0.0
    %6333 = vmatpush.msra.mxu0 0.0
    %v6334 = vand.u32 %v174, 4294901760
    %v6335 = vsub.f32 %v174, %v6334
    %v6336 = vand.u32 %v6335, 4294901760
    %6337 = vmatpush.msra.mxu0 %v6336
    %v6338 = vand.u32 %v135, 4294901760
    %v6339 = vsub.f32 %v135, %v6338
    %v6340 = vand.u32 %v6339, 4294901760
    %6341 = vmatpush.msra.mxu0 %v6340
    %v6342 = vand.u32 %v96, 4294901760
    %v6343 = vsub.f32 %v96, %v6342
    %v6344 = vand.u32 %v6343, 4294901760
    %6345 = vmatpush.msra.mxu0 %v6344
    %v6346 = vand.u32 %v181, 4294901760
    %6347 = vmatmul.f32.gmra.mxu0 %v6346
    %v6348 = vpop.f32.mrf.mxu0
    %v6349 = vadd.f32 %v6319, %v6348
    %6350 = vdwg.mxu0
    %6351 = vmatpush.msra.mxu0 0.0
    %6352 = vmatpush.msra.mxu0 0.0
    %6353 = vmatpush.msra.mxu0 0.0
    %6354 = vmatpush.msra.mxu0 0.0
    %6355 = vmatpush.msra.mxu0 0.0
    %6356 = vmatpush.msra.mxu0 0.0
    %6357 = vmatpush.msra.mxu0 0.0
    %6358 = vmatpush.msra.mxu0 0.0
    %6359 = vmatpush.msra.mxu0 0.0
    %6360 = vmatpush.msra.mxu0 0.0
    %6361 = vmatpush.msra.mxu0 0.0
    %6362 = vmatpush.msra.mxu0 0.0
    %6363 = vmatpush.msra.mxu0 0.0
    %v6364 = vand.u32 %v174, 4294901760
    %6365 = vmatpush.msra.mxu0 %v6364
    %v6366 = vand.u32 %v135, 4294901760
    %6367 = vmatpush.msra.mxu0 %v6366
    %v6368 = vand.u32 %v96, 4294901760
    %6369 = vmatpush.msra.mxu0 %v6368
    %v6370 = vand.u32 %v181, 4294901760
    %6371 = vmatmul.f32.gmra.mxu0 %v6370
    %v6372 = vpop.f32.mrf.mxu0
    %v6373 = vadd.f32 %v6349, %v6372
    %6374 = vdwg.mxu0
    %6375 = vmatpush.msra.mxu0 0.0
    %6376 = vmatpush.msra.mxu0 0.0
    %6377 = vmatpush.msra.mxu0 0.0
    %6378 = vmatpush.msra.mxu0 0.0
    %6379 = vmatpush.msra.mxu0 0.0
    %6380 = vmatpush.msra.mxu0 0.0
    %6381 = vmatpush.msra.mxu0 0.0
    %6382 = vmatpush.msra.mxu0 0.0
    %6383 = vmatpush.msra.mxu0 0.0
    %6384 = vmatpush.msra.mxu0 0.0
    %6385 = vmatpush.msra.mxu0 0.0
    %6386 = vmatpush.msra.mxu0 0.0
    %6387 = vmatpush.msra.mxu0 0.0
    %v6388 = vand.u32 %v175, 4294901760
    %6389 = vmatpush.msra.mxu0 %v6388
    %v6390 = vand.u32 %v136, 4294901760
    %6391 = vmatpush.msra.mxu0 %v6390
    %v6392 = vand.u32 %v97, 4294901760
    %6393 = vmatpush.msra.mxu0 %v6392
    %v6394 = vand.u32 %v181, 4294901760
    %v6395 = vsub.f32 %v181, %v6394
    %v6396 = vand.u32 %v6395, 4294901760
    %v6397 = vsub.f32 %v6395, %v6396
    %v6398 = vand.u32 %v6397, 4294901760
    %6399 = vmatmul.f32.gmra.mxu0 %v6398
    %v6400 = vpop.f32.mrf.mxu0
    %v6401 = vadd.f32 0.0, %v6400
    %6402 = vdwg.mxu0
    %6403 = vmatpush.msra.mxu0 0.0
    %6404 = vmatpush.msra.mxu0 0.0
    %6405 = vmatpush.msra.mxu0 0.0
    %6406 = vmatpush.msra.mxu0 0.0
    %6407 = vmatpush.msra.mxu0 0.0
    %6408 = vmatpush.msra.mxu0 0.0
    %6409 = vmatpush.msra.mxu0 0.0
    %6410 = vmatpush.msra.mxu0 0.0
    %6411 = vmatpush.msra.mxu0 0.0
    %6412 = vmatpush.msra.mxu0 0.0
    %6413 = vmatpush.msra.mxu0 0.0
    %6414 = vmatpush.msra.mxu0 0.0
    %6415 = vmatpush.msra.mxu0 0.0
    %v6416 = vand.u32 %v175, 4294901760
    %v6417 = vsub.f32 %v175, %v6416
    %v6418 = vand.u32 %v6417, 4294901760
    %v6419 = vsub.f32 %v6417, %v6418
    %v6420 = vand.u32 %v6419, 4294901760
    %6421 = vmatpush.msra.mxu0 %v6420
    %v6422 = vand.u32 %v136, 4294901760
    %v6423 = vsub.f32 %v136, %v6422
    %v6424 = vand.u32 %v6423, 4294901760
    %v6425 = vsub.f32 %v6423, %v6424
    %v6426 = vand.u32 %v6425, 4294901760
    %6427 = vmatpush.msra.mxu0 %v6426
    %v6428 = vand.u32 %v97, 4294901760
    %v6429 = vsub.f32 %v97, %v6428
    %v6430 = vand.u32 %v6429, 4294901760
    %v6431 = vsub.f32 %v6429, %v6430
    %v6432 = vand.u32 %v6431, 4294901760
    %6433 = vmatpush.msra.mxu0 %v6432
    %v6434 = vand.u32 %v181, 4294901760
    %6435 = vmatmul.f32.gmra.mxu0 %v6434
    %v6436 = vpop.f32.mrf.mxu0
    %v6437 = vadd.f32 %v6401, %v6436
    %6438 = vdwg.mxu0
    %6439 = vmatpush.msra.mxu0 0.0
    %6440 = vmatpush.msra.mxu0 0.0
    %6441 = vmatpush.msra.mxu0 0.0
    %6442 = vmatpush.msra.mxu0 0.0
    %6443 = vmatpush.msra.mxu0 0.0
    %6444 = vmatpush.msra.mxu0 0.0
    %6445 = vmatpush.msra.mxu0 0.0
    %6446 = vmatpush.msra.mxu0 0.0
    %6447 = vmatpush.msra.mxu0 0.0
    %6448 = vmatpush.msra.mxu0 0.0
    %6449 = vmatpush.msra.mxu0 0.0
    %6450 = vmatpush.msra.mxu0 0.0
    %6451 = vmatpush.msra.mxu0 0.0
    %v6452 = vand.u32 %v175, 4294901760
    %v6453 = vsub.f32 %v175, %v6452
    %6454 = vmatpush.msra.mxu0 %v6453
    %v6455 = vand.u32 %v136, 4294901760
    %v6456 = vsub.f32 %v136, %v6455
    %6457 = vmatpush.msra.mxu0 %v6456
    %v6458 = vand.u32 %v97, 4294901760
    %v6459 = vsub.f32 %v97, %v6458
    %6460 = vmatpush.msra.mxu0 %v6459
    %v6461 = vand.u32 %v181, 4294901760
    %v6462 = vsub.f32 %v181, %v6461
    %6463 = vmatmul.f32.gmra.mxu0 %v6462
    %v6464 = vpop.f32.mrf.mxu0
    %v6465 = vadd.f32 %v6437, %v6464
    %6466 = vdwg.mxu0
    %6467 = vmatpush.msra.mxu0 0.0
    %6468 = vmatpush.msra.mxu0 0.0
    %6469 = vmatpush.msra.mxu0 0.0
    %6470 = vmatpush.msra.mxu0 0.0
    %6471 = vmatpush.msra.mxu0 0.0
    %6472 = vmatpush.msra.mxu0 0.0
    %6473 = vmatpush.msra.mxu0 0.0
    %6474 = vmatpush.msra.mxu0 0.0
    %6475 = vmatpush.msra.mxu0 0.0
    %6476 = vmatpush.msra.mxu0 0.0
    %6477 = vmatpush.msra.mxu0 0.0
    %6478 = vmatpush.msra.mxu0 0.0
    %6479 = vmatpush.msra.mxu0 0.0
    %v6480 = vand.u32 %v175, 4294901760
    %6481 = vmatpush.msra.mxu0 %v6480
    %v6482 = vand.u32 %v136, 4294901760
    %6483 = vmatpush.msra.mxu0 %v6482
    %v6484 = vand.u32 %v97, 4294901760
    %6485 = vmatpush.msra.mxu0 %v6484
    %v6486 = vand.u32 %v181, 4294901760
    %v6487 = vsub.f32 %v181, %v6486
    %v6488 = vand.u32 %v6487, 4294901760
    %6489 = vmatmul.f32.gmra.mxu0 %v6488
    %v6490 = vpop.f32.mrf.mxu0
    %v6491 = vadd.f32 %v6465, %v6490
    %6492 = vdwg.mxu0
    %6493 = vmatpush.msra.mxu0 0.0
    %6494 = vmatpush.msra.mxu0 0.0
    %6495 = vmatpush.msra.mxu0 0.0
    %6496 = vmatpush.msra.mxu0 0.0
    %6497 = vmatpush.msra.mxu0 0.0
    %6498 = vmatpush.msra.mxu0 0.0
    %6499 = vmatpush.msra.mxu0 0.0
    %6500 = vmatpush.msra.mxu0 0.0
    %6501 = vmatpush.msra.mxu0 0.0
    %6502 = vmatpush.msra.mxu0 0.0
    %6503 = vmatpush.msra.mxu0 0.0
    %6504 = vmatpush.msra.mxu0 0.0
    %6505 = vmatpush.msra.mxu0 0.0
    %v6506 = vand.u32 %v175, 4294901760
    %v6507 = vsub.f32 %v175, %v6506
    %v6508 = vand.u32 %v6507, 4294901760
    %6509 = vmatpush.msra.mxu0 %v6508
    %v6510 = vand.u32 %v136, 4294901760
    %v6511 = vsub.f32 %v136, %v6510
    %v6512 = vand.u32 %v6511, 4294901760
    %6513 = vmatpush.msra.mxu0 %v6512
    %v6514 = vand.u32 %v97, 4294901760
    %v6515 = vsub.f32 %v97, %v6514
    %v6516 = vand.u32 %v6515, 4294901760
    %6517 = vmatpush.msra.mxu0 %v6516
    %v6518 = vand.u32 %v181, 4294901760
    %6519 = vmatmul.f32.gmra.mxu0 %v6518
    %v6520 = vpop.f32.mrf.mxu0
    %v6521 = vadd.f32 %v6491, %v6520
    %6522 = vdwg.mxu0
    %6523 = vmatpush.msra.mxu0 0.0
    %6524 = vmatpush.msra.mxu0 0.0
    %6525 = vmatpush.msra.mxu0 0.0
    %6526 = vmatpush.msra.mxu0 0.0
    %6527 = vmatpush.msra.mxu0 0.0
    %6528 = vmatpush.msra.mxu0 0.0
    %6529 = vmatpush.msra.mxu0 0.0
    %6530 = vmatpush.msra.mxu0 0.0
    %6531 = vmatpush.msra.mxu0 0.0
    %6532 = vmatpush.msra.mxu0 0.0
    %6533 = vmatpush.msra.mxu0 0.0
    %6534 = vmatpush.msra.mxu0 0.0
    %6535 = vmatpush.msra.mxu0 0.0
    %v6536 = vand.u32 %v175, 4294901760
    %6537 = vmatpush.msra.mxu0 %v6536
    %v6538 = vand.u32 %v136, 4294901760
    %6539 = vmatpush.msra.mxu0 %v6538
    %v6540 = vand.u32 %v97, 4294901760
    %6541 = vmatpush.msra.mxu0 %v6540
    %v6542 = vand.u32 %v181, 4294901760
    %6543 = vmatmul.f32.gmra.mxu0 %v6542
    %v6544 = vpop.f32.mrf.mxu0
    %v6545 = vadd.f32 %v6521, %v6544
    %6546 = vdwg.mxu0
    %6547 = vmatpush.msra.mxu0 0.0
    %6548 = vmatpush.msra.mxu0 0.0
    %6549 = vmatpush.msra.mxu0 0.0
    %6550 = vmatpush.msra.mxu0 0.0
    %6551 = vmatpush.msra.mxu0 0.0
    %6552 = vmatpush.msra.mxu0 0.0
    %6553 = vmatpush.msra.mxu0 0.0
    %6554 = vmatpush.msra.mxu0 0.0
    %6555 = vmatpush.msra.mxu0 0.0
    %6556 = vmatpush.msra.mxu0 0.0
    %6557 = vmatpush.msra.mxu0 0.0
    %6558 = vmatpush.msra.mxu0 0.0
    %6559 = vmatpush.msra.mxu0 0.0
    %v6560 = vand.u32 %v176, 4294901760
    %6561 = vmatpush.msra.mxu0 %v6560
    %v6562 = vand.u32 %v137, 4294901760
    %6563 = vmatpush.msra.mxu0 %v6562
    %v6564 = vand.u32 %v98, 4294901760
    %6565 = vmatpush.msra.mxu0 %v6564
    %v6566 = vand.u32 %v181, 4294901760
    %v6567 = vsub.f32 %v181, %v6566
    %v6568 = vand.u32 %v6567, 4294901760
    %v6569 = vsub.f32 %v6567, %v6568
    %v6570 = vand.u32 %v6569, 4294901760
    %6571 = vmatmul.f32.gmra.mxu0 %v6570
    %v6572 = vpop.f32.mrf.mxu0
    %v6573 = vadd.f32 0.0, %v6572
    %6574 = vdwg.mxu0
    %6575 = vmatpush.msra.mxu0 0.0
    %6576 = vmatpush.msra.mxu0 0.0
    %6577 = vmatpush.msra.mxu0 0.0
    %6578 = vmatpush.msra.mxu0 0.0
    %6579 = vmatpush.msra.mxu0 0.0
    %6580 = vmatpush.msra.mxu0 0.0
    %6581 = vmatpush.msra.mxu0 0.0
    %6582 = vmatpush.msra.mxu0 0.0
    %6583 = vmatpush.msra.mxu0 0.0
    %6584 = vmatpush.msra.mxu0 0.0
    %6585 = vmatpush.msra.mxu0 0.0
    %6586 = vmatpush.msra.mxu0 0.0
    %6587 = vmatpush.msra.mxu0 0.0
    %v6588 = vand.u32 %v176, 4294901760
    %v6589 = vsub.f32 %v176, %v6588
    %v6590 = vand.u32 %v6589, 4294901760
    %v6591 = vsub.f32 %v6589, %v6590
    %v6592 = vand.u32 %v6591, 4294901760
    %6593 = vmatpush.msra.mxu0 %v6592
    %v6594 = vand.u32 %v137, 4294901760
    %v6595 = vsub.f32 %v137, %v6594
    %v6596 = vand.u32 %v6595, 4294901760
    %v6597 = vsub.f32 %v6595, %v6596
    %v6598 = vand.u32 %v6597, 4294901760
    %6599 = vmatpush.msra.mxu0 %v6598
    %v6600 = vand.u32 %v98, 4294901760
    %v6601 = vsub.f32 %v98, %v6600
    %v6602 = vand.u32 %v6601, 4294901760
    %v6603 = vsub.f32 %v6601, %v6602
    %v6604 = vand.u32 %v6603, 4294901760
    %6605 = vmatpush.msra.mxu0 %v6604
    %v6606 = vand.u32 %v181, 4294901760
    %6607 = vmatmul.f32.gmra.mxu0 %v6606
    %v6608 = vpop.f32.mrf.mxu0
    %v6609 = vadd.f32 %v6573, %v6608
    %6610 = vdwg.mxu0
    %6611 = vmatpush.msra.mxu0 0.0
    %6612 = vmatpush.msra.mxu0 0.0
    %6613 = vmatpush.msra.mxu0 0.0
    %6614 = vmatpush.msra.mxu0 0.0
    %6615 = vmatpush.msra.mxu0 0.0
    %6616 = vmatpush.msra.mxu0 0.0
    %6617 = vmatpush.msra.mxu0 0.0
    %6618 = vmatpush.msra.mxu0 0.0
    %6619 = vmatpush.msra.mxu0 0.0
    %6620 = vmatpush.msra.mxu0 0.0
    %6621 = vmatpush.msra.mxu0 0.0
    %6622 = vmatpush.msra.mxu0 0.0
    %6623 = vmatpush.msra.mxu0 0.0
    %v6624 = vand.u32 %v176, 4294901760
    %v6625 = vsub.f32 %v176, %v6624
    %6626 = vmatpush.msra.mxu0 %v6625
    %v6627 = vand.u32 %v137, 4294901760
    %v6628 = vsub.f32 %v137, %v6627
    %6629 = vmatpush.msra.mxu0 %v6628
    %v6630 = vand.u32 %v98, 4294901760
    %v6631 = vsub.f32 %v98, %v6630
    %6632 = vmatpush.msra.mxu0 %v6631
    %v6633 = vand.u32 %v181, 4294901760
    %v6634 = vsub.f32 %v181, %v6633
    %6635 = vmatmul.f32.gmra.mxu0 %v6634
    %v6636 = vpop.f32.mrf.mxu0
    %v6637 = vadd.f32 %v6609, %v6636
    %6638 = vdwg.mxu0
    %6639 = vmatpush.msra.mxu0 0.0
    %6640 = vmatpush.msra.mxu0 0.0
    %6641 = vmatpush.msra.mxu0 0.0
    %6642 = vmatpush.msra.mxu0 0.0
    %6643 = vmatpush.msra.mxu0 0.0
    %6644 = vmatpush.msra.mxu0 0.0
    %6645 = vmatpush.msra.mxu0 0.0
    %6646 = vmatpush.msra.mxu0 0.0
    %6647 = vmatpush.msra.mxu0 0.0
    %6648 = vmatpush.msra.mxu0 0.0
    %6649 = vmatpush.msra.mxu0 0.0
    %6650 = vmatpush.msra.mxu0 0.0
    %6651 = vmatpush.msra.mxu0 0.0
    %v6652 = vand.u32 %v176, 4294901760
    %6653 = vmatpush.msra.mxu0 %v6652
    %v6654 = vand.u32 %v137, 4294901760
    %6655 = vmatpush.msra.mxu0 %v6654
    %v6656 = vand.u32 %v98, 4294901760
    %6657 = vmatpush.msra.mxu0 %v6656
    %v6658 = vand.u32 %v181, 4294901760
    %v6659 = vsub.f32 %v181, %v6658
    %v6660 = vand.u32 %v6659, 4294901760
    %6661 = vmatmul.f32.gmra.mxu0 %v6660
    %v6662 = vpop.f32.mrf.mxu0
    %v6663 = vadd.f32 %v6637, %v6662
    %6664 = vdwg.mxu0
    %6665 = vmatpush.msra.mxu0 0.0
    %6666 = vmatpush.msra.mxu0 0.0
    %6667 = vmatpush.msra.mxu0 0.0
    %6668 = vmatpush.msra.mxu0 0.0
    %6669 = vmatpush.msra.mxu0 0.0
    %6670 = vmatpush.msra.mxu0 0.0
    %6671 = vmatpush.msra.mxu0 0.0
    %6672 = vmatpush.msra.mxu0 0.0
    %6673 = vmatpush.msra.mxu0 0.0
    %6674 = vmatpush.msra.mxu0 0.0
    %6675 = vmatpush.msra.mxu0 0.0
    %6676 = vmatpush.msra.mxu0 0.0
    %6677 = vmatpush.msra.mxu0 0.0
    %v6678 = vand.u32 %v176, 4294901760
    %v6679 = vsub.f32 %v176, %v6678
    %v6680 = vand.u32 %v6679, 4294901760
    %6681 = vmatpush.msra.mxu0 %v6680
    %v6682 = vand.u32 %v137, 4294901760
    %v6683 = vsub.f32 %v137, %v6682
    %v6684 = vand.u32 %v6683, 4294901760
    %6685 = vmatpush.msra.mxu0 %v6684
    %v6686 = vand.u32 %v98, 4294901760
    %v6687 = vsub.f32 %v98, %v6686
    %v6688 = vand.u32 %v6687, 4294901760
    %6689 = vmatpush.msra.mxu0 %v6688
    %v6690 = vand.u32 %v181, 4294901760
    %6691 = vmatmul.f32.gmra.mxu0 %v6690
    %v6692 = vpop.f32.mrf.mxu0
    %v6693 = vadd.f32 %v6663, %v6692
    %6694 = vdwg.mxu0
    %6695 = vmatpush.msra.mxu0 0.0
    %6696 = vmatpush.msra.mxu0 0.0
    %6697 = vmatpush.msra.mxu0 0.0
    %6698 = vmatpush.msra.mxu0 0.0
    %6699 = vmatpush.msra.mxu0 0.0
    %6700 = vmatpush.msra.mxu0 0.0
    %6701 = vmatpush.msra.mxu0 0.0
    %6702 = vmatpush.msra.mxu0 0.0
    %6703 = vmatpush.msra.mxu0 0.0
    %6704 = vmatpush.msra.mxu0 0.0
    %6705 = vmatpush.msra.mxu0 0.0
    %6706 = vmatpush.msra.mxu0 0.0
    %6707 = vmatpush.msra.mxu0 0.0
    %v6708 = vand.u32 %v176, 4294901760
    %6709 = vmatpush.msra.mxu0 %v6708
    %v6710 = vand.u32 %v137, 4294901760
    %6711 = vmatpush.msra.mxu0 %v6710
    %v6712 = vand.u32 %v98, 4294901760
    %6713 = vmatpush.msra.mxu0 %v6712
    %v6714 = vand.u32 %v181, 4294901760
    %6715 = vmatmul.f32.gmra.mxu0 %v6714
    %v6716 = vpop.f32.mrf.mxu0
    %v6717 = vadd.f32 %v6693, %v6716
    %6718 = vdwg.mxu0
    %6719 = vmatpush.msra.mxu0 0.0
    %6720 = vmatpush.msra.mxu0 0.0
    %6721 = vmatpush.msra.mxu0 0.0
    %6722 = vmatpush.msra.mxu0 0.0
    %6723 = vmatpush.msra.mxu0 0.0
    %6724 = vmatpush.msra.mxu0 0.0
    %6725 = vmatpush.msra.mxu0 0.0
    %6726 = vmatpush.msra.mxu0 0.0
    %6727 = vmatpush.msra.mxu0 0.0
    %6728 = vmatpush.msra.mxu0 0.0
    %6729 = vmatpush.msra.mxu0 0.0
    %6730 = vmatpush.msra.mxu0 0.0
    %6731 = vmatpush.msra.mxu0 0.0
    %v6732 = vand.u32 %v177, 4294901760
    %6733 = vmatpush.msra.mxu0 %v6732
    %v6734 = vand.u32 %v138, 4294901760
    %6735 = vmatpush.msra.mxu0 %v6734
    %v6736 = vand.u32 %v99, 4294901760
    %6737 = vmatpush.msra.mxu0 %v6736
    %v6738 = vand.u32 %v181, 4294901760
    %v6739 = vsub.f32 %v181, %v6738
    %v6740 = vand.u32 %v6739, 4294901760
    %v6741 = vsub.f32 %v6739, %v6740
    %v6742 = vand.u32 %v6741, 4294901760
    %6743 = vmatmul.f32.gmra.mxu0 %v6742
    %v6744 = vpop.f32.mrf.mxu0
    %v6745 = vadd.f32 0.0, %v6744
    %6746 = vdwg.mxu0
    %6747 = vmatpush.msra.mxu0 0.0
    %6748 = vmatpush.msra.mxu0 0.0
    %6749 = vmatpush.msra.mxu0 0.0
    %6750 = vmatpush.msra.mxu0 0.0
    %6751 = vmatpush.msra.mxu0 0.0
    %6752 = vmatpush.msra.mxu0 0.0
    %6753 = vmatpush.msra.mxu0 0.0
    %6754 = vmatpush.msra.mxu0 0.0
    %6755 = vmatpush.msra.mxu0 0.0
    %6756 = vmatpush.msra.mxu0 0.0
    %6757 = vmatpush.msra.mxu0 0.0
    %6758 = vmatpush.msra.mxu0 0.0
    %6759 = vmatpush.msra.mxu0 0.0
    %v6760 = vand.u32 %v177, 4294901760
    %v6761 = vsub.f32 %v177, %v6760
    %v6762 = vand.u32 %v6761, 4294901760
    %v6763 = vsub.f32 %v6761, %v6762
    %v6764 = vand.u32 %v6763, 4294901760
    %6765 = vmatpush.msra.mxu0 %v6764
    %v6766 = vand.u32 %v138, 4294901760
    %v6767 = vsub.f32 %v138, %v6766
    %v6768 = vand.u32 %v6767, 4294901760
    %v6769 = vsub.f32 %v6767, %v6768
    %v6770 = vand.u32 %v6769, 4294901760
    %6771 = vmatpush.msra.mxu0 %v6770
    %v6772 = vand.u32 %v99, 4294901760
    %v6773 = vsub.f32 %v99, %v6772
    %v6774 = vand.u32 %v6773, 4294901760
    %v6775 = vsub.f32 %v6773, %v6774
    %v6776 = vand.u32 %v6775, 4294901760
    %6777 = vmatpush.msra.mxu0 %v6776
    %v6778 = vand.u32 %v181, 4294901760
    %6779 = vmatmul.f32.gmra.mxu0 %v6778
    %v6780 = vpop.f32.mrf.mxu0
    %v6781 = vadd.f32 %v6745, %v6780
    %6782 = vdwg.mxu0
    %6783 = vmatpush.msra.mxu0 0.0
    %6784 = vmatpush.msra.mxu0 0.0
    %6785 = vmatpush.msra.mxu0 0.0
    %6786 = vmatpush.msra.mxu0 0.0
    %6787 = vmatpush.msra.mxu0 0.0
    %6788 = vmatpush.msra.mxu0 0.0
    %6789 = vmatpush.msra.mxu0 0.0
    %6790 = vmatpush.msra.mxu0 0.0
    %6791 = vmatpush.msra.mxu0 0.0
    %6792 = vmatpush.msra.mxu0 0.0
    %6793 = vmatpush.msra.mxu0 0.0
    %6794 = vmatpush.msra.mxu0 0.0
    %6795 = vmatpush.msra.mxu0 0.0
    %v6796 = vand.u32 %v177, 4294901760
    %v6797 = vsub.f32 %v177, %v6796
    %6798 = vmatpush.msra.mxu0 %v6797
    %v6799 = vand.u32 %v138, 4294901760
    %v6800 = vsub.f32 %v138, %v6799
    %6801 = vmatpush.msra.mxu0 %v6800
    %v6802 = vand.u32 %v99, 4294901760
    %v6803 = vsub.f32 %v99, %v6802
    %6804 = vmatpush.msra.mxu0 %v6803
    %v6805 = vand.u32 %v181, 4294901760
    %v6806 = vsub.f32 %v181, %v6805
    %6807 = vmatmul.f32.gmra.mxu0 %v6806
    %v6808 = vpop.f32.mrf.mxu0
    %v6809 = vadd.f32 %v6781, %v6808
    %6810 = vdwg.mxu0
    %6811 = vmatpush.msra.mxu0 0.0
    %6812 = vmatpush.msra.mxu0 0.0
    %6813 = vmatpush.msra.mxu0 0.0
    %6814 = vmatpush.msra.mxu0 0.0
    %6815 = vmatpush.msra.mxu0 0.0
    %6816 = vmatpush.msra.mxu0 0.0
    %6817 = vmatpush.msra.mxu0 0.0
    %6818 = vmatpush.msra.mxu0 0.0
    %6819 = vmatpush.msra.mxu0 0.0
    %6820 = vmatpush.msra.mxu0 0.0
    %6821 = vmatpush.msra.mxu0 0.0
    %6822 = vmatpush.msra.mxu0 0.0
    %6823 = vmatpush.msra.mxu0 0.0
    %v6824 = vand.u32 %v177, 4294901760
    %6825 = vmatpush.msra.mxu0 %v6824
    %v6826 = vand.u32 %v138, 4294901760
    %6827 = vmatpush.msra.mxu0 %v6826
    %v6828 = vand.u32 %v99, 4294901760
    %6829 = vmatpush.msra.mxu0 %v6828
    %v6830 = vand.u32 %v181, 4294901760
    %v6831 = vsub.f32 %v181, %v6830
    %v6832 = vand.u32 %v6831, 4294901760
    %6833 = vmatmul.f32.gmra.mxu0 %v6832
    %v6834 = vpop.f32.mrf.mxu0
    %v6835 = vadd.f32 %v6809, %v6834
    %6836 = vdwg.mxu0
    %6837 = vmatpush.msra.mxu0 0.0
    %6838 = vmatpush.msra.mxu0 0.0
    %6839 = vmatpush.msra.mxu0 0.0
    %6840 = vmatpush.msra.mxu0 0.0
    %6841 = vmatpush.msra.mxu0 0.0
    %6842 = vmatpush.msra.mxu0 0.0
    %6843 = vmatpush.msra.mxu0 0.0
    %6844 = vmatpush.msra.mxu0 0.0
    %6845 = vmatpush.msra.mxu0 0.0
    %6846 = vmatpush.msra.mxu0 0.0
    %6847 = vmatpush.msra.mxu0 0.0
    %6848 = vmatpush.msra.mxu0 0.0
    %6849 = vmatpush.msra.mxu0 0.0
    %v6850 = vand.u32 %v177, 4294901760
    %v6851 = vsub.f32 %v177, %v6850
    %v6852 = vand.u32 %v6851, 4294901760
    %6853 = vmatpush.msra.mxu0 %v6852
    %v6854 = vand.u32 %v138, 4294901760
    %v6855 = vsub.f32 %v138, %v6854
    %v6856 = vand.u32 %v6855, 4294901760
    %6857 = vmatpush.msra.mxu0 %v6856
    %v6858 = vand.u32 %v99, 4294901760
    %v6859 = vsub.f32 %v99, %v6858
    %v6860 = vand.u32 %v6859, 4294901760
    %6861 = vmatpush.msra.mxu0 %v6860
    %v6862 = vand.u32 %v181, 4294901760
    %6863 = vmatmul.f32.gmra.mxu0 %v6862
    %v6864 = vpop.f32.mrf.mxu0
    %v6865 = vadd.f32 %v6835, %v6864
    %6866 = vdwg.mxu0
    %6867 = vmatpush.msra.mxu0 0.0
    %6868 = vmatpush.msra.mxu0 0.0
    %6869 = vmatpush.msra.mxu0 0.0
    %6870 = vmatpush.msra.mxu0 0.0
    %6871 = vmatpush.msra.mxu0 0.0
    %6872 = vmatpush.msra.mxu0 0.0
    %6873 = vmatpush.msra.mxu0 0.0
    %6874 = vmatpush.msra.mxu0 0.0
    %6875 = vmatpush.msra.mxu0 0.0
    %6876 = vmatpush.msra.mxu0 0.0
    %6877 = vmatpush.msra.mxu0 0.0
    %6878 = vmatpush.msra.mxu0 0.0
    %6879 = vmatpush.msra.mxu0 0.0
    %v6880 = vand.u32 %v177, 4294901760
    %6881 = vmatpush.msra.mxu0 %v6880
    %v6882 = vand.u32 %v138, 4294901760
    %6883 = vmatpush.msra.mxu0 %v6882
    %v6884 = vand.u32 %v99, 4294901760
    %6885 = vmatpush.msra.mxu0 %v6884
    %v6886 = vand.u32 %v181, 4294901760
    %6887 = vmatmul.f32.gmra.mxu0 %v6886
    %v6888 = vpop.f32.mrf.mxu0
    %v6889 = vadd.f32 %v6865, %v6888
    %6890 = vdwg.mxu0
    %6891 = vst [vmem:[#allocation8] sm:$0xff] %v353
    %6892 = vst [vmem:[#allocation8 + $0x8] sm:$0xff] %v525
    %6893 = vst [vmem:[#allocation8 + $0x10] sm:$0xff] %v697
    %6894 = vst [vmem:[#allocation8 + $0x18] sm:$0xff] %v869
    %6895 = vst [vmem:[#allocation8 + $0x20] sm:$0xff] %v1041
    %6896 = vst [vmem:[#allocation8 + $0x28] sm:$0xff] %v1213
    %6897 = vst [vmem:[#allocation8 + $0x30] sm:$0xff] %v1385
    %6898 = vst [vmem:[#allocation8 + $0x38] sm:$0xff] %v1557
    %6899 = vst [vmem:[#allocation8 + $0x40] sm:$0xff] %v1729
    %6900 = vst [vmem:[#allocation8 + $0x48] sm:$0xff] %v1901
    %6901 = vst [vmem:[#allocation8 + $0x50] sm:$0xff] %v2073
    %6902 = vst [vmem:[#allocation8 + $0x58] sm:$0xff] %v2245
    %6903 = vst [vmem:[#allocation8 + $0x60] sm:$0xff] %v2417
    %6904 = vst [vmem:[#allocation8 + $0x68] sm:$0xff] %v2589
    %6905 = vst [vmem:[#allocation8 + $0x70] sm:$0xff] %v2761
    %6906 = vst [vmem:[#allocation8 + $0x78] sm:$0xff] %v2933
    %6907 = vst [vmem:[#allocation8 + $0x80] sm:$0xff] %v3105
    %6908 = vst [vmem:[#allocation8 + $0x88] sm:$0xff] %v3277
    %6909 = vst [vmem:[#allocation8 + $0x90] sm:$0xff] %v3449
    %6910 = vst [vmem:[#allocation8 + $0x98] sm:$0xff] %v3621
    %6911 = vst [vmem:[#allocation8 + $0xa0] sm:$0xff] %v3793
    %6912 = vst [vmem:[#allocation8 + $0xa8] sm:$0xff] %v3965
    %6913 = vst [vmem:[#allocation8 + $0xb0] sm:$0xff] %v4137
    %6914 = vst [vmem:[#allocation8 + $0xb8] sm:$0xff] %v4309
    %6915 = vst [vmem:[#allocation8 + $0xc0] sm:$0xff] %v4481
    %6916 = vst [vmem:[#allocation8 + $0xc8] sm:$0xff] %v4653
    %6917 = vst [vmem:[#allocation8 + $0xd0] sm:$0xff] %v4825
    %6918 = vst [vmem:[#allocation8 + $0xd8] sm:$0xff] %v4997
    %6919 = vst [vmem:[#allocation8 + $0xe0] sm:$0xff] %v5169
    %6920 = vst [vmem:[#allocation8 + $0xe8] sm:$0xff] %v5341
    %6921 = vst [vmem:[#allocation8 + $0xf0] sm:$0xff] %v5513
    %6922 = vst [vmem:[#allocation8 + $0xf8] sm:$0xff] %v5685
    %6923 = vst [vmem:[#allocation8 + $0x100] sm:$0xff] %v5857
    %6924 = vst [vmem:[#allocation8 + $0x108] sm:$0xff] %v6029
    %6925 = vst [vmem:[#allocation8 + $0x110] sm:$0xff] %v6201
    %6926 = vst [vmem:[#allocation8 + $0x118] sm:$0xff] %v6373
    %6927 = vst [vmem:[#allocation8 + $0x120] sm:$0xff] %v6545
    %6928 = vst [vmem:[#allocation8 + $0x128] sm:$0xff] %v6717
    %6929 = vst [vmem:[#allocation8 + $0x130] sm:$0xff] %v6889
    %6930 = vrot.lane.b32.xlu0 %v61, 127
    %v6931 = vpop.permute.xlu0 %6930
    %6932 = vrot.lane.b32.xlu0 %v100, 127
    %v6933 = vpop.permute.xlu0 %6932
    %6934 = vrot.lane.b32.xlu0 %v139, 127
    %v6935 = vpop.permute.xlu0 %6934
    %6936 = vrot.lane.b32.xlu0 %v62, 127
    %v6937 = vpop.permute.xlu0 %6936
    %6938 = vrot.lane.b32.xlu0 %v101, 127
    %v6939 = vpop.permute.xlu0 %6938
    %6940 = vrot.lane.b32.xlu0 %v140, 127
    %v6941 = vpop.permute.xlu0 %6940
    %6942 = vrot.lane.b32.xlu0 %v63, 127
    %v6943 = vpop.permute.xlu0 %6942
    %6944 = vrot.lane.b32.xlu0 %v102, 127
    %v6945 = vpop.permute.xlu0 %6944
    %6946 = vrot.lane.b32.xlu0 %v141, 127
    %v6947 = vpop.permute.xlu0 %6946
    %6948 = vrot.lane.b32.xlu0 %v64, 127
    %v6949 = vpop.permute.xlu0 %6948
    %6950 = vrot.lane.b32.xlu0 %v103, 127
    %v6951 = vpop.permute.xlu0 %6950
    %6952 = vrot.lane.b32.xlu0 %v142, 127
    %v6953 = vpop.permute.xlu0 %6952
    %6954 = vrot.lane.b32.xlu0 %v65, 127
    %v6955 = vpop.permute.xlu0 %6954
    %6956 = vrot.lane.b32.xlu0 %v104, 127
    %v6957 = vpop.permute.xlu0 %6956
    %6958 = vrot.lane.b32.xlu0 %v143, 127
    %v6959 = vpop.permute.xlu0 %6958
    %6960 = vrot.lane.b32.xlu0 %v66, 127
    %v6961 = vpop.permute.xlu0 %6960
    %6962 = vrot.lane.b32.xlu0 %v105, 127
    %v6963 = vpop.permute.xlu0 %6962
    %6964 = vrot.lane.b32.xlu0 %v144, 127
    %v6965 = vpop.permute.xlu0 %6964
    %6966 = vrot.lane.b32.xlu0 %v67, 127
    %v6967 = vpop.permute.xlu0 %6966
    %6968 = vrot.lane.b32.xlu0 %v106, 127
    %v6969 = vpop.permute.xlu0 %6968
    %6970 = vrot.lane.b32.xlu0 %v145, 127
    %v6971 = vpop.permute.xlu0 %6970
    %6972 = vrot.lane.b32.xlu0 %v68, 127
    %v6973 = vpop.permute.xlu0 %6972
    %6974 = vrot.lane.b32.xlu0 %v107, 127
    %v6975 = vpop.permute.xlu0 %6974
    %6976 = vrot.lane.b32.xlu0 %v146, 127
    %v6977 = vpop.permute.xlu0 %6976
    %6978 = vrot.lane.b32.xlu0 %v69, 127
    %v6979 = vpop.permute.xlu0 %6978
    %6980 = vrot.lane.b32.xlu0 %v108, 127
    %v6981 = vpop.permute.xlu0 %6980
    %6982 = vrot.lane.b32.xlu0 %v147, 127
    %v6983 = vpop.permute.xlu0 %6982
    %6984 = vrot.lane.b32.xlu0 %v70, 127
    %v6985 = vpop.permute.xlu0 %6984
    %6986 = vrot.lane.b32.xlu0 %v109, 127
    %v6987 = vpop.permute.xlu0 %6986
    %6988 = vrot.lane.b32.xlu0 %v148, 127
    %v6989 = vpop.permute.xlu0 %6988
    %6990 = vrot.lane.b32.xlu0 %v71, 127
    %v6991 = vpop.permute.xlu0 %6990
    %6992 = vrot.lane.b32.xlu0 %v110, 127
    %v6993 = vpop.permute.xlu0 %6992
    %6994 = vrot.lane.b32.xlu0 %v149, 127
    %v6995 = vpop.permute.xlu0 %6994
    %6996 = vrot.lane.b32.xlu0 %v72, 127
    %v6997 = vpop.permute.xlu0 %6996
    %6998 = vrot.lane.b32.xlu0 %v111, 127
    %v6999 = vpop.permute.xlu0 %6998
    %7000 = vrot.lane.b32.xlu0 %v150, 127
    %v7001 = vpop.permute.xlu0 %7000
    %7002 = vrot.lane.b32.xlu0 %v73, 127
    %v7003 = vpop.permute.xlu0 %7002
    %7004 = vrot.lane.b32.xlu0 %v112, 127
    %v7005 = vpop.permute.xlu0 %7004
    %7006 = vrot.lane.b32.xlu0 %v151, 127
    %v7007 = vpop.permute.xlu0 %7006
    %7008 = vrot.lane.b32.xlu0 %v74, 127
    %v7009 = vpop.permute.xlu0 %7008
    %7010 = vrot.lane.b32.xlu0 %v113, 127
    %v7011 = vpop.permute.xlu0 %7010
    %7012 = vrot.lane.b32.xlu0 %v152, 127
    %v7013 = vpop.permute.xlu0 %7012
    %7014 = vrot.lane.b32.xlu0 %v75, 127
    %v7015 = vpop.permute.xlu0 %7014
    %7016 = vrot.lane.b32.xlu0 %v114, 127
    %v7017 = vpop.permute.xlu0 %7016
    %7018 = vrot.lane.b32.xlu0 %v153, 127
    %v7019 = vpop.permute.xlu0 %7018
    %7020 = vrot.lane.b32.xlu0 %v76, 127
    %v7021 = vpop.permute.xlu0 %7020
    %7022 = vrot.lane.b32.xlu0 %v115, 127
    %v7023 = vpop.permute.xlu0 %7022
    %7024 = vrot.lane.b32.xlu0 %v154, 127
    %v7025 = vpop.permute.xlu0 %7024
    %7026 = vrot.lane.b32.xlu0 %v77, 127
    %v7027 = vpop.permute.xlu0 %7026
    %7028 = vrot.lane.b32.xlu0 %v116, 127
    %v7029 = vpop.permute.xlu0 %7028
    %7030 = vrot.lane.b32.xlu0 %v155, 127
    %v7031 = vpop.permute.xlu0 %7030
    %7032 = vrot.lane.b32.xlu0 %v78, 127
    %v7033 = vpop.permute.xlu0 %7032
    %7034 = vrot.lane.b32.xlu0 %v117, 127
    %v7035 = vpop.permute.xlu0 %7034
    %7036 = vrot.lane.b32.xlu0 %v156, 127
    %v7037 = vpop.permute.xlu0 %7036
    %7038 = vrot.lane.b32.xlu0 %v79, 127
    %v7039 = vpop.permute.xlu0 %7038
    %7040 = vrot.lane.b32.xlu0 %v118, 127
    %v7041 = vpop.permute.xlu0 %7040
    %7042 = vrot.lane.b32.xlu0 %v157, 127
    %v7043 = vpop.permute.xlu0 %7042
    %7044 = vrot.lane.b32.xlu0 %v80, 127
    %v7045 = vpop.permute.xlu0 %7044
    %7046 = vrot.lane.b32.xlu0 %v119, 127
    %v7047 = vpop.permute.xlu0 %7046
    %7048 = vrot.lane.b32.xlu0 %v158, 127
    %v7049 = vpop.permute.xlu0 %7048
    %7050 = vrot.lane.b32.xlu0 %v81, 127
    %v7051 = vpop.permute.xlu0 %7050
    %7052 = vrot.lane.b32.xlu0 %v120, 127
    %v7053 = vpop.permute.xlu0 %7052
    %7054 = vrot.lane.b32.xlu0 %v159, 127
    %v7055 = vpop.permute.xlu0 %7054
    %7056 = vrot.lane.b32.xlu0 %v82, 127
    %v7057 = vpop.permute.xlu0 %7056
    %7058 = vrot.lane.b32.xlu0 %v121, 127
    %v7059 = vpop.permute.xlu0 %7058
    %7060 = vrot.lane.b32.xlu0 %v160, 127
    %v7061 = vpop.permute.xlu0 %7060
    %7062 = vrot.lane.b32.xlu0 %v83, 127
    %v7063 = vpop.permute.xlu0 %7062
    %7064 = vrot.lane.b32.xlu0 %v122, 127
    %v7065 = vpop.permute.xlu0 %7064
    %7066 = vrot.lane.b32.xlu0 %v161, 127
    %v7067 = vpop.permute.xlu0 %7066
    %7068 = vrot.lane.b32.xlu0 %v84, 127
    %v7069 = vpop.permute.xlu0 %7068
    %7070 = vrot.lane.b32.xlu0 %v123, 127
    %v7071 = vpop.permute.xlu0 %7070
    %7072 = vrot.lane.b32.xlu0 %v162, 127
    %v7073 = vpop.permute.xlu0 %7072
    %7074 = vrot.lane.b32.xlu0 %v85, 127
    %v7075 = vpop.permute.xlu0 %7074
    %7076 = vrot.lane.b32.xlu0 %v124, 127
    %v7077 = vpop.permute.xlu0 %7076
    %7078 = vrot.lane.b32.xlu0 %v163, 127
    %v7079 = vpop.permute.xlu0 %7078
    %7080 = vrot.lane.b32.xlu0 %v86, 127
    %v7081 = vpop.permute.xlu0 %7080
    %7082 = vrot.lane.b32.xlu0 %v125, 127
    %v7083 = vpop.permute.xlu0 %7082
    %7084 = vrot.lane.b32.xlu0 %v164, 127
    %v7085 = vpop.permute.xlu0 %7084
    %7086 = vrot.lane.b32.xlu0 %v87, 127
    %v7087 = vpop.permute.xlu0 %7086
    %7088 = vrot.lane.b32.xlu0 %v126, 127
    %v7089 = vpop.permute.xlu0 %7088
    %7090 = vrot.lane.b32.xlu0 %v165, 127
    %v7091 = vpop.permute.xlu0 %7090
    %7092 = vrot.lane.b32.xlu0 %v88, 127
    %v7093 = vpop.permute.xlu0 %7092
    %7094 = vrot.lane.b32.xlu0 %v127, 127
    %v7095 = vpop.permute.xlu0 %7094
    %7096 = vrot.lane.b32.xlu0 %v166, 127
    %v7097 = vpop.permute.xlu0 %7096
    %7098 = vrot.lane.b32.xlu0 %v89, 127
    %v7099 = vpop.permute.xlu0 %7098
    %7100 = vrot.lane.b32.xlu0 %v128, 127
    %v7101 = vpop.permute.xlu0 %7100
    %7102 = vrot.lane.b32.xlu0 %v167, 127
    %v7103 = vpop.permute.xlu0 %7102
    %7104 = vrot.lane.b32.xlu0 %v90, 127
    %v7105 = vpop.permute.xlu0 %7104
    %7106 = vrot.lane.b32.xlu0 %v129, 127
    %v7107 = vpop.permute.xlu0 %7106
    %7108 = vrot.lane.b32.xlu0 %v168, 127
    %v7109 = vpop.permute.xlu0 %7108
    %7110 = vrot.lane.b32.xlu0 %v91, 127
    %v7111 = vpop.permute.xlu0 %7110
    %7112 = vrot.lane.b32.xlu0 %v130, 127
    %v7113 = vpop.permute.xlu0 %7112
    %7114 = vrot.lane.b32.xlu0 %v169, 127
    %v7115 = vpop.permute.xlu0 %7114
    %7116 = vrot.lane.b32.xlu0 %v92, 127
    %v7117 = vpop.permute.xlu0 %7116
    %7118 = vrot.lane.b32.xlu0 %v131, 127
    %v7119 = vpop.permute.xlu0 %7118
    %7120 = vrot.lane.b32.xlu0 %v170, 127
    %v7121 = vpop.permute.xlu0 %7120
    %7122 = vrot.lane.b32.xlu0 %v93, 127
    %v7123 = vpop.permute.xlu0 %7122
    %7124 = vrot.lane.b32.xlu0 %v132, 127
    %v7125 = vpop.permute.xlu0 %7124
    %7126 = vrot.lane.b32.xlu0 %v171, 127
    %v7127 = vpop.permute.xlu0 %7126
    %7128 = vrot.lane.b32.xlu0 %v94, 127
    %v7129 = vpop.permute.xlu0 %7128
    %7130 = vrot.lane.b32.xlu0 %v133, 127
    %v7131 = vpop.permute.xlu0 %7130
    %7132 = vrot.lane.b32.xlu0 %v172, 127
    %v7133 = vpop.permute.xlu0 %7132
    %7134 = vrot.lane.b32.xlu0 %v95, 127
    %v7135 = vpop.permute.xlu0 %7134
    %7136 = vrot.lane.b32.xlu0 %v134, 127
    %v7137 = vpop.permute.xlu0 %7136
    %7138 = vrot.lane.b32.xlu0 %v173, 127
    %v7139 = vpop.permute.xlu0 %7138
    %7140 = vrot.lane.b32.xlu0 %v96, 127
    %v7141 = vpop.permute.xlu0 %7140
    %7142 = vrot.lane.b32.xlu0 %v135, 127
    %v7143 = vpop.permute.xlu0 %7142
    %7144 = vrot.lane.b32.xlu0 %v174, 127
    %v7145 = vpop.permute.xlu0 %7144
    %7146 = vrot.lane.b32.xlu0 %v97, 127
    %v7147 = vpop.permute.xlu0 %7146
    %7148 = vrot.lane.b32.xlu0 %v136, 127
    %v7149 = vpop.permute.xlu0 %7148
    %7150 = vrot.lane.b32.xlu0 %v175, 127
    %v7151 = vpop.permute.xlu0 %7150
    %7152 = vrot.lane.b32.xlu0 %v98, 127
    %v7153 = vpop.permute.xlu0 %7152
    %7154 = vrot.lane.b32.xlu0 %v137, 127
    %v7155 = vpop.permute.xlu0 %7154
    %7156 = vrot.lane.b32.xlu0 %v176, 127
    %v7157 = vpop.permute.xlu0 %7156
    %7158 = vrot.lane.b32.xlu0 %v99, 127
    %v7159 = vpop.permute.xlu0 %7158
    %7160 = vrot.lane.b32.xlu0 %v138, 127
    %v7161 = vpop.permute.xlu0 %7160
    %7162 = vrot.lane.b32.xlu0 %v177, 127
    %v7163 = vpop.permute.xlu0 %7162
    %v7164 = vlaneseq
    %v7165 = vand.u32 %v7164, 127
    %vm7166 = vcmp.lt.s32.totalorder %v7165, 127
    %v7167 = vsel %vm7166, %v7153, %v7159
    %v7168 = vsel %vm7166, %v7155, %v7161
    %v7169 = vsel %vm7166, %v7157, %v7163
    %v7170 = vsel %vm7166, %v7147, %v7153
    %v7171 = vsel %vm7166, %v7149, %v7155
    %v7172 = vsel %vm7166, %v7151, %v7157
    %v7173 = vsel %vm7166, %v7141, %v7147
    %v7174 = vsel %vm7166, %v7143, %v7149
    %v7175 = vsel %vm7166, %v7145, %v7151
    %v7176 = vsel %vm7166, %v7135, %v7141
    %v7177 = vsel %vm7166, %v7137, %v7143
    %v7178 = vsel %vm7166, %v7139, %v7145
    %v7179 = vsel %vm7166, %v7129, %v7135
    %v7180 = vsel %vm7166, %v7131, %v7137
    %v7181 = vsel %vm7166, %v7133, %v7139
    %v7182 = vsel %vm7166, %v7123, %v7129
    %v7183 = vsel %vm7166, %v7125, %v7131
    %v7184 = vsel %vm7166, %v7127, %v7133
    %v7185 = vsel %vm7166, %v7117, %v7123
    %v7186 = vsel %vm7166, %v7119, %v7125
    %v7187 = vsel %vm7166, %v7121, %v7127
    %v7188 = vsel %vm7166, %v7111, %v7117
    %v7189 = vsel %vm7166, %v7113, %v7119
    %v7190 = vsel %vm7166, %v7115, %v7121
    %v7191 = vsel %vm7166, %v7105, %v7111
    %v7192 = vsel %vm7166, %v7107, %v7113
    %v7193 = vsel %vm7166, %v7109, %v7115
    %v7194 = vsel %vm7166, %v7099, %v7105
    %v7195 = vsel %vm7166, %v7101, %v7107
    %v7196 = vsel %vm7166, %v7103, %v7109
    %v7197 = vsel %vm7166, %v7093, %v7099
    %v7198 = vsel %vm7166, %v7095, %v7101
    %v7199 = vsel %vm7166, %v7097, %v7103
    %v7200 = vsel %vm7166, %v7087, %v7093
    %v7201 = vsel %vm7166, %v7089, %v7095
    %v7202 = vsel %vm7166, %v7091, %v7097
    %v7203 = vsel %vm7166, %v7081, %v7087
    %v7204 = vsel %vm7166, %v7083, %v7089
    %v7205 = vsel %vm7166, %v7085, %v7091
    %v7206 = vsel %vm7166, %v7075, %v7081
    %v7207 = vsel %vm7166, %v7077, %v7083
    %v7208 = vsel %vm7166, %v7079, %v7085
    %v7209 = vsel %vm7166, %v7069, %v7075
    %v7210 = vsel %vm7166, %v7071, %v7077
    %v7211 = vsel %vm7166, %v7073, %v7079
    %v7212 = vsel %vm7166, %v7063, %v7069
    %v7213 = vsel %vm7166, %v7065, %v7071
    %v7214 = vsel %vm7166, %v7067, %v7073
    %v7215 = vsel %vm7166, %v7057, %v7063
    %v7216 = vsel %vm7166, %v7059, %v7065
    %v7217 = vsel %vm7166, %v7061, %v7067
    %v7218 = vsel %vm7166, %v7051, %v7057
    %v7219 = vsel %vm7166, %v7053, %v7059
    %v7220 = vsel %vm7166, %v7055, %v7061
    %v7221 = vsel %vm7166, %v7045, %v7051
    %v7222 = vsel %vm7166, %v7047, %v7053
    %v7223 = vsel %vm7166, %v7049, %v7055
    %v7224 = vsel %vm7166, %v7039, %v7045
    %v7225 = vsel %vm7166, %v7041, %v7047
    %v7226 = vsel %vm7166, %v7043, %v7049
    %v7227 = vsel %vm7166, %v7033, %v7039
    %v7228 = vsel %vm7166, %v7035, %v7041
    %v7229 = vsel %vm7166, %v7037, %v7043
    %v7230 = vsel %vm7166, %v7027, %v7033
    %v7231 = vsel %vm7166, %v7029, %v7035
    %v7232 = vsel %vm7166, %v7031, %v7037
    %v7233 = vsel %vm7166, %v7021, %v7027
    %v7234 = vsel %vm7166, %v7023, %v7029
    %v7235 = vsel %vm7166, %v7025, %v7031
    %v7236 = vsel %vm7166, %v7015, %v7021
    %v7237 = vsel %vm7166, %v7017, %v7023
    %v7238 = vsel %vm7166, %v7019, %v7025
    %v7239 = vsel %vm7166, %v7009, %v7015
    %v7240 = vsel %vm7166, %v7011, %v7017
    %v7241 = vsel %vm7166, %v7013, %v7019
    %v7242 = vsel %vm7166, %v7003, %v7009
    %v7243 = vsel %vm7166, %v7005, %v7011
    %v7244 = vsel %vm7166, %v7007, %v7013
    %v7245 = vsel %vm7166, %v6997, %v7003
    %v7246 = vsel %vm7166, %v6999, %v7005
    %v7247 = vsel %vm7166, %v7001, %v7007
    %v7248 = vsel %vm7166, %v6991, %v6997
    %v7249 = vsel %vm7166, %v6993, %v6999
    %v7250 = vsel %vm7166, %v6995, %v7001
    %v7251 = vsel %vm7166, %v6985, %v6991
    %v7252 = vsel %vm7166, %v6987, %v6993
    %v7253 = vsel %vm7166, %v6989, %v6995
    %v7254 = vsel %vm7166, %v6979, %v6985
    %v7255 = vsel %vm7166, %v6981, %v6987
    %v7256 = vsel %vm7166, %v6983, %v6989
    %v7257 = vsel %vm7166, %v6973, %v6979
    %v7258 = vsel %vm7166, %v6975, %v6981
    %v7259 = vsel %vm7166, %v6977, %v6983
    %v7260 = vsel %vm7166, %v6967, %v6973
    %v7261 = vsel %vm7166, %v6969, %v6975
    %v7262 = vsel %vm7166, %v6971, %v6977
    %v7263 = vsel %vm7166, %v6961, %v6967
    %v7264 = vsel %vm7166, %v6963, %v6969
    %v7265 = vsel %vm7166, %v6965, %v6971
    %v7266 = vsel %vm7166, %v6955, %v6961
    %v7267 = vsel %vm7166, %v6957, %v6963
    %v7268 = vsel %vm7166, %v6959, %v6965
    %v7269 = vsel %vm7166, %v6949, %v6955
    %v7270 = vsel %vm7166, %v6951, %v6957
    %v7271 = vsel %vm7166, %v6953, %v6959
    %v7272 = vsel %vm7166, %v6943, %v6949
    %v7273 = vsel %vm7166, %v6945, %v6951
    %v7274 = vsel %vm7166, %v6947, %v6953
    %v7275 = vsel %vm7166, %v6937, %v6943
    %v7276 = vsel %vm7166, %v6939, %v6945
    %v7277 = vsel %vm7166, %v6941, %v6947
    %v7278 = vsel %vm7166, %v6931, %v6937
    %v7279 = vsel %vm7166, %v6933, %v6939
    %v7280 = vsel %vm7166, %v6935, %v6941
    %v7281 = vsel %vm7166, %v7159, %v6931
    %v7282 = vsel %vm7166, %v7161, %v6933
    %v7283 = vsel %vm7166, %v7163, %v6935
    %v7284 = vsub.f32 %v61, %v7278
    %v7285 = vsub.f32 %v62, %v7275
    %v7286 = vsub.f32 %v63, %v7272
    %v7287 = vsub.f32 %v64, %v7269
    %v7288 = vsub.f32 %v65, %v7266
    %v7289 = vsub.f32 %v66, %v7263
    %v7290 = vsub.f32 %v67, %v7260
    %v7291 = vsub.f32 %v68, %v7257
    %v7292 = vsub.f32 %v69, %v7254
    %v7293 = vsub.f32 %v70, %v7251
    %v7294 = vsub.f32 %v71, %v7248
    %v7295 = vsub.f32 %v72, %v7245
    %v7296 = vsub.f32 %v73, %v7242
    %v7297 = vsub.f32 %v74, %v7239
    %v7298 = vsub.f32 %v75, %v7236
    %v7299 = vsub.f32 %v76, %v7233
    %v7300 = vsub.f32 %v77, %v7230
    %v7301 = vsub.f32 %v78, %v7227
    %v7302 = vsub.f32 %v79, %v7224
    %v7303 = vsub.f32 %v80, %v7221
    %v7304 = vsub.f32 %v81, %v7218
    %v7305 = vsub.f32 %v82, %v7215
    %v7306 = vsub.f32 %v83, %v7212
    %v7307 = vsub.f32 %v84, %v7209
    %v7308 = vsub.f32 %v85, %v7206
    %v7309 = vsub.f32 %v86, %v7203
    %v7310 = vsub.f32 %v87, %v7200
    %v7311 = vsub.f32 %v88, %v7197
    %v7312 = vsub.f32 %v89, %v7194
    %v7313 = vsub.f32 %v90, %v7191
    %v7314 = vsub.f32 %v91, %v7188
    %v7315 = vsub.f32 %v92, %v7185
    %v7316 = vsub.f32 %v93, %v7182
    %v7317 = vsub.f32 %v94, %v7179
    %v7318 = vsub.f32 %v95, %v7176
    %v7319 = vsub.f32 %v96, %v7173
    %v7320 = vsub.f32 %v97, %v7170
    %v7321 = vsub.f32 %v98, %v7167
    %v7322 = vsub.f32 %v99, %v7281
    %v7323 = vsub.f32 %v100, %v7279
    %v7324 = vsub.f32 %v101, %v7276
    %v7325 = vsub.f32 %v102, %v7273
    %v7326 = vsub.f32 %v103, %v7270
    %v7327 = vsub.f32 %v104, %v7267
    %v7328 = vsub.f32 %v105, %v7264
    %v7329 = vsub.f32 %v106, %v7261
    %v7330 = vsub.f32 %v107, %v7258
    %v7331 = vsub.f32 %v108, %v7255
    %v7332 = vsub.f32 %v109, %v7252
    %v7333 = vsub.f32 %v110, %v7249
    %v7334 = vsub.f32 %v111, %v7246
    %v7335 = vsub.f32 %v112, %v7243
    %v7336 = vsub.f32 %v113, %v7240
    %v7337 = vsub.f32 %v114, %v7237
    %v7338 = vsub.f32 %v115, %v7234
    %v7339 = vsub.f32 %v116, %v7231
    %v7340 = vsub.f32 %v117, %v7228
    %v7341 = vsub.f32 %v118, %v7225
    %v7342 = vsub.f32 %v119, %v7222
    %v7343 = vsub.f32 %v120, %v7219
    %v7344 = vsub.f32 %v121, %v7216
    %v7345 = vsub.f32 %v122, %v7213
    %v7346 = vsub.f32 %v123, %v7210
    %v7347 = vsub.f32 %v124, %v7207
    %v7348 = vsub.f32 %v125, %v7204
    %v7349 = vsub.f32 %v126, %v7201
    %v7350 = vsub.f32 %v127, %v7198
    %v7351 = vsub.f32 %v128, %v7195
    %v7352 = vsub.f32 %v129, %v7192
    %v7353 = vsub.f32 %v130, %v7189
    %v7354 = vsub.f32 %v131, %v7186
    %v7355 = vsub.f32 %v132, %v7183
    %v7356 = vsub.f32 %v133, %v7180
    %v7357 = vsub.f32 %v134, %v7177
    %v7358 = vsub.f32 %v135, %v7174
    %v7359 = vsub.f32 %v136, %v7171
    %v7360 = vsub.f32 %v137, %v7168
    %v7361 = vsub.f32 %v138, %v7282
    %v7362 = vsub.f32 %v139, %v7280
    %v7363 = vsub.f32 %v140, %v7277
    %v7364 = vsub.f32 %v141, %v7274
    %v7365 = vsub.f32 %v142, %v7271
    %v7366 = vsub.f32 %v143, %v7268
    %v7367 = vsub.f32 %v144, %v7265
    %v7368 = vsub.f32 %v145, %v7262
    %v7369 = vsub.f32 %v146, %v7259
    %v7370 = vsub.f32 %v147, %v7256
    %v7371 = vsub.f32 %v148, %v7253
    %v7372 = vsub.f32 %v149, %v7250
    %v7373 = vsub.f32 %v150, %v7247
    %v7374 = vsub.f32 %v151, %v7244
    %v7375 = vsub.f32 %v152, %v7241
    %v7376 = vsub.f32 %v153, %v7238
    %v7377 = vsub.f32 %v154, %v7235
    %v7378 = vsub.f32 %v155, %v7232
    %v7379 = vsub.f32 %v156, %v7229
    %v7380 = vsub.f32 %v157, %v7226
    %v7381 = vsub.f32 %v158, %v7223
    %v7382 = vsub.f32 %v159, %v7220
    %v7383 = vsub.f32 %v160, %v7217
    %v7384 = vsub.f32 %v161, %v7214
    %v7385 = vsub.f32 %v162, %v7211
    %v7386 = vsub.f32 %v163, %v7208
    %v7387 = vsub.f32 %v164, %v7205
    %v7388 = vsub.f32 %v165, %v7202
    %v7389 = vsub.f32 %v166, %v7199
    %v7390 = vsub.f32 %v167, %v7196
    %v7391 = vsub.f32 %v168, %v7193
    %v7392 = vsub.f32 %v169, %v7190
    %v7393 = vsub.f32 %v170, %v7187
    %v7394 = vsub.f32 %v171, %v7184
    %v7395 = vsub.f32 %v172, %v7181
    %v7396 = vsub.f32 %v173, %v7178
    %v7397 = vsub.f32 %v174, %v7175
    %v7398 = vsub.f32 %v175, %v7172
    %v7399 = vsub.f32 %v176, %v7169
    %v7400 = vsub.f32 %v177, %v7283
    %v7401 = vld [vmem:[#allocation7] ss:$4 sm:$0xff]
    %s7402 = scalar_lea.vmem [#allocation7], 32
    %v7403 = vld [vmem:[%s7402] ss:$4 sm:$0xff]
    %s7404 = scalar_lea.vmem [#allocation7], 64
    %v7405 = vld [vmem:[%s7404] ss:$4 sm:$0xff]
    %s7406 = scalar_lea.vmem [#allocation7], 96
    %v7407 = vld [vmem:[%s7406] ss:$4 sm:$0xff]
    %s7408 = scalar_lea.vmem [#allocation7], 128
    %v7409 = vld [vmem:[%s7408] ss:$4 sm:$0xff]
    %v7415 = vperm.slane %v7401, 0
    %v7416 = vperm.slane %v7401, 1
    %v7417 = vperm.slane %v7401, 2
    %v7418 = vperm.slane %v7401, 3
    %v7419 = vperm.slane %v7401, 4
    %v7420 = vperm.slane %v7401, 5
    %v7421 = vperm.slane %v7401, 6
    %v7422 = vperm.slane %v7401, 7
    %v7423 = vperm.slane %v7403, 0
    %v7424 = vperm.slane %v7403, 1
    %v7425 = vperm.slane %v7403, 2
    %v7426 = vperm.slane %v7403, 3
    %v7427 = vperm.slane %v7403, 4
    %v7428 = vperm.slane %v7403, 5
    %v7429 = vperm.slane %v7403, 6
    %v7430 = vperm.slane %v7403, 7
    %v7431 = vperm.slane %v7405, 0
    %v7432 = vperm.slane %v7405, 1
    %v7433 = vperm.slane %v7405, 2
    %v7434 = vperm.slane %v7405, 3
    %v7435 = vperm.slane %v7405, 4
    %v7436 = vperm.slane %v7405, 5
    %v7437 = vperm.slane %v7405, 6
    %v7438 = vperm.slane %v7405, 7
    %v7439 = vperm.slane %v7407, 0
    %v7440 = vperm.slane %v7407, 1
    %v7441 = vperm.slane %v7407, 2
    %v7442 = vperm.slane %v7407, 3
    %v7443 = vperm.slane %v7407, 4
    %v7444 = vperm.slane %v7407, 5
    %v7445 = vperm.slane %v7407, 6
    %v7446 = vperm.slane %v7407, 7
    %v7447 = vperm.slane %v7409, 0
    %v7448 = vperm.slane %v7409, 1
    %v7449 = vperm.slane %v7409, 2
    %v7450 = vperm.slane %v7409, 3
    %v7451 = vperm.slane %v7409, 4
    %v7452 = vperm.slane %v7409, 5
    %v7453 = vperm.slane %v7409, 6
    %v7493 = vmul.f32 %v7415, %v7284
    %v7494 = vmul.f32 %v7416, %v7285
    %v7495 = vmul.f32 %v7417, %v7286
    %v7496 = vmul.f32 %v7418, %v7287
    %v7497 = vmul.f32 %v7419, %v7288
    %v7498 = vmul.f32 %v7420, %v7289
    %v7499 = vmul.f32 %v7421, %v7290
    %v7500 = vmul.f32 %v7422, %v7291
    %v7501 = vmul.f32 %v7423, %v7292
    %v7502 = vmul.f32 %v7424, %v7293
    %v7503 = vmul.f32 %v7425, %v7294
    %v7504 = vmul.f32 %v7426, %v7295
    %v7505 = vmul.f32 %v7427, %v7296
    %v7506 = vmul.f32 %v7428, %v7297
    %v7507 = vmul.f32 %v7429, %v7298
    %v7508 = vmul.f32 %v7430, %v7299
    %v7509 = vmul.f32 %v7431, %v7300
    %v7510 = vmul.f32 %v7432, %v7301
    %v7511 = vmul.f32 %v7433, %v7302
    %v7512 = vmul.f32 %v7434, %v7303
    %v7513 = vmul.f32 %v7435, %v7304
    %v7514 = vmul.f32 %v7436, %v7305
    %v7515 = vmul.f32 %v7437, %v7306
    %v7516 = vmul.f32 %v7438, %v7307
    %v7517 = vmul.f32 %v7439, %v7308
    %v7518 = vmul.f32 %v7440, %v7309
    %v7519 = vmul.f32 %v7441, %v7310
    %v7520 = vmul.f32 %v7442, %v7311
    %v7521 = vmul.f32 %v7443, %v7312
    %v7522 = vmul.f32 %v7444, %v7313
    %v7523 = vmul.f32 %v7445, %v7314
    %v7524 = vmul.f32 %v7446, %v7315
    %v7525 = vmul.f32 %v7447, %v7316
    %v7526 = vmul.f32 %v7448, %v7317
    %v7527 = vmul.f32 %v7449, %v7318
    %v7528 = vmul.f32 %v7450, %v7319
    %v7529 = vmul.f32 %v7451, %v7320
    %v7530 = vmul.f32 %v7452, %v7321
    %v7531 = vmul.f32 %v7453, %v7322
    %v7532 = vmul.f32 %v7415, %v7323
    %v7533 = vmul.f32 %v7416, %v7324
    %v7534 = vmul.f32 %v7417, %v7325
    %v7535 = vmul.f32 %v7418, %v7326
    %v7536 = vmul.f32 %v7419, %v7327
    %v7537 = vmul.f32 %v7420, %v7328
    %v7538 = vmul.f32 %v7421, %v7329
    %v7539 = vmul.f32 %v7422, %v7330
    %v7540 = vmul.f32 %v7423, %v7331
    %v7541 = vmul.f32 %v7424, %v7332
    %v7542 = vmul.f32 %v7425, %v7333
    %v7543 = vmul.f32 %v7426, %v7334
    %v7544 = vmul.f32 %v7427, %v7335
    %v7545 = vmul.f32 %v7428, %v7336
    %v7546 = vmul.f32 %v7429, %v7337
    %v7547 = vmul.f32 %v7430, %v7338
    %v7548 = vmul.f32 %v7431, %v7339
    %v7549 = vmul.f32 %v7432, %v7340
    %v7550 = vmul.f32 %v7433, %v7341
    %v7551 = vmul.f32 %v7434, %v7342
    %v7552 = vmul.f32 %v7435, %v7343
    %v7553 = vmul.f32 %v7436, %v7344
    %v7554 = vmul.f32 %v7437, %v7345
    %v7555 = vmul.f32 %v7438, %v7346
    %v7556 = vmul.f32 %v7439, %v7347
    %v7557 = vmul.f32 %v7440, %v7348
    %v7558 = vmul.f32 %v7441, %v7349
    %v7559 = vmul.f32 %v7442, %v7350
    %v7560 = vmul.f32 %v7443, %v7351
    %v7561 = vmul.f32 %v7444, %v7352
    %v7562 = vmul.f32 %v7445, %v7353
    %v7563 = vmul.f32 %v7446, %v7354
    %v7564 = vmul.f32 %v7447, %v7355
    %v7565 = vmul.f32 %v7448, %v7356
    %v7566 = vmul.f32 %v7449, %v7357
    %v7567 = vmul.f32 %v7450, %v7358
    %v7568 = vmul.f32 %v7451, %v7359
    %v7569 = vmul.f32 %v7452, %v7360
    %v7570 = vmul.f32 %v7453, %v7361
    %v7571 = vmul.f32 %v7415, %v7362
    %v7572 = vmul.f32 %v7416, %v7363
    %v7573 = vmul.f32 %v7417, %v7364
    %v7574 = vmul.f32 %v7418, %v7365
    %v7575 = vmul.f32 %v7419, %v7366
    %v7576 = vmul.f32 %v7420, %v7367
    %v7577 = vmul.f32 %v7421, %v7368
    %v7578 = vmul.f32 %v7422, %v7369
    %v7579 = vmul.f32 %v7423, %v7370
    %v7580 = vmul.f32 %v7424, %v7371
    %v7581 = vmul.f32 %v7425, %v7372
    %v7582 = vmul.f32 %v7426, %v7373
    %v7583 = vmul.f32 %v7427, %v7374
    %v7584 = vmul.f32 %v7428, %v7375
    %v7585 = vmul.f32 %v7429, %v7376
    %v7586 = vmul.f32 %v7430, %v7377
    %v7587 = vmul.f32 %v7431, %v7378
    %v7588 = vmul.f32 %v7432, %v7379
    %v7589 = vmul.f32 %v7433, %v7380
    %v7590 = vmul.f32 %v7434, %v7381
    %v7591 = vmul.f32 %v7435, %v7382
    %v7592 = vmul.f32 %v7436, %v7383
    %v7593 = vmul.f32 %v7437, %v7384
    %v7594 = vmul.f32 %v7438, %v7385
    %v7595 = vmul.f32 %v7439, %v7386
    %v7596 = vmul.f32 %v7440, %v7387
    %v7597 = vmul.f32 %v7441, %v7388
    %v7598 = vmul.f32 %v7442, %v7389
    %v7599 = vmul.f32 %v7443, %v7390
    %v7600 = vmul.f32 %v7444, %v7391
    %v7601 = vmul.f32 %v7445, %v7392
    %v7602 = vmul.f32 %v7446, %v7393
    %v7603 = vmul.f32 %v7447, %v7394
    %v7604 = vmul.f32 %v7448, %v7395
    %v7605 = vmul.f32 %v7449, %v7396
    %v7606 = vmul.f32 %v7450, %v7397
    %v7607 = vmul.f32 %v7451, %v7398
    %v7608 = vmul.f32 %v7452, %v7399
    %v7609 = vmul.f32 %v7453, %v7400
    %v7610 = vmax.f32 %v7493, 0.0
    %v7611 = vmax.f32 %v7494, 0.0
    %v7612 = vmax.f32 %v7495, 0.0
    %v7613 = vmax.f32 %v7496, 0.0
    %v7614 = vmax.f32 %v7497, 0.0
    %v7615 = vmax.f32 %v7498, 0.0
    %v7616 = vmax.f32 %v7499, 0.0
    %v7617 = vmax.f32 %v7500, 0.0
    %v7618 = vmax.f32 %v7501, 0.0
    %v7619 = vmax.f32 %v7502, 0.0
    %v7620 = vmax.f32 %v7503, 0.0
    %v7621 = vmax.f32 %v7504, 0.0
    %v7622 = vmax.f32 %v7505, 0.0
    %v7623 = vmax.f32 %v7506, 0.0
    %v7624 = vmax.f32 %v7507, 0.0
    %v7625 = vmax.f32 %v7508, 0.0
    %v7626 = vmax.f32 %v7509, 0.0
    %v7627 = vmax.f32 %v7510, 0.0
    %v7628 = vmax.f32 %v7511, 0.0
    %v7629 = vmax.f32 %v7512, 0.0
    %v7630 = vmax.f32 %v7513, 0.0
    %v7631 = vmax.f32 %v7514, 0.0
    %v7632 = vmax.f32 %v7515, 0.0
    %v7633 = vmax.f32 %v7516, 0.0
    %v7634 = vmax.f32 %v7517, 0.0
    %v7635 = vmax.f32 %v7518, 0.0
    %v7636 = vmax.f32 %v7519, 0.0
    %v7637 = vmax.f32 %v7520, 0.0
    %v7638 = vmax.f32 %v7521, 0.0
    %v7639 = vmax.f32 %v7522, 0.0
    %v7640 = vmax.f32 %v7523, 0.0
    %v7641 = vmax.f32 %v7524, 0.0
    %v7642 = vmax.f32 %v7525, 0.0
    %v7643 = vmax.f32 %v7526, 0.0
    %v7644 = vmax.f32 %v7527, 0.0
    %v7645 = vmax.f32 %v7528, 0.0
    %v7646 = vmax.f32 %v7529, 0.0
    %v7647 = vmax.f32 %v7530, 0.0
    %v7648 = vmax.f32 %v7531, 0.0
    %v7649 = vmax.f32 %v7532, 0.0
    %v7650 = vmax.f32 %v7533, 0.0
    %v7651 = vmax.f32 %v7534, 0.0
    %v7652 = vmax.f32 %v7535, 0.0
    %v7653 = vmax.f32 %v7536, 0.0
    %v7654 = vmax.f32 %v7537, 0.0
    %v7655 = vmax.f32 %v7538, 0.0
    %v7656 = vmax.f32 %v7539, 0.0
    %v7657 = vmax.f32 %v7540, 0.0
    %v7658 = vmax.f32 %v7541, 0.0
    %v7659 = vmax.f32 %v7542, 0.0
    %v7660 = vmax.f32 %v7543, 0.0
    %v7661 = vmax.f32 %v7544, 0.0
    %v7662 = vmax.f32 %v7545, 0.0
    %v7663 = vmax.f32 %v7546, 0.0
    %v7664 = vmax.f32 %v7547, 0.0
    %v7665 = vmax.f32 %v7548, 0.0
    %v7666 = vmax.f32 %v7549, 0.0
    %v7667 = vmax.f32 %v7550, 0.0
    %v7668 = vmax.f32 %v7551, 0.0
    %v7669 = vmax.f32 %v7552, 0.0
    %v7670 = vmax.f32 %v7553, 0.0
    %v7671 = vmax.f32 %v7554, 0.0
    %v7672 = vmax.f32 %v7555, 0.0
    %v7673 = vmax.f32 %v7556, 0.0
    %v7674 = vmax.f32 %v7557, 0.0
    %v7675 = vmax.f32 %v7558, 0.0
    %v7676 = vmax.f32 %v7559, 0.0
    %v7677 = vmax.f32 %v7560, 0.0
    %v7678 = vmax.f32 %v7561, 0.0
    %v7679 = vmax.f32 %v7562, 0.0
    %v7680 = vmax.f32 %v7563, 0.0
    %v7681 = vmax.f32 %v7564, 0.0
    %v7682 = vmax.f32 %v7565, 0.0
    %v7683 = vmax.f32 %v7566, 0.0
    %v7684 = vmax.f32 %v7567, 0.0
    %v7685 = vmax.f32 %v7568, 0.0
    %v7686 = vmax.f32 %v7569, 0.0
    %v7687 = vmax.f32 %v7570, 0.0
    %v7688 = vmax.f32 %v7571, 0.0
    %v7689 = vmax.f32 %v7572, 0.0
    %v7690 = vmax.f32 %v7573, 0.0
    %v7691 = vmax.f32 %v7574, 0.0
    %v7692 = vmax.f32 %v7575, 0.0
    %v7693 = vmax.f32 %v7576, 0.0
    %v7694 = vmax.f32 %v7577, 0.0
    %v7695 = vmax.f32 %v7578, 0.0
    %v7696 = vmax.f32 %v7579, 0.0
    %v7697 = vmax.f32 %v7580, 0.0
    %v7698 = vmax.f32 %v7581, 0.0
    %v7699 = vmax.f32 %v7582, 0.0
    %v7700 = vmax.f32 %v7583, 0.0
    %v7701 = vmax.f32 %v7584, 0.0
    %v7702 = vmax.f32 %v7585, 0.0
    %v7703 = vmax.f32 %v7586, 0.0
    %v7704 = vmax.f32 %v7587, 0.0
    %v7705 = vmax.f32 %v7588, 0.0
    %v7706 = vmax.f32 %v7589, 0.0
    %v7707 = vmax.f32 %v7590, 0.0
    %v7708 = vmax.f32 %v7591, 0.0
    %v7709 = vmax.f32 %v7592, 0.0
    %v7710 = vmax.f32 %v7593, 0.0
    %v7711 = vmax.f32 %v7594, 0.0
    %v7712 = vmax.f32 %v7595, 0.0
    %v7713 = vmax.f32 %v7596, 0.0
    %v7714 = vmax.f32 %v7597, 0.0
    %v7715 = vmax.f32 %v7598, 0.0
    %v7716 = vmax.f32 %v7599, 0.0
    %v7717 = vmax.f32 %v7600, 0.0
    %v7718 = vmax.f32 %v7601, 0.0
    %v7719 = vmax.f32 %v7602, 0.0
    %v7720 = vmax.f32 %v7603, 0.0
    %v7721 = vmax.f32 %v7604, 0.0
    %v7722 = vmax.f32 %v7605, 0.0
    %v7723 = vmax.f32 %v7606, 0.0
    %v7724 = vmax.f32 %v7607, 0.0
    %v7725 = vmax.f32 %v7608, 0.0
    %v7726 = vmax.f32 %v7609, 0.0
    %v7727 = vmul.f32 %v7493, %v7284
    %v7728 = vmul.f32 %v7494, %v7285
    %v7729 = vmul.f32 %v7495, %v7286
    %v7730 = vmul.f32 %v7496, %v7287
    %v7731 = vmul.f32 %v7497, %v7288
    %v7732 = vmul.f32 %v7498, %v7289
    %v7733 = vmul.f32 %v7499, %v7290
    %v7734 = vmul.f32 %v7500, %v7291
    %v7735 = vmul.f32 %v7501, %v7292
    %v7736 = vmul.f32 %v7502, %v7293
    %v7737 = vmul.f32 %v7503, %v7294
    %v7738 = vmul.f32 %v7504, %v7295
    %v7739 = vmul.f32 %v7505, %v7296
    %v7740 = vmul.f32 %v7506, %v7297
    %v7741 = vmul.f32 %v7507, %v7298
    %v7742 = vmul.f32 %v7508, %v7299
    %v7743 = vmul.f32 %v7509, %v7300
    %v7744 = vmul.f32 %v7510, %v7301
    %v7745 = vmul.f32 %v7511, %v7302
    %v7746 = vmul.f32 %v7512, %v7303
    %v7747 = vmul.f32 %v7513, %v7304
    %v7748 = vmul.f32 %v7514, %v7305
    %v7749 = vmul.f32 %v7515, %v7306
    %v7750 = vmul.f32 %v7516, %v7307
    %v7751 = vmul.f32 %v7517, %v7308
    %v7752 = vmul.f32 %v7518, %v7309
    %v7753 = vmul.f32 %v7519, %v7310
    %v7754 = vmul.f32 %v7520, %v7311
    %v7755 = vmul.f32 %v7521, %v7312
    %v7756 = vmul.f32 %v7522, %v7313
    %v7757 = vmul.f32 %v7523, %v7314
    %v7758 = vmul.f32 %v7524, %v7315
    %v7759 = vmul.f32 %v7525, %v7316
    %v7760 = vmul.f32 %v7526, %v7317
    %v7761 = vmul.f32 %v7527, %v7318
    %v7762 = vmul.f32 %v7528, %v7319
    %v7763 = vmul.f32 %v7529, %v7320
    %v7764 = vmul.f32 %v7530, %v7321
    %v7765 = vmul.f32 %v7531, %v7322
    %v7766 = vmul.f32 %v7532, %v7323
    %v7767 = vmul.f32 %v7533, %v7324
    %v7768 = vmul.f32 %v7534, %v7325
    %v7769 = vmul.f32 %v7535, %v7326
    %v7770 = vmul.f32 %v7536, %v7327
    %v7771 = vmul.f32 %v7537, %v7328
    %v7772 = vmul.f32 %v7538, %v7329
    %v7773 = vmul.f32 %v7539, %v7330
    %v7774 = vmul.f32 %v7540, %v7331
    %v7775 = vmul.f32 %v7541, %v7332
    %v7776 = vmul.f32 %v7542, %v7333
    %v7777 = vmul.f32 %v7543, %v7334
    %v7778 = vmul.f32 %v7544, %v7335
    %v7779 = vmul.f32 %v7545, %v7336
    %v7780 = vmul.f32 %v7546, %v7337
    %v7781 = vmul.f32 %v7547, %v7338
    %v7782 = vmul.f32 %v7548, %v7339
    %v7783 = vmul.f32 %v7549, %v7340
    %v7784 = vmul.f32 %v7550, %v7341
    %v7785 = vmul.f32 %v7551, %v7342
    %v7786 = vmul.f32 %v7552, %v7343
    %v7787 = vmul.f32 %v7553, %v7344
    %v7788 = vmul.f32 %v7554, %v7345
    %v7789 = vmul.f32 %v7555, %v7346
    %v7790 = vmul.f32 %v7556, %v7347
    %v7791 = vmul.f32 %v7557, %v7348
    %v7792 = vmul.f32 %v7558, %v7349
    %v7793 = vmul.f32 %v7559, %v7350
    %v7794 = vmul.f32 %v7560, %v7351
    %v7795 = vmul.f32 %v7561, %v7352
    %v7796 = vmul.f32 %v7562, %v7353
    %v7797 = vmul.f32 %v7563, %v7354
    %v7798 = vmul.f32 %v7564, %v7355
    %v7799 = vmul.f32 %v7565, %v7356
    %v7800 = vmul.f32 %v7566, %v7357
    %v7801 = vmul.f32 %v7567, %v7358
    %v7802 = vmul.f32 %v7568, %v7359
    %v7803 = vmul.f32 %v7569, %v7360
    %v7804 = vmul.f32 %v7570, %v7361
    %v7805 = vmul.f32 %v7571, %v7362
    %v7806 = vmul.f32 %v7572, %v7363
    %v7807 = vmul.f32 %v7573, %v7364
    %v7808 = vmul.f32 %v7574, %v7365
    %v7809 = vmul.f32 %v7575, %v7366
    %v7810 = vmul.f32 %v7576, %v7367
    %v7811 = vmul.f32 %v7577, %v7368
    %v7812 = vmul.f32 %v7578, %v7369
    %v7813 = vmul.f32 %v7579, %v7370
    %v7814 = vmul.f32 %v7580, %v7371
    %v7815 = vmul.f32 %v7581, %v7372
    %v7816 = vmul.f32 %v7582, %v7373
    %v7817 = vmul.f32 %v7583, %v7374
    %v7818 = vmul.f32 %v7584, %v7375
    %v7819 = vmul.f32 %v7585, %v7376
    %v7820 = vmul.f32 %v7586, %v7377
    %v7821 = vmul.f32 %v7587, %v7378
    %v7822 = vmul.f32 %v7588, %v7379
    %v7823 = vmul.f32 %v7589, %v7380
    %v7824 = vmul.f32 %v7590, %v7381
    %v7825 = vmul.f32 %v7591, %v7382
    %v7826 = vmul.f32 %v7592, %v7383
    %v7827 = vmul.f32 %v7593, %v7384
    %v7828 = vmul.f32 %v7594, %v7385
    %v7829 = vmul.f32 %v7595, %v7386
    %v7830 = vmul.f32 %v7596, %v7387
    %v7831 = vmul.f32 %v7597, %v7388
    %v7832 = vmul.f32 %v7598, %v7389
    %v7833 = vmul.f32 %v7599, %v7390
    %v7834 = vmul.f32 %v7600, %v7391
    %v7835 = vmul.f32 %v7601, %v7392
    %v7836 = vmul.f32 %v7602, %v7393
    %v7837 = vmul.f32 %v7603, %v7394
    %v7838 = vmul.f32 %v7604, %v7395
    %v7839 = vmul.f32 %v7605, %v7396
    %v7840 = vmul.f32 %v7606, %v7397
    %v7841 = vmul.f32 %v7607, %v7398
    %v7842 = vmul.f32 %v7608, %v7399
    %v7843 = vmul.f32 %v7609, %v7400
    %v7844 = vmul.f32 %v7727, 0.0001
    %v7845 = vmul.f32 %v7728, 0.0001
    %v7846 = vmul.f32 %v7729, 0.0001
    %v7847 = vmul.f32 %v7730, 0.0001
    %v7848 = vmul.f32 %v7731, 0.0001
    %v7849 = vmul.f32 %v7732, 0.0001
    %v7850 = vmul.f32 %v7733, 0.0001
    %v7851 = vmul.f32 %v7734, 0.0001
    %v7852 = vmul.f32 %v7735, 0.0001
    %v7853 = vmul.f32 %v7736, 0.0001
    %v7854 = vmul.f32 %v7737, 0.0001
    %v7855 = vmul.f32 %v7738, 0.0001
    %v7856 = vmul.f32 %v7739, 0.0001
    %v7857 = vmul.f32 %v7740, 0.0001
    %v7858 = vmul.f32 %v7741, 0.0001
    %v7859 = vmul.f32 %v7742, 0.0001
    %v7860 = vmul.f32 %v7743, 0.0001
    %v7861 = vmul.f32 %v7744, 0.0001
    %v7862 = vmul.f32 %v7745, 0.0001
    %v7863 = vmul.f32 %v7746, 0.0001
    %v7864 = vmul.f32 %v7747, 0.0001
    %v7865 = vmul.f32 %v7748, 0.0001
    %v7866 = vmul.f32 %v7749, 0.0001
    %v7867 = vmul.f32 %v7750, 0.0001
    %v7868 = vmul.f32 %v7751, 0.0001
    %v7869 = vmul.f32 %v7752, 0.0001
    %v7870 = vmul.f32 %v7753, 0.0001
    %v7871 = vmul.f32 %v7754, 0.0001
    %v7872 = vmul.f32 %v7755, 0.0001
    %v7873 = vmul.f32 %v7756, 0.0001
    %v7874 = vmul.f32 %v7757, 0.0001
    %v7875 = vmul.f32 %v7758, 0.0001
    %v7876 = vmul.f32 %v7759, 0.0001
    %v7877 = vmul.f32 %v7760, 0.0001
    %v7878 = vmul.f32 %v7761, 0.0001
    %v7879 = vmul.f32 %v7762, 0.0001
    %v7880 = vmul.f32 %v7763, 0.0001
    %v7881 = vmul.f32 %v7764, 0.0001
    %v7882 = vmul.f32 %v7765, 0.0001
    %v7883 = vmul.f32 %v7766, 0.0001
    %v7884 = vmul.f32 %v7767, 0.0001
    %v7885 = vmul.f32 %v7768, 0.0001
    %v7886 = vmul.f32 %v7769, 0.0001
    %v7887 = vmul.f32 %v7770, 0.0001
    %v7888 = vmul.f32 %v7771, 0.0001
    %v7889 = vmul.f32 %v7772, 0.0001
    %v7890 = vmul.f32 %v7773, 0.0001
    %v7891 = vmul.f32 %v7774, 0.0001
    %v7892 = vmul.f32 %v7775, 0.0001
    %v7893 = vmul.f32 %v7776, 0.0001
    %v7894 = vmul.f32 %v7777, 0.0001
    %v7895 = vmul.f32 %v7778, 0.0001
    %v7896 = vmul.f32 %v7779, 0.0001
    %v7897 = vmul.f32 %v7780, 0.0001
    %v7898 = vmul.f32 %v7781, 0.0001
    %v7899 = vmul.f32 %v7782, 0.0001
    %v7900 = vmul.f32 %v7783, 0.0001
    %v7901 = vmul.f32 %v7784, 0.0001
    %v7902 = vmul.f32 %v7785, 0.0001
    %v7903 = vmul.f32 %v7786, 0.0001
    %v7904 = vmul.f32 %v7787, 0.0001
    %v7905 = vmul.f32 %v7788, 0.0001
    %v7906 = vmul.f32 %v7789, 0.0001
    %v7907 = vmul.f32 %v7790, 0.0001
    %v7908 = vmul.f32 %v7791, 0.0001
    %v7909 = vmul.f32 %v7792, 0.0001
    %v7910 = vmul.f32 %v7793, 0.0001
    %v7911 = vmul.f32 %v7794, 0.0001
    %v7912 = vmul.f32 %v7795, 0.0001
    %v7913 = vmul.f32 %v7796, 0.0001
    %v7914 = vmul.f32 %v7797, 0.0001
    %v7915 = vmul.f32 %v7798, 0.0001
    %v7916 = vmul.f32 %v7799, 0.0001
    %v7917 = vmul.f32 %v7800, 0.0001
    %v7918 = vmul.f32 %v7801, 0.0001
    %v7919 = vmul.f32 %v7802, 0.0001
    %v7920 = vmul.f32 %v7803, 0.0001
    %v7921 = vmul.f32 %v7804, 0.0001
    %v7922 = vmul.f32 %v7805, 0.0001
    %v7923 = vmul.f32 %v7806, 0.0001
    %v7924 = vmul.f32 %v7807, 0.0001
    %v7925 = vmul.f32 %v7808, 0.0001
    %v7926 = vmul.f32 %v7809, 0.0001
    %v7927 = vmul.f32 %v7810, 0.0001
    %v7928 = vmul.f32 %v7811, 0.0001
    %v7929 = vmul.f32 %v7812, 0.0001
    %v7930 = vmul.f32 %v7813, 0.0001
    %v7931 = vmul.f32 %v7814, 0.0001
    %v7932 = vmul.f32 %v7815, 0.0001
    %v7933 = vmul.f32 %v7816, 0.0001
    %v7934 = vmul.f32 %v7817, 0.0001
    %v7935 = vmul.f32 %v7818, 0.0001
    %v7936 = vmul.f32 %v7819, 0.0001
    %v7937 = vmul.f32 %v7820, 0.0001
    %v7938 = vmul.f32 %v7821, 0.0001
    %v7939 = vmul.f32 %v7822, 0.0001
    %v7940 = vmul.f32 %v7823, 0.0001
    %v7941 = vmul.f32 %v7824, 0.0001
    %v7942 = vmul.f32 %v7825, 0.0001
    %v7943 = vmul.f32 %v7826, 0.0001
    %v7944 = vmul.f32 %v7827, 0.0001
    %v7945 = vmul.f32 %v7828, 0.0001
    %v7946 = vmul.f32 %v7829, 0.0001
    %v7947 = vmul.f32 %v7830, 0.0001
    %v7948 = vmul.f32 %v7831, 0.0001
    %v7949 = vmul.f32 %v7832, 0.0001
    %v7950 = vmul.f32 %v7833, 0.0001
    %v7951 = vmul.f32 %v7834, 0.0001
    %v7952 = vmul.f32 %v7835, 0.0001
    %v7953 = vmul.f32 %v7836, 0.0001
    %v7954 = vmul.f32 %v7837, 0.0001
    %v7955 = vmul.f32 %v7838, 0.0001
    %v7956 = vmul.f32 %v7839, 0.0001
    %v7957 = vmul.f32 %v7840, 0.0001
    %v7958 = vmul.f32 %v7841, 0.0001
    %v7959 = vmul.f32 %v7842, 0.0001
    %v7960 = vmul.f32 %v7843, 0.0001
    %v7961 = vmul.f32 %v7610, %v7610
    %v7962 = vmul.f32 %v7611, %v7611
    %v7963 = vmul.f32 %v7612, %v7612
    %v7964 = vmul.f32 %v7613, %v7613
    %v7965 = vmul.f32 %v7614, %v7614
    %v7966 = vmul.f32 %v7615, %v7615
    %v7967 = vmul.f32 %v7616, %v7616
    %v7968 = vmul.f32 %v7617, %v7617
    %v7969 = vmul.f32 %v7618, %v7618
    %v7970 = vmul.f32 %v7619, %v7619
    %v7971 = vmul.f32 %v7620, %v7620
    %v7972 = vmul.f32 %v7621, %v7621
    %v7973 = vmul.f32 %v7622, %v7622
    %v7974 = vmul.f32 %v7623, %v7623
    %v7975 = vmul.f32 %v7624, %v7624
    %v7976 = vmul.f32 %v7625, %v7625
    %v7977 = vmul.f32 %v7626, %v7626
    %v7978 = vmul.f32 %v7627, %v7627
    %v7979 = vmul.f32 %v7628, %v7628
    %v7980 = vmul.f32 %v7629, %v7629
    %v7981 = vmul.f32 %v7630, %v7630
    %v7982 = vmul.f32 %v7631, %v7631
    %v7983 = vmul.f32 %v7632, %v7632
    %v7984 = vmul.f32 %v7633, %v7633
    %v7985 = vmul.f32 %v7634, %v7634
    %v7986 = vmul.f32 %v7635, %v7635
    %v7987 = vmul.f32 %v7636, %v7636
    %v7988 = vmul.f32 %v7637, %v7637
    %v7989 = vmul.f32 %v7638, %v7638
    %v7990 = vmul.f32 %v7639, %v7639
    %v7991 = vmul.f32 %v7640, %v7640
    %v7992 = vmul.f32 %v7641, %v7641
    %v7993 = vmul.f32 %v7642, %v7642
    %v7994 = vmul.f32 %v7643, %v7643
    %v7995 = vmul.f32 %v7644, %v7644
    %v7996 = vmul.f32 %v7645, %v7645
    %v7997 = vmul.f32 %v7646, %v7646
    %v7998 = vmul.f32 %v7647, %v7647
    %v7999 = vmul.f32 %v7648, %v7648
    %v8000 = vmul.f32 %v7649, %v7649
    %v8001 = vmul.f32 %v7650, %v7650
    %v8002 = vmul.f32 %v7651, %v7651
    %v8003 = vmul.f32 %v7652, %v7652
    %v8004 = vmul.f32 %v7653, %v7653
    %v8005 = vmul.f32 %v7654, %v7654
    %v8006 = vmul.f32 %v7655, %v7655
    %v8007 = vmul.f32 %v7656, %v7656
    %v8008 = vmul.f32 %v7657, %v7657
    %v8009 = vmul.f32 %v7658, %v7658
    %v8010 = vmul.f32 %v7659, %v7659
    %v8011 = vmul.f32 %v7660, %v7660
    %v8012 = vmul.f32 %v7661, %v7661
    %v8013 = vmul.f32 %v7662, %v7662
    %v8014 = vmul.f32 %v7663, %v7663
    %v8015 = vmul.f32 %v7664, %v7664
    %v8016 = vmul.f32 %v7665, %v7665
    %v8017 = vmul.f32 %v7666, %v7666
    %v8018 = vmul.f32 %v7667, %v7667
    %v8019 = vmul.f32 %v7668, %v7668
    %v8020 = vmul.f32 %v7669, %v7669
    %v8021 = vmul.f32 %v7670, %v7670
    %v8022 = vmul.f32 %v7671, %v7671
    %v8023 = vmul.f32 %v7672, %v7672
    %v8024 = vmul.f32 %v7673, %v7673
    %v8025 = vmul.f32 %v7674, %v7674
    %v8026 = vmul.f32 %v7675, %v7675
    %v8027 = vmul.f32 %v7676, %v7676
    %v8028 = vmul.f32 %v7677, %v7677
    %v8029 = vmul.f32 %v7678, %v7678
    %v8030 = vmul.f32 %v7679, %v7679
    %v8031 = vmul.f32 %v7680, %v7680
    %v8032 = vmul.f32 %v7681, %v7681
    %v8033 = vmul.f32 %v7682, %v7682
    %v8034 = vmul.f32 %v7683, %v7683
    %v8035 = vmul.f32 %v7684, %v7684
    %v8036 = vmul.f32 %v7685, %v7685
    %v8037 = vmul.f32 %v7686, %v7686
    %v8038 = vmul.f32 %v7687, %v7687
    %v8039 = vmul.f32 %v7688, %v7688
    %v8040 = vmul.f32 %v7689, %v7689
    %v8041 = vmul.f32 %v7690, %v7690
    %v8042 = vmul.f32 %v7691, %v7691
    %v8043 = vmul.f32 %v7692, %v7692
    %v8044 = vmul.f32 %v7693, %v7693
    %v8045 = vmul.f32 %v7694, %v7694
    %v8046 = vmul.f32 %v7695, %v7695
    %v8047 = vmul.f32 %v7696, %v7696
    %v8048 = vmul.f32 %v7697, %v7697
    %v8049 = vmul.f32 %v7698, %v7698
    %v8050 = vmul.f32 %v7699, %v7699
    %v8051 = vmul.f32 %v7700, %v7700
    %v8052 = vmul.f32 %v7701, %v7701
    %v8053 = vmul.f32 %v7702, %v7702
    %v8054 = vmul.f32 %v7703, %v7703
    %v8055 = vmul.f32 %v7704, %v7704
    %v8056 = vmul.f32 %v7705, %v7705
    %v8057 = vmul.f32 %v7706, %v7706
    %v8058 = vmul.f32 %v7707, %v7707
    %v8059 = vmul.f32 %v7708, %v7708
    %v8060 = vmul.f32 %v7709, %v7709
    %v8061 = vmul.f32 %v7710, %v7710
    %v8062 = vmul.f32 %v7711, %v7711
    %v8063 = vmul.f32 %v7712, %v7712
    %v8064 = vmul.f32 %v7713, %v7713
    %v8065 = vmul.f32 %v7714, %v7714
    %v8066 = vmul.f32 %v7715, %v7715
    %v8067 = vmul.f32 %v7716, %v7716
    %v8068 = vmul.f32 %v7717, %v7717
    %v8069 = vmul.f32 %v7718, %v7718
    %v8070 = vmul.f32 %v7719, %v7719
    %v8071 = vmul.f32 %v7720, %v7720
    %v8072 = vmul.f32 %v7721, %v7721
    %v8073 = vmul.f32 %v7722, %v7722
    %v8074 = vmul.f32 %v7723, %v7723
    %v8075 = vmul.f32 %v7724, %v7724
    %v8076 = vmul.f32 %v7725, %v7725
    %v8077 = vmul.f32 %v7726, %v7726
    %v8078 = vmul.f32 %v7961, 10.0
    %v8079 = vmul.f32 %v7962, 10.0
    %v8080 = vmul.f32 %v7963, 10.0
    %v8081 = vmul.f32 %v7964, 10.0
    %v8082 = vmul.f32 %v7965, 10.0
    %v8083 = vmul.f32 %v7966, 10.0
    %v8084 = vmul.f32 %v7967, 10.0
    %v8085 = vmul.f32 %v7968, 10.0
    %v8086 = vmul.f32 %v7969, 10.0
    %v8087 = vmul.f32 %v7970, 10.0
    %v8088 = vmul.f32 %v7971, 10.0
    %v8089 = vmul.f32 %v7972, 10.0
    %v8090 = vmul.f32 %v7973, 10.0
    %v8091 = vmul.f32 %v7974, 10.0
    %v8092 = vmul.f32 %v7975, 10.0
    %v8093 = vmul.f32 %v7976, 10.0
    %v8094 = vmul.f32 %v7977, 10.0
    %v8095 = vmul.f32 %v7978, 10.0
    %v8096 = vmul.f32 %v7979, 10.0
    %v8097 = vmul.f32 %v7980, 10.0
    %v8098 = vmul.f32 %v7981, 10.0
    %v8099 = vmul.f32 %v7982, 10.0
    %v8100 = vmul.f32 %v7983, 10.0
    %v8101 = vmul.f32 %v7984, 10.0
    %v8102 = vmul.f32 %v7985, 10.0
    %v8103 = vmul.f32 %v7986, 10.0
    %v8104 = vmul.f32 %v7987, 10.0
    %v8105 = vmul.f32 %v7988, 10.0
    %v8106 = vmul.f32 %v7989, 10.0
    %v8107 = vmul.f32 %v7990, 10.0
    %v8108 = vmul.f32 %v7991, 10.0
    %v8109 = vmul.f32 %v7992, 10.0
    %v8110 = vmul.f32 %v7993, 10.0
    %v8111 = vmul.f32 %v7994, 10.0
    %v8112 = vmul.f32 %v7995, 10.0
    %v8113 = vmul.f32 %v7996, 10.0
    %v8114 = vmul.f32 %v7997, 10.0
    %v8115 = vmul.f32 %v7998, 10.0
    %v8116 = vmul.f32 %v7999, 10.0
    %v8117 = vmul.f32 %v8000, 10.0
    %v8118 = vmul.f32 %v8001, 10.0
    %v8119 = vmul.f32 %v8002, 10.0
    %v8120 = vmul.f32 %v8003, 10.0
    %v8121 = vmul.f32 %v8004, 10.0
    %v8122 = vmul.f32 %v8005, 10.0
    %v8123 = vmul.f32 %v8006, 10.0
    %v8124 = vmul.f32 %v8007, 10.0
    %v8125 = vmul.f32 %v8008, 10.0
    %v8126 = vmul.f32 %v8009, 10.0
    %v8127 = vmul.f32 %v8010, 10.0
    %v8128 = vmul.f32 %v8011, 10.0
    %v8129 = vmul.f32 %v8012, 10.0
    %v8130 = vmul.f32 %v8013, 10.0
    %v8131 = vmul.f32 %v8014, 10.0
    %v8132 = vmul.f32 %v8015, 10.0
    %v8133 = vmul.f32 %v8016, 10.0
    %v8134 = vmul.f32 %v8017, 10.0
    %v8135 = vmul.f32 %v8018, 10.0
    %v8136 = vmul.f32 %v8019, 10.0
    %v8137 = vmul.f32 %v8020, 10.0
    %v8138 = vmul.f32 %v8021, 10.0
    %v8139 = vmul.f32 %v8022, 10.0
    %v8140 = vmul.f32 %v8023, 10.0
    %v8141 = vmul.f32 %v8024, 10.0
    %v8142 = vmul.f32 %v8025, 10.0
    %v8143 = vmul.f32 %v8026, 10.0
    %v8144 = vmul.f32 %v8027, 10.0
    %v8145 = vmul.f32 %v8028, 10.0
    %v8146 = vmul.f32 %v8029, 10.0
    %v8147 = vmul.f32 %v8030, 10.0
    %v8148 = vmul.f32 %v8031, 10.0
    %v8149 = vmul.f32 %v8032, 10.0
    %v8150 = vmul.f32 %v8033, 10.0
    %v8151 = vmul.f32 %v8034, 10.0
    %v8152 = vmul.f32 %v8035, 10.0
    %v8153 = vmul.f32 %v8036, 10.0
    %v8154 = vmul.f32 %v8037, 10.0
    %v8155 = vmul.f32 %v8038, 10.0
    %v8156 = vmul.f32 %v8039, 10.0
    %v8157 = vmul.f32 %v8040, 10.0
    %v8158 = vmul.f32 %v8041, 10.0
    %v8159 = vmul.f32 %v8042, 10.0
    %v8160 = vmul.f32 %v8043, 10.0
    %v8161 = vmul.f32 %v8044, 10.0
    %v8162 = vmul.f32 %v8045, 10.0
    %v8163 = vmul.f32 %v8046, 10.0
    %v8164 = vmul.f32 %v8047, 10.0
    %v8165 = vmul.f32 %v8048, 10.0
    %v8166 = vmul.f32 %v8049, 10.0
    %v8167 = vmul.f32 %v8050, 10.0
    %v8168 = vmul.f32 %v8051, 10.0
    %v8169 = vmul.f32 %v8052, 10.0
    %v8170 = vmul.f32 %v8053, 10.0
    %v8171 = vmul.f32 %v8054, 10.0
    %v8172 = vmul.f32 %v8055, 10.0
    %v8173 = vmul.f32 %v8056, 10.0
    %v8174 = vmul.f32 %v8057, 10.0
    %v8175 = vmul.f32 %v8058, 10.0
    %v8176 = vmul.f32 %v8059, 10.0
    %v8177 = vmul.f32 %v8060, 10.0
    %v8178 = vmul.f32 %v8061, 10.0
    %v8179 = vmul.f32 %v8062, 10.0
    %v8180 = vmul.f32 %v8063, 10.0
    %v8181 = vmul.f32 %v8064, 10.0
    %v8182 = vmul.f32 %v8065, 10.0
    %v8183 = vmul.f32 %v8066, 10.0
    %v8184 = vmul.f32 %v8067, 10.0
    %v8185 = vmul.f32 %v8068, 10.0
    %v8186 = vmul.f32 %v8069, 10.0
    %v8187 = vmul.f32 %v8070, 10.0
    %v8188 = vmul.f32 %v8071, 10.0
    %v8189 = vmul.f32 %v8072, 10.0
    %v8190 = vmul.f32 %v8073, 10.0
    %v8191 = vmul.f32 %v8074, 10.0
    %v8192 = vmul.f32 %v8075, 10.0
    %v8193 = vmul.f32 %v8076, 10.0
    %v8194 = vmul.f32 %v8077, 10.0
    %v8195 = vadd.f32 %v7844, %v8078
    %v8196 = vadd.f32 %v7845, %v8079
    %v8197 = vadd.f32 %v7846, %v8080
    %v8198 = vadd.f32 %v7847, %v8081
    %v8199 = vadd.f32 %v7848, %v8082
    %v8200 = vadd.f32 %v7849, %v8083
    %v8201 = vadd.f32 %v7850, %v8084
    %v8202 = vadd.f32 %v7851, %v8085
    %v8203 = vadd.f32 %v7852, %v8086
    %v8204 = vadd.f32 %v7853, %v8087
    %v8205 = vadd.f32 %v7854, %v8088
    %v8206 = vadd.f32 %v7855, %v8089
    %v8207 = vadd.f32 %v7856, %v8090
    %v8208 = vadd.f32 %v7857, %v8091
    %v8209 = vadd.f32 %v7858, %v8092
    %v8210 = vadd.f32 %v7859, %v8093
    %v8211 = vadd.f32 %v7860, %v8094
    %v8212 = vadd.f32 %v7861, %v8095
    %v8213 = vadd.f32 %v7862, %v8096
    %v8214 = vadd.f32 %v7863, %v8097
    %v8215 = vadd.f32 %v7864, %v8098
    %v8216 = vadd.f32 %v7865, %v8099
    %v8217 = vadd.f32 %v7866, %v8100
    %v8218 = vadd.f32 %v7867, %v8101
    %v8219 = vadd.f32 %v7868, %v8102
    %v8220 = vadd.f32 %v7869, %v8103
    %v8221 = vadd.f32 %v7870, %v8104
    %v8222 = vadd.f32 %v7871, %v8105
    %v8223 = vadd.f32 %v7872, %v8106
    %v8224 = vadd.f32 %v7873, %v8107
    %v8225 = vadd.f32 %v7874, %v8108
    %v8226 = vadd.f32 %v7875, %v8109
    %v8227 = vadd.f32 %v7876, %v8110
    %v8228 = vadd.f32 %v7877, %v8111
    %v8229 = vadd.f32 %v7878, %v8112
    %v8230 = vadd.f32 %v7879, %v8113
    %v8231 = vadd.f32 %v7880, %v8114
    %v8232 = vadd.f32 %v7881, %v8115
    %v8233 = vadd.f32 %v7882, %v8116
    %v8234 = vadd.f32 %v7883, %v8117
    %v8235 = vadd.f32 %v7884, %v8118
    %v8236 = vadd.f32 %v7885, %v8119
    %v8237 = vadd.f32 %v7886, %v8120
    %v8238 = vadd.f32 %v7887, %v8121
    %v8239 = vadd.f32 %v7888, %v8122
    %v8240 = vadd.f32 %v7889, %v8123
    %v8241 = vadd.f32 %v7890, %v8124
    %v8242 = vadd.f32 %v7891, %v8125
    %v8243 = vadd.f32 %v7892, %v8126
    %v8244 = vadd.f32 %v7893, %v8127
    %v8245 = vadd.f32 %v7894, %v8128
    %v8246 = vadd.f32 %v7895, %v8129
    %v8247 = vadd.f32 %v7896, %v8130
    %v8248 = vadd.f32 %v7897, %v8131
    %v8249 = vadd.f32 %v7898, %v8132
    %v8250 = vadd.f32 %v7899, %v8133
    %v8251 = vadd.f32 %v7900, %v8134
    %v8252 = vadd.f32 %v7901, %v8135
    %v8253 = vadd.f32 %v7902, %v8136
    %v8254 = vadd.f32 %v7903, %v8137
    %v8255 = vadd.f32 %v7904, %v8138
    %v8256 = vadd.f32 %v7905, %v8139
    %v8257 = vadd.f32 %v7906, %v8140
    %v8258 = vadd.f32 %v7907, %v8141
    %v8259 = vadd.f32 %v7908, %v8142
    %v8260 = vadd.f32 %v7909, %v8143
    %v8261 = vadd.f32 %v7910, %v8144
    %v8262 = vadd.f32 %v7911, %v8145
    %v8263 = vadd.f32 %v7912, %v8146
    %v8264 = vadd.f32 %v7913, %v8147
    %v8265 = vadd.f32 %v7914, %v8148
    %v8266 = vadd.f32 %v7915, %v8149
    %v8267 = vadd.f32 %v7916, %v8150
    %v8268 = vadd.f32 %v7917, %v8151
    %v8269 = vadd.f32 %v7918, %v8152
    %v8270 = vadd.f32 %v7919, %v8153
    %v8271 = vadd.f32 %v7920, %v8154
    %v8272 = vadd.f32 %v7921, %v8155
    %v8273 = vadd.f32 %v7922, %v8156
    %v8274 = vadd.f32 %v7923, %v8157
    %v8275 = vadd.f32 %v7924, %v8158
    %v8276 = vadd.f32 %v7925, %v8159
    %v8277 = vadd.f32 %v7926, %v8160
    %v8278 = vadd.f32 %v7927, %v8161
    %v8279 = vadd.f32 %v7928, %v8162
    %v8280 = vadd.f32 %v7929, %v8163
    %v8281 = vadd.f32 %v7930, %v8164
    %v8282 = vadd.f32 %v7931, %v8165
    %v8283 = vadd.f32 %v7932, %v8166
    %v8284 = vadd.f32 %v7933, %v8167
    %v8285 = vadd.f32 %v7934, %v8168
    %v8286 = vadd.f32 %v7935, %v8169
    %v8287 = vadd.f32 %v7936, %v8170
    %v8288 = vadd.f32 %v7937, %v8171
    %v8289 = vadd.f32 %v7938, %v8172
    %v8290 = vadd.f32 %v7939, %v8173
    %v8291 = vadd.f32 %v7940, %v8174
    %v8292 = vadd.f32 %v7941, %v8175
    %v8293 = vadd.f32 %v7942, %v8176
    %v8294 = vadd.f32 %v7943, %v8177
    %v8295 = vadd.f32 %v7944, %v8178
    %v8296 = vadd.f32 %v7945, %v8179
    %v8297 = vadd.f32 %v7946, %v8180
    %v8298 = vadd.f32 %v7947, %v8181
    %v8299 = vadd.f32 %v7948, %v8182
    %v8300 = vadd.f32 %v7949, %v8183
    %v8301 = vadd.f32 %v7950, %v8184
    %v8302 = vadd.f32 %v7951, %v8185
    %v8303 = vadd.f32 %v7952, %v8186
    %v8304 = vadd.f32 %v7953, %v8187
    %v8305 = vadd.f32 %v7954, %v8188
    %v8306 = vadd.f32 %v7955, %v8189
    %v8307 = vadd.f32 %v7956, %v8190
    %v8308 = vadd.f32 %v7957, %v8191
    %v8309 = vadd.f32 %v7958, %v8192
    %v8310 = vadd.f32 %v7959, %v8193
    %v8311 = vadd.f32 %v7960, %v8194
    %8312 = vrot.lane.b32.xlu0 %v61, 111
    %v8313 = vpop.permute.xlu0 %8312
    %8314 = vrot.lane.b32.xlu0 %v100, 111
    %v8315 = vpop.permute.xlu0 %8314
    %8316 = vrot.lane.b32.xlu0 %v139, 111
    %v8317 = vpop.permute.xlu0 %8316
    %8318 = vrot.lane.b32.xlu0 %v62, 111
    %v8319 = vpop.permute.xlu0 %8318
    %8320 = vrot.lane.b32.xlu0 %v101, 111
    %v8321 = vpop.permute.xlu0 %8320
    %8322 = vrot.lane.b32.xlu0 %v140, 111
    %v8323 = vpop.permute.xlu0 %8322
    %8324 = vrot.lane.b32.xlu0 %v63, 111
    %v8325 = vpop.permute.xlu0 %8324
    %8326 = vrot.lane.b32.xlu0 %v102, 111
    %v8327 = vpop.permute.xlu0 %8326
    %8328 = vrot.lane.b32.xlu0 %v141, 111
    %v8329 = vpop.permute.xlu0 %8328
    %8330 = vrot.lane.b32.xlu0 %v64, 111
    %v8331 = vpop.permute.xlu0 %8330
    %8332 = vrot.lane.b32.xlu0 %v103, 111
    %v8333 = vpop.permute.xlu0 %8332
    %8334 = vrot.lane.b32.xlu0 %v142, 111
    %v8335 = vpop.permute.xlu0 %8334
    %8336 = vrot.lane.b32.xlu0 %v65, 111
    %v8337 = vpop.permute.xlu0 %8336
    %8338 = vrot.lane.b32.xlu0 %v104, 111
    %v8339 = vpop.permute.xlu0 %8338
    %8340 = vrot.lane.b32.xlu0 %v143, 111
    %v8341 = vpop.permute.xlu0 %8340
    %8342 = vrot.lane.b32.xlu0 %v66, 111
    %v8343 = vpop.permute.xlu0 %8342
    %8344 = vrot.lane.b32.xlu0 %v105, 111
    %v8345 = vpop.permute.xlu0 %8344
    %8346 = vrot.lane.b32.xlu0 %v144, 111
    %v8347 = vpop.permute.xlu0 %8346
    %8348 = vrot.lane.b32.xlu0 %v67, 111
    %v8349 = vpop.permute.xlu0 %8348
    %8350 = vrot.lane.b32.xlu0 %v106, 111
    %v8351 = vpop.permute.xlu0 %8350
    %8352 = vrot.lane.b32.xlu0 %v145, 111
    %v8353 = vpop.permute.xlu0 %8352
    %8354 = vrot.lane.b32.xlu0 %v68, 111
    %v8355 = vpop.permute.xlu0 %8354
    %8356 = vrot.lane.b32.xlu0 %v107, 111
    %v8357 = vpop.permute.xlu0 %8356
    %8358 = vrot.lane.b32.xlu0 %v146, 111
    %v8359 = vpop.permute.xlu0 %8358
    %8360 = vrot.lane.b32.xlu0 %v69, 111
    %v8361 = vpop.permute.xlu0 %8360
    %8362 = vrot.lane.b32.xlu0 %v108, 111
    %v8363 = vpop.permute.xlu0 %8362
    %8364 = vrot.lane.b32.xlu0 %v147, 111
    %v8365 = vpop.permute.xlu0 %8364
    %8366 = vrot.lane.b32.xlu0 %v70, 111
    %v8367 = vpop.permute.xlu0 %8366
    %8368 = vrot.lane.b32.xlu0 %v109, 111
    %v8369 = vpop.permute.xlu0 %8368
    %8370 = vrot.lane.b32.xlu0 %v148, 111
    %v8371 = vpop.permute.xlu0 %8370
    %8372 = vrot.lane.b32.xlu0 %v71, 111
    %v8373 = vpop.permute.xlu0 %8372
    %8374 = vrot.lane.b32.xlu0 %v110, 111
    %v8375 = vpop.permute.xlu0 %8374
    %8376 = vrot.lane.b32.xlu0 %v149, 111
    %v8377 = vpop.permute.xlu0 %8376
    %8378 = vrot.lane.b32.xlu0 %v72, 111
    %v8379 = vpop.permute.xlu0 %8378
    %8380 = vrot.lane.b32.xlu0 %v111, 111
    %v8381 = vpop.permute.xlu0 %8380
    %8382 = vrot.lane.b32.xlu0 %v150, 111
    %v8383 = vpop.permute.xlu0 %8382
    %8384 = vrot.lane.b32.xlu0 %v73, 111
    %v8385 = vpop.permute.xlu0 %8384
    %8386 = vrot.lane.b32.xlu0 %v112, 111
    %v8387 = vpop.permute.xlu0 %8386
    %8388 = vrot.lane.b32.xlu0 %v151, 111
    %v8389 = vpop.permute.xlu0 %8388
    %8390 = vrot.lane.b32.xlu0 %v74, 111
    %v8391 = vpop.permute.xlu0 %8390
    %8392 = vrot.lane.b32.xlu0 %v113, 111
    %v8393 = vpop.permute.xlu0 %8392
    %8394 = vrot.lane.b32.xlu0 %v152, 111
    %v8395 = vpop.permute.xlu0 %8394
    %8396 = vrot.lane.b32.xlu0 %v75, 111
    %v8397 = vpop.permute.xlu0 %8396
    %8398 = vrot.lane.b32.xlu0 %v114, 111
    %v8399 = vpop.permute.xlu0 %8398
    %8400 = vrot.lane.b32.xlu0 %v153, 111
    %v8401 = vpop.permute.xlu0 %8400
    %8402 = vrot.lane.b32.xlu0 %v76, 111
    %v8403 = vpop.permute.xlu0 %8402
    %8404 = vrot.lane.b32.xlu0 %v115, 111
    %v8405 = vpop.permute.xlu0 %8404
    %8406 = vrot.lane.b32.xlu0 %v154, 111
    %v8407 = vpop.permute.xlu0 %8406
    %8408 = vrot.lane.b32.xlu0 %v77, 111
    %v8409 = vpop.permute.xlu0 %8408
    %8410 = vrot.lane.b32.xlu0 %v116, 111
    %v8411 = vpop.permute.xlu0 %8410
    %8412 = vrot.lane.b32.xlu0 %v155, 111
    %v8413 = vpop.permute.xlu0 %8412
    %8414 = vrot.lane.b32.xlu0 %v78, 111
    %v8415 = vpop.permute.xlu0 %8414
    %8416 = vrot.lane.b32.xlu0 %v117, 111
    %v8417 = vpop.permute.xlu0 %8416
    %8418 = vrot.lane.b32.xlu0 %v156, 111
    %v8419 = vpop.permute.xlu0 %8418
    %8420 = vrot.lane.b32.xlu0 %v79, 111
    %v8421 = vpop.permute.xlu0 %8420
    %8422 = vrot.lane.b32.xlu0 %v118, 111
    %v8423 = vpop.permute.xlu0 %8422
    %8424 = vrot.lane.b32.xlu0 %v157, 111
    %v8425 = vpop.permute.xlu0 %8424
    %8426 = vrot.lane.b32.xlu0 %v80, 111
    %v8427 = vpop.permute.xlu0 %8426
    %8428 = vrot.lane.b32.xlu0 %v119, 111
    %v8429 = vpop.permute.xlu0 %8428
    %8430 = vrot.lane.b32.xlu0 %v158, 111
    %v8431 = vpop.permute.xlu0 %8430
    %8432 = vrot.lane.b32.xlu0 %v81, 111
    %v8433 = vpop.permute.xlu0 %8432
    %8434 = vrot.lane.b32.xlu0 %v120, 111
    %v8435 = vpop.permute.xlu0 %8434
    %8436 = vrot.lane.b32.xlu0 %v159, 111
    %v8437 = vpop.permute.xlu0 %8436
    %8438 = vrot.lane.b32.xlu0 %v82, 111
    %v8439 = vpop.permute.xlu0 %8438
    %8440 = vrot.lane.b32.xlu0 %v121, 111
    %v8441 = vpop.permute.xlu0 %8440
    %8442 = vrot.lane.b32.xlu0 %v160, 111
    %v8443 = vpop.permute.xlu0 %8442
    %8444 = vrot.lane.b32.xlu0 %v83, 111
    %v8445 = vpop.permute.xlu0 %8444
    %8446 = vrot.lane.b32.xlu0 %v122, 111
    %v8447 = vpop.permute.xlu0 %8446
    %8448 = vrot.lane.b32.xlu0 %v161, 111
    %v8449 = vpop.permute.xlu0 %8448
    %8450 = vrot.lane.b32.xlu0 %v84, 111
    %v8451 = vpop.permute.xlu0 %8450
    %8452 = vrot.lane.b32.xlu0 %v123, 111
    %v8453 = vpop.permute.xlu0 %8452
    %8454 = vrot.lane.b32.xlu0 %v162, 111
    %v8455 = vpop.permute.xlu0 %8454
    %8456 = vrot.lane.b32.xlu0 %v85, 111
    %v8457 = vpop.permute.xlu0 %8456
    %8458 = vrot.lane.b32.xlu0 %v124, 111
    %v8459 = vpop.permute.xlu0 %8458
    %8460 = vrot.lane.b32.xlu0 %v163, 111
    %v8461 = vpop.permute.xlu0 %8460
    %8462 = vrot.lane.b32.xlu0 %v86, 111
    %v8463 = vpop.permute.xlu0 %8462
    %8464 = vrot.lane.b32.xlu0 %v125, 111
    %v8465 = vpop.permute.xlu0 %8464
    %8466 = vrot.lane.b32.xlu0 %v164, 111
    %v8467 = vpop.permute.xlu0 %8466
    %8468 = vrot.lane.b32.xlu0 %v87, 111
    %v8469 = vpop.permute.xlu0 %8468
    %8470 = vrot.lane.b32.xlu0 %v126, 111
    %v8471 = vpop.permute.xlu0 %8470
    %8472 = vrot.lane.b32.xlu0 %v165, 111
    %v8473 = vpop.permute.xlu0 %8472
    %8474 = vrot.lane.b32.xlu0 %v88, 111
    %v8475 = vpop.permute.xlu0 %8474
    %8476 = vrot.lane.b32.xlu0 %v127, 111
    %v8477 = vpop.permute.xlu0 %8476
    %8478 = vrot.lane.b32.xlu0 %v166, 111
    %v8479 = vpop.permute.xlu0 %8478
    %8480 = vrot.lane.b32.xlu0 %v89, 111
    %v8481 = vpop.permute.xlu0 %8480
    %8482 = vrot.lane.b32.xlu0 %v128, 111
    %v8483 = vpop.permute.xlu0 %8482
    %8484 = vrot.lane.b32.xlu0 %v167, 111
    %v8485 = vpop.permute.xlu0 %8484
    %8486 = vrot.lane.b32.xlu0 %v90, 111
    %v8487 = vpop.permute.xlu0 %8486
    %8488 = vrot.lane.b32.xlu0 %v129, 111
    %v8489 = vpop.permute.xlu0 %8488
    %8490 = vrot.lane.b32.xlu0 %v168, 111
    %v8491 = vpop.permute.xlu0 %8490
    %8492 = vrot.lane.b32.xlu0 %v91, 111
    %v8493 = vpop.permute.xlu0 %8492
    %8494 = vrot.lane.b32.xlu0 %v130, 111
    %v8495 = vpop.permute.xlu0 %8494
    %8496 = vrot.lane.b32.xlu0 %v169, 111
    %v8497 = vpop.permute.xlu0 %8496
    %8498 = vrot.lane.b32.xlu0 %v92, 111
    %v8499 = vpop.permute.xlu0 %8498
    %8500 = vrot.lane.b32.xlu0 %v131, 111
    %v8501 = vpop.permute.xlu0 %8500
    %8502 = vrot.lane.b32.xlu0 %v170, 111
    %v8503 = vpop.permute.xlu0 %8502
    %8504 = vrot.lane.b32.xlu0 %v93, 111
    %v8505 = vpop.permute.xlu0 %8504
    %8506 = vrot.lane.b32.xlu0 %v132, 111
    %v8507 = vpop.permute.xlu0 %8506
    %8508 = vrot.lane.b32.xlu0 %v171, 111
    %v8509 = vpop.permute.xlu0 %8508
    %8510 = vrot.lane.b32.xlu0 %v94, 111
    %v8511 = vpop.permute.xlu0 %8510
    %8512 = vrot.lane.b32.xlu0 %v133, 111
    %v8513 = vpop.permute.xlu0 %8512
    %8514 = vrot.lane.b32.xlu0 %v172, 111
    %v8515 = vpop.permute.xlu0 %8514
    %8516 = vrot.lane.b32.xlu0 %v95, 111
    %v8517 = vpop.permute.xlu0 %8516
    %8518 = vrot.lane.b32.xlu0 %v134, 111
    %v8519 = vpop.permute.xlu0 %8518
    %8520 = vrot.lane.b32.xlu0 %v173, 111
    %v8521 = vpop.permute.xlu0 %8520
    %8522 = vrot.lane.b32.xlu0 %v96, 111
    %v8523 = vpop.permute.xlu0 %8522
    %8524 = vrot.lane.b32.xlu0 %v135, 111
    %v8525 = vpop.permute.xlu0 %8524
    %8526 = vrot.lane.b32.xlu0 %v174, 111
    %v8527 = vpop.permute.xlu0 %8526
    %8528 = vrot.lane.b32.xlu0 %v97, 111
    %v8529 = vpop.permute.xlu0 %8528
    %8530 = vrot.lane.b32.xlu0 %v136, 111
    %v8531 = vpop.permute.xlu0 %8530
    %8532 = vrot.lane.b32.xlu0 %v175, 111
    %v8533 = vpop.permute.xlu0 %8532
    %8534 = vrot.lane.b32.xlu0 %v98, 111
    %v8535 = vpop.permute.xlu0 %8534
    %8536 = vrot.lane.b32.xlu0 %v137, 111
    %v8537 = vpop.permute.xlu0 %8536
    %8538 = vrot.lane.b32.xlu0 %v176, 111
    %v8539 = vpop.permute.xlu0 %8538
    %8540 = vrot.lane.b32.xlu0 %v99, 111
    %v8541 = vpop.permute.xlu0 %8540
    %8542 = vrot.lane.b32.xlu0 %v138, 111
    %v8543 = vpop.permute.xlu0 %8542
    %8544 = vrot.lane.b32.xlu0 %v177, 111
    %v8545 = vpop.permute.xlu0 %8544
    %vm8546 = vcmp.lt.s32.totalorder %v7165, 111
    %v8547 = vsel %vm8546, %v8535, %v8541
    %v8548 = vsel %vm8546, %v8537, %v8543
    %v8549 = vsel %vm8546, %v8539, %v8545
    %v8550 = vsel %vm8546, %v8529, %v8535
    %v8551 = vsel %vm8546, %v8531, %v8537
    %v8552 = vsel %vm8546, %v8533, %v8539
    %v8553 = vsel %vm8546, %v8523, %v8529
    %v8554 = vsel %vm8546, %v8525, %v8531
    %v8555 = vsel %vm8546, %v8527, %v8533
    %v8556 = vsel %vm8546, %v8517, %v8523
    %v8557 = vsel %vm8546, %v8519, %v8525
    %v8558 = vsel %vm8546, %v8521, %v8527
    %v8559 = vsel %vm8546, %v8511, %v8517
    %v8560 = vsel %vm8546, %v8513, %v8519
    %v8561 = vsel %vm8546, %v8515, %v8521
    %v8562 = vsel %vm8546, %v8505, %v8511
    %v8563 = vsel %vm8546, %v8507, %v8513
    %v8564 = vsel %vm8546, %v8509, %v8515
    %v8565 = vsel %vm8546, %v8499, %v8505
    %v8566 = vsel %vm8546, %v8501, %v8507
    %v8567 = vsel %vm8546, %v8503, %v8509
    %v8568 = vsel %vm8546, %v8493, %v8499
    %v8569 = vsel %vm8546, %v8495, %v8501
    %v8570 = vsel %vm8546, %v8497, %v8503
    %v8571 = vsel %vm8546, %v8487, %v8493
    %v8572 = vsel %vm8546, %v8489, %v8495
    %v8573 = vsel %vm8546, %v8491, %v8497
    %v8574 = vsel %vm8546, %v8481, %v8487
    %v8575 = vsel %vm8546, %v8483, %v8489
    %v8576 = vsel %vm8546, %v8485, %v8491
    %v8577 = vsel %vm8546, %v8475, %v8481
    %v8578 = vsel %vm8546, %v8477, %v8483
    %v8579 = vsel %vm8546, %v8479, %v8485
    %v8580 = vsel %vm8546, %v8469, %v8475
    %v8581 = vsel %vm8546, %v8471, %v8477
    %v8582 = vsel %vm8546, %v8473, %v8479
    %v8583 = vsel %vm8546, %v8463, %v8469
    %v8584 = vsel %vm8546, %v8465, %v8471
    %v8585 = vsel %vm8546, %v8467, %v8473
    %v8586 = vsel %vm8546, %v8457, %v8463
    %v8587 = vsel %vm8546, %v8459, %v8465
    %v8588 = vsel %vm8546, %v8461, %v8467
    %v8589 = vsel %vm8546, %v8451, %v8457
    %v8590 = vsel %vm8546, %v8453, %v8459
    %v8591 = vsel %vm8546, %v8455, %v8461
    %v8592 = vsel %vm8546, %v8445, %v8451
    %v8593 = vsel %vm8546, %v8447, %v8453
    %v8594 = vsel %vm8546, %v8449, %v8455
    %v8595 = vsel %vm8546, %v8439, %v8445
    %v8596 = vsel %vm8546, %v8441, %v8447
    %v8597 = vsel %vm8546, %v8443, %v8449
    %v8598 = vsel %vm8546, %v8433, %v8439
    %v8599 = vsel %vm8546, %v8435, %v8441
    %v8600 = vsel %vm8546, %v8437, %v8443
    %v8601 = vsel %vm8546, %v8427, %v8433
    %v8602 = vsel %vm8546, %v8429, %v8435
    %v8603 = vsel %vm8546, %v8431, %v8437
    %v8604 = vsel %vm8546, %v8421, %v8427
    %v8605 = vsel %vm8546, %v8423, %v8429
    %v8606 = vsel %vm8546, %v8425, %v8431
    %v8607 = vsel %vm8546, %v8415, %v8421
    %v8608 = vsel %vm8546, %v8417, %v8423
    %v8609 = vsel %vm8546, %v8419, %v8425
    %v8610 = vsel %vm8546, %v8409, %v8415
    %v8611 = vsel %vm8546, %v8411, %v8417
    %v8612 = vsel %vm8546, %v8413, %v8419
    %v8613 = vsel %vm8546, %v8403, %v8409
    %v8614 = vsel %vm8546, %v8405, %v8411
    %v8615 = vsel %vm8546, %v8407, %v8413
    %v8616 = vsel %vm8546, %v8397, %v8403
    %v8617 = vsel %vm8546, %v8399, %v8405
    %v8618 = vsel %vm8546, %v8401, %v8407
    %v8619 = vsel %vm8546, %v8391, %v8397
    %v8620 = vsel %vm8546, %v8393, %v8399
    %v8621 = vsel %vm8546, %v8395, %v8401
    %v8622 = vsel %vm8546, %v8385, %v8391
    %v8623 = vsel %vm8546, %v8387, %v8393
    %v8624 = vsel %vm8546, %v8389, %v8395
    %v8625 = vsel %vm8546, %v8379, %v8385
    %v8626 = vsel %vm8546, %v8381, %v8387
    %v8627 = vsel %vm8546, %v8383, %v8389
    %v8628 = vsel %vm8546, %v8373, %v8379
    %v8629 = vsel %vm8546, %v8375, %v8381
    %v8630 = vsel %vm8546, %v8377, %v8383
    %v8631 = vsel %vm8546, %v8367, %v8373
    %v8632 = vsel %vm8546, %v8369, %v8375
    %v8633 = vsel %vm8546, %v8371, %v8377
    %v8634 = vsel %vm8546, %v8361, %v8367
    %v8635 = vsel %vm8546, %v8363, %v8369
    %v8636 = vsel %vm8546, %v8365, %v8371
    %v8637 = vsel %vm8546, %v8355, %v8361
    %v8638 = vsel %vm8546, %v8357, %v8363
    %v8639 = vsel %vm8546, %v8359, %v8365
    %v8640 = vsel %vm8546, %v8349, %v8355
    %v8641 = vsel %vm8546, %v8351, %v8357
    %v8642 = vsel %vm8546, %v8353, %v8359
    %v8643 = vsel %vm8546, %v8343, %v8349
    %v8644 = vsel %vm8546, %v8345, %v8351
    %v8645 = vsel %vm8546, %v8347, %v8353
    %v8646 = vsel %vm8546, %v8337, %v8343
    %v8647 = vsel %vm8546, %v8339, %v8345
    %v8648 = vsel %vm8546, %v8341, %v8347
    %v8649 = vsel %vm8546, %v8331, %v8337
    %v8650 = vsel %vm8546, %v8333, %v8339
    %v8651 = vsel %vm8546, %v8335, %v8341
    %v8652 = vsel %vm8546, %v8325, %v8331
    %v8653 = vsel %vm8546, %v8327, %v8333
    %v8654 = vsel %vm8546, %v8329, %v8335
    %v8655 = vsel %vm8546, %v8319, %v8325
    %v8656 = vsel %vm8546, %v8321, %v8327
    %v8657 = vsel %vm8546, %v8323, %v8329
    %v8658 = vsel %vm8546, %v8313, %v8319
    %v8659 = vsel %vm8546, %v8315, %v8321
    %v8660 = vsel %vm8546, %v8317, %v8323
    %v8661 = vsel %vm8546, %v8541, %v8313
    %v8662 = vsel %vm8546, %v8543, %v8315
    %v8663 = vsel %vm8546, %v8545, %v8317
    %v8664 = vsub.f32 %v61, %v8658
    %v8665 = vsub.f32 %v62, %v8655
    %v8666 = vsub.f32 %v63, %v8652
    %v8667 = vsub.f32 %v64, %v8649
    %v8668 = vsub.f32 %v65, %v8646
    %v8669 = vsub.f32 %v66, %v8643
    %v8670 = vsub.f32 %v67, %v8640
    %v8671 = vsub.f32 %v68, %v8637
    %v8672 = vsub.f32 %v69, %v8634
    %v8673 = vsub.f32 %v70, %v8631
    %v8674 = vsub.f32 %v71, %v8628
    %v8675 = vsub.f32 %v72, %v8625
    %v8676 = vsub.f32 %v73, %v8622
    %v8677 = vsub.f32 %v74, %v8619
    %v8678 = vsub.f32 %v75, %v8616
    %v8679 = vsub.f32 %v76, %v8613
    %v8680 = vsub.f32 %v77, %v8610
    %v8681 = vsub.f32 %v78, %v8607
    %v8682 = vsub.f32 %v79, %v8604
    %v8683 = vsub.f32 %v80, %v8601
    %v8684 = vsub.f32 %v81, %v8598
    %v8685 = vsub.f32 %v82, %v8595
    %v8686 = vsub.f32 %v83, %v8592
    %v8687 = vsub.f32 %v84, %v8589
    %v8688 = vsub.f32 %v85, %v8586
    %v8689 = vsub.f32 %v86, %v8583
    %v8690 = vsub.f32 %v87, %v8580
    %v8691 = vsub.f32 %v88, %v8577
    %v8692 = vsub.f32 %v89, %v8574
    %v8693 = vsub.f32 %v90, %v8571
    %v8694 = vsub.f32 %v91, %v8568
    %v8695 = vsub.f32 %v92, %v8565
    %v8696 = vsub.f32 %v93, %v8562
    %v8697 = vsub.f32 %v94, %v8559
    %v8698 = vsub.f32 %v95, %v8556
    %v8699 = vsub.f32 %v96, %v8553
    %v8700 = vsub.f32 %v97, %v8550
    %v8701 = vsub.f32 %v98, %v8547
    %v8702 = vsub.f32 %v99, %v8661
    %v8703 = vsub.f32 %v100, %v8659
    %v8704 = vsub.f32 %v101, %v8656
    %v8705 = vsub.f32 %v102, %v8653
    %v8706 = vsub.f32 %v103, %v8650
    %v8707 = vsub.f32 %v104, %v8647
    %v8708 = vsub.f32 %v105, %v8644
    %v8709 = vsub.f32 %v106, %v8641
    %v8710 = vsub.f32 %v107, %v8638
    %v8711 = vsub.f32 %v108, %v8635
    %v8712 = vsub.f32 %v109, %v8632
    %v8713 = vsub.f32 %v110, %v8629
    %v8714 = vsub.f32 %v111, %v8626
    %v8715 = vsub.f32 %v112, %v8623
    %v8716 = vsub.f32 %v113, %v8620
    %v8717 = vsub.f32 %v114, %v8617
    %v8718 = vsub.f32 %v115, %v8614
    %v8719 = vsub.f32 %v116, %v8611
    %v8720 = vsub.f32 %v117, %v8608
    %v8721 = vsub.f32 %v118, %v8605
    %v8722 = vsub.f32 %v119, %v8602
    %v8723 = vsub.f32 %v120, %v8599
    %v8724 = vsub.f32 %v121, %v8596
    %v8725 = vsub.f32 %v122, %v8593
    %v8726 = vsub.f32 %v123, %v8590
    %v8727 = vsub.f32 %v124, %v8587
    %v8728 = vsub.f32 %v125, %v8584
    %v8729 = vsub.f32 %v126, %v8581
    %v8730 = vsub.f32 %v127, %v8578
    %v8731 = vsub.f32 %v128, %v8575
    %v8732 = vsub.f32 %v129, %v8572
    %v8733 = vsub.f32 %v130, %v8569
    %v8734 = vsub.f32 %v131, %v8566
    %v8735 = vsub.f32 %v132, %v8563
    %v8736 = vsub.f32 %v133, %v8560
    %v8737 = vsub.f32 %v134, %v8557
    %v8738 = vsub.f32 %v135, %v8554
    %v8739 = vsub.f32 %v136, %v8551
    %v8740 = vsub.f32 %v137, %v8548
    %v8741 = vsub.f32 %v138, %v8662
    %v8742 = vsub.f32 %v139, %v8660
    %v8743 = vsub.f32 %v140, %v8657
    %v8744 = vsub.f32 %v141, %v8654
    %v8745 = vsub.f32 %v142, %v8651
    %v8746 = vsub.f32 %v143, %v8648
    %v8747 = vsub.f32 %v144, %v8645
    %v8748 = vsub.f32 %v145, %v8642
    %v8749 = vsub.f32 %v146, %v8639
    %v8750 = vsub.f32 %v147, %v8636
    %v8751 = vsub.f32 %v148, %v8633
    %v8752 = vsub.f32 %v149, %v8630
    %v8753 = vsub.f32 %v150, %v8627
    %v8754 = vsub.f32 %v151, %v8624
    %v8755 = vsub.f32 %v152, %v8621
    %v8756 = vsub.f32 %v153, %v8618
    %v8757 = vsub.f32 %v154, %v8615
    %v8758 = vsub.f32 %v155, %v8612
    %v8759 = vsub.f32 %v156, %v8609
    %v8760 = vsub.f32 %v157, %v8606
    %v8761 = vsub.f32 %v158, %v8603
    %v8762 = vsub.f32 %v159, %v8600
    %v8763 = vsub.f32 %v160, %v8597
    %v8764 = vsub.f32 %v161, %v8594
    %v8765 = vsub.f32 %v162, %v8591
    %v8766 = vsub.f32 %v163, %v8588
    %v8767 = vsub.f32 %v164, %v8585
    %v8768 = vsub.f32 %v165, %v8582
    %v8769 = vsub.f32 %v166, %v8579
    %v8770 = vsub.f32 %v167, %v8576
    %v8771 = vsub.f32 %v168, %v8573
    %v8772 = vsub.f32 %v169, %v8570
    %v8773 = vsub.f32 %v170, %v8567
    %v8774 = vsub.f32 %v171, %v8564
    %v8775 = vsub.f32 %v172, %v8561
    %v8776 = vsub.f32 %v173, %v8558
    %v8777 = vsub.f32 %v174, %v8555
    %v8778 = vsub.f32 %v175, %v8552
    %v8779 = vsub.f32 %v176, %v8549
    %v8780 = vsub.f32 %v177, %v8663
    %s8781 = scalar_lea.vmem [#allocation7], 1
    %v8782 = vld [vmem:[%s8781] ss:$4 sm:$0xff]
    %s8783 = scalar_lea.vmem [#allocation7], 33
    %v8784 = vld [vmem:[%s8783] ss:$4 sm:$0xff]
    %s8785 = scalar_lea.vmem [#allocation7], 65
    %v8786 = vld [vmem:[%s8785] ss:$4 sm:$0xff]
    %s8787 = scalar_lea.vmem [#allocation7], 97
    %v8788 = vld [vmem:[%s8787] ss:$4 sm:$0xff]
    %s8789 = scalar_lea.vmem [#allocation7], 129
    %v8790 = vld [vmem:[%s8789] ss:$4 sm:$0xff]
    %v8796 = vperm.slane %v8782, 0
    %v8797 = vperm.slane %v8782, 1
    %v8798 = vperm.slane %v8782, 2
    %v8799 = vperm.slane %v8782, 3
    %v8800 = vperm.slane %v8782, 4
    %v8801 = vperm.slane %v8782, 5
    %v8802 = vperm.slane %v8782, 6
    %v8803 = vperm.slane %v8782, 7
    %v8804 = vperm.slane %v8784, 0
    %v8805 = vperm.slane %v8784, 1
    %v8806 = vperm.slane %v8784, 2
    %v8807 = vperm.slane %v8784, 3
    %v8808 = vperm.slane %v8784, 4
    %v8809 = vperm.slane %v8784, 5
    %v8810 = vperm.slane %v8784, 6
    %v8811 = vperm.slane %v8784, 7
    %v8812 = vperm.slane %v8786, 0
    %v8813 = vperm.slane %v8786, 1
    %v8814 = vperm.slane %v8786, 2
    %v8815 = vperm.slane %v8786, 3
    %v8816 = vperm.slane %v8786, 4
    %v8817 = vperm.slane %v8786, 5
    %v8818 = vperm.slane %v8786, 6
    %v8819 = vperm.slane %v8786, 7
    %v8820 = vperm.slane %v8788, 0
    %v8821 = vperm.slane %v8788, 1
    %v8822 = vperm.slane %v8788, 2
    %v8823 = vperm.slane %v8788, 3
    %v8824 = vperm.slane %v8788, 4
    %v8825 = vperm.slane %v8788, 5
    %v8826 = vperm.slane %v8788, 6
    %v8827 = vperm.slane %v8788, 7
    %v8828 = vperm.slane %v8790, 0
    %v8829 = vperm.slane %v8790, 1
    %v8830 = vperm.slane %v8790, 2
    %v8831 = vperm.slane %v8790, 3
    %v8832 = vperm.slane %v8790, 4
    %v8833 = vperm.slane %v8790, 5
    %v8834 = vperm.slane %v8790, 6
    %v8874 = vmul.f32 %v8796, %v8664
    %v8875 = vmul.f32 %v8797, %v8665
    %v8876 = vmul.f32 %v8798, %v8666
    %v8877 = vmul.f32 %v8799, %v8667
    %v8878 = vmul.f32 %v8800, %v8668
    %v8879 = vmul.f32 %v8801, %v8669
    %v8880 = vmul.f32 %v8802, %v8670
    %v8881 = vmul.f32 %v8803, %v8671
    %v8882 = vmul.f32 %v8804, %v8672
    %v8883 = vmul.f32 %v8805, %v8673
    %v8884 = vmul.f32 %v8806, %v8674
    %v8885 = vmul.f32 %v8807, %v8675
    %v8886 = vmul.f32 %v8808, %v8676
    %v8887 = vmul.f32 %v8809, %v8677
    %v8888 = vmul.f32 %v8810, %v8678
    %v8889 = vmul.f32 %v8811, %v8679
    %v8890 = vmul.f32 %v8812, %v8680
    %v8891 = vmul.f32 %v8813, %v8681
    %v8892 = vmul.f32 %v8814, %v8682
    %v8893 = vmul.f32 %v8815, %v8683
    %v8894 = vmul.f32 %v8816, %v8684
    %v8895 = vmul.f32 %v8817, %v8685
    %v8896 = vmul.f32 %v8818, %v8686
    %v8897 = vmul.f32 %v8819, %v8687
    %v8898 = vmul.f32 %v8820, %v8688
    %v8899 = vmul.f32 %v8821, %v8689
    %v8900 = vmul.f32 %v8822, %v8690
    %v8901 = vmul.f32 %v8823, %v8691
    %v8902 = vmul.f32 %v8824, %v8692
    %v8903 = vmul.f32 %v8825, %v8693
    %v8904 = vmul.f32 %v8826, %v8694
    %v8905 = vmul.f32 %v8827, %v8695
    %v8906 = vmul.f32 %v8828, %v8696
    %v8907 = vmul.f32 %v8829, %v8697
    %v8908 = vmul.f32 %v8830, %v8698
    %v8909 = vmul.f32 %v8831, %v8699
    %v8910 = vmul.f32 %v8832, %v8700
    %v8911 = vmul.f32 %v8833, %v8701
    %v8912 = vmul.f32 %v8834, %v8702
    %v8913 = vmul.f32 %v8796, %v8703
    %v8914 = vmul.f32 %v8797, %v8704
    %v8915 = vmul.f32 %v8798, %v8705
    %v8916 = vmul.f32 %v8799, %v8706
    %v8917 = vmul.f32 %v8800, %v8707
    %v8918 = vmul.f32 %v8801, %v8708
    %v8919 = vmul.f32 %v8802, %v8709
    %v8920 = vmul.f32 %v8803, %v8710
    %v8921 = vmul.f32 %v8804, %v8711
    %v8922 = vmul.f32 %v8805, %v8712
    %v8923 = vmul.f32 %v8806, %v8713
    %v8924 = vmul.f32 %v8807, %v8714
    %v8925 = vmul.f32 %v8808, %v8715
    %v8926 = vmul.f32 %v8809, %v8716
    %v8927 = vmul.f32 %v8810, %v8717
    %v8928 = vmul.f32 %v8811, %v8718
    %v8929 = vmul.f32 %v8812, %v8719
    %v8930 = vmul.f32 %v8813, %v8720
    %v8931 = vmul.f32 %v8814, %v8721
    %v8932 = vmul.f32 %v8815, %v8722
    %v8933 = vmul.f32 %v8816, %v8723
    %v8934 = vmul.f32 %v8817, %v8724
    %v8935 = vmul.f32 %v8818, %v8725
    %v8936 = vmul.f32 %v8819, %v8726
    %v8937 = vmul.f32 %v8820, %v8727
    %v8938 = vmul.f32 %v8821, %v8728
    %v8939 = vmul.f32 %v8822, %v8729
    %v8940 = vmul.f32 %v8823, %v8730
    %v8941 = vmul.f32 %v8824, %v8731
    %v8942 = vmul.f32 %v8825, %v8732
    %v8943 = vmul.f32 %v8826, %v8733
    %v8944 = vmul.f32 %v8827, %v8734
    %v8945 = vmul.f32 %v8828, %v8735
    %v8946 = vmul.f32 %v8829, %v8736
    %v8947 = vmul.f32 %v8830, %v8737
    %v8948 = vmul.f32 %v8831, %v8738
    %v8949 = vmul.f32 %v8832, %v8739
    %v8950 = vmul.f32 %v8833, %v8740
    %v8951 = vmul.f32 %v8834, %v8741
    %v8952 = vmul.f32 %v8796, %v8742
    %v8953 = vmul.f32 %v8797, %v8743
    %v8954 = vmul.f32 %v8798, %v8744
    %v8955 = vmul.f32 %v8799, %v8745
    %v8956 = vmul.f32 %v8800, %v8746
    %v8957 = vmul.f32 %v8801, %v8747
    %v8958 = vmul.f32 %v8802, %v8748
    %v8959 = vmul.f32 %v8803, %v8749
    %v8960 = vmul.f32 %v8804, %v8750
    %v8961 = vmul.f32 %v8805, %v8751
    %v8962 = vmul.f32 %v8806, %v8752
    %v8963 = vmul.f32 %v8807, %v8753
    %v8964 = vmul.f32 %v8808, %v8754
    %v8965 = vmul.f32 %v8809, %v8755
    %v8966 = vmul.f32 %v8810, %v8756
    %v8967 = vmul.f32 %v8811, %v8757
    %v8968 = vmul.f32 %v8812, %v8758
    %v8969 = vmul.f32 %v8813, %v8759
    %v8970 = vmul.f32 %v8814, %v8760
    %v8971 = vmul.f32 %v8815, %v8761
    %v8972 = vmul.f32 %v8816, %v8762
    %v8973 = vmul.f32 %v8817, %v8763
    %v8974 = vmul.f32 %v8818, %v8764
    %v8975 = vmul.f32 %v8819, %v8765
    %v8976 = vmul.f32 %v8820, %v8766
    %v8977 = vmul.f32 %v8821, %v8767
    %v8978 = vmul.f32 %v8822, %v8768
    %v8979 = vmul.f32 %v8823, %v8769
    %v8980 = vmul.f32 %v8824, %v8770
    %v8981 = vmul.f32 %v8825, %v8771
    %v8982 = vmul.f32 %v8826, %v8772
    %v8983 = vmul.f32 %v8827, %v8773
    %v8984 = vmul.f32 %v8828, %v8774
    %v8985 = vmul.f32 %v8829, %v8775
    %v8986 = vmul.f32 %v8830, %v8776
    %v8987 = vmul.f32 %v8831, %v8777
    %v8988 = vmul.f32 %v8832, %v8778
    %v8989 = vmul.f32 %v8833, %v8779
    %v8990 = vmul.f32 %v8834, %v8780
    %v8991 = vmax.f32 %v8874, 0.0
    %v8992 = vmax.f32 %v8875, 0.0
    %v8993 = vmax.f32 %v8876, 0.0
    %v8994 = vmax.f32 %v8877, 0.0
    %v8995 = vmax.f32 %v8878, 0.0
    %v8996 = vmax.f32 %v8879, 0.0
    %v8997 = vmax.f32 %v8880, 0.0
    %v8998 = vmax.f32 %v8881, 0.0
    %v8999 = vmax.f32 %v8882, 0.0
    %v9000 = vmax.f32 %v8883, 0.0
    %v9001 = vmax.f32 %v8884, 0.0
    %v9002 = vmax.f32 %v8885, 0.0
    %v9003 = vmax.f32 %v8886, 0.0
    %v9004 = vmax.f32 %v8887, 0.0
    %v9005 = vmax.f32 %v8888, 0.0
    %v9006 = vmax.f32 %v8889, 0.0
    %v9007 = vmax.f32 %v8890, 0.0
    %v9008 = vmax.f32 %v8891, 0.0
    %v9009 = vmax.f32 %v8892, 0.0
    %v9010 = vmax.f32 %v8893, 0.0
    %v9011 = vmax.f32 %v8894, 0.0
    %v9012 = vmax.f32 %v8895, 0.0
    %v9013 = vmax.f32 %v8896, 0.0
    %v9014 = vmax.f32 %v8897, 0.0
    %v9015 = vmax.f32 %v8898, 0.0
    %v9016 = vmax.f32 %v8899, 0.0
    %v9017 = vmax.f32 %v8900, 0.0
    %v9018 = vmax.f32 %v8901, 0.0
    %v9019 = vmax.f32 %v8902, 0.0
    %v9020 = vmax.f32 %v8903, 0.0
    %v9021 = vmax.f32 %v8904, 0.0
    %v9022 = vmax.f32 %v8905, 0.0
    %v9023 = vmax.f32 %v8906, 0.0
    %v9024 = vmax.f32 %v8907, 0.0
    %v9025 = vmax.f32 %v8908, 0.0
    %v9026 = vmax.f32 %v8909, 0.0
    %v9027 = vmax.f32 %v8910, 0.0
    %v9028 = vmax.f32 %v8911, 0.0
    %v9029 = vmax.f32 %v8912, 0.0
    %v9030 = vmax.f32 %v8913, 0.0
    %v9031 = vmax.f32 %v8914, 0.0
    %v9032 = vmax.f32 %v8915, 0.0
    %v9033 = vmax.f32 %v8916, 0.0
    %v9034 = vmax.f32 %v8917, 0.0
    %v9035 = vmax.f32 %v8918, 0.0
    %v9036 = vmax.f32 %v8919, 0.0
    %v9037 = vmax.f32 %v8920, 0.0
    %v9038 = vmax.f32 %v8921, 0.0
    %v9039 = vmax.f32 %v8922, 0.0
    %v9040 = vmax.f32 %v8923, 0.0
    %v9041 = vmax.f32 %v8924, 0.0
    %v9042 = vmax.f32 %v8925, 0.0
    %v9043 = vmax.f32 %v8926, 0.0
    %v9044 = vmax.f32 %v8927, 0.0
    %v9045 = vmax.f32 %v8928, 0.0
    %v9046 = vmax.f32 %v8929, 0.0
    %v9047 = vmax.f32 %v8930, 0.0
    %v9048 = vmax.f32 %v8931, 0.0
    %v9049 = vmax.f32 %v8932, 0.0
    %v9050 = vmax.f32 %v8933, 0.0
    %v9051 = vmax.f32 %v8934, 0.0
    %v9052 = vmax.f32 %v8935, 0.0
    %v9053 = vmax.f32 %v8936, 0.0
    %v9054 = vmax.f32 %v8937, 0.0
    %v9055 = vmax.f32 %v8938, 0.0
    %v9056 = vmax.f32 %v8939, 0.0
    %v9057 = vmax.f32 %v8940, 0.0
    %v9058 = vmax.f32 %v8941, 0.0
    %v9059 = vmax.f32 %v8942, 0.0
    %v9060 = vmax.f32 %v8943, 0.0
    %v9061 = vmax.f32 %v8944, 0.0
    %v9062 = vmax.f32 %v8945, 0.0
    %v9063 = vmax.f32 %v8946, 0.0
    %v9064 = vmax.f32 %v8947, 0.0
    %v9065 = vmax.f32 %v8948, 0.0
    %v9066 = vmax.f32 %v8949, 0.0
    %v9067 = vmax.f32 %v8950, 0.0
    %v9068 = vmax.f32 %v8951, 0.0
    %v9069 = vmax.f32 %v8952, 0.0
    %v9070 = vmax.f32 %v8953, 0.0
    %v9071 = vmax.f32 %v8954, 0.0
    %v9072 = vmax.f32 %v8955, 0.0
    %v9073 = vmax.f32 %v8956, 0.0
    %v9074 = vmax.f32 %v8957, 0.0
    %v9075 = vmax.f32 %v8958, 0.0
    %v9076 = vmax.f32 %v8959, 0.0
    %v9077 = vmax.f32 %v8960, 0.0
    %v9078 = vmax.f32 %v8961, 0.0
    %v9079 = vmax.f32 %v8962, 0.0
    %v9080 = vmax.f32 %v8963, 0.0
    %v9081 = vmax.f32 %v8964, 0.0
    %v9082 = vmax.f32 %v8965, 0.0
    %v9083 = vmax.f32 %v8966, 0.0
    %v9084 = vmax.f32 %v8967, 0.0
    %v9085 = vmax.f32 %v8968, 0.0
    %v9086 = vmax.f32 %v8969, 0.0
    %v9087 = vmax.f32 %v8970, 0.0
    %v9088 = vmax.f32 %v8971, 0.0
    %v9089 = vmax.f32 %v8972, 0.0
    %v9090 = vmax.f32 %v8973, 0.0
    %v9091 = vmax.f32 %v8974, 0.0
    %v9092 = vmax.f32 %v8975, 0.0
    %v9093 = vmax.f32 %v8976, 0.0
    %v9094 = vmax.f32 %v8977, 0.0
    %v9095 = vmax.f32 %v8978, 0.0
    %v9096 = vmax.f32 %v8979, 0.0
    %v9097 = vmax.f32 %v8980, 0.0
    %v9098 = vmax.f32 %v8981, 0.0
    %v9099 = vmax.f32 %v8982, 0.0
    %v9100 = vmax.f32 %v8983, 0.0
    %v9101 = vmax.f32 %v8984, 0.0
    %v9102 = vmax.f32 %v8985, 0.0
    %v9103 = vmax.f32 %v8986, 0.0
    %v9104 = vmax.f32 %v8987, 0.0
    %v9105 = vmax.f32 %v8988, 0.0
    %v9106 = vmax.f32 %v8989, 0.0
    %v9107 = vmax.f32 %v8990, 0.0
    %v9108 = vmul.f32 %v8874, %v8664
    %v9109 = vmul.f32 %v8875, %v8665
    %v9110 = vmul.f32 %v8876, %v8666
    %v9111 = vmul.f32 %v8877, %v8667
    %v9112 = vmul.f32 %v8878, %v8668
    %v9113 = vmul.f32 %v8879, %v8669
    %v9114 = vmul.f32 %v8880, %v8670
    %v9115 = vmul.f32 %v8881, %v8671
    %v9116 = vmul.f32 %v8882, %v8672
    %v9117 = vmul.f32 %v8883, %v8673
    %v9118 = vmul.f32 %v8884, %v8674
    %v9119 = vmul.f32 %v8885, %v8675
    %v9120 = vmul.f32 %v8886, %v8676
    %v9121 = vmul.f32 %v8887, %v8677
    %v9122 = vmul.f32 %v8888, %v8678
    %v9123 = vmul.f32 %v8889, %v8679
    %v9124 = vmul.f32 %v8890, %v8680
    %v9125 = vmul.f32 %v8891, %v8681
    %v9126 = vmul.f32 %v8892, %v8682
    %v9127 = vmul.f32 %v8893, %v8683
    %v9128 = vmul.f32 %v8894, %v8684
    %v9129 = vmul.f32 %v8895, %v8685
    %v9130 = vmul.f32 %v8896, %v8686
    %v9131 = vmul.f32 %v8897, %v8687
    %v9132 = vmul.f32 %v8898, %v8688
    %v9133 = vmul.f32 %v8899, %v8689
    %v9134 = vmul.f32 %v8900, %v8690
    %v9135 = vmul.f32 %v8901, %v8691
    %v9136 = vmul.f32 %v8902, %v8692
    %v9137 = vmul.f32 %v8903, %v8693
    %v9138 = vmul.f32 %v8904, %v8694
    %v9139 = vmul.f32 %v8905, %v8695
    %v9140 = vmul.f32 %v8906, %v8696
    %v9141 = vmul.f32 %v8907, %v8697
    %v9142 = vmul.f32 %v8908, %v8698
    %v9143 = vmul.f32 %v8909, %v8699
    %v9144 = vmul.f32 %v8910, %v8700
    %v9145 = vmul.f32 %v8911, %v8701
    %v9146 = vmul.f32 %v8912, %v8702
    %v9147 = vmul.f32 %v8913, %v8703
    %v9148 = vmul.f32 %v8914, %v8704
    %v9149 = vmul.f32 %v8915, %v8705
    %v9150 = vmul.f32 %v8916, %v8706
    %v9151 = vmul.f32 %v8917, %v8707
    %v9152 = vmul.f32 %v8918, %v8708
    %v9153 = vmul.f32 %v8919, %v8709
    %v9154 = vmul.f32 %v8920, %v8710
    %v9155 = vmul.f32 %v8921, %v8711
    %v9156 = vmul.f32 %v8922, %v8712
    %v9157 = vmul.f32 %v8923, %v8713
    %v9158 = vmul.f32 %v8924, %v8714
    %v9159 = vmul.f32 %v8925, %v8715
    %v9160 = vmul.f32 %v8926, %v8716
    %v9161 = vmul.f32 %v8927, %v8717
    %v9162 = vmul.f32 %v8928, %v8718
    %v9163 = vmul.f32 %v8929, %v8719
    %v9164 = vmul.f32 %v8930, %v8720
    %v9165 = vmul.f32 %v8931, %v8721
    %v9166 = vmul.f32 %v8932, %v8722
    %v9167 = vmul.f32 %v8933, %v8723
    %v9168 = vmul.f32 %v8934, %v8724
    %v9169 = vmul.f32 %v8935, %v8725
    %v9170 = vmul.f32 %v8936, %v8726
    %v9171 = vmul.f32 %v8937, %v8727
    %v9172 = vmul.f32 %v8938, %v8728
    %v9173 = vmul.f32 %v8939, %v8729
    %v9174 = vmul.f32 %v8940, %v8730
    %v9175 = vmul.f32 %v8941, %v8731
    %v9176 = vmul.f32 %v8942, %v8732
    %v9177 = vmul.f32 %v8943, %v8733
    %v9178 = vmul.f32 %v8944, %v8734
    %v9179 = vmul.f32 %v8945, %v8735
    %v9180 = vmul.f32 %v8946, %v8736
    %v9181 = vmul.f32 %v8947, %v8737
    %v9182 = vmul.f32 %v8948, %v8738
    %v9183 = vmul.f32 %v8949, %v8739
    %v9184 = vmul.f32 %v8950, %v8740
    %v9185 = vmul.f32 %v8951, %v8741
    %v9186 = vmul.f32 %v8952, %v8742
    %v9187 = vmul.f32 %v8953, %v8743
    %v9188 = vmul.f32 %v8954, %v8744
    %v9189 = vmul.f32 %v8955, %v8745
    %v9190 = vmul.f32 %v8956, %v8746
    %v9191 = vmul.f32 %v8957, %v8747
    %v9192 = vmul.f32 %v8958, %v8748
    %v9193 = vmul.f32 %v8959, %v8749
    %v9194 = vmul.f32 %v8960, %v8750
    %v9195 = vmul.f32 %v8961, %v8751
    %v9196 = vmul.f32 %v8962, %v8752
    %v9197 = vmul.f32 %v8963, %v8753
    %v9198 = vmul.f32 %v8964, %v8754
    %v9199 = vmul.f32 %v8965, %v8755
    %v9200 = vmul.f32 %v8966, %v8756
    %v9201 = vmul.f32 %v8967, %v8757
    %v9202 = vmul.f32 %v8968, %v8758
    %v9203 = vmul.f32 %v8969, %v8759
    %v9204 = vmul.f32 %v8970, %v8760
    %v9205 = vmul.f32 %v8971, %v8761
    %v9206 = vmul.f32 %v8972, %v8762
    %v9207 = vmul.f32 %v8973, %v8763
    %v9208 = vmul.f32 %v8974, %v8764
    %v9209 = vmul.f32 %v8975, %v8765
    %v9210 = vmul.f32 %v8976, %v8766
    %v9211 = vmul.f32 %v8977, %v8767
    %v9212 = vmul.f32 %v8978, %v8768
    %v9213 = vmul.f32 %v8979, %v8769
    %v9214 = vmul.f32 %v8980, %v8770
    %v9215 = vmul.f32 %v8981, %v8771
    %v9216 = vmul.f32 %v8982, %v8772
    %v9217 = vmul.f32 %v8983, %v8773
    %v9218 = vmul.f32 %v8984, %v8774
    %v9219 = vmul.f32 %v8985, %v8775
    %v9220 = vmul.f32 %v8986, %v8776
    %v9221 = vmul.f32 %v8987, %v8777
    %v9222 = vmul.f32 %v8988, %v8778
    %v9223 = vmul.f32 %v8989, %v8779
    %v9224 = vmul.f32 %v8990, %v8780
    %v9225 = vmul.f32 %v9108, 0.0001
    %v9226 = vmul.f32 %v9109, 0.0001
    %v9227 = vmul.f32 %v9110, 0.0001
    %v9228 = vmul.f32 %v9111, 0.0001
    %v9229 = vmul.f32 %v9112, 0.0001
    %v9230 = vmul.f32 %v9113, 0.0001
    %v9231 = vmul.f32 %v9114, 0.0001
    %v9232 = vmul.f32 %v9115, 0.0001
    %v9233 = vmul.f32 %v9116, 0.0001
    %v9234 = vmul.f32 %v9117, 0.0001
    %v9235 = vmul.f32 %v9118, 0.0001
    %v9236 = vmul.f32 %v9119, 0.0001
    %v9237 = vmul.f32 %v9120, 0.0001
    %v9238 = vmul.f32 %v9121, 0.0001
    %v9239 = vmul.f32 %v9122, 0.0001
    %v9240 = vmul.f32 %v9123, 0.0001
    %v9241 = vmul.f32 %v9124, 0.0001
    %v9242 = vmul.f32 %v9125, 0.0001
    %v9243 = vmul.f32 %v9126, 0.0001
    %v9244 = vmul.f32 %v9127, 0.0001
    %v9245 = vmul.f32 %v9128, 0.0001
    %v9246 = vmul.f32 %v9129, 0.0001
    %v9247 = vmul.f32 %v9130, 0.0001
    %v9248 = vmul.f32 %v9131, 0.0001
    %v9249 = vmul.f32 %v9132, 0.0001
    %v9250 = vmul.f32 %v9133, 0.0001
    %v9251 = vmul.f32 %v9134, 0.0001
    %v9252 = vmul.f32 %v9135, 0.0001
    %v9253 = vmul.f32 %v9136, 0.0001
    %v9254 = vmul.f32 %v9137, 0.0001
    %v9255 = vmul.f32 %v9138, 0.0001
    %v9256 = vmul.f32 %v9139, 0.0001
    %v9257 = vmul.f32 %v9140, 0.0001
    %v9258 = vmul.f32 %v9141, 0.0001
    %v9259 = vmul.f32 %v9142, 0.0001
    %v9260 = vmul.f32 %v9143, 0.0001
    %v9261 = vmul.f32 %v9144, 0.0001
    %v9262 = vmul.f32 %v9145, 0.0001
    %v9263 = vmul.f32 %v9146, 0.0001
    %v9264 = vmul.f32 %v9147, 0.0001
    %v9265 = vmul.f32 %v9148, 0.0001
    %v9266 = vmul.f32 %v9149, 0.0001
    %v9267 = vmul.f32 %v9150, 0.0001
    %v9268 = vmul.f32 %v9151, 0.0001
    %v9269 = vmul.f32 %v9152, 0.0001
    %v9270 = vmul.f32 %v9153, 0.0001
    %v9271 = vmul.f32 %v9154, 0.0001
    %v9272 = vmul.f32 %v9155, 0.0001
    %v9273 = vmul.f32 %v9156, 0.0001
    %v9274 = vmul.f32 %v9157, 0.0001
    %v9275 = vmul.f32 %v9158, 0.0001
    %v9276 = vmul.f32 %v9159, 0.0001
    %v9277 = vmul.f32 %v9160, 0.0001
    %v9278 = vmul.f32 %v9161, 0.0001
    %v9279 = vmul.f32 %v9162, 0.0001
    %v9280 = vmul.f32 %v9163, 0.0001
    %v9281 = vmul.f32 %v9164, 0.0001
    %v9282 = vmul.f32 %v9165, 0.0001
    %v9283 = vmul.f32 %v9166, 0.0001
    %v9284 = vmul.f32 %v9167, 0.0001
    %v9285 = vmul.f32 %v9168, 0.0001
    %v9286 = vmul.f32 %v9169, 0.0001
    %v9287 = vmul.f32 %v9170, 0.0001
    %v9288 = vmul.f32 %v9171, 0.0001
    %v9289 = vmul.f32 %v9172, 0.0001
    %v9290 = vmul.f32 %v9173, 0.0001
    %v9291 = vmul.f32 %v9174, 0.0001
    %v9292 = vmul.f32 %v9175, 0.0001
    %v9293 = vmul.f32 %v9176, 0.0001
    %v9294 = vmul.f32 %v9177, 0.0001
    %v9295 = vmul.f32 %v9178, 0.0001
    %v9296 = vmul.f32 %v9179, 0.0001
    %v9297 = vmul.f32 %v9180, 0.0001
    %v9298 = vmul.f32 %v9181, 0.0001
    %v9299 = vmul.f32 %v9182, 0.0001
    %v9300 = vmul.f32 %v9183, 0.0001
    %v9301 = vmul.f32 %v9184, 0.0001
    %v9302 = vmul.f32 %v9185, 0.0001
    %v9303 = vmul.f32 %v9186, 0.0001
    %v9304 = vmul.f32 %v9187, 0.0001
    %v9305 = vmul.f32 %v9188, 0.0001
    %v9306 = vmul.f32 %v9189, 0.0001
    %v9307 = vmul.f32 %v9190, 0.0001
    %v9308 = vmul.f32 %v9191, 0.0001
    %v9309 = vmul.f32 %v9192, 0.0001
    %v9310 = vmul.f32 %v9193, 0.0001
    %v9311 = vmul.f32 %v9194, 0.0001
    %v9312 = vmul.f32 %v9195, 0.0001
    %v9313 = vmul.f32 %v9196, 0.0001
    %v9314 = vmul.f32 %v9197, 0.0001
    %v9315 = vmul.f32 %v9198, 0.0001
    %v9316 = vmul.f32 %v9199, 0.0001
    %v9317 = vmul.f32 %v9200, 0.0001
    %v9318 = vmul.f32 %v9201, 0.0001
    %v9319 = vmul.f32 %v9202, 0.0001
    %v9320 = vmul.f32 %v9203, 0.0001
    %v9321 = vmul.f32 %v9204, 0.0001
    %v9322 = vmul.f32 %v9205, 0.0001
    %v9323 = vmul.f32 %v9206, 0.0001
    %v9324 = vmul.f32 %v9207, 0.0001
    %v9325 = vmul.f32 %v9208, 0.0001
    %v9326 = vmul.f32 %v9209, 0.0001
    %v9327 = vmul.f32 %v9210, 0.0001
    %v9328 = vmul.f32 %v9211, 0.0001
    %v9329 = vmul.f32 %v9212, 0.0001
    %v9330 = vmul.f32 %v9213, 0.0001
    %v9331 = vmul.f32 %v9214, 0.0001
    %v9332 = vmul.f32 %v9215, 0.0001
    %v9333 = vmul.f32 %v9216, 0.0001
    %v9334 = vmul.f32 %v9217, 0.0001
    %v9335 = vmul.f32 %v9218, 0.0001
    %v9336 = vmul.f32 %v9219, 0.0001
    %v9337 = vmul.f32 %v9220, 0.0001
    %v9338 = vmul.f32 %v9221, 0.0001
    %v9339 = vmul.f32 %v9222, 0.0001
    %v9340 = vmul.f32 %v9223, 0.0001
    %v9341 = vmul.f32 %v9224, 0.0001
    %v9342 = vmul.f32 %v8991, %v8991
    %v9343 = vmul.f32 %v8992, %v8992
    %v9344 = vmul.f32 %v8993, %v8993
    %v9345 = vmul.f32 %v8994, %v8994
    %v9346 = vmul.f32 %v8995, %v8995
    %v9347 = vmul.f32 %v8996, %v8996
    %v9348 = vmul.f32 %v8997, %v8997
    %v9349 = vmul.f32 %v8998, %v8998
    %v9350 = vmul.f32 %v8999, %v8999
    %v9351 = vmul.f32 %v9000, %v9000
    %v9352 = vmul.f32 %v9001, %v9001
    %v9353 = vmul.f32 %v9002, %v9002
    %v9354 = vmul.f32 %v9003, %v9003
    %v9355 = vmul.f32 %v9004, %v9004
    %v9356 = vmul.f32 %v9005, %v9005
    %v9357 = vmul.f32 %v9006, %v9006
    %v9358 = vmul.f32 %v9007, %v9007
    %v9359 = vmul.f32 %v9008, %v9008
    %v9360 = vmul.f32 %v9009, %v9009
    %v9361 = vmul.f32 %v9010, %v9010
    %v9362 = vmul.f32 %v9011, %v9011
    %v9363 = vmul.f32 %v9012, %v9012
    %v9364 = vmul.f32 %v9013, %v9013
    %v9365 = vmul.f32 %v9014, %v9014
    %v9366 = vmul.f32 %v9015, %v9015
    %v9367 = vmul.f32 %v9016, %v9016
    %v9368 = vmul.f32 %v9017, %v9017
    %v9369 = vmul.f32 %v9018, %v9018
    %v9370 = vmul.f32 %v9019, %v9019
    %v9371 = vmul.f32 %v9020, %v9020
    %v9372 = vmul.f32 %v9021, %v9021
    %v9373 = vmul.f32 %v9022, %v9022
    %v9374 = vmul.f32 %v9023, %v9023
    %v9375 = vmul.f32 %v9024, %v9024
    %v9376 = vmul.f32 %v9025, %v9025
    %v9377 = vmul.f32 %v9026, %v9026
    %v9378 = vmul.f32 %v9027, %v9027
    %v9379 = vmul.f32 %v9028, %v9028
    %v9380 = vmul.f32 %v9029, %v9029
    %v9381 = vmul.f32 %v9030, %v9030
    %v9382 = vmul.f32 %v9031, %v9031
    %v9383 = vmul.f32 %v9032, %v9032
    %v9384 = vmul.f32 %v9033, %v9033
    %v9385 = vmul.f32 %v9034, %v9034
    %v9386 = vmul.f32 %v9035, %v9035
    %v9387 = vmul.f32 %v9036, %v9036
    %v9388 = vmul.f32 %v9037, %v9037
    %v9389 = vmul.f32 %v9038, %v9038
    %v9390 = vmul.f32 %v9039, %v9039
    %v9391 = vmul.f32 %v9040, %v9040
    %v9392 = vmul.f32 %v9041, %v9041
    %v9393 = vmul.f32 %v9042, %v9042
    %v9394 = vmul.f32 %v9043, %v9043
    %v9395 = vmul.f32 %v9044, %v9044
    %v9396 = vmul.f32 %v9045, %v9045
    %v9397 = vmul.f32 %v9046, %v9046
    %v9398 = vmul.f32 %v9047, %v9047
    %v9399 = vmul.f32 %v9048, %v9048
    %v9400 = vmul.f32 %v9049, %v9049
    %v9401 = vmul.f32 %v9050, %v9050
    %v9402 = vmul.f32 %v9051, %v9051
    %v9403 = vmul.f32 %v9052, %v9052
    %v9404 = vmul.f32 %v9053, %v9053
    %v9405 = vmul.f32 %v9054, %v9054
    %v9406 = vmul.f32 %v9055, %v9055
    %v9407 = vmul.f32 %v9056, %v9056
    %v9408 = vmul.f32 %v9057, %v9057
    %v9409 = vmul.f32 %v9058, %v9058
    %v9410 = vmul.f32 %v9059, %v9059
    %v9411 = vmul.f32 %v9060, %v9060
    %v9412 = vmul.f32 %v9061, %v9061
    %v9413 = vmul.f32 %v9062, %v9062
    %v9414 = vmul.f32 %v9063, %v9063
    %v9415 = vmul.f32 %v9064, %v9064
    %v9416 = vmul.f32 %v9065, %v9065
    %v9417 = vmul.f32 %v9066, %v9066
    %v9418 = vmul.f32 %v9067, %v9067
    %v9419 = vmul.f32 %v9068, %v9068
    %v9420 = vmul.f32 %v9069, %v9069
    %v9421 = vmul.f32 %v9070, %v9070
    %v9422 = vmul.f32 %v9071, %v9071
    %v9423 = vmul.f32 %v9072, %v9072
    %v9424 = vmul.f32 %v9073, %v9073
    %v9425 = vmul.f32 %v9074, %v9074
    %v9426 = vmul.f32 %v9075, %v9075
    %v9427 = vmul.f32 %v9076, %v9076
    %v9428 = vmul.f32 %v9077, %v9077
    %v9429 = vmul.f32 %v9078, %v9078
    %v9430 = vmul.f32 %v9079, %v9079
    %v9431 = vmul.f32 %v9080, %v9080
    %v9432 = vmul.f32 %v9081, %v9081
    %v9433 = vmul.f32 %v9082, %v9082
    %v9434 = vmul.f32 %v9083, %v9083
    %v9435 = vmul.f32 %v9084, %v9084
    %v9436 = vmul.f32 %v9085, %v9085
    %v9437 = vmul.f32 %v9086, %v9086
    %v9438 = vmul.f32 %v9087, %v9087
    %v9439 = vmul.f32 %v9088, %v9088
    %v9440 = vmul.f32 %v9089, %v9089
    %v9441 = vmul.f32 %v9090, %v9090
    %v9442 = vmul.f32 %v9091, %v9091
    %v9443 = vmul.f32 %v9092, %v9092
    %v9444 = vmul.f32 %v9093, %v9093
    %v9445 = vmul.f32 %v9094, %v9094
    %v9446 = vmul.f32 %v9095, %v9095
    %v9447 = vmul.f32 %v9096, %v9096
    %v9448 = vmul.f32 %v9097, %v9097
    %v9449 = vmul.f32 %v9098, %v9098
    %v9450 = vmul.f32 %v9099, %v9099
    %v9451 = vmul.f32 %v9100, %v9100
    %v9452 = vmul.f32 %v9101, %v9101
    %v9453 = vmul.f32 %v9102, %v9102
    %v9454 = vmul.f32 %v9103, %v9103
    %v9455 = vmul.f32 %v9104, %v9104
    %v9456 = vmul.f32 %v9105, %v9105
    %v9457 = vmul.f32 %v9106, %v9106
    %v9458 = vmul.f32 %v9107, %v9107
    %v9459 = vmul.f32 %v9342, 10.0
    %v9460 = vmul.f32 %v9343, 10.0
    %v9461 = vmul.f32 %v9344, 10.0
    %v9462 = vmul.f32 %v9345, 10.0
    %v9463 = vmul.f32 %v9346, 10.0
    %v9464 = vmul.f32 %v9347, 10.0
    %v9465 = vmul.f32 %v9348, 10.0
    %v9466 = vmul.f32 %v9349, 10.0
    %v9467 = vmul.f32 %v9350, 10.0
    %v9468 = vmul.f32 %v9351, 10.0
    %v9469 = vmul.f32 %v9352, 10.0
    %v9470 = vmul.f32 %v9353, 10.0
    %v9471 = vmul.f32 %v9354, 10.0
    %v9472 = vmul.f32 %v9355, 10.0
    %v9473 = vmul.f32 %v9356, 10.0
    %v9474 = vmul.f32 %v9357, 10.0
    %v9475 = vmul.f32 %v9358, 10.0
    %v9476 = vmul.f32 %v9359, 10.0
    %v9477 = vmul.f32 %v9360, 10.0
    %v9478 = vmul.f32 %v9361, 10.0
    %v9479 = vmul.f32 %v9362, 10.0
    %v9480 = vmul.f32 %v9363, 10.0
    %v9481 = vmul.f32 %v9364, 10.0
    %v9482 = vmul.f32 %v9365, 10.0
    %v9483 = vmul.f32 %v9366, 10.0
    %v9484 = vmul.f32 %v9367, 10.0
    %v9485 = vmul.f32 %v9368, 10.0
    %v9486 = vmul.f32 %v9369, 10.0
    %v9487 = vmul.f32 %v9370, 10.0
    %v9488 = vmul.f32 %v9371, 10.0
    %v9489 = vmul.f32 %v9372, 10.0
    %v9490 = vmul.f32 %v9373, 10.0
    %v9491 = vmul.f32 %v9374, 10.0
    %v9492 = vmul.f32 %v9375, 10.0
    %v9493 = vmul.f32 %v9376, 10.0
    %v9494 = vmul.f32 %v9377, 10.0
    %v9495 = vmul.f32 %v9378, 10.0
    %v9496 = vmul.f32 %v9379, 10.0
    %v9497 = vmul.f32 %v9380, 10.0
    %v9498 = vmul.f32 %v9381, 10.0
    %v9499 = vmul.f32 %v9382, 10.0
    %v9500 = vmul.f32 %v9383, 10.0
    %v9501 = vmul.f32 %v9384, 10.0
    %v9502 = vmul.f32 %v9385, 10.0
    %v9503 = vmul.f32 %v9386, 10.0
    %v9504 = vmul.f32 %v9387, 10.0
    %v9505 = vmul.f32 %v9388, 10.0
    %v9506 = vmul.f32 %v9389, 10.0
    %v9507 = vmul.f32 %v9390, 10.0
    %v9508 = vmul.f32 %v9391, 10.0
    %v9509 = vmul.f32 %v9392, 10.0
    %v9510 = vmul.f32 %v9393, 10.0
    %v9511 = vmul.f32 %v9394, 10.0
    %v9512 = vmul.f32 %v9395, 10.0
    %v9513 = vmul.f32 %v9396, 10.0
    %v9514 = vmul.f32 %v9397, 10.0
    %v9515 = vmul.f32 %v9398, 10.0
    %v9516 = vmul.f32 %v9399, 10.0
    %v9517 = vmul.f32 %v9400, 10.0
    %v9518 = vmul.f32 %v9401, 10.0
    %v9519 = vmul.f32 %v9402, 10.0
    %v9520 = vmul.f32 %v9403, 10.0
    %v9521 = vmul.f32 %v9404, 10.0
    %v9522 = vmul.f32 %v9405, 10.0
    %v9523 = vmul.f32 %v9406, 10.0
    %v9524 = vmul.f32 %v9407, 10.0
    %v9525 = vmul.f32 %v9408, 10.0
    %v9526 = vmul.f32 %v9409, 10.0
    %v9527 = vmul.f32 %v9410, 10.0
    %v9528 = vmul.f32 %v9411, 10.0
    %v9529 = vmul.f32 %v9412, 10.0
    %v9530 = vmul.f32 %v9413, 10.0
    %v9531 = vmul.f32 %v9414, 10.0
    %v9532 = vmul.f32 %v9415, 10.0
    %v9533 = vmul.f32 %v9416, 10.0
    %v9534 = vmul.f32 %v9417, 10.0
    %v9535 = vmul.f32 %v9418, 10.0
    %v9536 = vmul.f32 %v9419, 10.0
    %v9537 = vmul.f32 %v9420, 10.0
    %v9538 = vmul.f32 %v9421, 10.0
    %v9539 = vmul.f32 %v9422, 10.0
    %v9540 = vmul.f32 %v9423, 10.0
    %v9541 = vmul.f32 %v9424, 10.0
    %v9542 = vmul.f32 %v9425, 10.0
    %v9543 = vmul.f32 %v9426, 10.0
    %v9544 = vmul.f32 %v9427, 10.0
    %v9545 = vmul.f32 %v9428, 10.0
    %v9546 = vmul.f32 %v9429, 10.0
    %v9547 = vmul.f32 %v9430, 10.0
    %v9548 = vmul.f32 %v9431, 10.0
    %v9549 = vmul.f32 %v9432, 10.0
    %v9550 = vmul.f32 %v9433, 10.0
    %v9551 = vmul.f32 %v9434, 10.0
    %v9552 = vmul.f32 %v9435, 10.0
    %v9553 = vmul.f32 %v9436, 10.0
    %v9554 = vmul.f32 %v9437, 10.0
    %v9555 = vmul.f32 %v9438, 10.0
    %v9556 = vmul.f32 %v9439, 10.0
    %v9557 = vmul.f32 %v9440, 10.0
    %v9558 = vmul.f32 %v9441, 10.0
    %v9559 = vmul.f32 %v9442, 10.0
    %v9560 = vmul.f32 %v9443, 10.0
    %v9561 = vmul.f32 %v9444, 10.0
    %v9562 = vmul.f32 %v9445, 10.0
    %v9563 = vmul.f32 %v9446, 10.0
    %v9564 = vmul.f32 %v9447, 10.0
    %v9565 = vmul.f32 %v9448, 10.0
    %v9566 = vmul.f32 %v9449, 10.0
    %v9567 = vmul.f32 %v9450, 10.0
    %v9568 = vmul.f32 %v9451, 10.0
    %v9569 = vmul.f32 %v9452, 10.0
    %v9570 = vmul.f32 %v9453, 10.0
    %v9571 = vmul.f32 %v9454, 10.0
    %v9572 = vmul.f32 %v9455, 10.0
    %v9573 = vmul.f32 %v9456, 10.0
    %v9574 = vmul.f32 %v9457, 10.0
    %v9575 = vmul.f32 %v9458, 10.0
    %v9576 = vadd.f32 %v9225, %v9459
    %v9577 = vadd.f32 %v9226, %v9460
    %v9578 = vadd.f32 %v9227, %v9461
    %v9579 = vadd.f32 %v9228, %v9462
    %v9580 = vadd.f32 %v9229, %v9463
    %v9581 = vadd.f32 %v9230, %v9464
    %v9582 = vadd.f32 %v9231, %v9465
    %v9583 = vadd.f32 %v9232, %v9466
    %v9584 = vadd.f32 %v9233, %v9467
    %v9585 = vadd.f32 %v9234, %v9468
    %v9586 = vadd.f32 %v9235, %v9469
    %v9587 = vadd.f32 %v9236, %v9470
    %v9588 = vadd.f32 %v9237, %v9471
    %v9589 = vadd.f32 %v9238, %v9472
    %v9590 = vadd.f32 %v9239, %v9473
    %v9591 = vadd.f32 %v9240, %v9474
    %v9592 = vadd.f32 %v9241, %v9475
    %v9593 = vadd.f32 %v9242, %v9476
    %v9594 = vadd.f32 %v9243, %v9477
    %v9595 = vadd.f32 %v9244, %v9478
    %v9596 = vadd.f32 %v9245, %v9479
    %v9597 = vadd.f32 %v9246, %v9480
    %v9598 = vadd.f32 %v9247, %v9481
    %v9599 = vadd.f32 %v9248, %v9482
    %v9600 = vadd.f32 %v9249, %v9483
    %v9601 = vadd.f32 %v9250, %v9484
    %v9602 = vadd.f32 %v9251, %v9485
    %v9603 = vadd.f32 %v9252, %v9486
    %v9604 = vadd.f32 %v9253, %v9487
    %v9605 = vadd.f32 %v9254, %v9488
    %v9606 = vadd.f32 %v9255, %v9489
    %v9607 = vadd.f32 %v9256, %v9490
    %v9608 = vadd.f32 %v9257, %v9491
    %v9609 = vadd.f32 %v9258, %v9492
    %v9610 = vadd.f32 %v9259, %v9493
    %v9611 = vadd.f32 %v9260, %v9494
    %v9612 = vadd.f32 %v9261, %v9495
    %v9613 = vadd.f32 %v9262, %v9496
    %v9614 = vadd.f32 %v9263, %v9497
    %v9615 = vadd.f32 %v9264, %v9498
    %v9616 = vadd.f32 %v9265, %v9499
    %v9617 = vadd.f32 %v9266, %v9500
    %v9618 = vadd.f32 %v9267, %v9501
    %v9619 = vadd.f32 %v9268, %v9502
    %v9620 = vadd.f32 %v9269, %v9503
    %v9621 = vadd.f32 %v9270, %v9504
    %v9622 = vadd.f32 %v9271, %v9505
    %v9623 = vadd.f32 %v9272, %v9506
    %v9624 = vadd.f32 %v9273, %v9507
    %v9625 = vadd.f32 %v9274, %v9508
    %v9626 = vadd.f32 %v9275, %v9509
    %v9627 = vadd.f32 %v9276, %v9510
    %v9628 = vadd.f32 %v9277, %v9511
    %v9629 = vadd.f32 %v9278, %v9512
    %v9630 = vadd.f32 %v9279, %v9513
    %v9631 = vadd.f32 %v9280, %v9514
    %v9632 = vadd.f32 %v9281, %v9515
    %v9633 = vadd.f32 %v9282, %v9516
    %v9634 = vadd.f32 %v9283, %v9517
    %v9635 = vadd.f32 %v9284, %v9518
    %v9636 = vadd.f32 %v9285, %v9519
    %v9637 = vadd.f32 %v9286, %v9520
    %v9638 = vadd.f32 %v9287, %v9521
    %v9639 = vadd.f32 %v9288, %v9522
    %v9640 = vadd.f32 %v9289, %v9523
    %v9641 = vadd.f32 %v9290, %v9524
    %v9642 = vadd.f32 %v9291, %v9525
    %v9643 = vadd.f32 %v9292, %v9526
    %v9644 = vadd.f32 %v9293, %v9527
    %v9645 = vadd.f32 %v9294, %v9528
    %v9646 = vadd.f32 %v9295, %v9529
    %v9647 = vadd.f32 %v9296, %v9530
    %v9648 = vadd.f32 %v9297, %v9531
    %v9649 = vadd.f32 %v9298, %v9532
    %v9650 = vadd.f32 %v9299, %v9533
    %v9651 = vadd.f32 %v9300, %v9534
    %v9652 = vadd.f32 %v9301, %v9535
    %v9653 = vadd.f32 %v9302, %v9536
    %v9654 = vadd.f32 %v9303, %v9537
    %v9655 = vadd.f32 %v9304, %v9538
    %v9656 = vadd.f32 %v9305, %v9539
    %v9657 = vadd.f32 %v9306, %v9540
    %v9658 = vadd.f32 %v9307, %v9541
    %v9659 = vadd.f32 %v9308, %v9542
    %v9660 = vadd.f32 %v9309, %v9543
    %v9661 = vadd.f32 %v9310, %v9544
    %v9662 = vadd.f32 %v9311, %v9545
    %v9663 = vadd.f32 %v9312, %v9546
    %v9664 = vadd.f32 %v9313, %v9547
    %v9665 = vadd.f32 %v9314, %v9548
    %v9666 = vadd.f32 %v9315, %v9549
    %v9667 = vadd.f32 %v9316, %v9550
    %v9668 = vadd.f32 %v9317, %v9551
    %v9669 = vadd.f32 %v9318, %v9552
    %v9670 = vadd.f32 %v9319, %v9553
    %v9671 = vadd.f32 %v9320, %v9554
    %v9672 = vadd.f32 %v9321, %v9555
    %v9673 = vadd.f32 %v9322, %v9556
    %v9674 = vadd.f32 %v9323, %v9557
    %v9675 = vadd.f32 %v9324, %v9558
    %v9676 = vadd.f32 %v9325, %v9559
    %v9677 = vadd.f32 %v9326, %v9560
    %v9678 = vadd.f32 %v9327, %v9561
    %v9679 = vadd.f32 %v9328, %v9562
    %v9680 = vadd.f32 %v9329, %v9563
    %v9681 = vadd.f32 %v9330, %v9564
    %v9682 = vadd.f32 %v9331, %v9565
    %v9683 = vadd.f32 %v9332, %v9566
    %v9684 = vadd.f32 %v9333, %v9567
    %v9685 = vadd.f32 %v9334, %v9568
    %v9686 = vadd.f32 %v9335, %v9569
    %v9687 = vadd.f32 %v9336, %v9570
    %v9688 = vadd.f32 %v9337, %v9571
    %v9689 = vadd.f32 %v9338, %v9572
    %v9690 = vadd.f32 %v9339, %v9573
    %v9691 = vadd.f32 %v9340, %v9574
    %v9692 = vadd.f32 %v9341, %v9575
    %v9693 = vadd.f32 %v8195, %v9576
    %v9694 = vadd.f32 %v8196, %v9577
    %v9695 = vadd.f32 %v8197, %v9578
    %v9696 = vadd.f32 %v8198, %v9579
    %v9697 = vadd.f32 %v8199, %v9580
    %v9698 = vadd.f32 %v8200, %v9581
    %v9699 = vadd.f32 %v8201, %v9582
    %v9700 = vadd.f32 %v8202, %v9583
    %v9701 = vadd.f32 %v8203, %v9584
    %v9702 = vadd.f32 %v8204, %v9585
    %v9703 = vadd.f32 %v8205, %v9586
    %v9704 = vadd.f32 %v8206, %v9587
    %v9705 = vadd.f32 %v8207, %v9588
    %v9706 = vadd.f32 %v8208, %v9589
    %v9707 = vadd.f32 %v8209, %v9590
    %v9708 = vadd.f32 %v8210, %v9591
    %v9709 = vadd.f32 %v8211, %v9592
    %v9710 = vadd.f32 %v8212, %v9593
    %v9711 = vadd.f32 %v8213, %v9594
    %v9712 = vadd.f32 %v8214, %v9595
    %v9713 = vadd.f32 %v8215, %v9596
    %v9714 = vadd.f32 %v8216, %v9597
    %v9715 = vadd.f32 %v8217, %v9598
    %v9716 = vadd.f32 %v8218, %v9599
    %v9717 = vadd.f32 %v8219, %v9600
    %v9718 = vadd.f32 %v8220, %v9601
    %v9719 = vadd.f32 %v8221, %v9602
    %v9720 = vadd.f32 %v8222, %v9603
    %v9721 = vadd.f32 %v8223, %v9604
    %v9722 = vadd.f32 %v8224, %v9605
    %v9723 = vadd.f32 %v8225, %v9606
    %v9724 = vadd.f32 %v8226, %v9607
    %v9725 = vadd.f32 %v8227, %v9608
    %v9726 = vadd.f32 %v8228, %v9609
    %v9727 = vadd.f32 %v8229, %v9610
    %v9728 = vadd.f32 %v8230, %v9611
    %v9729 = vadd.f32 %v8231, %v9612
    %v9730 = vadd.f32 %v8232, %v9613
    %v9731 = vadd.f32 %v8233, %v9614
    %v9732 = vadd.f32 %v8234, %v9615
    %v9733 = vadd.f32 %v8235, %v9616
    %v9734 = vadd.f32 %v8236, %v9617
    %v9735 = vadd.f32 %v8237, %v9618
    %v9736 = vadd.f32 %v8238, %v9619
    %v9737 = vadd.f32 %v8239, %v9620
    %v9738 = vadd.f32 %v8240, %v9621
    %v9739 = vadd.f32 %v8241, %v9622
    %v9740 = vadd.f32 %v8242, %v9623
    %v9741 = vadd.f32 %v8243, %v9624
    %v9742 = vadd.f32 %v8244, %v9625
    %v9743 = vadd.f32 %v8245, %v9626
    %v9744 = vadd.f32 %v8246, %v9627
    %v9745 = vadd.f32 %v8247, %v9628
    %v9746 = vadd.f32 %v8248, %v9629
    %v9747 = vadd.f32 %v8249, %v9630
    %v9748 = vadd.f32 %v8250, %v9631
    %v9749 = vadd.f32 %v8251, %v9632
    %v9750 = vadd.f32 %v8252, %v9633
    %v9751 = vadd.f32 %v8253, %v9634
    %v9752 = vadd.f32 %v8254, %v9635
    %v9753 = vadd.f32 %v8255, %v9636
    %v9754 = vadd.f32 %v8256, %v9637
    %v9755 = vadd.f32 %v8257, %v9638
    %v9756 = vadd.f32 %v8258, %v9639
    %v9757 = vadd.f32 %v8259, %v9640
    %v9758 = vadd.f32 %v8260, %v9641
    %v9759 = vadd.f32 %v8261, %v9642
    %v9760 = vadd.f32 %v8262, %v9643
    %v9761 = vadd.f32 %v8263, %v9644
    %v9762 = vadd.f32 %v8264, %v9645
    %v9763 = vadd.f32 %v8265, %v9646
    %v9764 = vadd.f32 %v8266, %v9647
    %v9765 = vadd.f32 %v8267, %v9648
    %v9766 = vadd.f32 %v8268, %v9649
    %v9767 = vadd.f32 %v8269, %v9650
    %v9768 = vadd.f32 %v8270, %v9651
    %v9769 = vadd.f32 %v8271, %v9652
    %v9770 = vadd.f32 %v8272, %v9653
    %v9771 = vadd.f32 %v8273, %v9654
    %v9772 = vadd.f32 %v8274, %v9655
    %v9773 = vadd.f32 %v8275, %v9656
    %v9774 = vadd.f32 %v8276, %v9657
    %v9775 = vadd.f32 %v8277, %v9658
    %v9776 = vadd.f32 %v8278, %v9659
    %v9777 = vadd.f32 %v8279, %v9660
    %v9778 = vadd.f32 %v8280, %v9661
    %v9779 = vadd.f32 %v8281, %v9662
    %v9780 = vadd.f32 %v8282, %v9663
    %v9781 = vadd.f32 %v8283, %v9664
    %v9782 = vadd.f32 %v8284, %v9665
    %v9783 = vadd.f32 %v8285, %v9666
    %v9784 = vadd.f32 %v8286, %v9667
    %v9785 = vadd.f32 %v8287, %v9668
    %v9786 = vadd.f32 %v8288, %v9669
    %v9787 = vadd.f32 %v8289, %v9670
    %v9788 = vadd.f32 %v8290, %v9671
    %v9789 = vadd.f32 %v8291, %v9672
    %v9790 = vadd.f32 %v8292, %v9673
    %v9791 = vadd.f32 %v8293, %v9674
    %v9792 = vadd.f32 %v8294, %v9675
    %v9793 = vadd.f32 %v8295, %v9676
    %v9794 = vadd.f32 %v8296, %v9677
    %v9795 = vadd.f32 %v8297, %v9678
    %v9796 = vadd.f32 %v8298, %v9679
    %v9797 = vadd.f32 %v8299, %v9680
    %v9798 = vadd.f32 %v8300, %v9681
    %v9799 = vadd.f32 %v8301, %v9682
    %v9800 = vadd.f32 %v8302, %v9683
    %v9801 = vadd.f32 %v8303, %v9684
    %v9802 = vadd.f32 %v8304, %v9685
    %v9803 = vadd.f32 %v8305, %v9686
    %v9804 = vadd.f32 %v8306, %v9687
    %v9805 = vadd.f32 %v8307, %v9688
    %v9806 = vadd.f32 %v8308, %v9689
    %v9807 = vadd.f32 %v8309, %v9690
    %v9808 = vadd.f32 %v8310, %v9691
    %v9809 = vadd.f32 %v8311, %v9692
    %9810 = vrot.lane.b32.xlu0 %v61, 95
    %v9811 = vpop.permute.xlu0 %9810
    %9812 = vrot.lane.b32.xlu0 %v100, 95
    %v9813 = vpop.permute.xlu0 %9812
    %9814 = vrot.lane.b32.xlu0 %v139, 95
    %v9815 = vpop.permute.xlu0 %9814
    %9816 = vrot.lane.b32.xlu0 %v62, 95
    %v9817 = vpop.permute.xlu0 %9816
    %9818 = vrot.lane.b32.xlu0 %v101, 95
    %v9819 = vpop.permute.xlu0 %9818
    %9820 = vrot.lane.b32.xlu0 %v140, 95
    %v9821 = vpop.permute.xlu0 %9820
    %9822 = vrot.lane.b32.xlu0 %v63, 95
    %v9823 = vpop.permute.xlu0 %9822
    %9824 = vrot.lane.b32.xlu0 %v102, 95
    %v9825 = vpop.permute.xlu0 %9824
    %9826 = vrot.lane.b32.xlu0 %v141, 95
    %v9827 = vpop.permute.xlu0 %9826
    %9828 = vrot.lane.b32.xlu0 %v64, 95
    %v9829 = vpop.permute.xlu0 %9828
    %9830 = vrot.lane.b32.xlu0 %v103, 95
    %v9831 = vpop.permute.xlu0 %9830
    %9832 = vrot.lane.b32.xlu0 %v142, 95
    %v9833 = vpop.permute.xlu0 %9832
    %9834 = vrot.lane.b32.xlu0 %v65, 95
    %v9835 = vpop.permute.xlu0 %9834
    %9836 = vrot.lane.b32.xlu0 %v104, 95
    %v9837 = vpop.permute.xlu0 %9836
    %9838 = vrot.lane.b32.xlu0 %v143, 95
    %v9839 = vpop.permute.xlu0 %9838
    %9840 = vrot.lane.b32.xlu0 %v66, 95
    %v9841 = vpop.permute.xlu0 %9840
    %9842 = vrot.lane.b32.xlu0 %v105, 95
    %v9843 = vpop.permute.xlu0 %9842
    %9844 = vrot.lane.b32.xlu0 %v144, 95
    %v9845 = vpop.permute.xlu0 %9844
    %9846 = vrot.lane.b32.xlu0 %v67, 95
    %v9847 = vpop.permute.xlu0 %9846
    %9848 = vrot.lane.b32.xlu0 %v106, 95
    %v9849 = vpop.permute.xlu0 %9848
    %9850 = vrot.lane.b32.xlu0 %v145, 95
    %v9851 = vpop.permute.xlu0 %9850
    %9852 = vrot.lane.b32.xlu0 %v68, 95
    %v9853 = vpop.permute.xlu0 %9852
    %9854 = vrot.lane.b32.xlu0 %v107, 95
    %v9855 = vpop.permute.xlu0 %9854
    %9856 = vrot.lane.b32.xlu0 %v146, 95
    %v9857 = vpop.permute.xlu0 %9856
    %9858 = vrot.lane.b32.xlu0 %v69, 95
    %v9859 = vpop.permute.xlu0 %9858
    %9860 = vrot.lane.b32.xlu0 %v108, 95
    %v9861 = vpop.permute.xlu0 %9860
    %9862 = vrot.lane.b32.xlu0 %v147, 95
    %v9863 = vpop.permute.xlu0 %9862
    %9864 = vrot.lane.b32.xlu0 %v70, 95
    %v9865 = vpop.permute.xlu0 %9864
    %9866 = vrot.lane.b32.xlu0 %v109, 95
    %v9867 = vpop.permute.xlu0 %9866
    %9868 = vrot.lane.b32.xlu0 %v148, 95
    %v9869 = vpop.permute.xlu0 %9868
    %9870 = vrot.lane.b32.xlu0 %v71, 95
    %v9871 = vpop.permute.xlu0 %9870
    %9872 = vrot.lane.b32.xlu0 %v110, 95
    %v9873 = vpop.permute.xlu0 %9872
    %9874 = vrot.lane.b32.xlu0 %v149, 95
    %v9875 = vpop.permute.xlu0 %9874
    %9876 = vrot.lane.b32.xlu0 %v72, 95
    %v9877 = vpop.permute.xlu0 %9876
    %9878 = vrot.lane.b32.xlu0 %v111, 95
    %v9879 = vpop.permute.xlu0 %9878
    %9880 = vrot.lane.b32.xlu0 %v150, 95
    %v9881 = vpop.permute.xlu0 %9880
    %9882 = vrot.lane.b32.xlu0 %v73, 95
    %v9883 = vpop.permute.xlu0 %9882
    %9884 = vrot.lane.b32.xlu0 %v112, 95
    %v9885 = vpop.permute.xlu0 %9884
    %9886 = vrot.lane.b32.xlu0 %v151, 95
    %v9887 = vpop.permute.xlu0 %9886
    %9888 = vrot.lane.b32.xlu0 %v74, 95
    %v9889 = vpop.permute.xlu0 %9888
    %9890 = vrot.lane.b32.xlu0 %v113, 95
    %v9891 = vpop.permute.xlu0 %9890
    %9892 = vrot.lane.b32.xlu0 %v152, 95
    %v9893 = vpop.permute.xlu0 %9892
    %9894 = vrot.lane.b32.xlu0 %v75, 95
    %v9895 = vpop.permute.xlu0 %9894
    %9896 = vrot.lane.b32.xlu0 %v114, 95
    %v9897 = vpop.permute.xlu0 %9896
    %9898 = vrot.lane.b32.xlu0 %v153, 95
    %v9899 = vpop.permute.xlu0 %9898
    %9900 = vrot.lane.b32.xlu0 %v76, 95
    %v9901 = vpop.permute.xlu0 %9900
    %9902 = vrot.lane.b32.xlu0 %v115, 95
    %v9903 = vpop.permute.xlu0 %9902
    %9904 = vrot.lane.b32.xlu0 %v154, 95
    %v9905 = vpop.permute.xlu0 %9904
    %9906 = vrot.lane.b32.xlu0 %v77, 95
    %v9907 = vpop.permute.xlu0 %9906
    %9908 = vrot.lane.b32.xlu0 %v116, 95
    %v9909 = vpop.permute.xlu0 %9908
    %9910 = vrot.lane.b32.xlu0 %v155, 95
    %v9911 = vpop.permute.xlu0 %9910
    %9912 = vrot.lane.b32.xlu0 %v78, 95
    %v9913 = vpop.permute.xlu0 %9912
    %9914 = vrot.lane.b32.xlu0 %v117, 95
    %v9915 = vpop.permute.xlu0 %9914
    %9916 = vrot.lane.b32.xlu0 %v156, 95
    %v9917 = vpop.permute.xlu0 %9916
    %9918 = vrot.lane.b32.xlu0 %v79, 95
    %v9919 = vpop.permute.xlu0 %9918
    %9920 = vrot.lane.b32.xlu0 %v118, 95
    %v9921 = vpop.permute.xlu0 %9920
    %9922 = vrot.lane.b32.xlu0 %v157, 95
    %v9923 = vpop.permute.xlu0 %9922
    %9924 = vrot.lane.b32.xlu0 %v80, 95
    %v9925 = vpop.permute.xlu0 %9924
    %9926 = vrot.lane.b32.xlu0 %v119, 95
    %v9927 = vpop.permute.xlu0 %9926
    %9928 = vrot.lane.b32.xlu0 %v158, 95
    %v9929 = vpop.permute.xlu0 %9928
    %9930 = vrot.lane.b32.xlu0 %v81, 95
    %v9931 = vpop.permute.xlu0 %9930
    %9932 = vrot.lane.b32.xlu0 %v120, 95
    %v9933 = vpop.permute.xlu0 %9932
    %9934 = vrot.lane.b32.xlu0 %v159, 95
    %v9935 = vpop.permute.xlu0 %9934
    %9936 = vrot.lane.b32.xlu0 %v82, 95
    %v9937 = vpop.permute.xlu0 %9936
    %9938 = vrot.lane.b32.xlu0 %v121, 95
    %v9939 = vpop.permute.xlu0 %9938
    %9940 = vrot.lane.b32.xlu0 %v160, 95
    %v9941 = vpop.permute.xlu0 %9940
    %9942 = vrot.lane.b32.xlu0 %v83, 95
    %v9943 = vpop.permute.xlu0 %9942
    %9944 = vrot.lane.b32.xlu0 %v122, 95
    %v9945 = vpop.permute.xlu0 %9944
    %9946 = vrot.lane.b32.xlu0 %v161, 95
    %v9947 = vpop.permute.xlu0 %9946
    %9948 = vrot.lane.b32.xlu0 %v84, 95
    %v9949 = vpop.permute.xlu0 %9948
    %9950 = vrot.lane.b32.xlu0 %v123, 95
    %v9951 = vpop.permute.xlu0 %9950
    %9952 = vrot.lane.b32.xlu0 %v162, 95
    %v9953 = vpop.permute.xlu0 %9952
    %9954 = vrot.lane.b32.xlu0 %v85, 95
    %v9955 = vpop.permute.xlu0 %9954
    %9956 = vrot.lane.b32.xlu0 %v124, 95
    %v9957 = vpop.permute.xlu0 %9956
    %9958 = vrot.lane.b32.xlu0 %v163, 95
    %v9959 = vpop.permute.xlu0 %9958
    %9960 = vrot.lane.b32.xlu0 %v86, 95
    %v9961 = vpop.permute.xlu0 %9960
    %9962 = vrot.lane.b32.xlu0 %v125, 95
    %v9963 = vpop.permute.xlu0 %9962
    %9964 = vrot.lane.b32.xlu0 %v164, 95
    %v9965 = vpop.permute.xlu0 %9964
    %9966 = vrot.lane.b32.xlu0 %v87, 95
    %v9967 = vpop.permute.xlu0 %9966
    %9968 = vrot.lane.b32.xlu0 %v126, 95
    %v9969 = vpop.permute.xlu0 %9968
    %9970 = vrot.lane.b32.xlu0 %v165, 95
    %v9971 = vpop.permute.xlu0 %9970
    %9972 = vrot.lane.b32.xlu0 %v88, 95
    %v9973 = vpop.permute.xlu0 %9972
    %9974 = vrot.lane.b32.xlu0 %v127, 95
    %v9975 = vpop.permute.xlu0 %9974
    %9976 = vrot.lane.b32.xlu0 %v166, 95
    %v9977 = vpop.permute.xlu0 %9976
    %9978 = vrot.lane.b32.xlu0 %v89, 95
    %v9979 = vpop.permute.xlu0 %9978
    %9980 = vrot.lane.b32.xlu0 %v128, 95
    %v9981 = vpop.permute.xlu0 %9980
    %9982 = vrot.lane.b32.xlu0 %v167, 95
    %v9983 = vpop.permute.xlu0 %9982
    %9984 = vrot.lane.b32.xlu0 %v90, 95
    %v9985 = vpop.permute.xlu0 %9984
    %9986 = vrot.lane.b32.xlu0 %v129, 95
    %v9987 = vpop.permute.xlu0 %9986
    %9988 = vrot.lane.b32.xlu0 %v168, 95
    %v9989 = vpop.permute.xlu0 %9988
    %9990 = vrot.lane.b32.xlu0 %v91, 95
    %v9991 = vpop.permute.xlu0 %9990
    %9992 = vrot.lane.b32.xlu0 %v130, 95
    %v9993 = vpop.permute.xlu0 %9992
    %9994 = vrot.lane.b32.xlu0 %v169, 95
    %v9995 = vpop.permute.xlu0 %9994
    %9996 = vrot.lane.b32.xlu0 %v92, 95
    %v9997 = vpop.permute.xlu0 %9996
    %9998 = vrot.lane.b32.xlu0 %v131, 95
    %v9999 = vpop.permute.xlu0 %9998
    %10000 = vrot.lane.b32.xlu0 %v170, 95
    %v10001 = vpop.permute.xlu0 %10000
    %10002 = vrot.lane.b32.xlu0 %v93, 95
    %v10003 = vpop.permute.xlu0 %10002
    %10004 = vrot.lane.b32.xlu0 %v132, 95
    %v10005 = vpop.permute.xlu0 %10004
    %10006 = vrot.lane.b32.xlu0 %v171, 95
    %v10007 = vpop.permute.xlu0 %10006
    %10008 = vrot.lane.b32.xlu0 %v94, 95
    %v10009 = vpop.permute.xlu0 %10008
    %10010 = vrot.lane.b32.xlu0 %v133, 95
    %v10011 = vpop.permute.xlu0 %10010
    %10012 = vrot.lane.b32.xlu0 %v172, 95
    %v10013 = vpop.permute.xlu0 %10012
    %10014 = vrot.lane.b32.xlu0 %v95, 95
    %v10015 = vpop.permute.xlu0 %10014
    %10016 = vrot.lane.b32.xlu0 %v134, 95
    %v10017 = vpop.permute.xlu0 %10016
    %10018 = vrot.lane.b32.xlu0 %v173, 95
    %v10019 = vpop.permute.xlu0 %10018
    %10020 = vrot.lane.b32.xlu0 %v96, 95
    %v10021 = vpop.permute.xlu0 %10020
    %10022 = vrot.lane.b32.xlu0 %v135, 95
    %v10023 = vpop.permute.xlu0 %10022
    %10024 = vrot.lane.b32.xlu0 %v174, 95
    %v10025 = vpop.permute.xlu0 %10024
    %10026 = vrot.lane.b32.xlu0 %v97, 95
    %v10027 = vpop.permute.xlu0 %10026
    %10028 = vrot.lane.b32.xlu0 %v136, 95
    %v10029 = vpop.permute.xlu0 %10028
    %10030 = vrot.lane.b32.xlu0 %v175, 95
    %v10031 = vpop.permute.xlu0 %10030
    %10032 = vrot.lane.b32.xlu0 %v98, 95
    %v10033 = vpop.permute.xlu0 %10032
    %10034 = vrot.lane.b32.xlu0 %v137, 95
    %v10035 = vpop.permute.xlu0 %10034
    %10036 = vrot.lane.b32.xlu0 %v176, 95
    %v10037 = vpop.permute.xlu0 %10036
    %10038 = vrot.lane.b32.xlu0 %v99, 95
    %v10039 = vpop.permute.xlu0 %10038
    %10040 = vrot.lane.b32.xlu0 %v138, 95
    %v10041 = vpop.permute.xlu0 %10040
    %10042 = vrot.lane.b32.xlu0 %v177, 95
    %v10043 = vpop.permute.xlu0 %10042
    %vm10044 = vcmp.lt.s32.totalorder %v7165, 95
    %v10045 = vsel %vm10044, %v10033, %v10039
    %v10046 = vsel %vm10044, %v10035, %v10041
    %v10047 = vsel %vm10044, %v10037, %v10043
    %v10048 = vsel %vm10044, %v10027, %v10033
    %v10049 = vsel %vm10044, %v10029, %v10035
    %v10050 = vsel %vm10044, %v10031, %v10037
    %v10051 = vsel %vm10044, %v10021, %v10027
    %v10052 = vsel %vm10044, %v10023, %v10029
    %v10053 = vsel %vm10044, %v10025, %v10031
    %v10054 = vsel %vm10044, %v10015, %v10021
    %v10055 = vsel %vm10044, %v10017, %v10023
    %v10056 = vsel %vm10044, %v10019, %v10025
    %v10057 = vsel %vm10044, %v10009, %v10015
    %v10058 = vsel %vm10044, %v10011, %v10017
    %v10059 = vsel %vm10044, %v10013, %v10019
    %v10060 = vsel %vm10044, %v10003, %v10009
    %v10061 = vsel %vm10044, %v10005, %v10011
    %v10062 = vsel %vm10044, %v10007, %v10013
    %v10063 = vsel %vm10044, %v9997, %v10003
    %v10064 = vsel %vm10044, %v9999, %v10005
    %v10065 = vsel %vm10044, %v10001, %v10007
    %v10066 = vsel %vm10044, %v9991, %v9997
    %v10067 = vsel %vm10044, %v9993, %v9999
    %v10068 = vsel %vm10044, %v9995, %v10001
    %v10069 = vsel %vm10044, %v9985, %v9991
    %v10070 = vsel %vm10044, %v9987, %v9993
    %v10071 = vsel %vm10044, %v9989, %v9995
    %v10072 = vsel %vm10044, %v9979, %v9985
    %v10073 = vsel %vm10044, %v9981, %v9987
    %v10074 = vsel %vm10044, %v9983, %v9989
    %v10075 = vsel %vm10044, %v9973, %v9979
    %v10076 = vsel %vm10044, %v9975, %v9981
    %v10077 = vsel %vm10044, %v9977, %v9983
    %v10078 = vsel %vm10044, %v9967, %v9973
    %v10079 = vsel %vm10044, %v9969, %v9975
    %v10080 = vsel %vm10044, %v9971, %v9977
    %v10081 = vsel %vm10044, %v9961, %v9967
    %v10082 = vsel %vm10044, %v9963, %v9969
    %v10083 = vsel %vm10044, %v9965, %v9971
    %v10084 = vsel %vm10044, %v9955, %v9961
    %v10085 = vsel %vm10044, %v9957, %v9963
    %v10086 = vsel %vm10044, %v9959, %v9965
    %v10087 = vsel %vm10044, %v9949, %v9955
    %v10088 = vsel %vm10044, %v9951, %v9957
    %v10089 = vsel %vm10044, %v9953, %v9959
    %v10090 = vsel %vm10044, %v9943, %v9949
    %v10091 = vsel %vm10044, %v9945, %v9951
    %v10092 = vsel %vm10044, %v9947, %v9953
    %v10093 = vsel %vm10044, %v9937, %v9943
    %v10094 = vsel %vm10044, %v9939, %v9945
    %v10095 = vsel %vm10044, %v9941, %v9947
    %v10096 = vsel %vm10044, %v9931, %v9937
    %v10097 = vsel %vm10044, %v9933, %v9939
    %v10098 = vsel %vm10044, %v9935, %v9941
    %v10099 = vsel %vm10044, %v9925, %v9931
    %v10100 = vsel %vm10044, %v9927, %v9933
    %v10101 = vsel %vm10044, %v9929, %v9935
    %v10102 = vsel %vm10044, %v9919, %v9925
    %v10103 = vsel %vm10044, %v9921, %v9927
    %v10104 = vsel %vm10044, %v9923, %v9929
    %v10105 = vsel %vm10044, %v9913, %v9919
    %v10106 = vsel %vm10044, %v9915, %v9921
    %v10107 = vsel %vm10044, %v9917, %v9923
    %v10108 = vsel %vm10044, %v9907, %v9913
    %v10109 = vsel %vm10044, %v9909, %v9915
    %v10110 = vsel %vm10044, %v9911, %v9917
    %v10111 = vsel %vm10044, %v9901, %v9907
    %v10112 = vsel %vm10044, %v9903, %v9909
    %v10113 = vsel %vm10044, %v9905, %v9911
    %v10114 = vsel %vm10044, %v9895, %v9901
    %v10115 = vsel %vm10044, %v9897, %v9903
    %v10116 = vsel %vm10044, %v9899, %v9905
    %v10117 = vsel %vm10044, %v9889, %v9895
    %v10118 = vsel %vm10044, %v9891, %v9897
    %v10119 = vsel %vm10044, %v9893, %v9899
    %v10120 = vsel %vm10044, %v9883, %v9889
    %v10121 = vsel %vm10044, %v9885, %v9891
    %v10122 = vsel %vm10044, %v9887, %v9893
    %v10123 = vsel %vm10044, %v9877, %v9883
    %v10124 = vsel %vm10044, %v9879, %v9885
    %v10125 = vsel %vm10044, %v9881, %v9887
    %v10126 = vsel %vm10044, %v9871, %v9877
    %v10127 = vsel %vm10044, %v9873, %v9879
    %v10128 = vsel %vm10044, %v9875, %v9881
    %v10129 = vsel %vm10044, %v9865, %v9871
    %v10130 = vsel %vm10044, %v9867, %v9873
    %v10131 = vsel %vm10044, %v9869, %v9875
    %v10132 = vsel %vm10044, %v9859, %v9865
    %v10133 = vsel %vm10044, %v9861, %v9867
    %v10134 = vsel %vm10044, %v9863, %v9869
    %v10135 = vsel %vm10044, %v9853, %v9859
    %v10136 = vsel %vm10044, %v9855, %v9861
    %v10137 = vsel %vm10044, %v9857, %v9863
    %v10138 = vsel %vm10044, %v9847, %v9853
    %v10139 = vsel %vm10044, %v9849, %v9855
    %v10140 = vsel %vm10044, %v9851, %v9857
    %v10141 = vsel %vm10044, %v9841, %v9847
    %v10142 = vsel %vm10044, %v9843, %v9849
    %v10143 = vsel %vm10044, %v9845, %v9851
    %v10144 = vsel %vm10044, %v9835, %v9841
    %v10145 = vsel %vm10044, %v9837, %v9843
    %v10146 = vsel %vm10044, %v9839, %v9845
    %v10147 = vsel %vm10044, %v9829, %v9835
    %v10148 = vsel %vm10044, %v9831, %v9837
    %v10149 = vsel %vm10044, %v9833, %v9839
    %v10150 = vsel %vm10044, %v9823, %v9829
    %v10151 = vsel %vm10044, %v9825, %v9831
    %v10152 = vsel %vm10044, %v9827, %v9833
    %v10153 = vsel %vm10044, %v9817, %v9823
    %v10154 = vsel %vm10044, %v9819, %v9825
    %v10155 = vsel %vm10044, %v9821, %v9827
    %v10156 = vsel %vm10044, %v9811, %v9817
    %v10157 = vsel %vm10044, %v9813, %v9819
    %v10158 = vsel %vm10044, %v9815, %v9821
    %v10159 = vsel %vm10044, %v10039, %v9811
    %v10160 = vsel %vm10044, %v10041, %v9813
    %v10161 = vsel %vm10044, %v10043, %v9815
    %v10162 = vsub.f32 %v61, %v10150
    %v10163 = vsub.f32 %v62, %v10147
    %v10164 = vsub.f32 %v63, %v10144
    %v10165 = vsub.f32 %v64, %v10141
    %v10166 = vsub.f32 %v65, %v10138
    %v10167 = vsub.f32 %v66, %v10135
    %v10168 = vsub.f32 %v67, %v10132
    %v10169 = vsub.f32 %v68, %v10129
    %v10170 = vsub.f32 %v69, %v10126
    %v10171 = vsub.f32 %v70, %v10123
    %v10172 = vsub.f32 %v71, %v10120
    %v10173 = vsub.f32 %v72, %v10117
    %v10174 = vsub.f32 %v73, %v10114
    %v10175 = vsub.f32 %v74, %v10111
    %v10176 = vsub.f32 %v75, %v10108
    %v10177 = vsub.f32 %v76, %v10105
    %v10178 = vsub.f32 %v77, %v10102
    %v10179 = vsub.f32 %v78, %v10099
    %v10180 = vsub.f32 %v79, %v10096
    %v10181 = vsub.f32 %v80, %v10093
    %v10182 = vsub.f32 %v81, %v10090
    %v10183 = vsub.f32 %v82, %v10087
    %v10184 = vsub.f32 %v83, %v10084
    %v10185 = vsub.f32 %v84, %v10081
    %v10186 = vsub.f32 %v85, %v10078
    %v10187 = vsub.f32 %v86, %v10075
    %v10188 = vsub.f32 %v87, %v10072
    %v10189 = vsub.f32 %v88, %v10069
    %v10190 = vsub.f32 %v89, %v10066
    %v10191 = vsub.f32 %v90, %v10063
    %v10192 = vsub.f32 %v91, %v10060
    %v10193 = vsub.f32 %v92, %v10057
    %v10194 = vsub.f32 %v93, %v10054
    %v10195 = vsub.f32 %v94, %v10051
    %v10196 = vsub.f32 %v95, %v10048
    %v10197 = vsub.f32 %v96, %v10045
    %v10198 = vsub.f32 %v97, %v10159
    %v10199 = vsub.f32 %v98, %v10156
    %v10200 = vsub.f32 %v99, %v10153
    %v10201 = vsub.f32 %v100, %v10151
    %v10202 = vsub.f32 %v101, %v10148
    %v10203 = vsub.f32 %v102, %v10145
    %v10204 = vsub.f32 %v103, %v10142
    %v10205 = vsub.f32 %v104, %v10139
    %v10206 = vsub.f32 %v105, %v10136
    %v10207 = vsub.f32 %v106, %v10133
    %v10208 = vsub.f32 %v107, %v10130
    %v10209 = vsub.f32 %v108, %v10127
    %v10210 = vsub.f32 %v109, %v10124
    %v10211 = vsub.f32 %v110, %v10121
    %v10212 = vsub.f32 %v111, %v10118
    %v10213 = vsub.f32 %v112, %v10115
    %v10214 = vsub.f32 %v113, %v10112
    %v10215 = vsub.f32 %v114, %v10109
    %v10216 = vsub.f32 %v115, %v10106
    %v10217 = vsub.f32 %v116, %v10103
    %v10218 = vsub.f32 %v117, %v10100
    %v10219 = vsub.f32 %v118, %v10097
    %v10220 = vsub.f32 %v119, %v10094
    %v10221 = vsub.f32 %v120, %v10091
    %v10222 = vsub.f32 %v121, %v10088
    %v10223 = vsub.f32 %v122, %v10085
    %v10224 = vsub.f32 %v123, %v10082
    %v10225 = vsub.f32 %v124, %v10079
    %v10226 = vsub.f32 %v125, %v10076
    %v10227 = vsub.f32 %v126, %v10073
    %v10228 = vsub.f32 %v127, %v10070
    %v10229 = vsub.f32 %v128, %v10067
    %v10230 = vsub.f32 %v129, %v10064
    %v10231 = vsub.f32 %v130, %v10061
    %v10232 = vsub.f32 %v131, %v10058
    %v10233 = vsub.f32 %v132, %v10055
    %v10234 = vsub.f32 %v133, %v10052
    %v10235 = vsub.f32 %v134, %v10049
    %v10236 = vsub.f32 %v135, %v10046
    %v10237 = vsub.f32 %v136, %v10160
    %v10238 = vsub.f32 %v137, %v10157
    %v10239 = vsub.f32 %v138, %v10154
    %v10240 = vsub.f32 %v139, %v10152
    %v10241 = vsub.f32 %v140, %v10149
    %v10242 = vsub.f32 %v141, %v10146
    %v10243 = vsub.f32 %v142, %v10143
    %v10244 = vsub.f32 %v143, %v10140
    %v10245 = vsub.f32 %v144, %v10137
    %v10246 = vsub.f32 %v145, %v10134
    %v10247 = vsub.f32 %v146, %v10131
    %v10248 = vsub.f32 %v147, %v10128
    %v10249 = vsub.f32 %v148, %v10125
    %v10250 = vsub.f32 %v149, %v10122
    %v10251 = vsub.f32 %v150, %v10119
    %v10252 = vsub.f32 %v151, %v10116
    %v10253 = vsub.f32 %v152, %v10113
    %v10254 = vsub.f32 %v153, %v10110
    %v10255 = vsub.f32 %v154, %v10107
    %v10256 = vsub.f32 %v155, %v10104
    %v10257 = vsub.f32 %v156, %v10101
    %v10258 = vsub.f32 %v157, %v10098
    %v10259 = vsub.f32 %v158, %v10095
    %v10260 = vsub.f32 %v159, %v10092
    %v10261 = vsub.f32 %v160, %v10089
    %v10262 = vsub.f32 %v161, %v10086
    %v10263 = vsub.f32 %v162, %v10083
    %v10264 = vsub.f32 %v163, %v10080
    %v10265 = vsub.f32 %v164, %v10077
    %v10266 = vsub.f32 %v165, %v10074
    %v10267 = vsub.f32 %v166, %v10071
    %v10268 = vsub.f32 %v167, %v10068
    %v10269 = vsub.f32 %v168, %v10065
    %v10270 = vsub.f32 %v169, %v10062
    %v10271 = vsub.f32 %v170, %v10059
    %v10272 = vsub.f32 %v171, %v10056
    %v10273 = vsub.f32 %v172, %v10053
    %v10274 = vsub.f32 %v173, %v10050
    %v10275 = vsub.f32 %v174, %v10047
    %v10276 = vsub.f32 %v175, %v10161
    %v10277 = vsub.f32 %v176, %v10158
    %v10278 = vsub.f32 %v177, %v10155
    %s10279 = scalar_lea.vmem [#allocation7], 2
    %v10280 = vld [vmem:[%s10279] ss:$4 sm:$0xff]
    %s10281 = scalar_lea.vmem [#allocation7], 34
    %v10282 = vld [vmem:[%s10281] ss:$4 sm:$0xff]
    %s10283 = scalar_lea.vmem [#allocation7], 66
    %v10284 = vld [vmem:[%s10283] ss:$4 sm:$0xff]
    %s10285 = scalar_lea.vmem [#allocation7], 98
    %v10286 = vld [vmem:[%s10285] ss:$4 sm:$0xff]
    %s10287 = scalar_lea.vmem [#allocation7], 130
    %v10288 = vld [vmem:[%s10287] ss:$4 sm:$0xff]
    %v10294 = vperm.slane %v10280, 0
    %v10295 = vperm.slane %v10280, 1
    %v10296 = vperm.slane %v10280, 2
    %v10297 = vperm.slane %v10280, 3
    %v10298 = vperm.slane %v10280, 4
    %v10299 = vperm.slane %v10280, 5
    %v10300 = vperm.slane %v10280, 6
    %v10301 = vperm.slane %v10280, 7
    %v10302 = vperm.slane %v10282, 0
    %v10303 = vperm.slane %v10282, 1
    %v10304 = vperm.slane %v10282, 2
    %v10305 = vperm.slane %v10282, 3
    %v10306 = vperm.slane %v10282, 4
    %v10307 = vperm.slane %v10282, 5
    %v10308 = vperm.slane %v10282, 6
    %v10309 = vperm.slane %v10282, 7
    %v10310 = vperm.slane %v10284, 0
    %v10311 = vperm.slane %v10284, 1
    %v10312 = vperm.slane %v10284, 2
    %v10313 = vperm.slane %v10284, 3
    %v10314 = vperm.slane %v10284, 4
    %v10315 = vperm.slane %v10284, 5
    %v10316 = vperm.slane %v10284, 6
    %v10317 = vperm.slane %v10284, 7
    %v10318 = vperm.slane %v10286, 0
    %v10319 = vperm.slane %v10286, 1
    %v10320 = vperm.slane %v10286, 2
    %v10321 = vperm.slane %v10286, 3
    %v10322 = vperm.slane %v10286, 4
    %v10323 = vperm.slane %v10286, 5
    %v10324 = vperm.slane %v10286, 6
    %v10325 = vperm.slane %v10286, 7
    %v10326 = vperm.slane %v10288, 0
    %v10327 = vperm.slane %v10288, 1
    %v10328 = vperm.slane %v10288, 2
    %v10329 = vperm.slane %v10288, 3
    %v10330 = vperm.slane %v10288, 4
    %v10331 = vperm.slane %v10288, 5
    %v10332 = vperm.slane %v10288, 6
    %v10372 = vmul.f32 %v10294, %v10162
    %v10373 = vmul.f32 %v10295, %v10163
    %v10374 = vmul.f32 %v10296, %v10164
    %v10375 = vmul.f32 %v10297, %v10165
    %v10376 = vmul.f32 %v10298, %v10166
    %v10377 = vmul.f32 %v10299, %v10167
    %v10378 = vmul.f32 %v10300, %v10168
    %v10379 = vmul.f32 %v10301, %v10169
    %v10380 = vmul.f32 %v10302, %v10170
    %v10381 = vmul.f32 %v10303, %v10171
    %v10382 = vmul.f32 %v10304, %v10172
    %v10383 = vmul.f32 %v10305, %v10173
    %v10384 = vmul.f32 %v10306, %v10174
    %v10385 = vmul.f32 %v10307, %v10175
    %v10386 = vmul.f32 %v10308, %v10176
    %v10387 = vmul.f32 %v10309, %v10177
    %v10388 = vmul.f32 %v10310, %v10178
    %v10389 = vmul.f32 %v10311, %v10179
    %v10390 = vmul.f32 %v10312, %v10180
    %v10391 = vmul.f32 %v10313, %v10181
    %v10392 = vmul.f32 %v10314, %v10182
    %v10393 = vmul.f32 %v10315, %v10183
    %v10394 = vmul.f32 %v10316, %v10184
    %v10395 = vmul.f32 %v10317, %v10185
    %v10396 = vmul.f32 %v10318, %v10186
    %v10397 = vmul.f32 %v10319, %v10187
    %v10398 = vmul.f32 %v10320, %v10188
    %v10399 = vmul.f32 %v10321, %v10189
    %v10400 = vmul.f32 %v10322, %v10190
    %v10401 = vmul.f32 %v10323, %v10191
    %v10402 = vmul.f32 %v10324, %v10192
    %v10403 = vmul.f32 %v10325, %v10193
    %v10404 = vmul.f32 %v10326, %v10194
    %v10405 = vmul.f32 %v10327, %v10195
    %v10406 = vmul.f32 %v10328, %v10196
    %v10407 = vmul.f32 %v10329, %v10197
    %v10408 = vmul.f32 %v10330, %v10198
    %v10409 = vmul.f32 %v10331, %v10199
    %v10410 = vmul.f32 %v10332, %v10200
    %v10411 = vmul.f32 %v10294, %v10201
    %v10412 = vmul.f32 %v10295, %v10202
    %v10413 = vmul.f32 %v10296, %v10203
    %v10414 = vmul.f32 %v10297, %v10204
    %v10415 = vmul.f32 %v10298, %v10205
    %v10416 = vmul.f32 %v10299, %v10206
    %v10417 = vmul.f32 %v10300, %v10207
    %v10418 = vmul.f32 %v10301, %v10208
    %v10419 = vmul.f32 %v10302, %v10209
    %v10420 = vmul.f32 %v10303, %v10210
    %v10421 = vmul.f32 %v10304, %v10211
    %v10422 = vmul.f32 %v10305, %v10212
    %v10423 = vmul.f32 %v10306, %v10213
    %v10424 = vmul.f32 %v10307, %v10214
    %v10425 = vmul.f32 %v10308, %v10215
    %v10426 = vmul.f32 %v10309, %v10216
    %v10427 = vmul.f32 %v10310, %v10217
    %v10428 = vmul.f32 %v10311, %v10218
    %v10429 = vmul.f32 %v10312, %v10219
    %v10430 = vmul.f32 %v10313, %v10220
    %v10431 = vmul.f32 %v10314, %v10221
    %v10432 = vmul.f32 %v10315, %v10222
    %v10433 = vmul.f32 %v10316, %v10223
    %v10434 = vmul.f32 %v10317, %v10224
    %v10435 = vmul.f32 %v10318, %v10225
    %v10436 = vmul.f32 %v10319, %v10226
    %v10437 = vmul.f32 %v10320, %v10227
    %v10438 = vmul.f32 %v10321, %v10228
    %v10439 = vmul.f32 %v10322, %v10229
    %v10440 = vmul.f32 %v10323, %v10230
    %v10441 = vmul.f32 %v10324, %v10231
    %v10442 = vmul.f32 %v10325, %v10232
    %v10443 = vmul.f32 %v10326, %v10233
    %v10444 = vmul.f32 %v10327, %v10234
    %v10445 = vmul.f32 %v10328, %v10235
    %v10446 = vmul.f32 %v10329, %v10236
    %v10447 = vmul.f32 %v10330, %v10237
    %v10448 = vmul.f32 %v10331, %v10238
    %v10449 = vmul.f32 %v10332, %v10239
    %v10450 = vmul.f32 %v10294, %v10240
    %v10451 = vmul.f32 %v10295, %v10241
    %v10452 = vmul.f32 %v10296, %v10242
    %v10453 = vmul.f32 %v10297, %v10243
    %v10454 = vmul.f32 %v10298, %v10244
    %v10455 = vmul.f32 %v10299, %v10245
    %v10456 = vmul.f32 %v10300, %v10246
    %v10457 = vmul.f32 %v10301, %v10247
    %v10458 = vmul.f32 %v10302, %v10248
    %v10459 = vmul.f32 %v10303, %v10249
    %v10460 = vmul.f32 %v10304, %v10250
    %v10461 = vmul.f32 %v10305, %v10251
    %v10462 = vmul.f32 %v10306, %v10252
    %v10463 = vmul.f32 %v10307, %v10253
    %v10464 = vmul.f32 %v10308, %v10254
    %v10465 = vmul.f32 %v10309, %v10255
    %v10466 = vmul.f32 %v10310, %v10256
    %v10467 = vmul.f32 %v10311, %v10257
    %v10468 = vmul.f32 %v10312, %v10258
    %v10469 = vmul.f32 %v10313, %v10259
    %v10470 = vmul.f32 %v10314, %v10260
    %v10471 = vmul.f32 %v10315, %v10261
    %v10472 = vmul.f32 %v10316, %v10262
    %v10473 = vmul.f32 %v10317, %v10263
    %v10474 = vmul.f32 %v10318, %v10264
    %v10475 = vmul.f32 %v10319, %v10265
    %v10476 = vmul.f32 %v10320, %v10266
    %v10477 = vmul.f32 %v10321, %v10267
    %v10478 = vmul.f32 %v10322, %v10268
    %v10479 = vmul.f32 %v10323, %v10269
    %v10480 = vmul.f32 %v10324, %v10270
    %v10481 = vmul.f32 %v10325, %v10271
    %v10482 = vmul.f32 %v10326, %v10272
    %v10483 = vmul.f32 %v10327, %v10273
    %v10484 = vmul.f32 %v10328, %v10274
    %v10485 = vmul.f32 %v10329, %v10275
    %v10486 = vmul.f32 %v10330, %v10276
    %v10487 = vmul.f32 %v10331, %v10277
    %v10488 = vmul.f32 %v10332, %v10278
    %v10489 = vmax.f32 %v10372, 0.0
    %v10490 = vmax.f32 %v10373, 0.0
    %v10491 = vmax.f32 %v10374, 0.0
    %v10492 = vmax.f32 %v10375, 0.0
    %v10493 = vmax.f32 %v10376, 0.0
    %v10494 = vmax.f32 %v10377, 0.0
    %v10495 = vmax.f32 %v10378, 0.0
    %v10496 = vmax.f32 %v10379, 0.0
    %v10497 = vmax.f32 %v10380, 0.0
    %v10498 = vmax.f32 %v10381, 0.0
    %v10499 = vmax.f32 %v10382, 0.0
    %v10500 = vmax.f32 %v10383, 0.0
    %v10501 = vmax.f32 %v10384, 0.0
    %v10502 = vmax.f32 %v10385, 0.0
    %v10503 = vmax.f32 %v10386, 0.0
    %v10504 = vmax.f32 %v10387, 0.0
    %v10505 = vmax.f32 %v10388, 0.0
    %v10506 = vmax.f32 %v10389, 0.0
    %v10507 = vmax.f32 %v10390, 0.0
    %v10508 = vmax.f32 %v10391, 0.0
    %v10509 = vmax.f32 %v10392, 0.0
    %v10510 = vmax.f32 %v10393, 0.0
    %v10511 = vmax.f32 %v10394, 0.0
    %v10512 = vmax.f32 %v10395, 0.0
    %v10513 = vmax.f32 %v10396, 0.0
    %v10514 = vmax.f32 %v10397, 0.0
    %v10515 = vmax.f32 %v10398, 0.0
    %v10516 = vmax.f32 %v10399, 0.0
    %v10517 = vmax.f32 %v10400, 0.0
    %v10518 = vmax.f32 %v10401, 0.0
    %v10519 = vmax.f32 %v10402, 0.0
    %v10520 = vmax.f32 %v10403, 0.0
    %v10521 = vmax.f32 %v10404, 0.0
    %v10522 = vmax.f32 %v10405, 0.0
    %v10523 = vmax.f32 %v10406, 0.0
    %v10524 = vmax.f32 %v10407, 0.0
    %v10525 = vmax.f32 %v10408, 0.0
    %v10526 = vmax.f32 %v10409, 0.0
    %v10527 = vmax.f32 %v10410, 0.0
    %v10528 = vmax.f32 %v10411, 0.0
    %v10529 = vmax.f32 %v10412, 0.0
    %v10530 = vmax.f32 %v10413, 0.0
    %v10531 = vmax.f32 %v10414, 0.0
    %v10532 = vmax.f32 %v10415, 0.0
    %v10533 = vmax.f32 %v10416, 0.0
    %v10534 = vmax.f32 %v10417, 0.0
    %v10535 = vmax.f32 %v10418, 0.0
    %v10536 = vmax.f32 %v10419, 0.0
    %v10537 = vmax.f32 %v10420, 0.0
    %v10538 = vmax.f32 %v10421, 0.0
    %v10539 = vmax.f32 %v10422, 0.0
    %v10540 = vmax.f32 %v10423, 0.0
    %v10541 = vmax.f32 %v10424, 0.0
    %v10542 = vmax.f32 %v10425, 0.0
    %v10543 = vmax.f32 %v10426, 0.0
    %v10544 = vmax.f32 %v10427, 0.0
    %v10545 = vmax.f32 %v10428, 0.0
    %v10546 = vmax.f32 %v10429, 0.0
    %v10547 = vmax.f32 %v10430, 0.0
    %v10548 = vmax.f32 %v10431, 0.0
    %v10549 = vmax.f32 %v10432, 0.0
    %v10550 = vmax.f32 %v10433, 0.0
    %v10551 = vmax.f32 %v10434, 0.0
    %v10552 = vmax.f32 %v10435, 0.0
    %v10553 = vmax.f32 %v10436, 0.0
    %v10554 = vmax.f32 %v10437, 0.0
    %v10555 = vmax.f32 %v10438, 0.0
    %v10556 = vmax.f32 %v10439, 0.0
    %v10557 = vmax.f32 %v10440, 0.0
    %v10558 = vmax.f32 %v10441, 0.0
    %v10559 = vmax.f32 %v10442, 0.0
    %v10560 = vmax.f32 %v10443, 0.0
    %v10561 = vmax.f32 %v10444, 0.0
    %v10562 = vmax.f32 %v10445, 0.0
    %v10563 = vmax.f32 %v10446, 0.0
    %v10564 = vmax.f32 %v10447, 0.0
    %v10565 = vmax.f32 %v10448, 0.0
    %v10566 = vmax.f32 %v10449, 0.0
    %v10567 = vmax.f32 %v10450, 0.0
    %v10568 = vmax.f32 %v10451, 0.0
    %v10569 = vmax.f32 %v10452, 0.0
    %v10570 = vmax.f32 %v10453, 0.0
    %v10571 = vmax.f32 %v10454, 0.0
    %v10572 = vmax.f32 %v10455, 0.0
    %v10573 = vmax.f32 %v10456, 0.0
    %v10574 = vmax.f32 %v10457, 0.0
    %v10575 = vmax.f32 %v10458, 0.0
    %v10576 = vmax.f32 %v10459, 0.0
    %v10577 = vmax.f32 %v10460, 0.0
    %v10578 = vmax.f32 %v10461, 0.0
    %v10579 = vmax.f32 %v10462, 0.0
    %v10580 = vmax.f32 %v10463, 0.0
    %v10581 = vmax.f32 %v10464, 0.0
    %v10582 = vmax.f32 %v10465, 0.0
    %v10583 = vmax.f32 %v10466, 0.0
    %v10584 = vmax.f32 %v10467, 0.0
    %v10585 = vmax.f32 %v10468, 0.0
    %v10586 = vmax.f32 %v10469, 0.0
    %v10587 = vmax.f32 %v10470, 0.0
    %v10588 = vmax.f32 %v10471, 0.0
    %v10589 = vmax.f32 %v10472, 0.0
    %v10590 = vmax.f32 %v10473, 0.0
    %v10591 = vmax.f32 %v10474, 0.0
    %v10592 = vmax.f32 %v10475, 0.0
    %v10593 = vmax.f32 %v10476, 0.0
    %v10594 = vmax.f32 %v10477, 0.0
    %v10595 = vmax.f32 %v10478, 0.0
    %v10596 = vmax.f32 %v10479, 0.0
    %v10597 = vmax.f32 %v10480, 0.0
    %v10598 = vmax.f32 %v10481, 0.0
    %v10599 = vmax.f32 %v10482, 0.0
    %v10600 = vmax.f32 %v10483, 0.0
    %v10601 = vmax.f32 %v10484, 0.0
    %v10602 = vmax.f32 %v10485, 0.0
    %v10603 = vmax.f32 %v10486, 0.0
    %v10604 = vmax.f32 %v10487, 0.0
    %v10605 = vmax.f32 %v10488, 0.0
    %v10606 = vmul.f32 %v10372, %v10162
    %v10607 = vmul.f32 %v10373, %v10163
    %v10608 = vmul.f32 %v10374, %v10164
    %v10609 = vmul.f32 %v10375, %v10165
    %v10610 = vmul.f32 %v10376, %v10166
    %v10611 = vmul.f32 %v10377, %v10167
    %v10612 = vmul.f32 %v10378, %v10168
    %v10613 = vmul.f32 %v10379, %v10169
    %v10614 = vmul.f32 %v10380, %v10170
    %v10615 = vmul.f32 %v10381, %v10171
    %v10616 = vmul.f32 %v10382, %v10172
    %v10617 = vmul.f32 %v10383, %v10173
    %v10618 = vmul.f32 %v10384, %v10174
    %v10619 = vmul.f32 %v10385, %v10175
    %v10620 = vmul.f32 %v10386, %v10176
    %v10621 = vmul.f32 %v10387, %v10177
    %v10622 = vmul.f32 %v10388, %v10178
    %v10623 = vmul.f32 %v10389, %v10179
    %v10624 = vmul.f32 %v10390, %v10180
    %v10625 = vmul.f32 %v10391, %v10181
    %v10626 = vmul.f32 %v10392, %v10182
    %v10627 = vmul.f32 %v10393, %v10183
    %v10628 = vmul.f32 %v10394, %v10184
    %v10629 = vmul.f32 %v10395, %v10185
    %v10630 = vmul.f32 %v10396, %v10186
    %v10631 = vmul.f32 %v10397, %v10187
    %v10632 = vmul.f32 %v10398, %v10188
    %v10633 = vmul.f32 %v10399, %v10189
    %v10634 = vmul.f32 %v10400, %v10190
    %v10635 = vmul.f32 %v10401, %v10191
    %v10636 = vmul.f32 %v10402, %v10192
    %v10637 = vmul.f32 %v10403, %v10193
    %v10638 = vmul.f32 %v10404, %v10194
    %v10639 = vmul.f32 %v10405, %v10195
    %v10640 = vmul.f32 %v10406, %v10196
    %v10641 = vmul.f32 %v10407, %v10197
    %v10642 = vmul.f32 %v10408, %v10198
    %v10643 = vmul.f32 %v10409, %v10199
    %v10644 = vmul.f32 %v10410, %v10200
    %v10645 = vmul.f32 %v10411, %v10201
    %v10646 = vmul.f32 %v10412, %v10202
    %v10647 = vmul.f32 %v10413, %v10203
    %v10648 = vmul.f32 %v10414, %v10204
    %v10649 = vmul.f32 %v10415, %v10205
    %v10650 = vmul.f32 %v10416, %v10206
    %v10651 = vmul.f32 %v10417, %v10207
    %v10652 = vmul.f32 %v10418, %v10208
    %v10653 = vmul.f32 %v10419, %v10209
    %v10654 = vmul.f32 %v10420, %v10210
    %v10655 = vmul.f32 %v10421, %v10211
    %v10656 = vmul.f32 %v10422, %v10212
    %v10657 = vmul.f32 %v10423, %v10213
    %v10658 = vmul.f32 %v10424, %v10214
    %v10659 = vmul.f32 %v10425, %v10215
    %v10660 = vmul.f32 %v10426, %v10216
    %v10661 = vmul.f32 %v10427, %v10217
    %v10662 = vmul.f32 %v10428, %v10218
    %v10663 = vmul.f32 %v10429, %v10219
    %v10664 = vmul.f32 %v10430, %v10220
    %v10665 = vmul.f32 %v10431, %v10221
    %v10666 = vmul.f32 %v10432, %v10222
    %v10667 = vmul.f32 %v10433, %v10223
    %v10668 = vmul.f32 %v10434, %v10224
    %v10669 = vmul.f32 %v10435, %v10225
    %v10670 = vmul.f32 %v10436, %v10226
    %v10671 = vmul.f32 %v10437, %v10227
    %v10672 = vmul.f32 %v10438, %v10228
    %v10673 = vmul.f32 %v10439, %v10229
    %v10674 = vmul.f32 %v10440, %v10230
    %v10675 = vmul.f32 %v10441, %v10231
    %v10676 = vmul.f32 %v10442, %v10232
    %v10677 = vmul.f32 %v10443, %v10233
    %v10678 = vmul.f32 %v10444, %v10234
    %v10679 = vmul.f32 %v10445, %v10235
    %v10680 = vmul.f32 %v10446, %v10236
    %v10681 = vmul.f32 %v10447, %v10237
    %v10682 = vmul.f32 %v10448, %v10238
    %v10683 = vmul.f32 %v10449, %v10239
    %v10684 = vmul.f32 %v10450, %v10240
    %v10685 = vmul.f32 %v10451, %v10241
    %v10686 = vmul.f32 %v10452, %v10242
    %v10687 = vmul.f32 %v10453, %v10243
    %v10688 = vmul.f32 %v10454, %v10244
    %v10689 = vmul.f32 %v10455, %v10245
    %v10690 = vmul.f32 %v10456, %v10246
    %v10691 = vmul.f32 %v10457, %v10247
    %v10692 = vmul.f32 %v10458, %v10248
    %v10693 = vmul.f32 %v10459, %v10249
    %v10694 = vmul.f32 %v10460, %v10250
    %v10695 = vmul.f32 %v10461, %v10251
    %v10696 = vmul.f32 %v10462, %v10252
    %v10697 = vmul.f32 %v10463, %v10253
    %v10698 = vmul.f32 %v10464, %v10254
    %v10699 = vmul.f32 %v10465, %v10255
    %v10700 = vmul.f32 %v10466, %v10256
    %v10701 = vmul.f32 %v10467, %v10257
    %v10702 = vmul.f32 %v10468, %v10258
    %v10703 = vmul.f32 %v10469, %v10259
    %v10704 = vmul.f32 %v10470, %v10260
    %v10705 = vmul.f32 %v10471, %v10261
    %v10706 = vmul.f32 %v10472, %v10262
    %v10707 = vmul.f32 %v10473, %v10263
    %v10708 = vmul.f32 %v10474, %v10264
    %v10709 = vmul.f32 %v10475, %v10265
    %v10710 = vmul.f32 %v10476, %v10266
    %v10711 = vmul.f32 %v10477, %v10267
    %v10712 = vmul.f32 %v10478, %v10268
    %v10713 = vmul.f32 %v10479, %v10269
    %v10714 = vmul.f32 %v10480, %v10270
    %v10715 = vmul.f32 %v10481, %v10271
    %v10716 = vmul.f32 %v10482, %v10272
    %v10717 = vmul.f32 %v10483, %v10273
    %v10718 = vmul.f32 %v10484, %v10274
    %v10719 = vmul.f32 %v10485, %v10275
    %v10720 = vmul.f32 %v10486, %v10276
    %v10721 = vmul.f32 %v10487, %v10277
    %v10722 = vmul.f32 %v10488, %v10278
    %v10723 = vmul.f32 %v10606, 0.0001
    %v10724 = vmul.f32 %v10607, 0.0001
    %v10725 = vmul.f32 %v10608, 0.0001
    %v10726 = vmul.f32 %v10609, 0.0001
    %v10727 = vmul.f32 %v10610, 0.0001
    %v10728 = vmul.f32 %v10611, 0.0001
    %v10729 = vmul.f32 %v10612, 0.0001
    %v10730 = vmul.f32 %v10613, 0.0001
    %v10731 = vmul.f32 %v10614, 0.0001
    %v10732 = vmul.f32 %v10615, 0.0001
    %v10733 = vmul.f32 %v10616, 0.0001
    %v10734 = vmul.f32 %v10617, 0.0001
    %v10735 = vmul.f32 %v10618, 0.0001
    %v10736 = vmul.f32 %v10619, 0.0001
    %v10737 = vmul.f32 %v10620, 0.0001
    %v10738 = vmul.f32 %v10621, 0.0001
    %v10739 = vmul.f32 %v10622, 0.0001
    %v10740 = vmul.f32 %v10623, 0.0001
    %v10741 = vmul.f32 %v10624, 0.0001
    %v10742 = vmul.f32 %v10625, 0.0001
    %v10743 = vmul.f32 %v10626, 0.0001
    %v10744 = vmul.f32 %v10627, 0.0001
    %v10745 = vmul.f32 %v10628, 0.0001
    %v10746 = vmul.f32 %v10629, 0.0001
    %v10747 = vmul.f32 %v10630, 0.0001
    %v10748 = vmul.f32 %v10631, 0.0001
    %v10749 = vmul.f32 %v10632, 0.0001
    %v10750 = vmul.f32 %v10633, 0.0001
    %v10751 = vmul.f32 %v10634, 0.0001
    %v10752 = vmul.f32 %v10635, 0.0001
    %v10753 = vmul.f32 %v10636, 0.0001
    %v10754 = vmul.f32 %v10637, 0.0001
    %v10755 = vmul.f32 %v10638, 0.0001
    %v10756 = vmul.f32 %v10639, 0.0001
    %v10757 = vmul.f32 %v10640, 0.0001
    %v10758 = vmul.f32 %v10641, 0.0001
    %v10759 = vmul.f32 %v10642, 0.0001
    %v10760 = vmul.f32 %v10643, 0.0001
    %v10761 = vmul.f32 %v10644, 0.0001
    %v10762 = vmul.f32 %v10645, 0.0001
    %v10763 = vmul.f32 %v10646, 0.0001
    %v10764 = vmul.f32 %v10647, 0.0001
    %v10765 = vmul.f32 %v10648, 0.0001
    %v10766 = vmul.f32 %v10649, 0.0001
    %v10767 = vmul.f32 %v10650, 0.0001
    %v10768 = vmul.f32 %v10651, 0.0001
    %v10769 = vmul.f32 %v10652, 0.0001
    %v10770 = vmul.f32 %v10653, 0.0001
    %v10771 = vmul.f32 %v10654, 0.0001
    %v10772 = vmul.f32 %v10655, 0.0001
    %v10773 = vmul.f32 %v10656, 0.0001
    %v10774 = vmul.f32 %v10657, 0.0001
    %v10775 = vmul.f32 %v10658, 0.0001
    %v10776 = vmul.f32 %v10659, 0.0001
    %v10777 = vmul.f32 %v10660, 0.0001
    %v10778 = vmul.f32 %v10661, 0.0001
    %v10779 = vmul.f32 %v10662, 0.0001
    %v10780 = vmul.f32 %v10663, 0.0001
    %v10781 = vmul.f32 %v10664, 0.0001
    %v10782 = vmul.f32 %v10665, 0.0001
    %v10783 = vmul.f32 %v10666, 0.0001
    %v10784 = vmul.f32 %v10667, 0.0001
    %v10785 = vmul.f32 %v10668, 0.0001
    %v10786 = vmul.f32 %v10669, 0.0001
    %v10787 = vmul.f32 %v10670, 0.0001
    %v10788 = vmul.f32 %v10671, 0.0001
    %v10789 = vmul.f32 %v10672, 0.0001
    %v10790 = vmul.f32 %v10673, 0.0001
    %v10791 = vmul.f32 %v10674, 0.0001
    %v10792 = vmul.f32 %v10675, 0.0001
    %v10793 = vmul.f32 %v10676, 0.0001
    %v10794 = vmul.f32 %v10677, 0.0001
    %v10795 = vmul.f32 %v10678, 0.0001
    %v10796 = vmul.f32 %v10679, 0.0001
    %v10797 = vmul.f32 %v10680, 0.0001
    %v10798 = vmul.f32 %v10681, 0.0001
    %v10799 = vmul.f32 %v10682, 0.0001
    %v10800 = vmul.f32 %v10683, 0.0001
    %v10801 = vmul.f32 %v10684, 0.0001
    %v10802 = vmul.f32 %v10685, 0.0001
    %v10803 = vmul.f32 %v10686, 0.0001
    %v10804 = vmul.f32 %v10687, 0.0001
    %v10805 = vmul.f32 %v10688, 0.0001
    %v10806 = vmul.f32 %v10689, 0.0001
    %v10807 = vmul.f32 %v10690, 0.0001
    %v10808 = vmul.f32 %v10691, 0.0001
    %v10809 = vmul.f32 %v10692, 0.0001
    %v10810 = vmul.f32 %v10693, 0.0001
    %v10811 = vmul.f32 %v10694, 0.0001
    %v10812 = vmul.f32 %v10695, 0.0001
    %v10813 = vmul.f32 %v10696, 0.0001
    %v10814 = vmul.f32 %v10697, 0.0001
    %v10815 = vmul.f32 %v10698, 0.0001
    %v10816 = vmul.f32 %v10699, 0.0001
    %v10817 = vmul.f32 %v10700, 0.0001
    %v10818 = vmul.f32 %v10701, 0.0001
    %v10819 = vmul.f32 %v10702, 0.0001
    %v10820 = vmul.f32 %v10703, 0.0001
    %v10821 = vmul.f32 %v10704, 0.0001
    %v10822 = vmul.f32 %v10705, 0.0001
    %v10823 = vmul.f32 %v10706, 0.0001
    %v10824 = vmul.f32 %v10707, 0.0001
    %v10825 = vmul.f32 %v10708, 0.0001
    %v10826 = vmul.f32 %v10709, 0.0001
    %v10827 = vmul.f32 %v10710, 0.0001
    %v10828 = vmul.f32 %v10711, 0.0001
    %v10829 = vmul.f32 %v10712, 0.0001
    %v10830 = vmul.f32 %v10713, 0.0001
    %v10831 = vmul.f32 %v10714, 0.0001
    %v10832 = vmul.f32 %v10715, 0.0001
    %v10833 = vmul.f32 %v10716, 0.0001
    %v10834 = vmul.f32 %v10717, 0.0001
    %v10835 = vmul.f32 %v10718, 0.0001
    %v10836 = vmul.f32 %v10719, 0.0001
    %v10837 = vmul.f32 %v10720, 0.0001
    %v10838 = vmul.f32 %v10721, 0.0001
    %v10839 = vmul.f32 %v10722, 0.0001
    %v10840 = vmul.f32 %v10489, %v10489
    %v10841 = vmul.f32 %v10490, %v10490
    %v10842 = vmul.f32 %v10491, %v10491
    %v10843 = vmul.f32 %v10492, %v10492
    %v10844 = vmul.f32 %v10493, %v10493
    %v10845 = vmul.f32 %v10494, %v10494
    %v10846 = vmul.f32 %v10495, %v10495
    %v10847 = vmul.f32 %v10496, %v10496
    %v10848 = vmul.f32 %v10497, %v10497
    %v10849 = vmul.f32 %v10498, %v10498
    %v10850 = vmul.f32 %v10499, %v10499
    %v10851 = vmul.f32 %v10500, %v10500
    %v10852 = vmul.f32 %v10501, %v10501
    %v10853 = vmul.f32 %v10502, %v10502
    %v10854 = vmul.f32 %v10503, %v10503
    %v10855 = vmul.f32 %v10504, %v10504
    %v10856 = vmul.f32 %v10505, %v10505
    %v10857 = vmul.f32 %v10506, %v10506
    %v10858 = vmul.f32 %v10507, %v10507
    %v10859 = vmul.f32 %v10508, %v10508
    %v10860 = vmul.f32 %v10509, %v10509
    %v10861 = vmul.f32 %v10510, %v10510
    %v10862 = vmul.f32 %v10511, %v10511
    %v10863 = vmul.f32 %v10512, %v10512
    %v10864 = vmul.f32 %v10513, %v10513
    %v10865 = vmul.f32 %v10514, %v10514
    %v10866 = vmul.f32 %v10515, %v10515
    %v10867 = vmul.f32 %v10516, %v10516
    %v10868 = vmul.f32 %v10517, %v10517
    %v10869 = vmul.f32 %v10518, %v10518
    %v10870 = vmul.f32 %v10519, %v10519
    %v10871 = vmul.f32 %v10520, %v10520
    %v10872 = vmul.f32 %v10521, %v10521
    %v10873 = vmul.f32 %v10522, %v10522
    %v10874 = vmul.f32 %v10523, %v10523
    %v10875 = vmul.f32 %v10524, %v10524
    %v10876 = vmul.f32 %v10525, %v10525
    %v10877 = vmul.f32 %v10526, %v10526
    %v10878 = vmul.f32 %v10527, %v10527
    %v10879 = vmul.f32 %v10528, %v10528
    %v10880 = vmul.f32 %v10529, %v10529
    %v10881 = vmul.f32 %v10530, %v10530
    %v10882 = vmul.f32 %v10531, %v10531
    %v10883 = vmul.f32 %v10532, %v10532
    %v10884 = vmul.f32 %v10533, %v10533
    %v10885 = vmul.f32 %v10534, %v10534
    %v10886 = vmul.f32 %v10535, %v10535
    %v10887 = vmul.f32 %v10536, %v10536
    %v10888 = vmul.f32 %v10537, %v10537
    %v10889 = vmul.f32 %v10538, %v10538
    %v10890 = vmul.f32 %v10539, %v10539
    %v10891 = vmul.f32 %v10540, %v10540
    %v10892 = vmul.f32 %v10541, %v10541
    %v10893 = vmul.f32 %v10542, %v10542
    %v10894 = vmul.f32 %v10543, %v10543
    %v10895 = vmul.f32 %v10544, %v10544
    %v10896 = vmul.f32 %v10545, %v10545
    %v10897 = vmul.f32 %v10546, %v10546
    %v10898 = vmul.f32 %v10547, %v10547
    %v10899 = vmul.f32 %v10548, %v10548
    %v10900 = vmul.f32 %v10549, %v10549
    %v10901 = vmul.f32 %v10550, %v10550
    %v10902 = vmul.f32 %v10551, %v10551
    %v10903 = vmul.f32 %v10552, %v10552
    %v10904 = vmul.f32 %v10553, %v10553
    %v10905 = vmul.f32 %v10554, %v10554
    %v10906 = vmul.f32 %v10555, %v10555
    %v10907 = vmul.f32 %v10556, %v10556
    %v10908 = vmul.f32 %v10557, %v10557
    %v10909 = vmul.f32 %v10558, %v10558
    %v10910 = vmul.f32 %v10559, %v10559
    %v10911 = vmul.f32 %v10560, %v10560
    %v10912 = vmul.f32 %v10561, %v10561
    %v10913 = vmul.f32 %v10562, %v10562
    %v10914 = vmul.f32 %v10563, %v10563
    %v10915 = vmul.f32 %v10564, %v10564
    %v10916 = vmul.f32 %v10565, %v10565
    %v10917 = vmul.f32 %v10566, %v10566
    %v10918 = vmul.f32 %v10567, %v10567
    %v10919 = vmul.f32 %v10568, %v10568
    %v10920 = vmul.f32 %v10569, %v10569
    %v10921 = vmul.f32 %v10570, %v10570
    %v10922 = vmul.f32 %v10571, %v10571
    %v10923 = vmul.f32 %v10572, %v10572
    %v10924 = vmul.f32 %v10573, %v10573
    %v10925 = vmul.f32 %v10574, %v10574
    %v10926 = vmul.f32 %v10575, %v10575
    %v10927 = vmul.f32 %v10576, %v10576
    %v10928 = vmul.f32 %v10577, %v10577
    %v10929 = vmul.f32 %v10578, %v10578
    %v10930 = vmul.f32 %v10579, %v10579
    %v10931 = vmul.f32 %v10580, %v10580
    %v10932 = vmul.f32 %v10581, %v10581
    %v10933 = vmul.f32 %v10582, %v10582
    %v10934 = vmul.f32 %v10583, %v10583
    %v10935 = vmul.f32 %v10584, %v10584
    %v10936 = vmul.f32 %v10585, %v10585
    %v10937 = vmul.f32 %v10586, %v10586
    %v10938 = vmul.f32 %v10587, %v10587
    %v10939 = vmul.f32 %v10588, %v10588
    %v10940 = vmul.f32 %v10589, %v10589
    %v10941 = vmul.f32 %v10590, %v10590
    %v10942 = vmul.f32 %v10591, %v10591
    %v10943 = vmul.f32 %v10592, %v10592
    %v10944 = vmul.f32 %v10593, %v10593
    %v10945 = vmul.f32 %v10594, %v10594
    %v10946 = vmul.f32 %v10595, %v10595
    %v10947 = vmul.f32 %v10596, %v10596
    %v10948 = vmul.f32 %v10597, %v10597
    %v10949 = vmul.f32 %v10598, %v10598
    %v10950 = vmul.f32 %v10599, %v10599
    %v10951 = vmul.f32 %v10600, %v10600
    %v10952 = vmul.f32 %v10601, %v10601
    %v10953 = vmul.f32 %v10602, %v10602
    %v10954 = vmul.f32 %v10603, %v10603
    %v10955 = vmul.f32 %v10604, %v10604
    %v10956 = vmul.f32 %v10605, %v10605
    %v10957 = vmul.f32 %v10840, 10.0
    %v10958 = vmul.f32 %v10841, 10.0
    %v10959 = vmul.f32 %v10842, 10.0
    %v10960 = vmul.f32 %v10843, 10.0
    %v10961 = vmul.f32 %v10844, 10.0
    %v10962 = vmul.f32 %v10845, 10.0
    %v10963 = vmul.f32 %v10846, 10.0
    %v10964 = vmul.f32 %v10847, 10.0
    %v10965 = vmul.f32 %v10848, 10.0
    %v10966 = vmul.f32 %v10849, 10.0
    %v10967 = vmul.f32 %v10850, 10.0
    %v10968 = vmul.f32 %v10851, 10.0
    %v10969 = vmul.f32 %v10852, 10.0
    %v10970 = vmul.f32 %v10853, 10.0
    %v10971 = vmul.f32 %v10854, 10.0
    %v10972 = vmul.f32 %v10855, 10.0
    %v10973 = vmul.f32 %v10856, 10.0
    %v10974 = vmul.f32 %v10857, 10.0
    %v10975 = vmul.f32 %v10858, 10.0
    %v10976 = vmul.f32 %v10859, 10.0
    %v10977 = vmul.f32 %v10860, 10.0
    %v10978 = vmul.f32 %v10861, 10.0
    %v10979 = vmul.f32 %v10862, 10.0
    %v10980 = vmul.f32 %v10863, 10.0
    %v10981 = vmul.f32 %v10864, 10.0
    %v10982 = vmul.f32 %v10865, 10.0
    %v10983 = vmul.f32 %v10866, 10.0
    %v10984 = vmul.f32 %v10867, 10.0
    %v10985 = vmul.f32 %v10868, 10.0
    %v10986 = vmul.f32 %v10869, 10.0
    %v10987 = vmul.f32 %v10870, 10.0
    %v10988 = vmul.f32 %v10871, 10.0
    %v10989 = vmul.f32 %v10872, 10.0
    %v10990 = vmul.f32 %v10873, 10.0
    %v10991 = vmul.f32 %v10874, 10.0
    %v10992 = vmul.f32 %v10875, 10.0
    %v10993 = vmul.f32 %v10876, 10.0
    %v10994 = vmul.f32 %v10877, 10.0
    %v10995 = vmul.f32 %v10878, 10.0
    %v10996 = vmul.f32 %v10879, 10.0
    %v10997 = vmul.f32 %v10880, 10.0
    %v10998 = vmul.f32 %v10881, 10.0
    %v10999 = vmul.f32 %v10882, 10.0
    %v11000 = vmul.f32 %v10883, 10.0
    %v11001 = vmul.f32 %v10884, 10.0
    %v11002 = vmul.f32 %v10885, 10.0
    %v11003 = vmul.f32 %v10886, 10.0
    %v11004 = vmul.f32 %v10887, 10.0
    %v11005 = vmul.f32 %v10888, 10.0
    %v11006 = vmul.f32 %v10889, 10.0
    %v11007 = vmul.f32 %v10890, 10.0
    %v11008 = vmul.f32 %v10891, 10.0
    %v11009 = vmul.f32 %v10892, 10.0
    %v11010 = vmul.f32 %v10893, 10.0
    %v11011 = vmul.f32 %v10894, 10.0
    %v11012 = vmul.f32 %v10895, 10.0
    %v11013 = vmul.f32 %v10896, 10.0
    %v11014 = vmul.f32 %v10897, 10.0
    %v11015 = vmul.f32 %v10898, 10.0
    %v11016 = vmul.f32 %v10899, 10.0
    %v11017 = vmul.f32 %v10900, 10.0
    %v11018 = vmul.f32 %v10901, 10.0
    %v11019 = vmul.f32 %v10902, 10.0
    %v11020 = vmul.f32 %v10903, 10.0
    %v11021 = vmul.f32 %v10904, 10.0
    %v11022 = vmul.f32 %v10905, 10.0
    %v11023 = vmul.f32 %v10906, 10.0
    %v11024 = vmul.f32 %v10907, 10.0
    %v11025 = vmul.f32 %v10908, 10.0
    %v11026 = vmul.f32 %v10909, 10.0
    %v11027 = vmul.f32 %v10910, 10.0
    %v11028 = vmul.f32 %v10911, 10.0
    %v11029 = vmul.f32 %v10912, 10.0
    %v11030 = vmul.f32 %v10913, 10.0
    %v11031 = vmul.f32 %v10914, 10.0
    %v11032 = vmul.f32 %v10915, 10.0
    %v11033 = vmul.f32 %v10916, 10.0
    %v11034 = vmul.f32 %v10917, 10.0
    %v11035 = vmul.f32 %v10918, 10.0
    %v11036 = vmul.f32 %v10919, 10.0
    %v11037 = vmul.f32 %v10920, 10.0
    %v11038 = vmul.f32 %v10921, 10.0
    %v11039 = vmul.f32 %v10922, 10.0
    %v11040 = vmul.f32 %v10923, 10.0
    %v11041 = vmul.f32 %v10924, 10.0
    %v11042 = vmul.f32 %v10925, 10.0
    %v11043 = vmul.f32 %v10926, 10.0
    %v11044 = vmul.f32 %v10927, 10.0
    %v11045 = vmul.f32 %v10928, 10.0
    %v11046 = vmul.f32 %v10929, 10.0
    %v11047 = vmul.f32 %v10930, 10.0
    %v11048 = vmul.f32 %v10931, 10.0
    %v11049 = vmul.f32 %v10932, 10.0
    %v11050 = vmul.f32 %v10933, 10.0
    %v11051 = vmul.f32 %v10934, 10.0
    %v11052 = vmul.f32 %v10935, 10.0
    %v11053 = vmul.f32 %v10936, 10.0
    %v11054 = vmul.f32 %v10937, 10.0
    %v11055 = vmul.f32 %v10938, 10.0
    %v11056 = vmul.f32 %v10939, 10.0
    %v11057 = vmul.f32 %v10940, 10.0
    %v11058 = vmul.f32 %v10941, 10.0
    %v11059 = vmul.f32 %v10942, 10.0
    %v11060 = vmul.f32 %v10943, 10.0
    %v11061 = vmul.f32 %v10944, 10.0
    %v11062 = vmul.f32 %v10945, 10.0
    %v11063 = vmul.f32 %v10946, 10.0
    %v11064 = vmul.f32 %v10947, 10.0
    %v11065 = vmul.f32 %v10948, 10.0
    %v11066 = vmul.f32 %v10949, 10.0
    %v11067 = vmul.f32 %v10950, 10.0
    %v11068 = vmul.f32 %v10951, 10.0
    %v11069 = vmul.f32 %v10952, 10.0
    %v11070 = vmul.f32 %v10953, 10.0
    %v11071 = vmul.f32 %v10954, 10.0
    %v11072 = vmul.f32 %v10955, 10.0
    %v11073 = vmul.f32 %v10956, 10.0
    %v11074 = vadd.f32 %v10723, %v10957
    %v11075 = vadd.f32 %v10724, %v10958
    %v11076 = vadd.f32 %v10725, %v10959
    %v11077 = vadd.f32 %v10726, %v10960
    %v11078 = vadd.f32 %v10727, %v10961
    %v11079 = vadd.f32 %v10728, %v10962
    %v11080 = vadd.f32 %v10729, %v10963
    %v11081 = vadd.f32 %v10730, %v10964
    %v11082 = vadd.f32 %v10731, %v10965
    %v11083 = vadd.f32 %v10732, %v10966
    %v11084 = vadd.f32 %v10733, %v10967
    %v11085 = vadd.f32 %v10734, %v10968
    %v11086 = vadd.f32 %v10735, %v10969
    %v11087 = vadd.f32 %v10736, %v10970
    %v11088 = vadd.f32 %v10737, %v10971
    %v11089 = vadd.f32 %v10738, %v10972
    %v11090 = vadd.f32 %v10739, %v10973
    %v11091 = vadd.f32 %v10740, %v10974
    %v11092 = vadd.f32 %v10741, %v10975
    %v11093 = vadd.f32 %v10742, %v10976
    %v11094 = vadd.f32 %v10743, %v10977
    %v11095 = vadd.f32 %v10744, %v10978
    %v11096 = vadd.f32 %v10745, %v10979
    %v11097 = vadd.f32 %v10746, %v10980
    %v11098 = vadd.f32 %v10747, %v10981
    %v11099 = vadd.f32 %v10748, %v10982
    %v11100 = vadd.f32 %v10749, %v10983
    %v11101 = vadd.f32 %v10750, %v10984
    %v11102 = vadd.f32 %v10751, %v10985
    %v11103 = vadd.f32 %v10752, %v10986
    %v11104 = vadd.f32 %v10753, %v10987
    %v11105 = vadd.f32 %v10754, %v10988
    %v11106 = vadd.f32 %v10755, %v10989
    %v11107 = vadd.f32 %v10756, %v10990
    %v11108 = vadd.f32 %v10757, %v10991
    %v11109 = vadd.f32 %v10758, %v10992
    %v11110 = vadd.f32 %v10759, %v10993
    %v11111 = vadd.f32 %v10760, %v10994
    %v11112 = vadd.f32 %v10761, %v10995
    %v11113 = vadd.f32 %v10762, %v10996
    %v11114 = vadd.f32 %v10763, %v10997
    %v11115 = vadd.f32 %v10764, %v10998
    %v11116 = vadd.f32 %v10765, %v10999
    %v11117 = vadd.f32 %v10766, %v11000
    %v11118 = vadd.f32 %v10767, %v11001
    %v11119 = vadd.f32 %v10768, %v11002
    %v11120 = vadd.f32 %v10769, %v11003
    %v11121 = vadd.f32 %v10770, %v11004
    %v11122 = vadd.f32 %v10771, %v11005
    %v11123 = vadd.f32 %v10772, %v11006
    %v11124 = vadd.f32 %v10773, %v11007
    %v11125 = vadd.f32 %v10774, %v11008
    %v11126 = vadd.f32 %v10775, %v11009
    %v11127 = vadd.f32 %v10776, %v11010
    %v11128 = vadd.f32 %v10777, %v11011
    %v11129 = vadd.f32 %v10778, %v11012
    %v11130 = vadd.f32 %v10779, %v11013
    %v11131 = vadd.f32 %v10780, %v11014
    %v11132 = vadd.f32 %v10781, %v11015
    %v11133 = vadd.f32 %v10782, %v11016
    %v11134 = vadd.f32 %v10783, %v11017
    %v11135 = vadd.f32 %v10784, %v11018
    %v11136 = vadd.f32 %v10785, %v11019
    %v11137 = vadd.f32 %v10786, %v11020
    %v11138 = vadd.f32 %v10787, %v11021
    %v11139 = vadd.f32 %v10788, %v11022
    %v11140 = vadd.f32 %v10789, %v11023
    %v11141 = vadd.f32 %v10790, %v11024
    %v11142 = vadd.f32 %v10791, %v11025
    %v11143 = vadd.f32 %v10792, %v11026
    %v11144 = vadd.f32 %v10793, %v11027
    %v11145 = vadd.f32 %v10794, %v11028
    %v11146 = vadd.f32 %v10795, %v11029
    %v11147 = vadd.f32 %v10796, %v11030
    %v11148 = vadd.f32 %v10797, %v11031
    %v11149 = vadd.f32 %v10798, %v11032
    %v11150 = vadd.f32 %v10799, %v11033
    %v11151 = vadd.f32 %v10800, %v11034
    %v11152 = vadd.f32 %v10801, %v11035
    %v11153 = vadd.f32 %v10802, %v11036
    %v11154 = vadd.f32 %v10803, %v11037
    %v11155 = vadd.f32 %v10804, %v11038
    %v11156 = vadd.f32 %v10805, %v11039
    %v11157 = vadd.f32 %v10806, %v11040
    %v11158 = vadd.f32 %v10807, %v11041
    %v11159 = vadd.f32 %v10808, %v11042
    %v11160 = vadd.f32 %v10809, %v11043
    %v11161 = vadd.f32 %v10810, %v11044
    %v11162 = vadd.f32 %v10811, %v11045
    %v11163 = vadd.f32 %v10812, %v11046
    %v11164 = vadd.f32 %v10813, %v11047
    %v11165 = vadd.f32 %v10814, %v11048
    %v11166 = vadd.f32 %v10815, %v11049
    %v11167 = vadd.f32 %v10816, %v11050
    %v11168 = vadd.f32 %v10817, %v11051
    %v11169 = vadd.f32 %v10818, %v11052
    %v11170 = vadd.f32 %v10819, %v11053
    %v11171 = vadd.f32 %v10820, %v11054
    %v11172 = vadd.f32 %v10821, %v11055
    %v11173 = vadd.f32 %v10822, %v11056
    %v11174 = vadd.f32 %v10823, %v11057
    %v11175 = vadd.f32 %v10824, %v11058
    %v11176 = vadd.f32 %v10825, %v11059
    %v11177 = vadd.f32 %v10826, %v11060
    %v11178 = vadd.f32 %v10827, %v11061
    %v11179 = vadd.f32 %v10828, %v11062
    %v11180 = vadd.f32 %v10829, %v11063
    %v11181 = vadd.f32 %v10830, %v11064
    %v11182 = vadd.f32 %v10831, %v11065
    %v11183 = vadd.f32 %v10832, %v11066
    %v11184 = vadd.f32 %v10833, %v11067
    %v11185 = vadd.f32 %v10834, %v11068
    %v11186 = vadd.f32 %v10835, %v11069
    %v11187 = vadd.f32 %v10836, %v11070
    %v11188 = vadd.f32 %v10837, %v11071
    %v11189 = vadd.f32 %v10838, %v11072
    %v11190 = vadd.f32 %v10839, %v11073
    %v11191 = vadd.f32 %v9693, %v11074
    %v11192 = vadd.f32 %v9694, %v11075
    %v11193 = vadd.f32 %v9695, %v11076
    %v11194 = vadd.f32 %v9696, %v11077
    %v11195 = vadd.f32 %v9697, %v11078
    %v11196 = vadd.f32 %v9698, %v11079
    %v11197 = vadd.f32 %v9699, %v11080
    %v11198 = vadd.f32 %v9700, %v11081
    %v11199 = vadd.f32 %v9701, %v11082
    %v11200 = vadd.f32 %v9702, %v11083
    %v11201 = vadd.f32 %v9703, %v11084
    %v11202 = vadd.f32 %v9704, %v11085
    %v11203 = vadd.f32 %v9705, %v11086
    %v11204 = vadd.f32 %v9706, %v11087
    %v11205 = vadd.f32 %v9707, %v11088
    %v11206 = vadd.f32 %v9708, %v11089
    %v11207 = vadd.f32 %v9709, %v11090
    %v11208 = vadd.f32 %v9710, %v11091
    %v11209 = vadd.f32 %v9711, %v11092
    %v11210 = vadd.f32 %v9712, %v11093
    %v11211 = vadd.f32 %v9713, %v11094
    %v11212 = vadd.f32 %v9714, %v11095
    %v11213 = vadd.f32 %v9715, %v11096
    %v11214 = vadd.f32 %v9716, %v11097
    %v11215 = vadd.f32 %v9717, %v11098
    %v11216 = vadd.f32 %v9718, %v11099
    %v11217 = vadd.f32 %v9719, %v11100
    %v11218 = vadd.f32 %v9720, %v11101
    %v11219 = vadd.f32 %v9721, %v11102
    %v11220 = vadd.f32 %v9722, %v11103
    %v11221 = vadd.f32 %v9723, %v11104
    %v11222 = vadd.f32 %v9724, %v11105
    %v11223 = vadd.f32 %v9725, %v11106
    %v11224 = vadd.f32 %v9726, %v11107
    %v11225 = vadd.f32 %v9727, %v11108
    %v11226 = vadd.f32 %v9728, %v11109
    %v11227 = vadd.f32 %v9729, %v11110
    %v11228 = vadd.f32 %v9730, %v11111
    %v11229 = vadd.f32 %v9731, %v11112
    %v11230 = vadd.f32 %v9732, %v11113
    %v11231 = vadd.f32 %v9733, %v11114
    %v11232 = vadd.f32 %v9734, %v11115
    %v11233 = vadd.f32 %v9735, %v11116
    %v11234 = vadd.f32 %v9736, %v11117
    %v11235 = vadd.f32 %v9737, %v11118
    %v11236 = vadd.f32 %v9738, %v11119
    %v11237 = vadd.f32 %v9739, %v11120
    %v11238 = vadd.f32 %v9740, %v11121
    %v11239 = vadd.f32 %v9741, %v11122
    %v11240 = vadd.f32 %v9742, %v11123
    %v11241 = vadd.f32 %v9743, %v11124
    %v11242 = vadd.f32 %v9744, %v11125
    %v11243 = vadd.f32 %v9745, %v11126
    %v11244 = vadd.f32 %v9746, %v11127
    %v11245 = vadd.f32 %v9747, %v11128
    %v11246 = vadd.f32 %v9748, %v11129
    %v11247 = vadd.f32 %v9749, %v11130
    %v11248 = vadd.f32 %v9750, %v11131
    %v11249 = vadd.f32 %v9751, %v11132
    %v11250 = vadd.f32 %v9752, %v11133
    %v11251 = vadd.f32 %v9753, %v11134
    %v11252 = vadd.f32 %v9754, %v11135
    %v11253 = vadd.f32 %v9755, %v11136
    %v11254 = vadd.f32 %v9756, %v11137
    %v11255 = vadd.f32 %v9757, %v11138
    %v11256 = vadd.f32 %v9758, %v11139
    %v11257 = vadd.f32 %v9759, %v11140
    %v11258 = vadd.f32 %v9760, %v11141
    %v11259 = vadd.f32 %v9761, %v11142
    %v11260 = vadd.f32 %v9762, %v11143
    %v11261 = vadd.f32 %v9763, %v11144
    %v11262 = vadd.f32 %v9764, %v11145
    %v11263 = vadd.f32 %v9765, %v11146
    %v11264 = vadd.f32 %v9766, %v11147
    %v11265 = vadd.f32 %v9767, %v11148
    %v11266 = vadd.f32 %v9768, %v11149
    %v11267 = vadd.f32 %v9769, %v11150
    %v11268 = vadd.f32 %v9770, %v11151
    %v11269 = vadd.f32 %v9771, %v11152
    %v11270 = vadd.f32 %v9772, %v11153
    %v11271 = vadd.f32 %v9773, %v11154
    %v11272 = vadd.f32 %v9774, %v11155
    %v11273 = vadd.f32 %v9775, %v11156
    %v11274 = vadd.f32 %v9776, %v11157
    %v11275 = vadd.f32 %v9777, %v11158
    %v11276 = vadd.f32 %v9778, %v11159
    %v11277 = vadd.f32 %v9779, %v11160
    %v11278 = vadd.f32 %v9780, %v11161
    %v11279 = vadd.f32 %v9781, %v11162
    %v11280 = vadd.f32 %v9782, %v11163
    %v11281 = vadd.f32 %v9783, %v11164
    %v11282 = vadd.f32 %v9784, %v11165
    %v11283 = vadd.f32 %v9785, %v11166
    %v11284 = vadd.f32 %v9786, %v11167
    %v11285 = vadd.f32 %v9787, %v11168
    %v11286 = vadd.f32 %v9788, %v11169
    %v11287 = vadd.f32 %v9789, %v11170
    %v11288 = vadd.f32 %v9790, %v11171
    %v11289 = vadd.f32 %v9791, %v11172
    %v11290 = vadd.f32 %v9792, %v11173
    %v11291 = vadd.f32 %v9793, %v11174
    %v11292 = vadd.f32 %v9794, %v11175
    %v11293 = vadd.f32 %v9795, %v11176
    %v11294 = vadd.f32 %v9796, %v11177
    %v11295 = vadd.f32 %v9797, %v11178
    %v11296 = vadd.f32 %v9798, %v11179
    %v11297 = vadd.f32 %v9799, %v11180
    %v11298 = vadd.f32 %v9800, %v11181
    %v11299 = vadd.f32 %v9801, %v11182
    %v11300 = vadd.f32 %v9802, %v11183
    %v11301 = vadd.f32 %v9803, %v11184
    %v11302 = vadd.f32 %v9804, %v11185
    %v11303 = vadd.f32 %v9805, %v11186
    %v11304 = vadd.f32 %v9806, %v11187
    %v11305 = vadd.f32 %v9807, %v11188
    %v11306 = vadd.f32 %v9808, %v11189
    %v11307 = vadd.f32 %v9809, %v11190
    %v11308 = vadd.f32 %v11191, %v11192
    %v11309 = vadd.f32 %v11308, %v11193
    %v11310 = vadd.f32 %v11309, %v11194
    %v11311 = vadd.f32 %v11310, %v11195
    %v11312 = vadd.f32 %v11311, %v11196
    %v11313 = vadd.f32 %v11312, %v11197
    %v11314 = vadd.f32 %v11313, %v11198
    %v11315 = vadd.f32 %v11314, %v11199
    %v11316 = vadd.f32 %v11315, %v11200
    %v11317 = vadd.f32 %v11316, %v11201
    %v11318 = vadd.f32 %v11317, %v11202
    %v11319 = vadd.f32 %v11318, %v11203
    %v11320 = vadd.f32 %v11319, %v11204
    %v11321 = vadd.f32 %v11320, %v11205
    %v11322 = vadd.f32 %v11321, %v11206
    %v11323 = vadd.f32 %v11322, %v11207
    %v11324 = vadd.f32 %v11323, %v11208
    %v11325 = vadd.f32 %v11324, %v11209
    %v11326 = vadd.f32 %v11325, %v11210
    %v11327 = vadd.f32 %v11326, %v11211
    %v11328 = vadd.f32 %v11327, %v11212
    %v11329 = vadd.f32 %v11328, %v11213
    %v11330 = vadd.f32 %v11329, %v11214
    %v11331 = vadd.f32 %v11330, %v11215
    %v11332 = vadd.f32 %v11331, %v11216
    %v11333 = vadd.f32 %v11332, %v11217
    %v11334 = vadd.f32 %v11333, %v11218
    %v11335 = vadd.f32 %v11334, %v11219
    %v11336 = vadd.f32 %v11335, %v11220
    %v11337 = vadd.f32 %v11336, %v11221
    %v11338 = vadd.f32 %v11337, %v11222
    %v11339 = vadd.f32 %v11338, %v11223
    %v11340 = vadd.f32 %v11339, %v11224
    %v11341 = vadd.f32 %v11340, %v11225
    %v11342 = vadd.f32 %v11341, %v11226
    %v11343 = vadd.f32 %v11342, %v11227
    %v11344 = vadd.f32 %v11343, %v11228
    %v11345 = vadd.f32 %v11344, %v11229
    %v11346 = vadd.f32 %v11345, %v11230
    %v11347 = vadd.f32 %v11346, %v11231
    %v11348 = vadd.f32 %v11347, %v11232
    %v11349 = vadd.f32 %v11348, %v11233
    %v11350 = vadd.f32 %v11349, %v11234
    %v11351 = vadd.f32 %v11350, %v11235
    %v11352 = vadd.f32 %v11351, %v11236
    %v11353 = vadd.f32 %v11352, %v11237
    %v11354 = vadd.f32 %v11353, %v11238
    %v11355 = vadd.f32 %v11354, %v11239
    %v11356 = vadd.f32 %v11355, %v11240
    %v11357 = vadd.f32 %v11356, %v11241
    %v11358 = vadd.f32 %v11357, %v11242
    %v11359 = vadd.f32 %v11358, %v11243
    %v11360 = vadd.f32 %v11359, %v11244
    %v11361 = vadd.f32 %v11360, %v11245
    %v11362 = vadd.f32 %v11361, %v11246
    %v11363 = vadd.f32 %v11362, %v11247
    %v11364 = vadd.f32 %v11363, %v11248
    %v11365 = vadd.f32 %v11364, %v11249
    %v11366 = vadd.f32 %v11365, %v11250
    %v11367 = vadd.f32 %v11366, %v11251
    %v11368 = vadd.f32 %v11367, %v11252
    %v11369 = vadd.f32 %v11368, %v11253
    %v11370 = vadd.f32 %v11369, %v11254
    %v11371 = vadd.f32 %v11370, %v11255
    %v11372 = vadd.f32 %v11371, %v11256
    %v11373 = vadd.f32 %v11372, %v11257
    %v11374 = vadd.f32 %v11373, %v11258
    %v11375 = vadd.f32 %v11374, %v11259
    %v11376 = vadd.f32 %v11375, %v11260
    %v11377 = vadd.f32 %v11376, %v11261
    %v11378 = vadd.f32 %v11377, %v11262
    %v11379 = vadd.f32 %v11378, %v11263
    %v11380 = vadd.f32 %v11379, %v11264
    %v11381 = vadd.f32 %v11380, %v11265
    %v11382 = vadd.f32 %v11381, %v11266
    %v11383 = vadd.f32 %v11382, %v11267
    %v11384 = vadd.f32 %v11383, %v11268
    %v11385 = vadd.f32 %v11384, %v11269
    %v11386 = vadd.f32 %v11385, %v11270
    %v11387 = vadd.f32 %v11386, %v11271
    %v11388 = vadd.f32 %v11387, %v11272
    %v11389 = vadd.f32 %v11388, %v11273
    %v11390 = vadd.f32 %v11389, %v11274
    %v11391 = vadd.f32 %v11390, %v11275
    %v11392 = vadd.f32 %v11391, %v11276
    %v11393 = vadd.f32 %v11392, %v11277
    %v11394 = vadd.f32 %v11393, %v11278
    %v11395 = vadd.f32 %v11394, %v11279
    %v11396 = vadd.f32 %v11395, %v11280
    %v11397 = vadd.f32 %v11396, %v11281
    %v11398 = vadd.f32 %v11397, %v11282
    %v11399 = vadd.f32 %v11398, %v11283
    %v11400 = vadd.f32 %v11399, %v11284
    %v11401 = vadd.f32 %v11400, %v11285
    %v11402 = vadd.f32 %v11401, %v11286
    %v11403 = vadd.f32 %v11402, %v11287
    %v11404 = vadd.f32 %v11403, %v11288
    %v11405 = vadd.f32 %v11404, %v11289
    %v11406 = vadd.f32 %v11405, %v11290
    %v11407 = vadd.f32 %v11406, %v11291
    %v11408 = vadd.f32 %v11407, %v11292
    %v11409 = vadd.f32 %v11408, %v11293
    %v11410 = vadd.f32 %v11409, %v11294
    %v11411 = vadd.f32 %v11410, %v11295
    %v11412 = vadd.f32 %v11411, %v11296
    %v11413 = vadd.f32 %v11412, %v11297
    %v11414 = vadd.f32 %v11413, %v11298
    %v11415 = vadd.f32 %v11414, %v11299
    %v11416 = vadd.f32 %v11415, %v11300
    %v11417 = vadd.f32 %v11416, %v11301
    %v11418 = vadd.f32 %v11417, %v11302
    %v11419 = vadd.f32 %v11418, %v11303
    %v11420 = vadd.f32 %v11419, %v11304
    %v11421 = vadd.f32 %v11420, %v11305
    %v11422 = vadd.f32 %v11421, %v11306
    %v11423 = vadd.f32 %v11422, %v11307
    %11424 = vadd.xlane.f32.xlu0 %v11423
    %v11425 = vpop.xlane.xlu0 %11424
    %v11426 = vrot.slane %v11425, 4
    %v11427 = vadd.f32 %v11425, %v11426
    %v11428 = vrot.slane %v11427, 2
    %v11429 = vadd.f32 %v11427, %v11428
    %v11430 = vrot.slane %v11429, 1
    %v11431 = vadd.f32 %v11429, %v11430
    %s11432 = vtos %v11431
    %v11433 = vstv %s11432
    %v11434 = vmul.f32 %v11433, 9.010957e-06
    %vm11435 = vcmask 0
    %11436 = vst.msk [vmem:[#allocation9] sm:$0x1] %vm11435, %v11434
    // Predicated region
    $region26: #{tpu_custom_call.1} parent=1 // pred_check
      _
    $region27: #{tpu_custom_call.1} parent=1 // pred_check_branch
      %11438 = sbr.rel (0) target = $region29
    $region28: #{tpu_custom_call.1} parent=1 // pred_region
      %11440 = vsyncadd [#allocation4], 0
      %s11442 = sshll.u32 [#allocation8], 4
      %s11443 = int_to_ptr.vmem [resolvable:$true] %s11442
      %s11444 = sshll.u32 %s3, 4
      %s11445 = int_to_ptr.hbm [resolvable:$true] %s11444
      %11447 = dma.vmem_to_hbm [thread:$0]  %s11443, 4992, %s11445, [#allocation4]
    $region29: #{tpu_custom_call.1} parent=1 // pred_fallthru
      _
    // Predicated region
    $region30: #{tpu_custom_call.1} parent=1 // pred_check
      _
    $region31: #{tpu_custom_call.1} parent=1 // pred_check_branch
      %11449 = sbr.rel (0) target = $region33
    $region32: #{tpu_custom_call.1} parent=1 // pred_region
      %11451 = vsyncadd [#allocation10], 0
      %s11453 = sshll.u32 [#allocation9], 4
      %s11454 = int_to_ptr.vmem [resolvable:$true] %s11453
      %s11455 = sshll.u32 %s4, 4
      %s11456 = int_to_ptr.hbm [resolvable:$true] %s11455
      %11458 = dma.vmem_to_hbm [thread:$0]  %s11454, 16, %s11456, [#allocation10]
    $region33: #{tpu_custom_call.1} parent=1 // pred_fallthru
      _
    // Predicated region
    $region34: #{tpu_custom_call.1} parent=1 // pred_check
      _
    $region35: #{tpu_custom_call.1} parent=1 // pred_check_branch
      %11460 = sbr.rel (0) target = $region37
    $region36: #{tpu_custom_call.1} parent=1 // pred_region
      %11462 = dma.done [#allocation4], 4992
    $region37: #{tpu_custom_call.1} parent=1 // pred_fallthru
      _
    // Predicated region
    $region38: #{tpu_custom_call.1} parent=1 // pred_check
      _
    $region39: #{tpu_custom_call.1} parent=1 // pred_check_branch
      %11464 = sbr.rel (0) target = $region41
    $region40: #{tpu_custom_call.1} parent=1 // pred_region
      %11466 = dma.done [#allocation10], 16
    $region41: #{tpu_custom_call.1} parent=1 // pred_fallthru
      _
    %11467 = vsyncpa [#allocation3], 1
    %11468 = vsyncpa [#allocation6], 1
    %11469 = vsyncpa [#allocation4], 1
    %11470 = vsyncpa [#allocation10], 1

</llo_original>
